<compile_context>
chip_gen: v7x
topology: tpu7x:2x2x1
jax: 0.10.0
libtpu: 0.0.40
codegen_flags: <defaults>
</compile_context>

<pallas_src>
import functools
import math

import jax
import jax.numpy as jnp
from jax import lax
from jax.experimental import pallas as pl
from jax.experimental.pallas import tpu as pltpu


_NEG_INF = -1e10
_LN_EPS = 1e-5
_TRANS_B = (((1,), (1,)), ((), ()))   # Q @ K^T without materializing K^T


# ----------------------------- in-kernel helpers -----------------------------

def _layer_norm(z, g, b, eps=_LN_EPS):
    """Row LayerNorm with single-pass (mean, mean-of-squares) statistics."""
    mu = jnp.mean(z, axis=-1, keepdims=True)
    ms = jnp.mean(z * z, axis=-1, keepdims=True)
    var = jnp.maximum(ms - mu * mu, 0.0)
    return (z - mu) * lax.rsqrt(var + eps) * g + b


def _mha(xq_b, xkv_b, bias, wq, wk, wv, wo, bq, bk, bv, bo,
         n_heads, scale, attn_ref=None):
    """Multi-head attention for one batch row.

    xq_b : (Lq, D) bf16   query-side activations
    xkv_b: (Lk, D) bf16   key/value-side activations
    bias : (Lq, Lk) f32   additive mask bias (0 where allowed, -1e10 masked)
    w*   : (D, D) bf16 weights;  b*: (1, D) f32 biases
    attn_ref: optional (H, Lq, Lk) output ref for exported attention weights.
    Returns the (Lq, D) f32 attention-block output (pre-residual).
    """
    D = wq.shape[0]
    Dh = D // n_heads
    bf16 = jnp.bfloat16

    # Fold 1/sqrt(Dh) into Q once (Lq x D) instead of scaling every score tile.
    q2 = (jnp.dot(xq_b, wq, preferred_element_type=jnp.float32) + bq) * scale
    k2 = jnp.dot(xkv_b, wk, preferred_element_type=jnp.float32) + bk
    v2 = jnp.dot(xkv_b, wv, preferred_element_type=jnp.float32) + bv

    heads = []
    for h in range(n_heads):
        sl = slice(h * Dh, (h + 1) * Dh)
        qh = q2[:, sl].astype(bf16)
        kh = k2[:, sl].astype(bf16)
        vh = v2[:, sl].astype(bf16)

        s = lax.dot_general(qh, kh, _TRANS_B,
                            preferred_element_type=jnp.float32) + bias
        m = jnp.max(s, axis=-1, keepdims=True)
        e = jnp.exp(s - m)
        den = jnp.sum(e, axis=-1, keepdims=True)
        if attn_ref is None:
            p = e * pl.reciprocal(den, approx=True)   # internal: EUP approx
        else:
            p = e / den                               # exported: rows sum to 1
            attn_ref[h] = p
        heads.append(jnp.dot(p.astype(bf16), vh,
                             preferred_element_type=jnp.float32))

    # Concatenate heads -> single (Lq, D) @ (D, D) output projection.
    o = jnp.concatenate(heads, axis=-1)
    return jnp.dot(o.astype(bf16), wo, preferred_element_type=jnp.float32) + bo


def _ffn(x, w1, b1, w2, b2):
    bf16 = jnp.bfloat16
    h = jnp.dot(x.astype(bf16), w1, preferred_element_type=jnp.float32) + b1
    h = jnp.maximum(h, 0.0)
    return jnp.dot(h.astype(bf16), w2, preferred_element_type=jnp.float32) + b2


# ------------------------------- Pallas kernels -------------------------------

def _encoder_layer_kernel(x_ref, bias_ref,
                          wq, wk, wv, wo, bq, bk, bv, bo, ln1g, ln1b,
                          w1, b1, w2, b2, ln2g, ln2b,
                          o_ref, *, n_heads, scale):
    x = x_ref[...]                                    # (L, D) f32 (batch squeezed)
    xb = x.astype(jnp.bfloat16)
    a = _mha(xb, xb, bias_ref[...],
             wq[...], wk[...], wv[...], wo[...],
             bq[...], bk[...], bv[...], bo[...],
             n_heads, scale)
    z = _layer_norm(x + a, ln1g[...], ln1b[...])
    f = _ffn(z, w1[...], b1[...], w2[...], b2[...])
    o_ref[...] = _layer_norm(z + f, ln2g[...], ln2b[...])


def _decoder_layer_kernel(*refs, n_heads, scale, write_attn):
    (trg_ref, enc_ref, tbias_ref, xbias_ref,
     s_wq, s_wk, s_wv, s_wo, s_bq, s_bk, s_bv, s_bo, ln1g, ln1b,
     c_wq, c_wk, c_wv, c_wo, c_bq, c_bk, c_bv, c_bo, ln2g, ln2b,
     w1, b1, w2, b2, ln3g, ln3b) = refs[:30]
    o_ref = refs[30]
    attn_ref = refs[31] if write_attn else None

    trg = trg_ref[...]                                # (Lt, D) f32
    tb = trg.astype(jnp.bfloat16)
    a = _mha(tb, tb, tbias_ref[...],
             s_wq[...], s_wk[...], s_wv[...], s_wo[...],
             s_bq[...], s_bk[...], s_bv[...], s_bo[...],
             n_heads, scale)
    z1 = _layer_norm(trg + a, ln1g[...], ln1b[...])

    enc_b = enc_ref[...].astype(jnp.bfloat16)         # (Ls, D)
    c = _mha(z1.astype(jnp.bfloat16), enc_b, xbias_ref[...],
             c_wq[...], c_wk[...], c_wv[...], c_wo[...],
             c_bq[...], c_bk[...], c_bv[...], c_bo[...],
             n_heads, scale, attn_ref=attn_ref)
    z2 = _layer_norm(z1 + c, ln2g[...], ln2b[...])

    f = _ffn(z2, w1[...], b1[...], w2[...], b2[...])
    o_ref[...] = _layer_norm(z2 + f, ln3g[...], ln3b[...])


def _vocab_proj_kernel(x_ref, w_ref, b_ref, o_ref):
    o_ref[...] = (jnp.dot(x_ref[...].astype(jnp.bfloat16), w_ref[...],
                          preferred_element_type=jnp.float32) + b_ref[...])


# ------------------------------ BlockSpec helpers ------------------------------

def _rep_spec(shape):
    """Full array, replicated across the batch grid axis."""
    n = len(shape)
    return pl.BlockSpec(tuple(shape), lambda b, _n=n: (0,) * _n)


def _bat_spec(inner_shape):
    """Batch dim squeezed; one batch row per grid step."""
    n = len(inner_shape)
    return pl.BlockSpec((None,) + tuple(inner_shape),
                        lambda b, _n=n: (b,) + (0,) * _n)


_PARALLEL_BATCH = pltpu.CompilerParams(dimension_semantics=("parallel",))


# -------------------------------- layer wrappers --------------------------------

def encoder_layer(p, src, bias, n_heads):
    B, L, D = src.shape
    scale = 1.0 / math.sqrt(D // n_heads)
    a, f = p["self_attn"], p["ffn"]
    args = (src, bias,
            a["wq"], a["wk"], a["wv"], a["wo"],
            a["bq"], a["bk"], a["bv"], a["bo"],
            p["ln1_g"], p["ln1_b"],
            f["w1"], f["b1"], f["w2"], f["b2"],
            p["ln2_g"], p["ln2_b"])
    in_specs = ([_bat_spec((L, D)), _bat_spec((L, L))]
                + [_rep_spec(t.shape) for t in args[2:]])
    return pl.pallas_call(
        functools.partial(_encoder_layer_kernel, n_heads=n_heads, scale=scale),
        grid=(B,),
        in_specs=in_specs,
        out_specs=_bat_spec((L, D)),
        out_shape=jax.ShapeDtypeStruct((B, L, D), jnp.float32),
        compiler_params=_PARALLEL_BATCH,
    )(*args)


def decoder_layer(p, trg, enc_src, tbias, xbias, n_heads, want_attn):
    B, Lt, D = trg.shape
    Ls = enc_src.shape[1]
    scale = 1.0 / math.sqrt(D // n_heads)
    sa, ca, f = p["self_attn"], p["enc_attn"], p["ffn"]
    args = (trg, enc_src, tbias, xbias,
            sa["wq"], sa["wk"], sa["wv"], sa["wo"],
            sa["bq"], sa["bk"], sa["bv"], sa["bo"],
            p["ln1_g"], p["ln1_b"],
            ca["wq"], ca["wk"], ca["wv"], ca["wo"],
            ca["bq"], ca["bk"], ca["bv"], ca["bo"],
            p["ln2_g"], p["ln2_b"],
            f["w1"], f["b1"], f["w2"], f["b2"],
            p["ln3_g"], p["ln3_b"])
    in_specs = ([_bat_spec((Lt, D)), _bat_spec((Ls, D)),
                 _bat_spec((Lt, Lt)), _bat_spec((Lt, Ls))]
                + [_rep_spec(t.shape) for t in args[4:]])
    kernel = functools.partial(_decoder_layer_kernel, n_heads=n_heads,
                               scale=scale, write_attn=want_attn)
    if want_attn:
        out, attn = pl.pallas_call(
            kernel, grid=(B,), in_specs=in_specs,
            out_specs=(_bat_spec((Lt, D)), _bat_spec((n_heads, Lt, Ls))),
            out_shape=(jax.ShapeDtypeStruct((B, Lt, D), jnp.float32),
                       jax.ShapeDtypeStruct((B, n_heads, Lt, Ls), jnp.float32)),
            compiler_params=_PARALLEL_BATCH,
        )(*args)
        return out, attn
    out = pl.pallas_call(
        kernel, grid=(B,), in_specs=in_specs,
        out_specs=_bat_spec((Lt, D)),
        out_shape=jax.ShapeDtypeStruct((B, Lt, D), jnp.float32),
        compiler_params=_PARALLEL_BATCH,
    )(*args)
    return out, None


def vocab_projection(trg, w_pad, b_pad, vocab):
    """(B,L,D) @ (D,Vp) + (1,Vp): lane-dense padded output, sliced back to V."""
    B, L, D = trg.shape
    vp = w_pad.shape[1]
    out = pl.pallas_call(
        _vocab_proj_kernel,
        grid=(B,),
        in_specs=[_bat_spec((L, D)), _rep_spec((D, vp)), _rep_spec((1, vp))],
        out_specs=_bat_spec((L, vp)),
        out_shape=jax.ShapeDtypeStruct((B, L, vp), jnp.float32),
        compiler_params=_PARALLEL_BATCH,
    )(trg, w_pad, b_pad)
    return out[:, :, :vocab]


# ------------------------------- model forward -------------------------------

def encoder_forward(p, x, src_bias, n_heads):
    L = x.shape[1]
    D = p["tok_emb"].shape[1]
    # TODO(synk): embedding gather + positional add stay in plain JAX (no clean
    # Pallas gather at these sizes).  Dropout is identity (eval mode).
    src = jnp.take(p["tok_emb"], x, axis=0) * math.sqrt(D) + p["pos_emb"][None, :L]
    for lp in p["layers"]:
        src = encoder_layer(lp, src, src_bias, n_heads)
    return src


def decoder_forward(p, y, enc_src, cross_bias, trg_bias, n_heads, trg_vocab):
    L = y.shape[1]
    D = p["tok_emb"].shape[1]
    trg = jnp.take(p["tok_emb"], y, axis=0) * math.sqrt(D) + p["pos_emb"][None, :L]
    attention = None
    n_layers = len(p["layers"])
    for li, lp in enumerate(p["layers"]):
        want_attn = li == n_layers - 1       # only the returned (last) attention
        trg, attn = decoder_layer(lp, trg, enc_src, trg_bias, cross_bias,
                                  n_heads, want_attn)
        if want_attn:
            attention = attn
    out = vocab_projection(trg, p["fc1_w_pad"], p["fc1_b_pad"], trg_vocab)
    return out, attention


def make_src_bias(x, src_pad_ix, lq):
    """(B, lq, Ls) additive bias: 0 for real key tokens, -1e10 at padding."""
    keep = (x != src_pad_ix)[:, None, :]                       # (B, 1, Ls)
    bias = jnp.where(keep, 0.0, _NEG_INF).astype(jnp.float32)
    return jnp.broadcast_to(bias, (x.shape[0], lq, x.shape[1]))


def make_trg_bias(y, trg_pad_ix):
    """(B, Lt, Lt) additive bias: pad mask AND causal lower-triangle."""
    B, L = y.shape
    keep = (y != trg_pad_ix)[:, None, :] & jnp.tril(jnp.ones((L, L), dtype=bool))
    return jnp.where(keep, 0.0, _NEG_INF).astype(jnp.float32)


def seq2seq_forward(params, x, y, src_pad_ix, trg_pad_ix, n_heads, trg_vocab):
    ls, lt = x.shape[1], y.shape[1]
    enc_self_bias = make_src_bias(x, src_pad_ix, ls)   # (B, Ls, Ls)
    cross_bias = make_src_bias(x, src_pad_ix, lt)      # (B, Lt, Ls)
    trg_bias = make_trg_bias(y, trg_pad_ix)            # (B, Lt, Lt)
    enc_src = encoder_forward(params["encoder"], x, enc_self_bias, n_heads)
    out, attention = decoder_forward(params["decoder"], y, enc_src,
                                     cross_bias, trg_bias, n_heads, trg_vocab)
    return out, attention


# -------------------------------- parameter init --------------------------------

def _xavier(key, shape):
    fan_in, fan_out = shape[0], shape[1]
    limit = math.sqrt(6.0 / (fan_in + fan_out))
    return jax.random.uniform(key, shape, jnp.float32, -limit, limit)


def _mha_params(key, d):
    ks = jax.random.split(key, 4)
    zero = jnp.zeros((1, d), jnp.float32)
    return {
        "wq": _xavier(ks[0], (d, d)).astype(jnp.bfloat16), "bq": zero,
        "wk": _xavier(ks[1], (d, d)).astype(jnp.bfloat16), "bk": zero,
        "wv": _xavier(ks[2], (d, d)).astype(jnp.bfloat16), "bv": zero,
        "wo": _xavier(ks[3], (d, d)).astype(jnp.bfloat16), "bo": zero,
    }


def _ffn_params(key, d, d_ff):
    k1, k2 = jax.random.split(key)
    return {
        "w1": _xavier(k1, (d, d_ff)).astype(jnp.bfloat16),
        "b1": jnp.zeros((1, d_ff), jnp.float32),
        "w2": _xavier(k2, (d_ff, d)).astype(jnp.bfloat16),
        "b2": jnp.zeros((1, d), jnp.float32),
    }


def _enc_layer_params(key, d, d_ff):
    k1, k2 = jax.random.split(key)
    ones, zeros = jnp.ones((1, d), jnp.float32), jnp.zeros((1, d), jnp.float32)
    return {
        "self_attn": _mha_params(k1, d),
        "ffn": _ffn_params(k2, d, d_ff),
        "ln1_g": ones, "ln1_b": zeros,
        "ln2_g": ones, "ln2_b": zeros,
    }


def _dec_layer_params(key, d, d_ff):
    k1, k2, k3 = jax.random.split(key, 3)
    ones, zeros = jnp.ones((1, d), jnp.float32), jnp.zeros((1, d), jnp.float32)
    return {
        "self_attn": _mha_params(k1, d),
        "enc_attn": _mha_params(k2, d),
        "ffn": _ffn_params(k3, d, d_ff),
        "ln1_g": ones, "ln1_b": zeros,
        "ln2_g": ones, "ln2_b": zeros,
        "ln3_g": ones, "ln3_b": zeros,
    }


def init_params(key, src_vocab, trg_vocab, d, n_layers, d_ff, max_len):
    ke, kd = jax.random.split(key)
    ke_all = jax.random.split(ke, n_layers + 2)
    kd_all = jax.random.split(kd, n_layers + 3)
    encoder = {
        "tok_emb": _xavier(ke_all[0], (src_vocab, d)),
        "pos_emb": _xavier(ke_all[1], (max_len, d)),
        "layers": [_enc_layer_params(ke_all[2 + i], d, d_ff) for i in range(n_layers)],
    }
    # Vocab projection weight padded to a 128-lane multiple ONCE at init.
    vp = ((trg_vocab + 127) // 128) * 128
    fc1_w = _xavier(kd_all[2 + n_layers], (d, trg_vocab))
    decoder = {
        "tok_emb": _xavier(kd_all[0], (trg_vocab, d)),
        "pos_emb": _xavier(kd_all[1], (max_len, d)),
        "layers": [_dec_layer_params(kd_all[2 + i], d, d_ff) for i in range(n_layers)],
        "fc1_w_pad": jnp.pad(fc1_w, ((0, 0), (0, vp - trg_vocab))).astype(jnp.bfloat16),
        "fc1_b_pad": jnp.zeros((1, vp), jnp.float32),
    }
    return {"encoder": encoder, "decoder": decoder}


# ------------------------------------- main -------------------------------------

if __name__ == "__main__":
    SRC_VOCAB = 50
    TRG_VOCAB = 50
    D_MODEL = 32
    N_HEADS = 4
    N_LAYERS = 2
    D_FF = 64
    MAX_LEN = 16
    SRC_PAD_IX = 0
    TRG_PAD_IX = 0
    B, LS, LT = 2, 8, 8

    root = jax.random.PRNGKey(0)
    kp, kx, ky = jax.random.split(root, 3)
    params = init_params(kp, SRC_VOCAB, TRG_VOCAB, D_MODEL, N_LAYERS, D_FF, MAX_LEN)

    x = jax.random.randint(kx, (B, LS), 1, SRC_VOCAB, dtype=jnp.int32)
    y = jax.random.randint(ky, (B, LT), 1, TRG_VOCAB, dtype=jnp.int32)
    # introduce some padding positions to exercise the masks
    x = x.at[0, -2:].set(SRC_PAD_IX)
    y = y.at[1, -3:].set(TRG_PAD_IX)

    fwd = jax.jit(functools.partial(seq2seq_forward,
                                    src_pad_ix=SRC_PAD_IX,
                                    trg_pad_ix=TRG_PAD_IX,
                                    n_heads=N_HEADS,
                                    trg_vocab=TRG_VOCAB))
    out, attention = fwd(params, x, y)
    jax.block_until_ready((out, attention))

    assert out.shape == (B, LT, TRG_VOCAB)
    assert attention.shape == (B, N_HEADS, LT, LS)
    assert bool(jnp.all(jnp.isfinite(out))) and bool(jnp.all(jnp.isfinite(attention)))
    # exported attention uses the exact softmax path -> rows sum to 1
    row_sums = jnp.sum(attention, axis=-1)
    assert bool(jnp.all(jnp.abs(row_sums - 1.0) < 1e-3))
    print("KERNEL_OK")
</pallas_src>

<mosaic_0001>
module attributes {stable_mosaic.version = 11 : i64} {
  func.func @_vocab_proj_kernel(%arg0: i32, %arg1: memref<1x8x32xf32, #tpu.memory_space<vmem>>, %arg2: memref<32x128xbf16, #tpu.memory_space<vmem>>, %arg3: memref<1x128xf32, #tpu.memory_space<vmem>>, %arg4: memref<1x8x128xf32, #tpu.memory_space<vmem>>) attributes {dimension_semantics = [#tpu.dimension_semantics<parallel>], iteration_bounds = array<i64: 2>, scalar_prefetch = 0 : i64, scratch_operands = 0 : i64, tpu.core_type = #tpu.core_type<tc>, window_params = [{transform_indices = @transform_0, window_bounds = array<i64: 1, 8, 32>}, {pipeline_mode = #tpu.pipeline_mode<synchronous>, transform_indices = @transform_1, window_bounds = array<i64: 32, 128>}, {pipeline_mode = #tpu.pipeline_mode<synchronous>, transform_indices = @transform_2, window_bounds = array<i64: 1, 128>}, {transform_indices = @transform_3, window_bounds = array<i64: 1, 8, 128>}]} {
    %c0 = arith.constant 0 : index
    %c0_0 = arith.constant 0 : index
    %c0_1 = arith.constant 0 : index
    %0 = vector.load %arg1[%c0, %c0_0, %c0_1] : memref<1x8x32xf32, #tpu.memory_space<vmem>>, vector<1x8x32xf32>
    %1 = vector.shape_cast %0 : vector<1x8x32xf32> to vector<8x32xf32>
    %2 = arith.truncf %1 : vector<8x32xf32> to vector<8x32xbf16>
    %c0_2 = arith.constant 0 : index
    %c0_3 = arith.constant 0 : index
    %3 = vector.load %arg2[%c0_2, %c0_3] : memref<32x128xbf16, #tpu.memory_space<vmem>>, vector<32x128xbf16>
    %cst = arith.constant dense<0.000000e+00> : vector<8x128xf32>
    %4 = tpu.matmul %2, %3, %cst {dimension_numbers = #tpu.dot_dimension_numbers<[1], [0], [0], [1], [0, 0, 1, 1], [], []>} : vector<8x32xbf16>, vector<32x128xbf16>, vector<8x128xf32> -> vector<8x128xf32>
    %c0_4 = arith.constant 0 : index
    %c0_5 = arith.constant 0 : index
    %5 = vector.load %arg3[%c0_4, %c0_5] : memref<1x128xf32, #tpu.memory_space<vmem>>, vector<1x128xf32>
    %6 = vector.broadcast %5 : vector<1x128xf32> to vector<8x128xf32>
    %7 = arith.addf %4, %6 : vector<8x128xf32>
    %c0_6 = arith.constant 0 : index
    %c0_7 = arith.constant 0 : index
    %c0_8 = arith.constant 0 : index
    %8 = vector.load %arg4[%c0_6, %c0_7, %c0_8] : memref<1x8x128xf32, #tpu.memory_space<vmem>>, vector<1x8x128xf32>
    %9 = vector.shape_cast %8 : vector<1x8x128xf32> to vector<8x128xf32>
    %10 = vector.shape_cast %7 : vector<8x128xf32> to vector<1x8x128xf32>
    tpu.vector_store %arg4[%c0_6, %c0_7, %c0_8], %10 {strides = array<i32>} : memref<1x8x128xf32, #tpu.memory_space<vmem>>, vector<1x8x128xf32>,
    return
  }
  func.func @transform_0(%arg0: i32) -> (i32, i32, i32) {
    %c0_i32 = arith.constant 0 : i32
    %c0_i32_0 = arith.constant 0 : i32
    %c0_i32_1 = arith.constant 0 : i32
    return %arg0, %c0_i32, %c0_i32_0 : i32, i32, i32
  }
  func.func @transform_1(%arg0: i32) -> (i32, i32) {
    %c0_i32 = arith.constant 0 : i32
    %c0_i32_0 = arith.constant 0 : i32
    %c0_i32_1 = arith.constant 0 : i32
    return %c0_i32, %c0_i32_0 : i32, i32
  }
  func.func @transform_2(%arg0: i32) -> (i32, i32) {
    %c0_i32 = arith.constant 0 : i32
    %c0_i32_0 = arith.constant 0 : i32
    %c0_i32_1 = arith.constant 0 : i32
    return %c0_i32, %c0_i32_0 : i32, i32
  }
  func.func @transform_3(%arg0: i32) -> (i32, i32, i32) {
    %c0_i32 = arith.constant 0 : i32
    %c0_i32_0 = arith.constant 0 : i32
    %c0_i32_1 = arith.constant 0 : i32
    return %arg0, %c0_i32, %c0_i32_0 : i32, i32, i32
  }
}

module attributes {stable_mosaic.version = 11 : i64} {
  func.func @_encoder_layer_kernel(%arg0: i32, %arg1: memref<1x8x32xf32, #tpu.memory_space<vmem>>, %arg2: memref<1x8x8xf32, #tpu.memory_space<vmem>>, %arg3: memref<32x32xbf16, #tpu.memory_space<vmem>>, %arg4: memref<32x32xbf16, #tpu.memory_space<vmem>>, %arg5: memref<32x32xbf16, #tpu.memory_space<vmem>>, %arg6: memref<32x32xbf16, #tpu.memory_space<vmem>>, %arg7: memref<1x32xf32, #tpu.memory_space<vmem>>, %arg8: memref<1x32xf32, #tpu.memory_space<vmem>>, %arg9: memref<1x32xf32, #tpu.memory_space<vmem>>, %arg10: memref<1x32xf32, #tpu.memory_space<vmem>>, %arg11: memref<1x32xf32, #tpu.memory_space<vmem>>, %arg12: memref<1x32xf32, #tpu.memory_space<vmem>>, %arg13: memref<32x64xbf16, #tpu.memory_space<vmem>>, %arg14: memref<1x64xf32, #tpu.memory_space<vmem>>, %arg15: memref<64x32xbf16, #tpu.memory_space<vmem>>, %arg16: memref<1x32xf32, #tpu.memory_space<vmem>>, %arg17: memref<1x32xf32, #tpu.memory_space<vmem>>, %arg18: memref<1x32xf32, #tpu.memory_space<vmem>>, %arg19: memref<1x8x32xf32, #tpu.memory_space<vmem>>) attributes {dimension_semantics = [#tpu.dimension_semantics<parallel>], iteration_bounds = array<i64: 2>, scalar_prefetch = 0 : i64, scratch_operands = 0 : i64, tpu.core_type = #tpu.core_type<tc>, window_params = [{transform_indices = @transform_0, window_bounds = array<i64: 1, 8, 32>}, {transform_indices = @transform_1, window_bounds = array<i64: 1, 8, 8>}, {pipeline_mode = #tpu.pipeline_mode<synchronous>, transform_indices = @transform_2, window_bounds = array<i64: 32, 32>}, {pipeline_mode = #tpu.pipeline_mode<synchronous>, transform_indices = @transform_3, window_bounds = array<i64: 32, 32>}, {pipeline_mode = #tpu.pipeline_mode<synchronous>, transform_indices = @transform_4, window_bounds = array<i64: 32, 32>}, {pipeline_mode = #tpu.pipeline_mode<synchronous>, transform_indices = @transform_5, window_bounds = array<i64: 32, 32>}, {pipeline_mode = #tpu.pipeline_mode<synchronous>, transform_indices = @transform_6, window_bounds = array<i64: 1, 32>}, {pipeline_mode = #tpu.pipeline_mode<synchronous>, transform_indices = @transform_7, window_bounds = array<i64: 1, 32>}, {pipeline_mode = #tpu.pipeline_mode<synchronous>, transform_indices = @transform_8, window_bounds = array<i64: 1, 32>}, {pipeline_mode = #tpu.pipeline_mode<synchronous>, transform_indices = @transform_9, window_bounds = array<i64: 1, 32>}, {pipeline_mode = #tpu.pipeline_mode<synchronous>, transform_indices = @transform_10, window_bounds = array<i64: 1, 32>}, {pipeline_mode = #tpu.pipeline_mode<synchronous>, transform_indices = @transform_11, window_bounds = array<i64: 1, 32>}, {pipeline_mode = #tpu.pipeline_mode<synchronous>, transform_indices = @transform_12, window_bounds = array<i64: 32, 64>}, {pipeline_mode = #tpu.pipeline_mode<synchronous>, transform_indices = @transform_13, window_bounds = array<i64: 1, 64>}, {pipeline_mode = #tpu.pipeline_mode<synchronous>, transform_indices = @transform_14, window_bounds = array<i64: 64, 32>}, {pipeline_mode = #tpu.pipeline_mode<synchronous>, transform_indices = @transform_15, window_bounds = array<i64: 1, 32>}, {pipeline_mode = #tpu.pipeline_mode<synchronous>, transform_indices = @transform_16, window_bounds = array<i64: 1, 32>}, {pipeline_mode = #tpu.pipeline_mode<synchronous>, transform_indices = @transform_17, window_bounds = array<i64: 1, 32>}, {transform_indices = @transform_18, window_bounds = array<i64: 1, 8, 32>}]} {
    %c0 = arith.constant 0 : index
    %c0_0 = arith.constant 0 : index
    %c0_1 = arith.constant 0 : index
    %0 = vector.load %arg1[%c0, %c0_0, %c0_1] : memref<1x8x32xf32, #tpu.memory_space<vmem>>, vector<1x8x32xf32>
    %1 = vector.shape_cast %0 : vector<1x8x32xf32> to vector<8x32xf32>
    %2 = arith.truncf %1 : vector<8x32xf32> to vector<8x32xbf16>
    %c0_2 = arith.constant 0 : index
    %c0_3 = arith.constant 0 : index
    %c0_4 = arith.constant 0 : index
    %3 = vector.load %arg2[%c0_2, %c0_3, %c0_4] : memref<1x8x8xf32, #tpu.memory_space<vmem>>, vector<1x8x8xf32>
    %4 = vector.shape_cast %3 : vector<1x8x8xf32> to vector<8x8xf32>
    %c0_5 = arith.constant 0 : index
    %c0_6 = arith.constant 0 : index
    %5 = vector.load %arg3[%c0_5, %c0_6] : memref<32x32xbf16, #tpu.memory_space<vmem>>, vector<32x32xbf16>
    %c0_7 = arith.constant 0 : index
    %c0_8 = arith.constant 0 : index
    %6 = vector.load %arg4[%c0_7, %c0_8] : memref<32x32xbf16, #tpu.memory_space<vmem>>, vector<32x32xbf16>
    %c0_9 = arith.constant 0 : index
    %c0_10 = arith.constant 0 : index
    %7 = vector.load %arg5[%c0_9, %c0_10] : memref<32x32xbf16, #tpu.memory_space<vmem>>, vector<32x32xbf16>
    %c0_11 = arith.constant 0 : index
    %c0_12 = arith.constant 0 : index
    %8 = vector.load %arg6[%c0_11, %c0_12] : memref<32x32xbf16, #tpu.memory_space<vmem>>, vector<32x32xbf16>
    %c0_13 = arith.constant 0 : index
    %c0_14 = arith.constant 0 : index
    %9 = vector.load %arg7[%c0_13, %c0_14] : memref<1x32xf32, #tpu.memory_space<vmem>>, vector<1x32xf32>
    %c0_15 = arith.constant 0 : index
    %c0_16 = arith.constant 0 : index
    %10 = vector.load %arg8[%c0_15, %c0_16] : memref<1x32xf32, #tpu.memory_space<vmem>>, vector<1x32xf32>
    %c0_17 = arith.constant 0 : index
    %c0_18 = arith.constant 0 : index
    %11 = vector.load %arg9[%c0_17, %c0_18] : memref<1x32xf32, #tpu.memory_space<vmem>>, vector<1x32xf32>
    %c0_19 = arith.constant 0 : index
    %c0_20 = arith.constant 0 : index
    %12 = vector.load %arg10[%c0_19, %c0_20] : memref<1x32xf32, #tpu.memory_space<vmem>>, vector<1x32xf32>
    %cst = arith.constant dense<0.000000e+00> : vector<8x32xf32>
    %13 = tpu.matmul %2, %5, %cst {dimension_numbers = #tpu.dot_dimension_numbers<[1], [0], [0], [1], [0, 0, 1, 1], [], []>} : vector<8x32xbf16>, vector<32x32xbf16>, vector<8x32xf32> -> vector<8x32xf32>
    %14 = vector.broadcast %9 : vector<1x32xf32> to vector<8x32xf32>
    %15 = arith.addf %13, %14 : vector<8x32xf32>
    %cst_21 = arith.constant 0.353553385 : f32
    %16 = vector.broadcast %cst_21 : f32 to vector<8x32xf32>
    %17 = arith.mulf %15, %16 : vector<8x32xf32>
    %cst_22 = arith.constant dense<0.000000e+00> : vector<8x32xf32>
    %18 = tpu.matmul %2, %6, %cst_22 {dimension_numbers = #tpu.dot_dimension_numbers<[1], [0], [0], [1], [0, 0, 1, 1], [], []>} : vector<8x32xbf16>, vector<32x32xbf16>, vector<8x32xf32> -> vector<8x32xf32>
    %19 = vector.broadcast %10 : vector<1x32xf32> to vector<8x32xf32>
    %20 = arith.addf %18, %19 : vector<8x32xf32>
    %cst_23 = arith.constant dense<0.000000e+00> : vector<8x32xf32>
    %21 = tpu.matmul %2, %7, %cst_23 {dimension_numbers = #tpu.dot_dimension_numbers<[1], [0], [0], [1], [0, 0, 1, 1], [], []>} : vector<8x32xbf16>, vector<32x32xbf16>, vector<8x32xf32> -> vector<8x32xf32>
    %22 = vector.broadcast %11 : vector<1x32xf32> to vector<8x32xf32>
    %23 = arith.addf %21, %22 : vector<8x32xf32>
    %24 = vector.extract_strided_slice %17 {offsets = [0, 0], sizes = [8, 8], strides = [1, 1]} : vector<8x32xf32> to vector<8x8xf32>
    %25 = arith.truncf %24 : vector<8x8xf32> to vector<8x8xbf16>
    %26 = vector.extract_strided_slice %20 {offsets = [0, 0], sizes = [8, 8], strides = [1, 1]} : vector<8x32xf32> to vector<8x8xf32>
    %27 = arith.truncf %26 : vector<8x8xf32> to vector<8x8xbf16>
    %28 = vector.extract_strided_slice %23 {offsets = [0, 0], sizes = [8, 8], strides = [1, 1]} : vector<8x32xf32> to vector<8x8xf32>
    %29 = arith.truncf %28 : vector<8x8xf32> to vector<8x8xbf16>
    %cst_24 = arith.constant dense<0.000000e+00> : vector<8x8xf32>
    %30 = tpu.matmul %25, %27, %cst_24 {dimension_numbers = #tpu.dot_dimension_numbers<[1], [1], [0], [0], [0, 0, 1, 0], [], []>} : vector<8x8xbf16>, vector<8x8xbf16>, vector<8x8xf32> -> vector<8x8xf32>
    %31 = arith.addf %30, %4 : vector<8x8xf32>
    %cst_25 = arith.constant dense<0xFF800000> : vector<8xf32>
    %32 = vector.multi_reduction <maximumf>, %31, %cst_25 [1] : vector<8x8xf32> to vector<8xf32>
    %33 = vector.shape_cast %32 : vector<8xf32> to vector<8x1xf32>
    %34 = vector.broadcast %33 : vector<8x1xf32> to vector<8x8xf32>
    %35 = arith.subf %31, %34 : vector<8x8xf32>
    %36 = math.exp %35 : vector<8x8xf32>
    %cst_26 = arith.constant dense<0.000000e+00> : vector<8xf32>
    %37 = vector.multi_reduction <add>, %36, %cst_26 [1] : vector<8x8xf32> to vector<8xf32>
    %38 = vector.shape_cast %37 : vector<8xf32> to vector<8x1xf32>
    %39 = tpu.reciprocal %38 {approx = true} : vector<8x1xf32> -> vector<8x1xf32>
    %40 = vector.broadcast %39 : vector<8x1xf32> to vector<8x8xf32>
    %41 = arith.mulf %36, %40 : vector<8x8xf32>
    %42 = arith.truncf %41 : vector<8x8xf32> to vector<8x8xbf16>
    %cst_27 = arith.constant dense<0.000000e+00> : vector<8x8xf32>
    %43 = tpu.matmul %42, %29, %cst_27 {dimension_numbers = #tpu.dot_dimension_numbers<[1], [0], [0], [1], [0, 0, 1, 1], [], []>} : vector<8x8xbf16>, vector<8x8xbf16>, vector<8x8xf32> -> vector<8x8xf32>
    %44 = vector.extract_strided_slice %17 {offsets = [0, 8], sizes = [8, 8], strides = [1, 1]} : vector<8x32xf32> to vector<8x8xf32>
    %45 = arith.truncf %44 : vector<8x8xf32> to vector<8x8xbf16>
    %46 = vector.extract_strided_slice %20 {offsets = [0, 8], sizes = [8, 8], strides = [1, 1]} : vector<8x32xf32> to vector<8x8xf32>
    %47 = arith.truncf %46 : vector<8x8xf32> to vector<8x8xbf16>
    %48 = vector.extract_strided_slice %23 {offsets = [0, 8], sizes = [8, 8], strides = [1, 1]} : vector<8x32xf32> to vector<8x8xf32>
    %49 = arith.truncf %48 : vector<8x8xf32> to vector<8x8xbf16>
    %cst_28 = arith.constant dense<0.000000e+00> : vector<8x8xf32>
    %50 = tpu.matmul %45, %47, %cst_28 {dimension_numbers = #tpu.dot_dimension_numbers<[1], [1], [0], [0], [0, 0, 1, 0], [], []>} : vector<8x8xbf16>, vector<8x8xbf16>, vector<8x8xf32> -> vector<8x8xf32>
    %51 = arith.addf %50, %4 : vector<8x8xf32>
    %cst_29 = arith.constant dense<0xFF800000> : vector<8xf32>
    %52 = vector.multi_reduction <maximumf>, %51, %cst_29 [1] : vector<8x8xf32> to vector<8xf32>
    %53 = vector.shape_cast %52 : vector<8xf32> to vector<8x1xf32>
    %54 = vector.broadcast %53 : vector<8x1xf32> to vector<8x8xf32>
    %55 = arith.subf %51, %54 : vector<8x8xf32>
    %56 = math.exp %55 : vector<8x8xf32>
    %cst_30 = arith.constant dense<0.000000e+00> : vector<8xf32>
    %57 = vector.multi_reduction <add>, %56, %cst_30 [1] : vector<8x8xf32> to vector<8xf32>
    %58 = vector.shape_cast %57 : vector<8xf32> to vector<8x1xf32>
    %59 = tpu.reciprocal %58 {approx = true} : vector<8x1xf32> -> vector<8x1xf32>
    %60 = vector.broadcast %59 : vector<8x1xf32> to vector<8x8xf32>
    %61 = arith.mulf %56, %60 : vector<8x8xf32>
    %62 = arith.truncf %61 : vector<8x8xf32> to vector<8x8xbf16>
    %cst_31 = arith.constant dense<0.000000e+00> : vector<8x8xf32>
    %63 = tpu.matmul %62, %49, %cst_31 {dimension_numbers = #tpu.dot_dimension_numbers<[1], [0], [0], [1], [0, 0, 1, 1], [], []>} : vector<8x8xbf16>, vector<8x8xbf16>, vector<8x8xf32> -> vector<8x8xf32>
    %64 = vector.extract_strided_slice %17 {offsets = [0, 16], sizes = [8, 8], strides = [1, 1]} : vector<8x32xf32> to vector<8x8xf32>
    %65 = arith.truncf %64 : vector<8x8xf32> to vector<8x8xbf16>
    %66 = vector.extract_strided_slice %20 {offsets = [0, 16], sizes = [8, 8], strides = [1, 1]} : vector<8x32xf32> to vector<8x8xf32>
    %67 = arith.truncf %66 : vector<8x8xf32> to vector<8x8xbf16>
    %68 = vector.extract_strided_slice %23 {offsets = [0, 16], sizes = [8, 8], strides = [1, 1]} : vector<8x32xf32> to vector<8x8xf32>
    %69 = arith.truncf %68 : vector<8x8xf32> to vector<8x8xbf16>
    %cst_32 = arith.constant dense<0.000000e+00> : vector<8x8xf32>
    %70 = tpu.matmul %65, %67, %cst_32 {dimension_numbers = #tpu.dot_dimension_numbers<[1], [1], [0], [0], [0, 0, 1, 0], [], []>} : vector<8x8xbf16>, vector<8x8xbf16>, vector<8x8xf32> -> vector<8x8xf32>
    %71 = arith.addf %70, %4 : vector<8x8xf32>
    %cst_33 = arith.constant dense<0xFF800000> : vector<8xf32>
    %72 = vector.multi_reduction <maximumf>, %71, %cst_33 [1] : vector<8x8xf32> to vector<8xf32>
    %73 = vector.shape_cast %72 : vector<8xf32> to vector<8x1xf32>
    %74 = vector.broadcast %73 : vector<8x1xf32> to vector<8x8xf32>
    %75 = arith.subf %71, %74 : vector<8x8xf32>
    %76 = math.exp %75 : vector<8x8xf32>
    %cst_34 = arith.constant dense<0.000000e+00> : vector<8xf32>
    %77 = vector.multi_reduction <add>, %76, %cst_34 [1] : vector<8x8xf32> to vector<8xf32>
    %78 = vector.shape_cast %77 : vector<8xf32> to vector<8x1xf32>
    %79 = tpu.reciprocal %78 {approx = true} : vector<8x1xf32> -> vector<8x1xf32>
    %80 = vector.broadcast %79 : vector<8x1xf32> to vector<8x8xf32>
    %81 = arith.mulf %76, %80 : vector<8x8xf32>
    %82 = arith.truncf %81 : vector<8x8xf32> to vector<8x8xbf16>
    %cst_35 = arith.constant dense<0.000000e+00> : vector<8x8xf32>
    %83 = tpu.matmul %82, %69, %cst_35 {dimension_numbers = #tpu.dot_dimension_numbers<[1], [0], [0], [1], [0, 0, 1, 1], [], []>} : vector<8x8xbf16>, vector<8x8xbf16>, vector<8x8xf32> -> vector<8x8xf32>
    %84 = vector.extract_strided_slice %17 {offsets = [0, 24], sizes = [8, 8], strides = [1, 1]} : vector<8x32xf32> to vector<8x8xf32>
    %85 = arith.truncf %84 : vector<8x8xf32> to vector<8x8xbf16>
    %86 = vector.extract_strided_slice %20 {offsets = [0, 24], sizes = [8, 8], strides = [1, 1]} : vector<8x32xf32> to vector<8x8xf32>
    %87 = arith.truncf %86 : vector<8x8xf32> to vector<8x8xbf16>
    %88 = vector.extract_strided_slice %23 {offsets = [0, 24], sizes = [8, 8], strides = [1, 1]} : vector<8x32xf32> to vector<8x8xf32>
    %89 = arith.truncf %88 : vector<8x8xf32> to vector<8x8xbf16>
    %cst_36 = arith.constant dense<0.000000e+00> : vector<8x8xf32>
    %90 = tpu.matmul %85, %87, %cst_36 {dimension_numbers = #tpu.dot_dimension_numbers<[1], [1], [0], [0], [0, 0, 1, 0], [], []>} : vector<8x8xbf16>, vector<8x8xbf16>, vector<8x8xf32> -> vector<8x8xf32>
    %91 = arith.addf %90, %4 : vector<8x8xf32>
    %cst_37 = arith.constant dense<0xFF800000> : vector<8xf32>
    %92 = vector.multi_reduction <maximumf>, %91, %cst_37 [1] : vector<8x8xf32> to vector<8xf32>
    %93 = vector.shape_cast %92 : vector<8xf32> to vector<8x1xf32>
    %94 = vector.broadcast %93 : vector<8x1xf32> to vector<8x8xf32>
    %95 = arith.subf %91, %94 : vector<8x8xf32>
    %96 = math.exp %95 : vector<8x8xf32>
    %cst_38 = arith.constant dense<0.000000e+00> : vector<8xf32>
    %97 = vector.multi_reduction <add>, %96, %cst_38 [1] : vector<8x8xf32> to vector<8xf32>
    %98 = vector.shape_cast %97 : vector<8xf32> to vector<8x1xf32>
    %99 = tpu.reciprocal %98 {approx = true} : vector<8x1xf32> -> vector<8x1xf32>
    %100 = vector.broadcast %99 : vector<8x1xf32> to vector<8x8xf32>
    %101 = arith.mulf %96, %100 : vector<8x8xf32>
    %102 = arith.truncf %101 : vector<8x8xf32> to vector<8x8xbf16>
    %cst_39 = arith.constant dense<0.000000e+00> : vector<8x8xf32>
    %103 = tpu.matmul %102, %89, %cst_39 {dimension_numbers = #tpu.dot_dimension_numbers<[1], [0], [0], [1], [0, 0, 1, 1], [], []>} : vector<8x8xbf16>, vector<8x8xbf16>, vector<8x8xf32> -> vector<8x8xf32>
    %104 = tpu.concatenate %43, %63, %83, %103 in 1 : vector<8x8xf32>, vector<8x8xf32>, vector<8x8xf32>, vector<8x8xf32> -> vector<8x32xf32>
    %105 = arith.truncf %104 : vector<8x32xf32> to vector<8x32xbf16>
    %cst_40 = arith.constant dense<0.000000e+00> : vector<8x32xf32>
    %106 = tpu.matmul %105, %8, %cst_40 {dimension_numbers = #tpu.dot_dimension_numbers<[1], [0], [0], [1], [0, 0, 1, 1], [], []>} : vector<8x32xbf16>, vector<32x32xbf16>, vector<8x32xf32> -> vector<8x32xf32>
    %107 = vector.broadcast %12 : vector<1x32xf32> to vector<8x32xf32>
    %108 = arith.addf %106, %107 : vector<8x32xf32>
    %109 = arith.addf %1, %108 : vector<8x32xf32>
    %c0_41 = arith.constant 0 : index
    %c0_42 = arith.constant 0 : index
    %110 = vector.load %arg11[%c0_41, %c0_42] : memref<1x32xf32, #tpu.memory_space<vmem>>, vector<1x32xf32>
    %c0_43 = arith.constant 0 : index
    %c0_44 = arith.constant 0 : index
    %111 = vector.load %arg12[%c0_43, %c0_44] : memref<1x32xf32, #tpu.memory_space<vmem>>, vector<1x32xf32>
    %cst_45 = arith.constant dense<0.000000e+00> : vector<8xf32>
    %112 = vector.multi_reduction <add>, %109, %cst_45 [1] : vector<8x32xf32> to vector<8xf32>
    %113 = vector.shape_cast %112 : vector<8xf32> to vector<8x1xf32>
    %cst_46 = arith.constant 3.200000e+01 : f32
    %114 = vector.broadcast %cst_46 : f32 to vector<8x1xf32>
    %115 = arith.divf %113, %114 : vector<8x1xf32>
    %116 = arith.mulf %109, %109 : vector<8x32xf32>
    %cst_47 = arith.constant dense<0.000000e+00> : vector<8xf32>
    %117 = vector.multi_reduction <add>, %116, %cst_47 [1] : vector<8x32xf32> to vector<8xf32>
    %118 = vector.shape_cast %117 : vector<8xf32> to vector<8x1xf32>
    %cst_48 = arith.constant 3.200000e+01 : f32
    %119 = vector.broadcast %cst_48 : f32 to vector<8x1xf32>
    %120 = arith.divf %118, %119 : vector<8x1xf32>
    %121 = arith.mulf %115, %115 : vector<8x1xf32>
    %122 = arith.subf %120, %121 : vector<8x1xf32>
    %cst_49 = arith.constant 0.000000e+00 : f32
    %123 = vector.broadcast %cst_49 : f32 to vector<8x1xf32>
    %124 = arith.maximumf %122, %123 : vector<8x1xf32>
    %125 = vector.broadcast %115 : vector<8x1xf32> to vector<8x32xf32>
    %126 = arith.subf %109, %125 : vector<8x32xf32>
    %cst_50 = arith.constant 9.99999974E-6 : f32
    %127 = vector.broadcast %cst_50 : f32 to vector<8x1xf32>
    %128 = arith.addf %124, %127 : vector<8x1xf32>
    %129 = math.rsqrt %128 : vector<8x1xf32>
    %130 = vector.broadcast %129 : vector<8x1xf32> to vector<8x32xf32>
    %131 = arith.mulf %126, %130 : vector<8x32xf32>
    %132 = vector.broadcast %110 : vector<1x32xf32> to vector<8x32xf32>
    %133 = arith.mulf %131, %132 : vector<8x32xf32>
    %134 = vector.broadcast %111 : vector<1x32xf32> to vector<8x32xf32>
    %135 = arith.addf %133, %134 : vector<8x32xf32>
    %c0_51 = arith.constant 0 : index
    %c0_52 = arith.constant 0 : index
    %136 = vector.load %arg13[%c0_51, %c0_52] : memref<32x64xbf16, #tpu.memory_space<vmem>>, vector<32x64xbf16>
    %c0_53 = arith.constant 0 : index
    %c0_54 = arith.constant 0 : index
    %137 = vector.load %arg14[%c0_53, %c0_54] : memref<1x64xf32, #tpu.memory_space<vmem>>, vector<1x64xf32>
    %c0_55 = arith.constant 0 : index
    %c0_56 = arith.constant 0 : index
    %138 = vector.load %arg15[%c0_55, %c0_56] : memref<64x32xbf16, #tpu.memory_space<vmem>>, vector<64x32xbf16>
    %c0_57 = arith.constant 0 : index
    %c0_58 = arith.constant 0 : index
    %139 = vector.load %arg16[%c0_57, %c0_58] : memref<1x32xf32, #tpu.memory_space<vmem>>, vector<1x32xf32>
    %140 = arith.truncf %135 : vector<8x32xf32> to vector<8x32xbf16>
    %cst_59 = arith.constant dense<0.000000e+00> : vector<8x64xf32>
    %141 = tpu.matmul %140, %136, %cst_59 {dimension_numbers = #tpu.dot_dimension_numbers<[1], [0], [0], [1], [0, 0, 1, 1], [], []>} : vector<8x32xbf16>, vector<32x64xbf16>, vector<8x64xf32> -> vector<8x64xf32>
    %142 = vector.broadcast %137 : vector<1x64xf32> to vector<8x64xf32>
    %143 = arith.addf %141, %142 : vector<8x64xf32>
    %cst_60 = arith.constant 0.000000e+00 : f32
    %144 = vector.broadcast %cst_60 : f32 to vector<8x64xf32>
    %145 = arith.maximumf %143, %144 : vector<8x64xf32>
    %146 = arith.truncf %145 : vector<8x64xf32> to vector<8x64xbf16>
    %cst_61 = arith.constant dense<0.000000e+00> : vector<8x32xf32>
    %147 = tpu.matmul %146, %138, %cst_61 {dimension_numbers = #tpu.dot_dimension_numbers<[1], [0], [0], [1], [0, 0, 1, 1], [], []>} : vector<8x64xbf16>, vector<64x32xbf16>, vector<8x32xf32> -> vector<8x32xf32>
    %148 = vector.broadcast %139 : vector<1x32xf32> to vector<8x32xf32>
    %149 = arith.addf %147, %148 : vector<8x32xf32>
    %150 = arith.addf %135, %149 : vector<8x32xf32>
    %c0_62 = arith.constant 0 : index
    %c0_63 = arith.constant 0 : index
    %151 = vector.load %arg17[%c0_62, %c0_63] : memref<1x32xf32, #tpu.memory_space<vmem>>, vector<1x32xf32>
    %c0_64 = arith.constant 0 : index
    %c0_65 = arith.constant 0 : index
    %152 = vector.load %arg18[%c0_64, %c0_65] : memref<1x32xf32, #tpu.memory_space<vmem>>, vector<1x32xf32>
    %cst_66 = arith.constant dense<0.000000e+00> : vector<8xf32>
    %153 = vector.multi_reduction <add>, %150, %cst_66 [1] : vector<8x32xf32> to vector<8xf32>
    %154 = vector.shape_cast %153 : vector<8xf32> to vector<8x1xf32>
    %cst_67 = arith.constant 3.200000e+01 : f32
    %155 = vector.broadcast %cst_67 : f32 to vector<8x1xf32>
    %156 = arith.divf %154, %155 : vector<8x1xf32>
    %157 = arith.mulf %150, %150 : vector<8x32xf32>
    %cst_68 = arith.constant dense<0.000000e+00> : vector<8xf32>
    %158 = vector.multi_reduction <add>, %157, %cst_68 [1] : vector<8x32xf32> to vector<8xf32>
    %159 = vector.shape_cast %158 : vector<8xf32> to vector<8x1xf32>
    %cst_69 = arith.constant 3.200000e+01 : f32
    %160 = vector.broadcast %cst_69 : f32 to vector<8x1xf32>
    %161 = arith.divf %159, %160 : vector<8x1xf32>
    %162 = arith.mulf %156, %156 : vector<8x1xf32>
    %163 = arith.subf %161, %162 : vector<8x1xf32>
    %cst_70 = arith.constant 0.000000e+00 : f32
    %164 = vector.broadcast %cst_70 : f32 to vector<8x1xf32>
    %165 = arith.maximumf %163, %164 : vector<8x1xf32>
    %166 = vector.broadcast %156 : vector<8x1xf32> to vector<8x32xf32>
    %167 = arith.subf %150, %166 : vector<8x32xf32>
    %cst_71 = arith.constant 9.99999974E-6 : f32
    %168 = vector.broadcast %cst_71 : f32 to vector<8x1xf32>
    %169 = arith.addf %165, %168 : vector<8x1xf32>
    %170 = math.rsqrt %169 : vector<8x1xf32>
    %171 = vector.broadcast %170 : vector<8x1xf32> to vector<8x32xf32>
    %172 = arith.mulf %167, %171 : vector<8x32xf32>
    %173 = vector.broadcast %151 : vector<1x32xf32> to vector<8x32xf32>
    %174 = arith.mulf %172, %173 : vector<8x32xf32>
    %175 = vector.broadcast %152 : vector<1x32xf32> to vector<8x32xf32>
    %176 = arith.addf %174, %175 : vector<8x32xf32>
    %c0_72 = arith.constant 0 : index
    %c0_73 = arith.constant 0 : index
    %c0_74 = arith.constant 0 : index
    %177 = vector.load %arg19[%c0_72, %c0_73, %c0_74] : memref<1x8x32xf32, #tpu.memory_space<vmem>>, vector<1x8x32xf32>
    %178 = vector.shape_cast %177 : vector<1x8x32xf32> to vector<8x32xf32>
    %179 = vector.shape_cast %176 : vector<8x32xf32> to vector<1x8x32xf32>
    tpu.vector_store %arg19[%c0_72, %c0_73, %c0_74], %179 {strides = array<i32>} : memref<1x8x32xf32, #tpu.memory_space<vmem>>, vector<1x8x32xf32>,
    return
  }
  func.func @transform_0(%arg0: i32) -> (i32, i32, i32) {
    %c0_i32 = arith.constant 0 : i32
    %c0_i32_0 = arith.constant 0 : i32
    %c0_i32_1 = arith.constant 0 : i32
    return %arg0, %c0_i32, %c0_i32_0 : i32, i32, i32
  }
  func.func @transform_1(%arg0: i32) -> (i32, i32, i32) {
    %c0_i32 = arith.constant 0 : i32
    %c0_i32_0 = arith.constant 0 : i32
    %c0_i32_1 = arith.constant 0 : i32
    return %arg0, %c0_i32, %c0_i32_0 : i32, i32, i32
  }
  func.func @transform_2(%arg0: i32) -> (i32, i32) {
    %c0_i32 = arith.constant 0 : i32
    %c0_i32_0 = arith.constant 0 : i32
    %c0_i32_1 = arith.constant 0 : i32
    return %c0_i32, %c0_i32_0 : i32, i32
  }
  func.func @transform_3(%arg0: i32) -> (i32, i32) {
    %c0_i32 = arith.constant 0 : i32
    %c0_i32_0 = arith.constant 0 : i32
    %c0_i32_1 = arith.constant 0 : i32
    return %c0_i32, %c0_i32_0 : i32, i32
  }
  func.func @transform_4(%arg0: i32) -> (i32, i32) {
    %c0_i32 = arith.constant 0 : i32
    %c0_i32_0 = arith.constant 0 : i32
    %c0_i32_1 = arith.constant 0 : i32
    return %c0_i32, %c0_i32_0 : i32, i32
  }
  func.func @transform_5(%arg0: i32) -> (i32, i32) {
    %c0_i32 = arith.constant 0 : i32
    %c0_i32_0 = arith.constant 0 : i32
    %c0_i32_1 = arith.constant 0 : i32
    return %c0_i32, %c0_i32_0 : i32, i32
  }
  func.func @transform_6(%arg0: i32) -> (i32, i32) {
    %c0_i32 = arith.constant 0 : i32
    %c0_i32_0 = arith.constant 0 : i32
    %c0_i32_1 = arith.constant 0 : i32
    return %c0_i32, %c0_i32_0 : i32, i32
  }
  func.func @transform_7(%arg0: i32) -> (i32, i32) {
    %c0_i32 = arith.constant 0 : i32
    %c0_i32_0 = arith.constant 0 : i32
    %c0_i32_1 = arith.constant 0 : i32
    return %c0_i32, %c0_i32_0 : i32, i32
  }
  func.func @transform_8(%arg0: i32) -> (i32, i32) {
    %c0_i32 = arith.constant 0 : i32
    %c0_i32_0 = arith.constant 0 : i32
    %c0_i32_1 = arith.constant 0 : i32
    return %c0_i32, %c0_i32_0 : i32, i32
  }
  func.func @transform_9(%arg0: i32) -> (i32, i32) {
    %c0_i32 = arith.constant 0 : i32
    %c0_i32_0 = arith.constant 0 : i32
    %c0_i32_1 = arith.constant 0 : i32
    return %c0_i32, %c0_i32_0 : i32, i32
  }
  func.func @transform_10(%arg0: i32) -> (i32, i32) {
    %c0_i32 = arith.constant 0 : i32
    %c0_i32_0 = arith.constant 0 : i32
    %c0_i32_1 = arith.constant 0 : i32
    return %c0_i32, %c0_i32_0 : i32, i32
  }
  func.func @transform_11(%arg0: i32) -> (i32, i32) {
    %c0_i32 = arith.constant 0 : i32
    %c0_i32_0 = arith.constant 0 : i32
    %c0_i32_1 = arith.constant 0 : i32
    return %c0_i32, %c0_i32_0 : i32, i32
  }
  func.func @transform_12(%arg0: i32) -> (i32, i32) {
    %c0_i32 = arith.constant 0 : i32
    %c0_i32_0 = arith.constant 0 : i32
    %c0_i32_1 = arith.constant 0 : i32
    return %c0_i32, %c0_i32_0 : i32, i32
  }
  func.func @transform_13(%arg0: i32) -> (i32, i32) {
    %c0_i32 = arith.constant 0 : i32
    %c0_i32_0 = arith.constant 0 : i32
    %c0_i32_1 = arith.constant 0 : i32
    return %c0_i32, %c0_i32_0 : i32, i32
  }
  func.func @transform_14(%arg0: i32) -> (i32, i32) {
    %c0_i32 = arith.constant 0 : i32
    %c0_i32_0 = arith.constant 0 : i32
    %c0_i32_1 = arith.constant 0 : i32
    return %c0_i32, %c0_i32_0 : i32, i32
  }
  func.func @transform_15(%arg0: i32) -> (i32, i32) {
    %c0_i32 = arith.constant 0 : i32
    %c0_i32_0 = arith.constant 0 : i32
    %c0_i32_1 = arith.constant 0 : i32
    return %c0_i32, %c0_i32_0 : i32, i32
  }
  func.func @transform_16(%arg0: i32) -> (i32, i32) {
    %c0_i32 = arith.constant 0 : i32
    %c0_i32_0 = arith.constant 0 : i32
    %c0_i32_1 = arith.constant 0 : i32
    return %c0_i32, %c0_i32_0 : i32, i32
  }
  func.func @transform_17(%arg0: i32) -> (i32, i32) {
    %c0_i32 = arith.constant 0 : i32
    %c0_i32_0 = arith.constant 0 : i32
    %c0_i32_1 = arith.constant 0 : i32
    return %c0_i32, %c0_i32_0 : i32, i32
  }
  func.func @transform_18(%arg0: i32) -> (i32, i32, i32) {
    %c0_i32 = arith.constant 0 : i32
    %c0_i32_0 = arith.constant 0 : i32
    %c0_i32_1 = arith.constant 0 : i32
    return %arg0, %c0_i32, %c0_i32_0 : i32, i32, i32
  }
}

module attributes {stable_mosaic.version = 11 : i64} {
  func.func @_decoder_layer_kernel(%arg0: i32, %arg1: memref<1x8x32xf32, #tpu.memory_space<vmem>>, %arg2: memref<1x8x32xf32, #tpu.memory_space<vmem>>, %arg3: memref<1x8x8xf32, #tpu.memory_space<vmem>>, %arg4: memref<1x8x8xf32, #tpu.memory_space<vmem>>, %arg5: memref<32x32xbf16, #tpu.memory_space<vmem>>, %arg6: memref<32x32xbf16, #tpu.memory_space<vmem>>, %arg7: memref<32x32xbf16, #tpu.memory_space<vmem>>, %arg8: memref<32x32xbf16, #tpu.memory_space<vmem>>, %arg9: memref<1x32xf32, #tpu.memory_space<vmem>>, %arg10: memref<1x32xf32, #tpu.memory_space<vmem>>, %arg11: memref<1x32xf32, #tpu.memory_space<vmem>>, %arg12: memref<1x32xf32, #tpu.memory_space<vmem>>, %arg13: memref<1x32xf32, #tpu.memory_space<vmem>>, %arg14: memref<1x32xf32, #tpu.memory_space<vmem>>, %arg15: memref<32x32xbf16, #tpu.memory_space<vmem>>, %arg16: memref<32x32xbf16, #tpu.memory_space<vmem>>, %arg17: memref<32x32xbf16, #tpu.memory_space<vmem>>, %arg18: memref<32x32xbf16, #tpu.memory_space<vmem>>, %arg19: memref<1x32xf32, #tpu.memory_space<vmem>>, %arg20: memref<1x32xf32, #tpu.memory_space<vmem>>, %arg21: memref<1x32xf32, #tpu.memory_space<vmem>>, %arg22: memref<1x32xf32, #tpu.memory_space<vmem>>, %arg23: memref<1x32xf32, #tpu.memory_space<vmem>>, %arg24: memref<1x32xf32, #tpu.memory_space<vmem>>, %arg25: memref<32x64xbf16, #tpu.memory_space<vmem>>, %arg26: memref<1x64xf32, #tpu.memory_space<vmem>>, %arg27: memref<64x32xbf16, #tpu.memory_space<vmem>>, %arg28: memref<1x32xf32, #tpu.memory_space<vmem>>, %arg29: memref<1x32xf32, #tpu.memory_space<vmem>>, %arg30: memref<1x32xf32, #tpu.memory_space<vmem>>, %arg31: memref<1x8x32xf32, #tpu.memory_space<vmem>>, %arg32: memref<1x4x8x8xf32, #tpu.memory_space<vmem>>) attributes {dimension_semantics = [#tpu.dimension_semantics<parallel>], iteration_bounds = array<i64: 2>, scalar_prefetch = 0 : i64, scratch_operands = 0 : i64, tpu.core_type = #tpu.core_type<tc>, window_params = [{transform_indices = @transform_0, window_bounds = array<i64: 1, 8, 32>}, {transform_indices = @transform_1, window_bounds = array<i64: 1, 8, 32>}, {transform_indices = @transform_2, window_bounds = array<i64: 1, 8, 8>}, {transform_indices = @transform_3, window_bounds = array<i64: 1, 8, 8>}, {pipeline_mode = #tpu.pipeline_mode<synchronous>, transform_indices = @transform_4, window_bounds = array<i64: 32, 32>}, {pipeline_mode = #tpu.pipeline_mode<synchronous>, transform_indices = @transform_5, window_bounds = array<i64: 32, 32>}, {pipeline_mode = #tpu.pipeline_mode<synchronous>, transform_indices = @transform_6, window_bounds = array<i64: 32, 32>}, {pipeline_mode = #tpu.pipeline_mode<synchronous>, transform_indices = @transform_7, window_bounds = array<i64: 32, 32>}, {pipeline_mode = #tpu.pipeline_mode<synchronous>, transform_indices = @transform_8, window_bounds = array<i64: 1, 32>}, {pipeline_mode = #tpu.pipeline_mode<synchronous>, transform_indices = @transform_9, window_bounds = array<i64: 1, 32>}, {pipeline_mode = #tpu.pipeline_mode<synchronous>, transform_indices = @transform_10, window_bounds = array<i64: 1, 32>}, {pipeline_mode = #tpu.pipeline_mode<synchronous>, transform_indices = @transform_11, window_bounds = array<i64: 1, 32>}, {pipeline_mode = #tpu.pipeline_mode<synchronous>, transform_indices = @transform_12, window_bounds = array<i64: 1, 32>}, {pipeline_mode = #tpu.pipeline_mode<synchronous>, transform_indices = @transform_13, window_bounds = array<i64: 1, 32>}, {pipeline_mode = #tpu.pipeline_mode<synchronous>, transform_indices = @transform_14, window_bounds = array<i64: 32, 32>}, {pipeline_mode = #tpu.pipeline_mode<synchronous>, transform_indices = @transform_15, window_bounds = array<i64: 32, 32>}, {pipeline_mode = #tpu.pipeline_mode<synchronous>, transform_indices = @transform_16, window_bounds = array<i64: 32, 32>}, {pipeline_mode = #tpu.pipeline_mode<synchronous>, transform_indices = @transform_17, window_bounds = array<i64: 32, 32>}, {pipeline_mode = #tpu.pipeline_mode<synchronous>, transform_indices = @transform_18, window_bounds = array<i64: 1, 32>}, {pipeline_mode = #tpu.pipeline_mode<synchronous>, transform_indices = @transform_19, window_bounds = array<i64: 1, 32>}, {pipeline_mode = #tpu.pipeline_mode<synchronous>, transform_indices = @transform_20, window_bounds = array<i64: 1, 32>}, {pipeline_mode = #tpu.pipeline_mode<synchronous>, transform_indices = @transform_21, window_bounds = array<i64: 1, 32>}, {pipeline_mode = #tpu.pipeline_mode<synchronous>, transform_indices = @transform_22, window_bounds = array<i64: 1, 32>}, {pipeline_mode = #tpu.pipeline_mode<synchronous>, transform_indices = @transform_23, window_bounds = array<i64: 1, 32>}, {pipeline_mode = #tpu.pipeline_mode<synchronous>, transform_indices = @transform_24, window_bounds = array<i64: 32, 64>}, {pipeline_mode = #tpu.pipeline_mode<synchronous>, transform_indices = @transform_25, window_bounds = array<i64: 1, 64>}, {pipeline_mode = #tpu.pipeline_mode<synchronous>, transform_indices = @transform_26, window_bounds = array<i64: 64, 32>}, {pipeline_mode = #tpu.pipeline_mode<synchronous>, transform_indices = @transform_27, window_bounds = array<i64: 1, 32>}, {pipeline_mode = #tpu.pipeline_mode<synchronous>, transform_indices = @transform_28, window_bounds = array<i64: 1, 32>}, {pipeline_mode = #tpu.pipeline_mode<synchronous>, transform_indices = @transform_29, window_bounds = array<i64: 1, 32>}, {transform_indices = @transform_30, window_bounds = array<i64: 1, 8, 32>}, {transform_indices = @transform_31, window_bounds = array<i64: 1, 4, 8, 8>}]} {
    %c0 = arith.constant 0 : index
    %c0_0 = arith.constant 0 : index
    %c0_1 = arith.constant 0 : index
    %0 = vector.load %arg1[%c0, %c0_0, %c0_1] : memref<1x8x32xf32, #tpu.memory_space<vmem>>, vector<1x8x32xf32>
    %1 = vector.shape_cast %0 : vector<1x8x32xf32> to vector<8x32xf32>
    %2 = arith.truncf %1 : vector<8x32xf32> to vector<8x32xbf16>
    %c0_2 = arith.constant 0 : index
    %c0_3 = arith.constant 0 : index
    %c0_4 = arith.constant 0 : index
    %3 = vector.load %arg3[%c0_2, %c0_3, %c0_4] : memref<1x8x8xf32, #tpu.memory_space<vmem>>, vector<1x8x8xf32>
    %4 = vector.shape_cast %3 : vector<1x8x8xf32> to vector<8x8xf32>
    %c0_5 = arith.constant 0 : index
    %c0_6 = arith.constant 0 : index
    %5 = vector.load %arg5[%c0_5, %c0_6] : memref<32x32xbf16, #tpu.memory_space<vmem>>, vector<32x32xbf16>
    %c0_7 = arith.constant 0 : index
    %c0_8 = arith.constant 0 : index
    %6 = vector.load %arg6[%c0_7, %c0_8] : memref<32x32xbf16, #tpu.memory_space<vmem>>, vector<32x32xbf16>
    %c0_9 = arith.constant 0 : index
    %c0_10 = arith.constant 0 : index
    %7 = vector.load %arg7[%c0_9, %c0_10] : memref<32x32xbf16, #tpu.memory_space<vmem>>, vector<32x32xbf16>
    %c0_11 = arith.constant 0 : index
    %c0_12 = arith.constant 0 : index
    %8 = vector.load %arg8[%c0_11, %c0_12] : memref<32x32xbf16, #tpu.memory_space<vmem>>, vector<32x32xbf16>
    %c0_13 = arith.constant 0 : index
    %c0_14 = arith.constant 0 : index
    %9 = vector.load %arg9[%c0_13, %c0_14] : memref<1x32xf32, #tpu.memory_space<vmem>>, vector<1x32xf32>
    %c0_15 = arith.constant 0 : index
    %c0_16 = arith.constant 0 : index
    %10 = vector.load %arg10[%c0_15, %c0_16] : memref<1x32xf32, #tpu.memory_space<vmem>>, vector<1x32xf32>
    %c0_17 = arith.constant 0 : index
    %c0_18 = arith.constant 0 : index
    %11 = vector.load %arg11[%c0_17, %c0_18] : memref<1x32xf32, #tpu.memory_space<vmem>>, vector<1x32xf32>
    %c0_19 = arith.constant 0 : index
    %c0_20 = arith.constant 0 : index
    %12 = vector.load %arg12[%c0_19, %c0_20] : memref<1x32xf32, #tpu.memory_space<vmem>>, vector<1x32xf32>
    %cst = arith.constant dense<0.000000e+00> : vector<8x32xf32>
    %13 = tpu.matmul %2, %5, %cst {dimension_numbers = #tpu.dot_dimension_numbers<[1], [0], [0], [1], [0, 0, 1, 1], [], []>} : vector<8x32xbf16>, vector<32x32xbf16>, vector<8x32xf32> -> vector<8x32xf32>
    %14 = vector.broadcast %9 : vector<1x32xf32> to vector<8x32xf32>
    %15 = arith.addf %13, %14 : vector<8x32xf32>
    %cst_21 = arith.constant 0.353553385 : f32
    %16 = vector.broadcast %cst_21 : f32 to vector<8x32xf32>
    %17 = arith.mulf %15, %16 : vector<8x32xf32>
    %cst_22 = arith.constant dense<0.000000e+00> : vector<8x32xf32>
    %18 = tpu.matmul %2, %6, %cst_22 {dimension_numbers = #tpu.dot_dimension_numbers<[1], [0], [0], [1], [0, 0, 1, 1], [], []>} : vector<8x32xbf16>, vector<32x32xbf16>, vector<8x32xf32> -> vector<8x32xf32>
    %19 = vector.broadcast %10 : vector<1x32xf32> to vector<8x32xf32>
    %20 = arith.addf %18, %19 : vector<8x32xf32>
    %cst_23 = arith.constant dense<0.000000e+00> : vector<8x32xf32>
    %21 = tpu.matmul %2, %7, %cst_23 {dimension_numbers = #tpu.dot_dimension_numbers<[1], [0], [0], [1], [0, 0, 1, 1], [], []>} : vector<8x32xbf16>, vector<32x32xbf16>, vector<8x32xf32> -> vector<8x32xf32>
    %22 = vector.broadcast %11 : vector<1x32xf32> to vector<8x32xf32>
    %23 = arith.addf %21, %22 : vector<8x32xf32>
    %24 = vector.extract_strided_slice %17 {offsets = [0, 0], sizes = [8, 8], strides = [1, 1]} : vector<8x32xf32> to vector<8x8xf32>
    %25 = arith.truncf %24 : vector<8x8xf32> to vector<8x8xbf16>
    %26 = vector.extract_strided_slice %20 {offsets = [0, 0], sizes = [8, 8], strides = [1, 1]} : vector<8x32xf32> to vector<8x8xf32>
    %27 = arith.truncf %26 : vector<8x8xf32> to vector<8x8xbf16>
    %28 = vector.extract_strided_slice %23 {offsets = [0, 0], sizes = [8, 8], strides = [1, 1]} : vector<8x32xf32> to vector<8x8xf32>
    %29 = arith.truncf %28 : vector<8x8xf32> to vector<8x8xbf16>
    %cst_24 = arith.constant dense<0.000000e+00> : vector<8x8xf32>
    %30 = tpu.matmul %25, %27, %cst_24 {dimension_numbers = #tpu.dot_dimension_numbers<[1], [1], [0], [0], [0, 0, 1, 0], [], []>} : vector<8x8xbf16>, vector<8x8xbf16>, vector<8x8xf32> -> vector<8x8xf32>
    %31 = arith.addf %30, %4 : vector<8x8xf32>
    %cst_25 = arith.constant dense<0xFF800000> : vector<8xf32>
    %32 = vector.multi_reduction <maximumf>, %31, %cst_25 [1] : vector<8x8xf32> to vector<8xf32>
    %33 = vector.shape_cast %32 : vector<8xf32> to vector<8x1xf32>
    %34 = vector.broadcast %33 : vector<8x1xf32> to vector<8x8xf32>
    %35 = arith.subf %31, %34 : vector<8x8xf32>
    %36 = math.exp %35 : vector<8x8xf32>
    %cst_26 = arith.constant dense<0.000000e+00> : vector<8xf32>
    %37 = vector.multi_reduction <add>, %36, %cst_26 [1] : vector<8x8xf32> to vector<8xf32>
    %38 = vector.shape_cast %37 : vector<8xf32> to vector<8x1xf32>
    %39 = tpu.reciprocal %38 {approx = true} : vector<8x1xf32> -> vector<8x1xf32>
    %40 = vector.broadcast %39 : vector<8x1xf32> to vector<8x8xf32>
    %41 = arith.mulf %36, %40 : vector<8x8xf32>
    %42 = arith.truncf %41 : vector<8x8xf32> to vector<8x8xbf16>
    %cst_27 = arith.constant dense<0.000000e+00> : vector<8x8xf32>
    %43 = tpu.matmul %42, %29, %cst_27 {dimension_numbers = #tpu.dot_dimension_numbers<[1], [0], [0], [1], [0, 0, 1, 1], [], []>} : vector<8x8xbf16>, vector<8x8xbf16>, vector<8x8xf32> -> vector<8x8xf32>
    %44 = vector.extract_strided_slice %17 {offsets = [0, 8], sizes = [8, 8], strides = [1, 1]} : vector<8x32xf32> to vector<8x8xf32>
    %45 = arith.truncf %44 : vector<8x8xf32> to vector<8x8xbf16>
    %46 = vector.extract_strided_slice %20 {offsets = [0, 8], sizes = [8, 8], strides = [1, 1]} : vector<8x32xf32> to vector<8x8xf32>
    %47 = arith.truncf %46 : vector<8x8xf32> to vector<8x8xbf16>
    %48 = vector.extract_strided_slice %23 {offsets = [0, 8], sizes = [8, 8], strides = [1, 1]} : vector<8x32xf32> to vector<8x8xf32>
    %49 = arith.truncf %48 : vector<8x8xf32> to vector<8x8xbf16>
    %cst_28 = arith.constant dense<0.000000e+00> : vector<8x8xf32>
    %50 = tpu.matmul %45, %47, %cst_28 {dimension_numbers = #tpu.dot_dimension_numbers<[1], [1], [0], [0], [0, 0, 1, 0], [], []>} : vector<8x8xbf16>, vector<8x8xbf16>, vector<8x8xf32> -> vector<8x8xf32>
    %51 = arith.addf %50, %4 : vector<8x8xf32>
    %cst_29 = arith.constant dense<0xFF800000> : vector<8xf32>
    %52 = vector.multi_reduction <maximumf>, %51, %cst_29 [1] : vector<8x8xf32> to vector<8xf32>
    %53 = vector.shape_cast %52 : vector<8xf32> to vector<8x1xf32>
    %54 = vector.broadcast %53 : vector<8x1xf32> to vector<8x8xf32>
    %55 = arith.subf %51, %54 : vector<8x8xf32>
    %56 = math.exp %55 : vector<8x8xf32>
    %cst_30 = arith.constant dense<0.000000e+00> : vector<8xf32>
    %57 = vector.multi_reduction <add>, %56, %cst_30 [1] : vector<8x8xf32> to vector<8xf32>
    %58 = vector.shape_cast %57 : vector<8xf32> to vector<8x1xf32>
    %59 = tpu.reciprocal %58 {approx = true} : vector<8x1xf32> -> vector<8x1xf32>
    %60 = vector.broadcast %59 : vector<8x1xf32> to vector<8x8xf32>
    %61 = arith.mulf %56, %60 : vector<8x8xf32>
    %62 = arith.truncf %61 : vector<8x8xf32> to vector<8x8xbf16>
    %cst_31 = arith.constant dense<0.000000e+00> : vector<8x8xf32>
    %63 = tpu.matmul %62, %49, %cst_31 {dimension_numbers = #tpu.dot_dimension_numbers<[1], [0], [0], [1], [0, 0, 1, 1], [], []>} : vector<8x8xbf16>, vector<8x8xbf16>, vector<8x8xf32> -> vector<8x8xf32>
    %64 = vector.extract_strided_slice %17 {offsets = [0, 16], sizes = [8, 8], strides = [1, 1]} : vector<8x32xf32> to vector<8x8xf32>
    %65 = arith.truncf %64 : vector<8x8xf32> to vector<8x8xbf16>
    %66 = vector.extract_strided_slice %20 {offsets = [0, 16], sizes = [8, 8], strides = [1, 1]} : vector<8x32xf32> to vector<8x8xf32>
    %67 = arith.truncf %66 : vector<8x8xf32> to vector<8x8xbf16>
    %68 = vector.extract_strided_slice %23 {offsets = [0, 16], sizes = [8, 8], strides = [1, 1]} : vector<8x32xf32> to vector<8x8xf32>
    %69 = arith.truncf %68 : vector<8x8xf32> to vector<8x8xbf16>
    %cst_32 = arith.constant dense<0.000000e+00> : vector<8x8xf32>
    %70 = tpu.matmul %65, %67, %cst_32 {dimension_numbers = #tpu.dot_dimension_numbers<[1], [1], [0], [0], [0, 0, 1, 0], [], []>} : vector<8x8xbf16>, vector<8x8xbf16>, vector<8x8xf32> -> vector<8x8xf32>
    %71 = arith.addf %70, %4 : vector<8x8xf32>
    %cst_33 = arith.constant dense<0xFF800000> : vector<8xf32>
    %72 = vector.multi_reduction <maximumf>, %71, %cst_33 [1] : vector<8x8xf32> to vector<8xf32>
    %73 = vector.shape_cast %72 : vector<8xf32> to vector<8x1xf32>
    %74 = vector.broadcast %73 : vector<8x1xf32> to vector<8x8xf32>
    %75 = arith.subf %71, %74 : vector<8x8xf32>
    %76 = math.exp %75 : vector<8x8xf32>
    %cst_34 = arith.constant dense<0.000000e+00> : vector<8xf32>
    %77 = vector.multi_reduction <add>, %76, %cst_34 [1] : vector<8x8xf32> to vector<8xf32>
    %78 = vector.shape_cast %77 : vector<8xf32> to vector<8x1xf32>
    %79 = tpu.reciprocal %78 {approx = true} : vector<8x1xf32> -> vector<8x1xf32>
    %80 = vector.broadcast %79 : vector<8x1xf32> to vector<8x8xf32>
    %81 = arith.mulf %76, %80 : vector<8x8xf32>
    %82 = arith.truncf %81 : vector<8x8xf32> to vector<8x8xbf16>
    %cst_35 = arith.constant dense<0.000000e+00> : vector<8x8xf32>
    %83 = tpu.matmul %82, %69, %cst_35 {dimension_numbers = #tpu.dot_dimension_numbers<[1], [0], [0], [1], [0, 0, 1, 1], [], []>} : vector<8x8xbf16>, vector<8x8xbf16>, vector<8x8xf32> -> vector<8x8xf32>
    %84 = vector.extract_strided_slice %17 {offsets = [0, 24], sizes = [8, 8], strides = [1, 1]} : vector<8x32xf32> to vector<8x8xf32>
    %85 = arith.truncf %84 : vector<8x8xf32> to vector<8x8xbf16>
    %86 = vector.extract_strided_slice %20 {offsets = [0, 24], sizes = [8, 8], strides = [1, 1]} : vector<8x32xf32> to vector<8x8xf32>
    %87 = arith.truncf %86 : vector<8x8xf32> to vector<8x8xbf16>
    %88 = vector.extract_strided_slice %23 {offsets = [0, 24], sizes = [8, 8], strides = [1, 1]} : vector<8x32xf32> to vector<8x8xf32>
    %89 = arith.truncf %88 : vector<8x8xf32> to vector<8x8xbf16>
    %cst_36 = arith.constant dense<0.000000e+00> : vector<8x8xf32>
    %90 = tpu.matmul %85, %87, %cst_36 {dimension_numbers = #tpu.dot_dimension_numbers<[1], [1], [0], [0], [0, 0, 1, 0], [], []>} : vector<8x8xbf16>, vector<8x8xbf16>, vector<8x8xf32> -> vector<8x8xf32>
    %91 = arith.addf %90, %4 : vector<8x8xf32>
    %cst_37 = arith.constant dense<0xFF800000> : vector<8xf32>
    %92 = vector.multi_reduction <maximumf>, %91, %cst_37 [1] : vector<8x8xf32> to vector<8xf32>
    %93 = vector.shape_cast %92 : vector<8xf32> to vector<8x1xf32>
    %94 = vector.broadcast %93 : vector<8x1xf32> to vector<8x8xf32>
    %95 = arith.subf %91, %94 : vector<8x8xf32>
    %96 = math.exp %95 : vector<8x8xf32>
    %cst_38 = arith.constant dense<0.000000e+00> : vector<8xf32>
    %97 = vector.multi_reduction <add>, %96, %cst_38 [1] : vector<8x8xf32> to vector<8xf32>
    %98 = vector.shape_cast %97 : vector<8xf32> to vector<8x1xf32>
    %99 = tpu.reciprocal %98 {approx = true} : vector<8x1xf32> -> vector<8x1xf32>
    %100 = vector.broadcast %99 : vector<8x1xf32> to vector<8x8xf32>
    %101 = arith.mulf %96, %100 : vector<8x8xf32>
    %102 = arith.truncf %101 : vector<8x8xf32> to vector<8x8xbf16>
    %cst_39 = arith.constant dense<0.000000e+00> : vector<8x8xf32>
    %103 = tpu.matmul %102, %89, %cst_39 {dimension_numbers = #tpu.dot_dimension_numbers<[1], [0], [0], [1], [0, 0, 1, 1], [], []>} : vector<8x8xbf16>, vector<8x8xbf16>, vector<8x8xf32> -> vector<8x8xf32>
    %104 = tpu.concatenate %43, %63, %83, %103 in 1 : vector<8x8xf32>, vector<8x8xf32>, vector<8x8xf32>, vector<8x8xf32> -> vector<8x32xf32>
    %105 = arith.truncf %104 : vector<8x32xf32> to vector<8x32xbf16>
    %cst_40 = arith.constant dense<0.000000e+00> : vector<8x32xf32>
    %106 = tpu.matmul %105, %8, %cst_40 {dimension_numbers = #tpu.dot_dimension_numbers<[1], [0], [0], [1], [0, 0, 1, 1], [], []>} : vector<8x32xbf16>, vector<32x32xbf16>, vector<8x32xf32> -> vector<8x32xf32>
    %107 = vector.broadcast %12 : vector<1x32xf32> to vector<8x32xf32>
    %108 = arith.addf %106, %107 : vector<8x32xf32>
    %109 = arith.addf %1, %108 : vector<8x32xf32>
    %c0_41 = arith.constant 0 : index
    %c0_42 = arith.constant 0 : index
    %110 = vector.load %arg13[%c0_41, %c0_42] : memref<1x32xf32, #tpu.memory_space<vmem>>, vector<1x32xf32>
    %c0_43 = arith.constant 0 : index
    %c0_44 = arith.constant 0 : index
    %111 = vector.load %arg14[%c0_43, %c0_44] : memref<1x32xf32, #tpu.memory_space<vmem>>, vector<1x32xf32>
    %cst_45 = arith.constant dense<0.000000e+00> : vector<8xf32>
    %112 = vector.multi_reduction <add>, %109, %cst_45 [1] : vector<8x32xf32> to vector<8xf32>
    %113 = vector.shape_cast %112 : vector<8xf32> to vector<8x1xf32>
    %cst_46 = arith.constant 3.200000e+01 : f32
    %114 = vector.broadcast %cst_46 : f32 to vector<8x1xf32>
    %115 = arith.divf %113, %114 : vector<8x1xf32>
    %116 = arith.mulf %109, %109 : vector<8x32xf32>
    %cst_47 = arith.constant dense<0.000000e+00> : vector<8xf32>
    %117 = vector.multi_reduction <add>, %116, %cst_47 [1] : vector<8x32xf32> to vector<8xf32>
    %118 = vector.shape_cast %117 : vector<8xf32> to vector<8x1xf32>
    %cst_48 = arith.constant 3.200000e+01 : f32
    %119 = vector.broadcast %cst_48 : f32 to vector<8x1xf32>
    %120 = arith.divf %118, %119 : vector<8x1xf32>
    %121 = arith.mulf %115, %115 : vector<8x1xf32>
    %122 = arith.subf %120, %121 : vector<8x1xf32>
    %cst_49 = arith.constant 0.000000e+00 : f32
    %123 = vector.broadcast %cst_49 : f32 to vector<8x1xf32>
    %124 = arith.maximumf %122, %123 : vector<8x1xf32>
    %125 = vector.broadcast %115 : vector<8x1xf32> to vector<8x32xf32>
    %126 = arith.subf %109, %125 : vector<8x32xf32>
    %cst_50 = arith.constant 9.99999974E-6 : f32
    %127 = vector.broadcast %cst_50 : f32 to vector<8x1xf32>
    %128 = arith.addf %124, %127 : vector<8x1xf32>
    %129 = math.rsqrt %128 : vector<8x1xf32>
    %130 = vector.broadcast %129 : vector<8x1xf32> to vector<8x32xf32>
    %131 = arith.mulf %126, %130 : vector<8x32xf32>
    %132 = vector.broadcast %110 : vector<1x32xf32> to vector<8x32xf32>
    %133 = arith.mulf %131, %132 : vector<8x32xf32>
    %134 = vector.broadcast %111 : vector<1x32xf32> to vector<8x32xf32>
    %135 = arith.addf %133, %134 : vector<8x32xf32>
    %c0_51 = arith.constant 0 : index
    %c0_52 = arith.constant 0 : index
    %c0_53 = arith.constant 0 : index
    %136 = vector.load %arg2[%c0_51, %c0_52, %c0_53] : memref<1x8x32xf32, #tpu.memory_space<vmem>>, vector<1x8x32xf32>
    %137 = vector.shape_cast %136 : vector<1x8x32xf32> to vector<8x32xf32>
    %138 = arith.truncf %137 : vector<8x32xf32> to vector<8x32xbf16>
    %139 = arith.truncf %135 : vector<8x32xf32> to vector<8x32xbf16>
    %c0_54 = arith.constant 0 : index
    %c0_55 = arith.constant 0 : index
    %c0_56 = arith.constant 0 : index
    %140 = vector.load %arg4[%c0_54, %c0_55, %c0_56] : memref<1x8x8xf32, #tpu.memory_space<vmem>>, vector<1x8x8xf32>
    %141 = vector.shape_cast %140 : vector<1x8x8xf32> to vector<8x8xf32>
    %c0_57 = arith.constant 0 : index
    %c0_58 = arith.constant 0 : index
    %142 = vector.load %arg15[%c0_57, %c0_58] : memref<32x32xbf16, #tpu.memory_space<vmem>>, vector<32x32xbf16>
    %c0_59 = arith.constant 0 : index
    %c0_60 = arith.constant 0 : index
    %143 = vector.load %arg16[%c0_59, %c0_60] : memref<32x32xbf16, #tpu.memory_space<vmem>>, vector<32x32xbf16>
    %c0_61 = arith.constant 0 : index
    %c0_62 = arith.constant 0 : index
    %144 = vector.load %arg17[%c0_61, %c0_62] : memref<32x32xbf16, #tpu.memory_space<vmem>>, vector<32x32xbf16>
    %c0_63 = arith.constant 0 : index
    %c0_64 = arith.constant 0 : index
    %145 = vector.load %arg18[%c0_63, %c0_64] : memref<32x32xbf16, #tpu.memory_space<vmem>>, vector<32x32xbf16>
    %c0_65 = arith.constant 0 : index
    %c0_66 = arith.constant 0 : index
    %146 = vector.load %arg19[%c0_65, %c0_66] : memref<1x32xf32, #tpu.memory_space<vmem>>, vector<1x32xf32>
    %c0_67 = arith.constant 0 : index
    %c0_68 = arith.constant 0 : index
    %147 = vector.load %arg20[%c0_67, %c0_68] : memref<1x32xf32, #tpu.memory_space<vmem>>, vector<1x32xf32>
    %c0_69 = arith.constant 0 : index
    %c0_70 = arith.constant 0 : index
    %148 = vector.load %arg21[%c0_69, %c0_70] : memref<1x32xf32, #tpu.memory_space<vmem>>, vector<1x32xf32>
    %c0_71 = arith.constant 0 : index
    %c0_72 = arith.constant 0 : index
    %149 = vector.load %arg22[%c0_71, %c0_72] : memref<1x32xf32, #tpu.memory_space<vmem>>, vector<1x32xf32>
    %cst_73 = arith.constant dense<0.000000e+00> : vector<8x32xf32>
    %150 = tpu.matmul %139, %142, %cst_73 {dimension_numbers = #tpu.dot_dimension_numbers<[1], [0], [0], [1], [0, 0, 1, 1], [], []>} : vector<8x32xbf16>, vector<32x32xbf16>, vector<8x32xf32> -> vector<8x32xf32>
    %151 = vector.broadcast %146 : vector<1x32xf32> to vector<8x32xf32>
    %152 = arith.addf %150, %151 : vector<8x32xf32>
    %cst_74 = arith.constant 0.353553385 : f32
    %153 = vector.broadcast %cst_74 : f32 to vector<8x32xf32>
    %154 = arith.mulf %152, %153 : vector<8x32xf32>
    %cst_75 = arith.constant dense<0.000000e+00> : vector<8x32xf32>
    %155 = tpu.matmul %138, %143, %cst_75 {dimension_numbers = #tpu.dot_dimension_numbers<[1], [0], [0], [1], [0, 0, 1, 1], [], []>} : vector<8x32xbf16>, vector<32x32xbf16>, vector<8x32xf32> -> vector<8x32xf32>
    %156 = vector.broadcast %147 : vector<1x32xf32> to vector<8x32xf32>
    %157 = arith.addf %155, %156 : vector<8x32xf32>
    %cst_76 = arith.constant dense<0.000000e+00> : vector<8x32xf32>
    %158 = tpu.matmul %138, %144, %cst_76 {dimension_numbers = #tpu.dot_dimension_numbers<[1], [0], [0], [1], [0, 0, 1, 1], [], []>} : vector<8x32xbf16>, vector<32x32xbf16>, vector<8x32xf32> -> vector<8x32xf32>
    %159 = vector.broadcast %148 : vector<1x32xf32> to vector<8x32xf32>
    %160 = arith.addf %158, %159 : vector<8x32xf32>
    %161 = vector.extract_strided_slice %154 {offsets = [0, 0], sizes = [8, 8], strides = [1, 1]} : vector<8x32xf32> to vector<8x8xf32>
    %162 = arith.truncf %161 : vector<8x8xf32> to vector<8x8xbf16>
    %163 = vector.extract_strided_slice %157 {offsets = [0, 0], sizes = [8, 8], strides = [1, 1]} : vector<8x32xf32> to vector<8x8xf32>
    %164 = arith.truncf %163 : vector<8x8xf32> to vector<8x8xbf16>
    %165 = vector.extract_strided_slice %160 {offsets = [0, 0], sizes = [8, 8], strides = [1, 1]} : vector<8x32xf32> to vector<8x8xf32>
    %166 = arith.truncf %165 : vector<8x8xf32> to vector<8x8xbf16>
    %cst_77 = arith.constant dense<0.000000e+00> : vector<8x8xf32>
    %167 = tpu.matmul %162, %164, %cst_77 {dimension_numbers = #tpu.dot_dimension_numbers<[1], [1], [0], [0], [0, 0, 1, 0], [], []>} : vector<8x8xbf16>, vector<8x8xbf16>, vector<8x8xf32> -> vector<8x8xf32>
    %168 = arith.addf %167, %141 : vector<8x8xf32>
    %cst_78 = arith.constant dense<0xFF800000> : vector<8xf32>
    %169 = vector.multi_reduction <maximumf>, %168, %cst_78 [1] : vector<8x8xf32> to vector<8xf32>
    %170 = vector.shape_cast %169 : vector<8xf32> to vector<8x1xf32>
    %171 = vector.broadcast %170 : vector<8x1xf32> to vector<8x8xf32>
    %172 = arith.subf %168, %171 : vector<8x8xf32>
    %173 = math.exp %172 : vector<8x8xf32>
    %cst_79 = arith.constant dense<0.000000e+00> : vector<8xf32>
    %174 = vector.multi_reduction <add>, %173, %cst_79 [1] : vector<8x8xf32> to vector<8xf32>
    %175 = vector.shape_cast %174 : vector<8xf32> to vector<8x1xf32>
    %176 = vector.broadcast %175 : vector<8x1xf32> to vector<8x8xf32>
    %177 = arith.divf %173, %176 : vector<8x8xf32>
    %c0_80 = arith.constant 0 : index
    %c0_81 = arith.constant 0 : index
    %c0_82 = arith.constant 0 : index
    %c0_83 = arith.constant 0 : index
    %178 = vector.load %arg32[%c0_80, %c0_81, %c0_82, %c0_83] : memref<1x4x8x8xf32, #tpu.memory_space<vmem>>, vector<1x1x8x8xf32>
    %179 = vector.shape_cast %178 : vector<1x1x8x8xf32> to vector<8x8xf32>
    %180 = vector.shape_cast %177 : vector<8x8xf32> to vector<1x1x8x8xf32>
    tpu.vector_store %arg32[%c0_80, %c0_81, %c0_82, %c0_83], %180 {strides = array<i32>} : memref<1x4x8x8xf32, #tpu.memory_space<vmem>>, vector<1x1x8x8xf32>,
    %181 = arith.truncf %177 : vector<8x8xf32> to vector<8x8xbf16>
    %cst_84 = arith.constant dense<0.000000e+00> : vector<8x8xf32>
    %182 = tpu.matmul %181, %166, %cst_84 {dimension_numbers = #tpu.dot_dimension_numbers<[1], [0], [0], [1], [0, 0, 1, 1], [], []>} : vector<8x8xbf16>, vector<8x8xbf16>, vector<8x8xf32> -> vector<8x8xf32>
    %183 = vector.extract_strided_slice %154 {offsets = [0, 8], sizes = [8, 8], strides = [1, 1]} : vector<8x32xf32> to vector<8x8xf32>
    %184 = arith.truncf %183 : vector<8x8xf32> to vector<8x8xbf16>
    %185 = vector.extract_strided_slice %157 {offsets = [0, 8], sizes = [8, 8], strides = [1, 1]} : vector<8x32xf32> to vector<8x8xf32>
    %186 = arith.truncf %185 : vector<8x8xf32> to vector<8x8xbf16>
    %187 = vector.extract_strided_slice %160 {offsets = [0, 8], sizes = [8, 8], strides = [1, 1]} : vector<8x32xf32> to vector<8x8xf32>
    %188 = arith.truncf %187 : vector<8x8xf32> to vector<8x8xbf16>
    %cst_85 = arith.constant dense<0.000000e+00> : vector<8x8xf32>
    %189 = tpu.matmul %184, %186, %cst_85 {dimension_numbers = #tpu.dot_dimension_numbers<[1], [1], [0], [0], [0, 0, 1, 0], [], []>} : vector<8x8xbf16>, vector<8x8xbf16>, vector<8x8xf32> -> vector<8x8xf32>
    %190 = arith.addf %189, %141 : vector<8x8xf32>
    %cst_86 = arith.constant dense<0xFF800000> : vector<8xf32>
    %191 = vector.multi_reduction <maximumf>, %190, %cst_86 [1] : vector<8x8xf32> to vector<8xf32>
    %192 = vector.shape_cast %191 : vector<8xf32> to vector<8x1xf32>
    %193 = vector.broadcast %192 : vector<8x1xf32> to vector<8x8xf32>
    %194 = arith.subf %190, %193 : vector<8x8xf32>
    %195 = math.exp %194 : vector<8x8xf32>
    %cst_87 = arith.constant dense<0.000000e+00> : vector<8xf32>
    %196 = vector.multi_reduction <add>, %195, %cst_87 [1] : vector<8x8xf32> to vector<8xf32>
    %197 = vector.shape_cast %196 : vector<8xf32> to vector<8x1xf32>
    %198 = vector.broadcast %197 : vector<8x1xf32> to vector<8x8xf32>
    %199 = arith.divf %195, %198 : vector<8x8xf32>
    %c0_88 = arith.constant 0 : index
    %c1 = arith.constant 1 : index
    %c0_89 = arith.constant 0 : index
    %c0_90 = arith.constant 0 : index
    %200 = vector.load %arg32[%c0_88, %c1, %c0_89, %c0_90] : memref<1x4x8x8xf32, #tpu.memory_space<vmem>>, vector<1x1x8x8xf32>
    %201 = vector.shape_cast %200 : vector<1x1x8x8xf32> to vector<8x8xf32>
    %202 = vector.shape_cast %199 : vector<8x8xf32> to vector<1x1x8x8xf32>
    tpu.vector_store %arg32[%c0_88, %c1, %c0_89, %c0_90], %202 {strides = array<i32>} : memref<1x4x8x8xf32, #tpu.memory_space<vmem>>, vector<1x1x8x8xf32>,
    %203 = arith.truncf %199 : vector<8x8xf32> to vector<8x8xbf16>
    %cst_91 = arith.constant dense<0.000000e+00> : vector<8x8xf32>
    %204 = tpu.matmul %203, %188, %cst_91 {dimension_numbers = #tpu.dot_dimension_numbers<[1], [0], [0], [1], [0, 0, 1, 1], [], []>} : vector<8x8xbf16>, vector<8x8xbf16>, vector<8x8xf32> -> vector<8x8xf32>
    %205 = vector.extract_strided_slice %154 {offsets = [0, 16], sizes = [8, 8], strides = [1, 1]} : vector<8x32xf32> to vector<8x8xf32>
    %206 = arith.truncf %205 : vector<8x8xf32> to vector<8x8xbf16>
    %207 = vector.extract_strided_slice %157 {offsets = [0, 16], sizes = [8, 8], strides = [1, 1]} : vector<8x32xf32> to vector<8x8xf32>
    %208 = arith.truncf %207 : vector<8x8xf32> to vector<8x8xbf16>
    %209 = vector.extract_strided_slice %160 {offsets = [0, 16], sizes = [8, 8], strides = [1, 1]} : vector<8x32xf32> to vector<8x8xf32>
    %210 = arith.truncf %209 : vector<8x8xf32> to vector<8x8xbf16>
    %cst_92 = arith.constant dense<0.000000e+00> : vector<8x8xf32>
    %211 = tpu.matmul %206, %208, %cst_92 {dimension_numbers = #tpu.dot_dimension_numbers<[1], [1], [0], [0], [0, 0, 1, 0], [], []>} : vector<8x8xbf16>, vector<8x8xbf16>, vector<8x8xf32> -> vector<8x8xf32>
    %212 = arith.addf %211, %141 : vector<8x8xf32>
    %cst_93 = arith.constant dense<0xFF800000> : vector<8xf32>
    %213 = vector.multi_reduction <maximumf>, %212, %cst_93 [1] : vector<8x8xf32> to vector<8xf32>
    %214 = vector.shape_cast %213 : vector<8xf32> to vector<8x1xf32>
    %215 = vector.broadcast %214 : vector<8x1xf32> to vector<8x8xf32>
    %216 = arith.subf %212, %215 : vector<8x8xf32>
    %217 = math.exp %216 : vector<8x8xf32>
    %cst_94 = arith.constant dense<0.000000e+00> : vector<8xf32>
    %218 = vector.multi_reduction <add>, %217, %cst_94 [1] : vector<8x8xf32> to vector<8xf32>
    %219 = vector.shape_cast %218 : vector<8xf32> to vector<8x1xf32>
    %220 = vector.broadcast %219 : vector<8x1xf32> to vector<8x8xf32>
    %221 = arith.divf %217, %220 : vector<8x8xf32>
    %c0_95 = arith.constant 0 : index
    %c2 = arith.constant 2 : index
    %c0_96 = arith.constant 0 : index
    %c0_97 = arith.constant 0 : index
    %222 = vector.load %arg32[%c0_95, %c2, %c0_96, %c0_97] : memref<1x4x8x8xf32, #tpu.memory_space<vmem>>, vector<1x1x8x8xf32>
    %223 = vector.shape_cast %222 : vector<1x1x8x8xf32> to vector<8x8xf32>
    %224 = vector.shape_cast %221 : vector<8x8xf32> to vector<1x1x8x8xf32>
    tpu.vector_store %arg32[%c0_95, %c2, %c0_96, %c0_97], %224 {strides = array<i32>} : memref<1x4x8x8xf32, #tpu.memory_space<vmem>>, vector<1x1x8x8xf32>,
    %225 = arith.truncf %221 : vector<8x8xf32> to vector<8x8xbf16>
    %cst_98 = arith.constant dense<0.000000e+00> : vector<8x8xf32>
    %226 = tpu.matmul %225, %210, %cst_98 {dimension_numbers = #tpu.dot_dimension_numbers<[1], [0], [0], [1], [0, 0, 1, 1], [], []>} : vector<8x8xbf16>, vector<8x8xbf16>, vector<8x8xf32> -> vector<8x8xf32>
    %227 = vector.extract_strided_slice %154 {offsets = [0, 24], sizes = [8, 8], strides = [1, 1]} : vector<8x32xf32> to vector<8x8xf32>
    %228 = arith.truncf %227 : vector<8x8xf32> to vector<8x8xbf16>
    %229 = vector.extract_strided_slice %157 {offsets = [0, 24], sizes = [8, 8], strides = [1, 1]} : vector<8x32xf32> to vector<8x8xf32>
    %230 = arith.truncf %229 : vector<8x8xf32> to vector<8x8xbf16>
    %231 = vector.extract_strided_slice %160 {offsets = [0, 24], sizes = [8, 8], strides = [1, 1]} : vector<8x32xf32> to vector<8x8xf32>
    %232 = arith.truncf %231 : vector<8x8xf32> to vector<8x8xbf16>
    %cst_99 = arith.constant dense<0.000000e+00> : vector<8x8xf32>
    %233 = tpu.matmul %228, %230, %cst_99 {dimension_numbers = #tpu.dot_dimension_numbers<[1], [1], [0], [0], [0, 0, 1, 0], [], []>} : vector<8x8xbf16>, vector<8x8xbf16>, vector<8x8xf32> -> vector<8x8xf32>
    %234 = arith.addf %233, %141 : vector<8x8xf32>
    %cst_100 = arith.constant dense<0xFF800000> : vector<8xf32>
    %235 = vector.multi_reduction <maximumf>, %234, %cst_100 [1] : vector<8x8xf32> to vector<8xf32>
    %236 = vector.shape_cast %235 : vector<8xf32> to vector<8x1xf32>
    %237 = vector.broadcast %236 : vector<8x1xf32> to vector<8x8xf32>
    %238 = arith.subf %234, %237 : vector<8x8xf32>
    %239 = math.exp %238 : vector<8x8xf32>
    %cst_101 = arith.constant dense<0.000000e+00> : vector<8xf32>
    %240 = vector.multi_reduction <add>, %239, %cst_101 [1] : vector<8x8xf32> to vector<8xf32>
    %241 = vector.shape_cast %240 : vector<8xf32> to vector<8x1xf32>
    %242 = vector.broadcast %241 : vector<8x1xf32> to vector<8x8xf32>
    %243 = arith.divf %239, %242 : vector<8x8xf32>
    %c0_102 = arith.constant 0 : index
    %c3 = arith.constant 3 : index
    %c0_103 = arith.constant 0 : index
    %c0_104 = arith.constant 0 : index
    %244 = vector.load %arg32[%c0_102, %c3, %c0_103, %c0_104] : memref<1x4x8x8xf32, #tpu.memory_space<vmem>>, vector<1x1x8x8xf32>
    %245 = vector.shape_cast %244 : vector<1x1x8x8xf32> to vector<8x8xf32>
    %246 = vector.shape_cast %243 : vector<8x8xf32> to vector<1x1x8x8xf32>
    tpu.vector_store %arg32[%c0_102, %c3, %c0_103, %c0_104], %246 {strides = array<i32>} : memref<1x4x8x8xf32, #tpu.memory_space<vmem>>, vector<1x1x8x8xf32>,
    %247 = arith.truncf %243 : vector<8x8xf32> to vector<8x8xbf16>
    %cst_105 = arith.constant dense<0.000000e+00> : vector<8x8xf32>
    %248 = tpu.matmul %247, %232, %cst_105 {dimension_numbers = #tpu.dot_dimension_numbers<[1], [0], [0], [1], [0, 0, 1, 1], [], []>} : vector<8x8xbf16>, vector<8x8xbf16>, vector<8x8xf32> -> vector<8x8xf32>
    %249 = tpu.concatenate %182, %204, %226, %248 in 1 : vector<8x8xf32>, vector<8x8xf32>, vector<8x8xf32>, vector<8x8xf32> -> vector<8x32xf32>
    %250 = arith.truncf %249 : vector<8x32xf32> to vector<8x32xbf16>
    %cst_106 = arith.constant dense<0.000000e+00> : vector<8x32xf32>
    %251 = tpu.matmul %250, %145, %cst_106 {dimension_numbers = #tpu.dot_dimension_numbers<[1], [0], [0], [1], [0, 0, 1, 1], [], []>} : vector<8x32xbf16>, vector<32x32xbf16>, vector<8x32xf32> -> vector<8x32xf32>
    %252 = vector.broadcast %149 : vector<1x32xf32> to vector<8x32xf32>
    %253 = arith.addf %251, %252 : vector<8x32xf32>
    %254 = arith.addf %135, %253 : vector<8x32xf32>
    %c0_107 = arith.constant 0 : index
    %c0_108 = arith.constant 0 : index
    %255 = vector.load %arg23[%c0_107, %c0_108] : memref<1x32xf32, #tpu.memory_space<vmem>>, vector<1x32xf32>
    %c0_109 = arith.constant 0 : index
    %c0_110 = arith.constant 0 : index
    %256 = vector.load %arg24[%c0_109, %c0_110] : memref<1x32xf32, #tpu.memory_space<vmem>>, vector<1x32xf32>
    %cst_111 = arith.constant dense<0.000000e+00> : vector<8xf32>
    %257 = vector.multi_reduction <add>, %254, %cst_111 [1] : vector<8x32xf32> to vector<8xf32>
    %258 = vector.shape_cast %257 : vector<8xf32> to vector<8x1xf32>
    %cst_112 = arith.constant 3.200000e+01 : f32
    %259 = vector.broadcast %cst_112 : f32 to vector<8x1xf32>
    %260 = arith.divf %258, %259 : vector<8x1xf32>
    %261 = arith.mulf %254, %254 : vector<8x32xf32>
    %cst_113 = arith.constant dense<0.000000e+00> : vector<8xf32>
    %262 = vector.multi_reduction <add>, %261, %cst_113 [1] : vector<8x32xf32> to vector<8xf32>
    %263 = vector.shape_cast %262 : vector<8xf32> to vector<8x1xf32>
    %cst_114 = arith.constant 3.200000e+01 : f32
    %264 = vector.broadcast %cst_114 : f32 to vector<8x1xf32>
    %265 = arith.divf %263, %264 : vector<8x1xf32>
    %266 = arith.mulf %260, %260 : vector<8x1xf32>
    %267 = arith.subf %265, %266 : vector<8x1xf32>
    %cst_115 = arith.constant 0.000000e+00 : f32
    %268 = vector.broadcast %cst_115 : f32 to vector<8x1xf32>
    %269 = arith.maximumf %267, %268 : vector<8x1xf32>
    %270 = vector.broadcast %260 : vector<8x1xf32> to vector<8x32xf32>
    %271 = arith.subf %254, %270 : vector<8x32xf32>
    %cst_116 = arith.constant 9.99999974E-6 : f32
    %272 = vector.broadcast %cst_116 : f32 to vector<8x1xf32>
    %273 = arith.addf %269, %272 : vector<8x1xf32>
    %274 = math.rsqrt %273 : vector<8x1xf32>
    %275 = vector.broadcast %274 : vector<8x1xf32> to vector<8x32xf32>
    %276 = arith.mulf %271, %275 : vector<8x32xf32>
    %277 = vector.broadcast %255 : vector<1x32xf32> to vector<8x32xf32>
    %278 = arith.mulf %276, %277 : vector<8x32xf32>
    %279 = vector.broadcast %256 : vector<1x32xf32> to vector<8x32xf32>
    %280 = arith.addf %278, %279 : vector<8x32xf32>
    %c0_117 = arith.constant 0 : index
    %c0_118 = arith.constant 0 : index
    %281 = vector.load %arg25[%c0_117, %c0_118] : memref<32x64xbf16, #tpu.memory_space<vmem>>, vector<32x64xbf16>
    %c0_119 = arith.constant 0 : index
    %c0_120 = arith.constant 0 : index
    %282 = vector.load %arg26[%c0_119, %c0_120] : memref<1x64xf32, #tpu.memory_space<vmem>>, vector<1x64xf32>
    %c0_121 = arith.constant 0 : index
    %c0_122 = arith.constant 0 : index
    %283 = vector.load %arg27[%c0_121, %c0_122] : memref<64x32xbf16, #tpu.memory_space<vmem>>, vector<64x32xbf16>
    %c0_123 = arith.constant 0 : index
    %c0_124 = arith.constant 0 : index
    %284 = vector.load %arg28[%c0_123, %c0_124] : memref<1x32xf32, #tpu.memory_space<vmem>>, vector<1x32xf32>
    %285 = arith.truncf %280 : vector<8x32xf32> to vector<8x32xbf16>
    %cst_125 = arith.constant dense<0.000000e+00> : vector<8x64xf32>
    %286 = tpu.matmul %285, %281, %cst_125 {dimension_numbers = #tpu.dot_dimension_numbers<[1], [0], [0], [1], [0, 0, 1, 1], [], []>} : vector<8x32xbf16>, vector<32x64xbf16>, vector<8x64xf32> -> vector<8x64xf32>
    %287 = vector.broadcast %282 : vector<1x64xf32> to vector<8x64xf32>
    %288 = arith.addf %286, %287 : vector<8x64xf32>
    %cst_126 = arith.constant 0.000000e+00 : f32
    %289 = vector.broadcast %cst_126 : f32 to vector<8x64xf32>
    %290 = arith.maximumf %288, %289 : vector<8x64xf32>
    %291 = arith.truncf %290 : vector<8x64xf32> to vector<8x64xbf16>
    %cst_127 = arith.constant dense<0.000000e+00> : vector<8x32xf32>
    %292 = tpu.matmul %291, %283, %cst_127 {dimension_numbers = #tpu.dot_dimension_numbers<[1], [0], [0], [1], [0, 0, 1, 1], [], []>} : vector<8x64xbf16>, vector<64x32xbf16>, vector<8x32xf32> -> vector<8x32xf32>
    %293 = vector.broadcast %284 : vector<1x32xf32> to vector<8x32xf32>
    %294 = arith.addf %292, %293 : vector<8x32xf32>
    %295 = arith.addf %280, %294 : vector<8x32xf32>
    %c0_128 = arith.constant 0 : index
    %c0_129 = arith.constant 0 : index
    %296 = vector.load %arg29[%c0_128, %c0_129] : memref<1x32xf32, #tpu.memory_space<vmem>>, vector<1x32xf32>
    %c0_130 = arith.constant 0 : index
    %c0_131 = arith.constant 0 : index
    %297 = vector.load %arg30[%c0_130, %c0_131] : memref<1x32xf32, #tpu.memory_space<vmem>>, vector<1x32xf32>
    %cst_132 = arith.constant dense<0.000000e+00> : vector<8xf32>
    %298 = vector.multi_reduction <add>, %295, %cst_132 [1] : vector<8x32xf32> to vector<8xf32>
    %299 = vector.shape_cast %298 : vector<8xf32> to vector<8x1xf32>
    %cst_133 = arith.constant 3.200000e+01 : f32
    %300 = vector.broadcast %cst_133 : f32 to vector<8x1xf32>
    %301 = arith.divf %299, %300 : vector<8x1xf32>
    %302 = arith.mulf %295, %295 : vector<8x32xf32>
    %cst_134 = arith.constant dense<0.000000e+00> : vector<8xf32>
    %303 = vector.multi_reduction <add>, %302, %cst_134 [1] : vector<8x32xf32> to vector<8xf32>
    %304 = vector.shape_cast %303 : vector<8xf32> to vector<8x1xf32>
    %cst_135 = arith.constant 3.200000e+01 : f32
    %305 = vector.broadcast %cst_135 : f32 to vector<8x1xf32>
    %306 = arith.divf %304, %305 : vector<8x1xf32>
    %307 = arith.mulf %301, %301 : vector<8x1xf32>
    %308 = arith.subf %306, %307 : vector<8x1xf32>
    %cst_136 = arith.constant 0.000000e+00 : f32
    %309 = vector.broadcast %cst_136 : f32 to vector<8x1xf32>
    %310 = arith.maximumf %308, %309 : vector<8x1xf32>
    %311 = vector.broadcast %301 : vector<8x1xf32> to vector<8x32xf32>
    %312 = arith.subf %295, %311 : vector<8x32xf32>
    %cst_137 = arith.constant 9.99999974E-6 : f32
    %313 = vector.broadcast %cst_137 : f32 to vector<8x1xf32>
    %314 = arith.addf %310, %313 : vector<8x1xf32>
    %315 = math.rsqrt %314 : vector<8x1xf32>
    %316 = vector.broadcast %315 : vector<8x1xf32> to vector<8x32xf32>
    %317 = arith.mulf %312, %316 : vector<8x32xf32>
    %318 = vector.broadcast %296 : vector<1x32xf32> to vector<8x32xf32>
    %319 = arith.mulf %317, %318 : vector<8x32xf32>
    %320 = vector.broadcast %297 : vector<1x32xf32> to vector<8x32xf32>
    %321 = arith.addf %319, %320 : vector<8x32xf32>
    %c0_138 = arith.constant 0 : index
    %c0_139 = arith.constant 0 : index
    %c0_140 = arith.constant 0 : index
    %322 = vector.load %arg31[%c0_138, %c0_139, %c0_140] : memref<1x8x32xf32, #tpu.memory_space<vmem>>, vector<1x8x32xf32>
    %323 = vector.shape_cast %322 : vector<1x8x32xf32> to vector<8x32xf32>
    %324 = vector.shape_cast %321 : vector<8x32xf32> to vector<1x8x32xf32>
    tpu.vector_store %arg31[%c0_138, %c0_139, %c0_140], %324 {strides = array<i32>} : memref<1x8x32xf32, #tpu.memory_space<vmem>>, vector<1x8x32xf32>,
    return
  }
  func.func @transform_0(%arg0: i32) -> (i32, i32, i32) {
    %c0_i32 = arith.constant 0 : i32
    %c0_i32_0 = arith.constant 0 : i32
    %c0_i32_1 = arith.constant 0 : i32
    return %arg0, %c0_i32, %c0_i32_0 : i32, i32, i32
  }
  func.func @transform_1(%arg0: i32) -> (i32, i32, i32) {
    %c0_i32 = arith.constant 0 : i32
    %c0_i32_0 = arith.constant 0 : i32
    %c0_i32_1 = arith.constant 0 : i32
    return %arg0, %c0_i32, %c0_i32_0 : i32, i32, i32
  }
  func.func @transform_2(%arg0: i32) -> (i32, i32, i32) {
    %c0_i32 = arith.constant 0 : i32
    %c0_i32_0 = arith.constant 0 : i32
    %c0_i32_1 = arith.constant 0 : i32
    return %arg0, %c0_i32, %c0_i32_0 : i32, i32, i32
  }
  func.func @transform_3(%arg0: i32) -> (i32, i32, i32) {
    %c0_i32 = arith.constant 0 : i32
    %c0_i32_0 = arith.constant 0 : i32
    %c0_i32_1 = arith.constant 0 : i32
    return %arg0, %c0_i32, %c0_i32_0 : i32, i32, i32
  }
  func.func @transform_4(%arg0: i32) -> (i32, i32) {
    %c0_i32 = arith.constant 0 : i32
    %c0_i32_0 = arith.constant 0 : i32
    %c0_i32_1 = arith.constant 0 : i32
    return %c0_i32, %c0_i32_0 : i32, i32
  }
  func.func @transform_5(%arg0: i32) -> (i32, i32) {
    %c0_i32 = arith.constant 0 : i32
    %c0_i32_0 = arith.constant 0 : i32
    %c0_i32_1 = arith.constant 0 : i32
    return %c0_i32, %c0_i32_0 : i32, i32
  }
  func.func @transform_6(%arg0: i32) -> (i32, i32) {
    %c0_i32 = arith.constant 0 : i32
    %c0_i32_0 = arith.constant 0 : i32
    %c0_i32_1 = arith.constant 0 : i32
    return %c0_i32, %c0_i32_0 : i32, i32
  }
  func.func @transform_7(%arg0: i32) -> (i32, i32) {
    %c0_i32 = arith.constant 0 : i32
    %c0_i32_0 = arith.constant 0 : i32
    %c0_i32_1 = arith.constant 0 : i32
    return %c0_i32, %c0_i32_0 : i32, i32
  }
  func.func @transform_8(%arg0: i32) -> (i32, i32) {
    %c0_i32 = arith.constant 0 : i32
    %c0_i32_0 = arith.constant 0 : i32
    %c0_i32_1 = arith.constant 0 : i32
    return %c0_i32, %c0_i32_0 : i32, i32
  }
  func.func @transform_9(%arg0: i32) -> (i32, i32) {
    %c0_i32 = arith.constant 0 : i32
    %c0_i32_0 = arith.constant 0 : i32
    %c0_i32_1 = arith.constant 0 : i32
    return %c0_i32, %c0_i32_0 : i32, i32
  }
  func.func @transform_10(%arg0: i32) -> (i32, i32) {
    %c0_i32 = arith.constant 0 : i32
    %c0_i32_0 = arith.constant 0 : i32
    %c0_i32_1 = arith.constant 0 : i32
    return %c0_i32, %c0_i32_0 : i32, i32
  }
  func.func @transform_11(%arg0: i32) -> (i32, i32) {
    %c0_i32 = arith.constant 0 : i32
    %c0_i32_0 = arith.constant 0 : i32
    %c0_i32_1 = arith.constant 0 : i32
    return %c0_i32, %c0_i32_0 : i32, i32
  }
  func.func @transform_12(%arg0: i32) -> (i32, i32) {
    %c0_i32 = arith.constant 0 : i32
    %c0_i32_0 = arith.constant 0 : i32
    %c0_i32_1 = arith.constant 0 : i32
    return %c0_i32, %c0_i32_0 : i32, i32
  }
  func.func @transform_13(%arg0: i32) -> (i32, i32) {
    %c0_i32 = arith.constant 0 : i32
    %c0_i32_0 = arith.constant 0 : i32
    %c0_i32_1 = arith.constant 0 : i32
    return %c0_i32, %c0_i32_0 : i32, i32
  }
  func.func @transform_14(%arg0: i32) -> (i32, i32) {
    %c0_i32 = arith.constant 0 : i32
    %c0_i32_0 = arith.constant 0 : i32
    %c0_i32_1 = arith.constant 0 : i32
    return %c0_i32, %c0_i32_0 : i32, i32
  }
  func.func @transform_15(%arg0: i32) -> (i32, i32) {
    %c0_i32 = arith.constant 0 : i32
    %c0_i32_0 = arith.constant 0 : i32
    %c0_i32_1 = arith.constant 0 : i32
    return %c0_i32, %c0_i32_0 : i32, i32
  }
  func.func @transform_16(%arg0: i32) -> (i32, i32) {
    %c0_i32 = arith.constant 0 : i32
    %c0_i32_0 = arith.constant 0 : i32
    %c0_i32_1 = arith.constant 0 : i32
    return %c0_i32, %c0_i32_0 : i32, i32
  }
  func.func @transform_17(%arg0: i32) -> (i32, i32) {
    %c0_i32 = arith.constant 0 : i32
    %c0_i32_0 = arith.constant 0 : i32
    %c0_i32_1 = arith.constant 0 : i32
    return %c0_i32, %c0_i32_0 : i32, i32
  }
  func.func @transform_18(%arg0: i32) -> (i32, i32) {
    %c0_i32 = arith.constant 0 : i32
    %c0_i32_0 = arith.constant 0 : i32
    %c0_i32_1 = arith.constant 0 : i32
    return %c0_i32, %c0_i32_0 : i32, i32
  }
  func.func @transform_19(%arg0: i32) -> (i32, i32) {
    %c0_i32 = arith.constant 0 : i32
    %c0_i32_0 = arith.constant 0 : i32
    %c0_i32_1 = arith.constant 0 : i32
    return %c0_i32, %c0_i32_0 : i32, i32
  }
  func.func @transform_20(%arg0: i32) -> (i32, i32) {
    %c0_i32 = arith.constant 0 : i32
    %c0_i32_0 = arith.constant 0 : i32
    %c0_i32_1 = arith.constant 0 : i32
    return %c0_i32, %c0_i32_0 : i32, i32
  }
  func.func @transform_21(%arg0: i32) -> (i32, i32) {
    %c0_i32 = arith.constant 0 : i32
    %c0_i32_0 = arith.constant 0 : i32
    %c0_i32_1 = arith.constant 0 : i32
    return %c0_i32, %c0_i32_0 : i32, i32
  }
  func.func @transform_22(%arg0: i32) -> (i32, i32) {
    %c0_i32 = arith.constant 0 : i32
    %c0_i32_0 = arith.constant 0 : i32
    %c0_i32_1 = arith.constant 0 : i32
    return %c0_i32, %c0_i32_0 : i32, i32
  }
  func.func @transform_23(%arg0: i32) -> (i32, i32) {
    %c0_i32 = arith.constant 0 : i32
    %c0_i32_0 = arith.constant 0 : i32
    %c0_i32_1 = arith.constant 0 : i32
    return %c0_i32, %c0_i32_0 : i32, i32
  }
  func.func @transform_24(%arg0: i32) -> (i32, i32) {
    %c0_i32 = arith.constant 0 : i32
    %c0_i32_0 = arith.constant 0 : i32
    %c0_i32_1 = arith.constant 0 : i32
    return %c0_i32, %c0_i32_0 : i32, i32
  }
  func.func @transform_25(%arg0: i32) -> (i32, i32) {
    %c0_i32 = arith.constant 0 : i32
    %c0_i32_0 = arith.constant 0 : i32
    %c0_i32_1 = arith.constant 0 : i32
    return %c0_i32, %c0_i32_0 : i32, i32
  }
  func.func @transform_26(%arg0: i32) -> (i32, i32) {
    %c0_i32 = arith.constant 0 : i32
    %c0_i32_0 = arith.constant 0 : i32
    %c0_i32_1 = arith.constant 0 : i32
    return %c0_i32, %c0_i32_0 : i32, i32
  }
  func.func @transform_27(%arg0: i32) -> (i32, i32) {
    %c0_i32 = arith.constant 0 : i32
    %c0_i32_0 = arith.constant 0 : i32
    %c0_i32_1 = arith.constant 0 : i32
    return %c0_i32, %c0_i32_0 : i32, i32
  }
  func.func @transform_28(%arg0: i32) -> (i32, i32) {
    %c0_i32 = arith.constant 0 : i32
    %c0_i32_0 = arith.constant 0 : i32
    %c0_i32_1 = arith.constant 0 : i32
    return %c0_i32, %c0_i32_0 : i32, i32
  }
  func.func @transform_29(%arg0: i32) -> (i32, i32) {
    %c0_i32 = arith.constant 0 : i32
    %c0_i32_0 = arith.constant 0 : i32
    %c0_i32_1 = arith.constant 0 : i32
    return %c0_i32, %c0_i32_0 : i32, i32
  }
  func.func @transform_30(%arg0: i32) -> (i32, i32, i32) {
    %c0_i32 = arith.constant 0 : i32
    %c0_i32_0 = arith.constant 0 : i32
    %c0_i32_1 = arith.constant 0 : i32
    return %arg0, %c0_i32, %c0_i32_0 : i32, i32, i32
  }
  func.func @transform_31(%arg0: i32) -> (i32, i32, i32, i32) {
    %c0_i32 = arith.constant 0 : i32
    %c0_i32_0 = arith.constant 0 : i32
    %c0_i32_1 = arith.constant 0 : i32
    %c0_i32_2 = arith.constant 0 : i32
    return %arg0, %c0_i32, %c0_i32_0, %c0_i32_1 : i32, i32, i32, i32
  }
}

module attributes {stable_mosaic.version = 11 : i64} {
  func.func @_decoder_layer_kernel(%arg0: i32, %arg1: memref<1x8x32xf32, #tpu.memory_space<vmem>>, %arg2: memref<1x8x32xf32, #tpu.memory_space<vmem>>, %arg3: memref<1x8x8xf32, #tpu.memory_space<vmem>>, %arg4: memref<1x8x8xf32, #tpu.memory_space<vmem>>, %arg5: memref<32x32xbf16, #tpu.memory_space<vmem>>, %arg6: memref<32x32xbf16, #tpu.memory_space<vmem>>, %arg7: memref<32x32xbf16, #tpu.memory_space<vmem>>, %arg8: memref<32x32xbf16, #tpu.memory_space<vmem>>, %arg9: memref<1x32xf32, #tpu.memory_space<vmem>>, %arg10: memref<1x32xf32, #tpu.memory_space<vmem>>, %arg11: memref<1x32xf32, #tpu.memory_space<vmem>>, %arg12: memref<1x32xf32, #tpu.memory_space<vmem>>, %arg13: memref<1x32xf32, #tpu.memory_space<vmem>>, %arg14: memref<1x32xf32, #tpu.memory_space<vmem>>, %arg15: memref<32x32xbf16, #tpu.memory_space<vmem>>, %arg16: memref<32x32xbf16, #tpu.memory_space<vmem>>, %arg17: memref<32x32xbf16, #tpu.memory_space<vmem>>, %arg18: memref<32x32xbf16, #tpu.memory_space<vmem>>, %arg19: memref<1x32xf32, #tpu.memory_space<vmem>>, %arg20: memref<1x32xf32, #tpu.memory_space<vmem>>, %arg21: memref<1x32xf32, #tpu.memory_space<vmem>>, %arg22: memref<1x32xf32, #tpu.memory_space<vmem>>, %arg23: memref<1x32xf32, #tpu.memory_space<vmem>>, %arg24: memref<1x32xf32, #tpu.memory_space<vmem>>, %arg25: memref<32x64xbf16, #tpu.memory_space<vmem>>, %arg26: memref<1x64xf32, #tpu.memory_space<vmem>>, %arg27: memref<64x32xbf16, #tpu.memory_space<vmem>>, %arg28: memref<1x32xf32, #tpu.memory_space<vmem>>, %arg29: memref<1x32xf32, #tpu.memory_space<vmem>>, %arg30: memref<1x32xf32, #tpu.memory_space<vmem>>, %arg31: memref<1x8x32xf32, #tpu.memory_space<vmem>>) attributes {dimension_semantics = [#tpu.dimension_semantics<parallel>], iteration_bounds = array<i64: 2>, scalar_prefetch = 0 : i64, scratch_operands = 0 : i64, tpu.core_type = #tpu.core_type<tc>, window_params = [{transform_indices = @transform_0, window_bounds = array<i64: 1, 8, 32>}, {transform_indices = @transform_1, window_bounds = array<i64: 1, 8, 32>}, {transform_indices = @transform_2, window_bounds = array<i64: 1, 8, 8>}, {transform_indices = @transform_3, window_bounds = array<i64: 1, 8, 8>}, {pipeline_mode = #tpu.pipeline_mode<synchronous>, transform_indices = @transform_4, window_bounds = array<i64: 32, 32>}, {pipeline_mode = #tpu.pipeline_mode<synchronous>, transform_indices = @transform_5, window_bounds = array<i64: 32, 32>}, {pipeline_mode = #tpu.pipeline_mode<synchronous>, transform_indices = @transform_6, window_bounds = array<i64: 32, 32>}, {pipeline_mode = #tpu.pipeline_mode<synchronous>, transform_indices = @transform_7, window_bounds = array<i64: 32, 32>}, {pipeline_mode = #tpu.pipeline_mode<synchronous>, transform_indices = @transform_8, window_bounds = array<i64: 1, 32>}, {pipeline_mode = #tpu.pipeline_mode<synchronous>, transform_indices = @transform_9, window_bounds = array<i64: 1, 32>}, {pipeline_mode = #tpu.pipeline_mode<synchronous>, transform_indices = @transform_10, window_bounds = array<i64: 1, 32>}, {pipeline_mode = #tpu.pipeline_mode<synchronous>, transform_indices = @transform_11, window_bounds = array<i64: 1, 32>}, {pipeline_mode = #tpu.pipeline_mode<synchronous>, transform_indices = @transform_12, window_bounds = array<i64: 1, 32>}, {pipeline_mode = #tpu.pipeline_mode<synchronous>, transform_indices = @transform_13, window_bounds = array<i64: 1, 32>}, {pipeline_mode = #tpu.pipeline_mode<synchronous>, transform_indices = @transform_14, window_bounds = array<i64: 32, 32>}, {pipeline_mode = #tpu.pipeline_mode<synchronous>, transform_indices = @transform_15, window_bounds = array<i64: 32, 32>}, {pipeline_mode = #tpu.pipeline_mode<synchronous>, transform_indices = @transform_16, window_bounds = array<i64: 32, 32>}, {pipeline_mode = #tpu.pipeline_mode<synchronous>, transform_indices = @transform_17, window_bounds = array<i64: 32, 32>}, {pipeline_mode = #tpu.pipeline_mode<synchronous>, transform_indices = @transform_18, window_bounds = array<i64: 1, 32>}, {pipeline_mode = #tpu.pipeline_mode<synchronous>, transform_indices = @transform_19, window_bounds = array<i64: 1, 32>}, {pipeline_mode = #tpu.pipeline_mode<synchronous>, transform_indices = @transform_20, window_bounds = array<i64: 1, 32>}, {pipeline_mode = #tpu.pipeline_mode<synchronous>, transform_indices = @transform_21, window_bounds = array<i64: 1, 32>}, {pipeline_mode = #tpu.pipeline_mode<synchronous>, transform_indices = @transform_22, window_bounds = array<i64: 1, 32>}, {pipeline_mode = #tpu.pipeline_mode<synchronous>, transform_indices = @transform_23, window_bounds = array<i64: 1, 32>}, {pipeline_mode = #tpu.pipeline_mode<synchronous>, transform_indices = @transform_24, window_bounds = array<i64: 32, 64>}, {pipeline_mode = #tpu.pipeline_mode<synchronous>, transform_indices = @transform_25, window_bounds = array<i64: 1, 64>}, {pipeline_mode = #tpu.pipeline_mode<synchronous>, transform_indices = @transform_26, window_bounds = array<i64: 64, 32>}, {pipeline_mode = #tpu.pipeline_mode<synchronous>, transform_indices = @transform_27, window_bounds = array<i64: 1, 32>}, {pipeline_mode = #tpu.pipeline_mode<synchronous>, transform_indices = @transform_28, window_bounds = array<i64: 1, 32>}, {pipeline_mode = #tpu.pipeline_mode<synchronous>, transform_indices = @transform_29, window_bounds = array<i64: 1, 32>}, {transform_indices = @transform_30, window_bounds = array<i64: 1, 8, 32>}]} {
    %c0 = arith.constant 0 : index
    %c0_0 = arith.constant 0 : index
    %c0_1 = arith.constant 0 : index
    %0 = vector.load %arg1[%c0, %c0_0, %c0_1] : memref<1x8x32xf32, #tpu.memory_space<vmem>>, vector<1x8x32xf32>
    %1 = vector.shape_cast %0 : vector<1x8x32xf32> to vector<8x32xf32>
    %2 = arith.truncf %1 : vector<8x32xf32> to vector<8x32xbf16>
    %c0_2 = arith.constant 0 : index
    %c0_3 = arith.constant 0 : index
    %c0_4 = arith.constant 0 : index
    %3 = vector.load %arg3[%c0_2, %c0_3, %c0_4] : memref<1x8x8xf32, #tpu.memory_space<vmem>>, vector<1x8x8xf32>
    %4 = vector.shape_cast %3 : vector<1x8x8xf32> to vector<8x8xf32>
    %c0_5 = arith.constant 0 : index
    %c0_6 = arith.constant 0 : index
    %5 = vector.load %arg5[%c0_5, %c0_6] : memref<32x32xbf16, #tpu.memory_space<vmem>>, vector<32x32xbf16>
    %c0_7 = arith.constant 0 : index
    %c0_8 = arith.constant 0 : index
    %6 = vector.load %arg6[%c0_7, %c0_8] : memref<32x32xbf16, #tpu.memory_space<vmem>>, vector<32x32xbf16>
    %c0_9 = arith.constant 0 : index
    %c0_10 = arith.constant 0 : index
    %7 = vector.load %arg7[%c0_9, %c0_10] : memref<32x32xbf16, #tpu.memory_space<vmem>>, vector<32x32xbf16>
    %c0_11 = arith.constant 0 : index
    %c0_12 = arith.constant 0 : index
    %8 = vector.load %arg8[%c0_11, %c0_12] : memref<32x32xbf16, #tpu.memory_space<vmem>>, vector<32x32xbf16>
    %c0_13 = arith.constant 0 : index
    %c0_14 = arith.constant 0 : index
    %9 = vector.load %arg9[%c0_13, %c0_14] : memref<1x32xf32, #tpu.memory_space<vmem>>, vector<1x32xf32>
    %c0_15 = arith.constant 0 : index
    %c0_16 = arith.constant 0 : index
    %10 = vector.load %arg10[%c0_15, %c0_16] : memref<1x32xf32, #tpu.memory_space<vmem>>, vector<1x32xf32>
    %c0_17 = arith.constant 0 : index
    %c0_18 = arith.constant 0 : index
    %11 = vector.load %arg11[%c0_17, %c0_18] : memref<1x32xf32, #tpu.memory_space<vmem>>, vector<1x32xf32>
    %c0_19 = arith.constant 0 : index
    %c0_20 = arith.constant 0 : index
    %12 = vector.load %arg12[%c0_19, %c0_20] : memref<1x32xf32, #tpu.memory_space<vmem>>, vector<1x32xf32>
    %cst = arith.constant dense<0.000000e+00> : vector<8x32xf32>
    %13 = tpu.matmul %2, %5, %cst {dimension_numbers = #tpu.dot_dimension_numbers<[1], [0], [0], [1], [0, 0, 1, 1], [], []>} : vector<8x32xbf16>, vector<32x32xbf16>, vector<8x32xf32> -> vector<8x32xf32>
    %14 = vector.broadcast %9 : vector<1x32xf32> to vector<8x32xf32>
    %15 = arith.addf %13, %14 : vector<8x32xf32>
    %cst_21 = arith.constant 0.353553385 : f32
    %16 = vector.broadcast %cst_21 : f32 to vector<8x32xf32>
    %17 = arith.mulf %15, %16 : vector<8x32xf32>
    %cst_22 = arith.constant dense<0.000000e+00> : vector<8x32xf32>
    %18 = tpu.matmul %2, %6, %cst_22 {dimension_numbers = #tpu.dot_dimension_numbers<[1], [0], [0], [1], [0, 0, 1, 1], [], []>} : vector<8x32xbf16>, vector<32x32xbf16>, vector<8x32xf32> -> vector<8x32xf32>
    %19 = vector.broadcast %10 : vector<1x32xf32> to vector<8x32xf32>
    %20 = arith.addf %18, %19 : vector<8x32xf32>
    %cst_23 = arith.constant dense<0.000000e+00> : vector<8x32xf32>
    %21 = tpu.matmul %2, %7, %cst_23 {dimension_numbers = #tpu.dot_dimension_numbers<[1], [0], [0], [1], [0, 0, 1, 1], [], []>} : vector<8x32xbf16>, vector<32x32xbf16>, vector<8x32xf32> -> vector<8x32xf32>
    %22 = vector.broadcast %11 : vector<1x32xf32> to vector<8x32xf32>
    %23 = arith.addf %21, %22 : vector<8x32xf32>
    %24 = vector.extract_strided_slice %17 {offsets = [0, 0], sizes = [8, 8], strides = [1, 1]} : vector<8x32xf32> to vector<8x8xf32>
    %25 = arith.truncf %24 : vector<8x8xf32> to vector<8x8xbf16>
    %26 = vector.extract_strided_slice %20 {offsets = [0, 0], sizes = [8, 8], strides = [1, 1]} : vector<8x32xf32> to vector<8x8xf32>
    %27 = arith.truncf %26 : vector<8x8xf32> to vector<8x8xbf16>
    %28 = vector.extract_strided_slice %23 {offsets = [0, 0], sizes = [8, 8], strides = [1, 1]} : vector<8x32xf32> to vector<8x8xf32>
    %29 = arith.truncf %28 : vector<8x8xf32> to vector<8x8xbf16>
    %cst_24 = arith.constant dense<0.000000e+00> : vector<8x8xf32>
    %30 = tpu.matmul %25, %27, %cst_24 {dimension_numbers = #tpu.dot_dimension_numbers<[1], [1], [0], [0], [0, 0, 1, 0], [], []>} : vector<8x8xbf16>, vector<8x8xbf16>, vector<8x8xf32> -> vector<8x8xf32>
    %31 = arith.addf %30, %4 : vector<8x8xf32>
    %cst_25 = arith.constant dense<0xFF800000> : vector<8xf32>
    %32 = vector.multi_reduction <maximumf>, %31, %cst_25 [1] : vector<8x8xf32> to vector<8xf32>
    %33 = vector.shape_cast %32 : vector<8xf32> to vector<8x1xf32>
    %34 = vector.broadcast %33 : vector<8x1xf32> to vector<8x8xf32>
    %35 = arith.subf %31, %34 : vector<8x8xf32>
    %36 = math.exp %35 : vector<8x8xf32>
    %cst_26 = arith.constant dense<0.000000e+00> : vector<8xf32>
    %37 = vector.multi_reduction <add>, %36, %cst_26 [1] : vector<8x8xf32> to vector<8xf32>
    %38 = vector.shape_cast %37 : vector<8xf32> to vector<8x1xf32>
    %39 = tpu.reciprocal %38 {approx = true} : vector<8x1xf32> -> vector<8x1xf32>
    %40 = vector.broadcast %39 : vector<8x1xf32> to vector<8x8xf32>
    %41 = arith.mulf %36, %40 : vector<8x8xf32>
    %42 = arith.truncf %41 : vector<8x8xf32> to vector<8x8xbf16>
    %cst_27 = arith.constant dense<0.000000e+00> : vector<8x8xf32>
    %43 = tpu.matmul %42, %29, %cst_27 {dimension_numbers = #tpu.dot_dimension_numbers<[1], [0], [0], [1], [0, 0, 1, 1], [], []>} : vector<8x8xbf16>, vector<8x8xbf16>, vector<8x8xf32> -> vector<8x8xf32>
    %44 = vector.extract_strided_slice %17 {offsets = [0, 8], sizes = [8, 8], strides = [1, 1]} : vector<8x32xf32> to vector<8x8xf32>
    %45 = arith.truncf %44 : vector<8x8xf32> to vector<8x8xbf16>
    %46 = vector.extract_strided_slice %20 {offsets = [0, 8], sizes = [8, 8], strides = [1, 1]} : vector<8x32xf32> to vector<8x8xf32>
    %47 = arith.truncf %46 : vector<8x8xf32> to vector<8x8xbf16>
    %48 = vector.extract_strided_slice %23 {offsets = [0, 8], sizes = [8, 8], strides = [1, 1]} : vector<8x32xf32> to vector<8x8xf32>
    %49 = arith.truncf %48 : vector<8x8xf32> to vector<8x8xbf16>
    %cst_28 = arith.constant dense<0.000000e+00> : vector<8x8xf32>
    %50 = tpu.matmul %45, %47, %cst_28 {dimension_numbers = #tpu.dot_dimension_numbers<[1], [1], [0], [0], [0, 0, 1, 0], [], []>} : vector<8x8xbf16>, vector<8x8xbf16>, vector<8x8xf32> -> vector<8x8xf32>
    %51 = arith.addf %50, %4 : vector<8x8xf32>
    %cst_29 = arith.constant dense<0xFF800000> : vector<8xf32>
    %52 = vector.multi_reduction <maximumf>, %51, %cst_29 [1] : vector<8x8xf32> to vector<8xf32>
    %53 = vector.shape_cast %52 : vector<8xf32> to vector<8x1xf32>
    %54 = vector.broadcast %53 : vector<8x1xf32> to vector<8x8xf32>
    %55 = arith.subf %51, %54 : vector<8x8xf32>
    %56 = math.exp %55 : vector<8x8xf32>
    %cst_30 = arith.constant dense<0.000000e+00> : vector<8xf32>
    %57 = vector.multi_reduction <add>, %56, %cst_30 [1] : vector<8x8xf32> to vector<8xf32>
    %58 = vector.shape_cast %57 : vector<8xf32> to vector<8x1xf32>
    %59 = tpu.reciprocal %58 {approx = true} : vector<8x1xf32> -> vector<8x1xf32>
    %60 = vector.broadcast %59 : vector<8x1xf32> to vector<8x8xf32>
    %61 = arith.mulf %56, %60 : vector<8x8xf32>
    %62 = arith.truncf %61 : vector<8x8xf32> to vector<8x8xbf16>
    %cst_31 = arith.constant dense<0.000000e+00> : vector<8x8xf32>
    %63 = tpu.matmul %62, %49, %cst_31 {dimension_numbers = #tpu.dot_dimension_numbers<[1], [0], [0], [1], [0, 0, 1, 1], [], []>} : vector<8x8xbf16>, vector<8x8xbf16>, vector<8x8xf32> -> vector<8x8xf32>
    %64 = vector.extract_strided_slice %17 {offsets = [0, 16], sizes = [8, 8], strides = [1, 1]} : vector<8x32xf32> to vector<8x8xf32>
    %65 = arith.truncf %64 : vector<8x8xf32> to vector<8x8xbf16>
    %66 = vector.extract_strided_slice %20 {offsets = [0, 16], sizes = [8, 8], strides = [1, 1]} : vector<8x32xf32> to vector<8x8xf32>
    %67 = arith.truncf %66 : vector<8x8xf32> to vector<8x8xbf16>
    %68 = vector.extract_strided_slice %23 {offsets = [0, 16], sizes = [8, 8], strides = [1, 1]} : vector<8x32xf32> to vector<8x8xf32>
    %69 = arith.truncf %68 : vector<8x8xf32> to vector<8x8xbf16>
    %cst_32 = arith.constant dense<0.000000e+00> : vector<8x8xf32>
    %70 = tpu.matmul %65, %67, %cst_32 {dimension_numbers = #tpu.dot_dimension_numbers<[1], [1], [0], [0], [0, 0, 1, 0], [], []>} : vector<8x8xbf16>, vector<8x8xbf16>, vector<8x8xf32> -> vector<8x8xf32>
    %71 = arith.addf %70, %4 : vector<8x8xf32>
    %cst_33 = arith.constant dense<0xFF800000> : vector<8xf32>
    %72 = vector.multi_reduction <maximumf>, %71, %cst_33 [1] : vector<8x8xf32> to vector<8xf32>
    %73 = vector.shape_cast %72 : vector<8xf32> to vector<8x1xf32>
    %74 = vector.broadcast %73 : vector<8x1xf32> to vector<8x8xf32>
    %75 = arith.subf %71, %74 : vector<8x8xf32>
    %76 = math.exp %75 : vector<8x8xf32>
    %cst_34 = arith.constant dense<0.000000e+00> : vector<8xf32>
    %77 = vector.multi_reduction <add>, %76, %cst_34 [1] : vector<8x8xf32> to vector<8xf32>
    %78 = vector.shape_cast %77 : vector<8xf32> to vector<8x1xf32>
    %79 = tpu.reciprocal %78 {approx = true} : vector<8x1xf32> -> vector<8x1xf32>
    %80 = vector.broadcast %79 : vector<8x1xf32> to vector<8x8xf32>
    %81 = arith.mulf %76, %80 : vector<8x8xf32>
    %82 = arith.truncf %81 : vector<8x8xf32> to vector<8x8xbf16>
    %cst_35 = arith.constant dense<0.000000e+00> : vector<8x8xf32>
    %83 = tpu.matmul %82, %69, %cst_35 {dimension_numbers = #tpu.dot_dimension_numbers<[1], [0], [0], [1], [0, 0, 1, 1], [], []>} : vector<8x8xbf16>, vector<8x8xbf16>, vector<8x8xf32> -> vector<8x8xf32>
    %84 = vector.extract_strided_slice %17 {offsets = [0, 24], sizes = [8, 8], strides = [1, 1]} : vector<8x32xf32> to vector<8x8xf32>
    %85 = arith.truncf %84 : vector<8x8xf32> to vector<8x8xbf16>
    %86 = vector.extract_strided_slice %20 {offsets = [0, 24], sizes = [8, 8], strides = [1, 1]} : vector<8x32xf32> to vector<8x8xf32>
    %87 = arith.truncf %86 : vector<8x8xf32> to vector<8x8xbf16>
    %88 = vector.extract_strided_slice %23 {offsets = [0, 24], sizes = [8, 8], strides = [1, 1]} : vector<8x32xf32> to vector<8x8xf32>
    %89 = arith.truncf %88 : vector<8x8xf32> to vector<8x8xbf16>
    %cst_36 = arith.constant dense<0.000000e+00> : vector<8x8xf32>
    %90 = tpu.matmul %85, %87, %cst_36 {dimension_numbers = #tpu.dot_dimension_numbers<[1], [1], [0], [0], [0, 0, 1, 0], [], []>} : vector<8x8xbf16>, vector<8x8xbf16>, vector<8x8xf32> -> vector<8x8xf32>
    %91 = arith.addf %90, %4 : vector<8x8xf32>
    %cst_37 = arith.constant dense<0xFF800000> : vector<8xf32>
    %92 = vector.multi_reduction <maximumf>, %91, %cst_37 [1] : vector<8x8xf32> to vector<8xf32>
    %93 = vector.shape_cast %92 : vector<8xf32> to vector<8x1xf32>
    %94 = vector.broadcast %93 : vector<8x1xf32> to vector<8x8xf32>
    %95 = arith.subf %91, %94 : vector<8x8xf32>
    %96 = math.exp %95 : vector<8x8xf32>
    %cst_38 = arith.constant dense<0.000000e+00> : vector<8xf32>
    %97 = vector.multi_reduction <add>, %96, %cst_38 [1] : vector<8x8xf32> to vector<8xf32>
    %98 = vector.shape_cast %97 : vector<8xf32> to vector<8x1xf32>
    %99 = tpu.reciprocal %98 {approx = true} : vector<8x1xf32> -> vector<8x1xf32>
    %100 = vector.broadcast %99 : vector<8x1xf32> to vector<8x8xf32>
    %101 = arith.mulf %96, %100 : vector<8x8xf32>
    %102 = arith.truncf %101 : vector<8x8xf32> to vector<8x8xbf16>
    %cst_39 = arith.constant dense<0.000000e+00> : vector<8x8xf32>
    %103 = tpu.matmul %102, %89, %cst_39 {dimension_numbers = #tpu.dot_dimension_numbers<[1], [0], [0], [1], [0, 0, 1, 1], [], []>} : vector<8x8xbf16>, vector<8x8xbf16>, vector<8x8xf32> -> vector<8x8xf32>
    %104 = tpu.concatenate %43, %63, %83, %103 in 1 : vector<8x8xf32>, vector<8x8xf32>, vector<8x8xf32>, vector<8x8xf32> -> vector<8x32xf32>
    %105 = arith.truncf %104 : vector<8x32xf32> to vector<8x32xbf16>
    %cst_40 = arith.constant dense<0.000000e+00> : vector<8x32xf32>
    %106 = tpu.matmul %105, %8, %cst_40 {dimension_numbers = #tpu.dot_dimension_numbers<[1], [0], [0], [1], [0, 0, 1, 1], [], []>} : vector<8x32xbf16>, vector<32x32xbf16>, vector<8x32xf32> -> vector<8x32xf32>
    %107 = vector.broadcast %12 : vector<1x32xf32> to vector<8x32xf32>
    %108 = arith.addf %106, %107 : vector<8x32xf32>
    %109 = arith.addf %1, %108 : vector<8x32xf32>
    %c0_41 = arith.constant 0 : index
    %c0_42 = arith.constant 0 : index
    %110 = vector.load %arg13[%c0_41, %c0_42] : memref<1x32xf32, #tpu.memory_space<vmem>>, vector<1x32xf32>
    %c0_43 = arith.constant 0 : index
    %c0_44 = arith.constant 0 : index
    %111 = vector.load %arg14[%c0_43, %c0_44] : memref<1x32xf32, #tpu.memory_space<vmem>>, vector<1x32xf32>
    %cst_45 = arith.constant dense<0.000000e+00> : vector<8xf32>
    %112 = vector.multi_reduction <add>, %109, %cst_45 [1] : vector<8x32xf32> to vector<8xf32>
    %113 = vector.shape_cast %112 : vector<8xf32> to vector<8x1xf32>
    %cst_46 = arith.constant 3.200000e+01 : f32
    %114 = vector.broadcast %cst_46 : f32 to vector<8x1xf32>
    %115 = arith.divf %113, %114 : vector<8x1xf32>
    %116 = arith.mulf %109, %109 : vector<8x32xf32>
    %cst_47 = arith.constant dense<0.000000e+00> : vector<8xf32>
    %117 = vector.multi_reduction <add>, %116, %cst_47 [1] : vector<8x32xf32> to vector<8xf32>
    %118 = vector.shape_cast %117 : vector<8xf32> to vector<8x1xf32>
    %cst_48 = arith.constant 3.200000e+01 : f32
    %119 = vector.broadcast %cst_48 : f32 to vector<8x1xf32>
    %120 = arith.divf %118, %119 : vector<8x1xf32>
    %121 = arith.mulf %115, %115 : vector<8x1xf32>
    %122 = arith.subf %120, %121 : vector<8x1xf32>
    %cst_49 = arith.constant 0.000000e+00 : f32
    %123 = vector.broadcast %cst_49 : f32 to vector<8x1xf32>
    %124 = arith.maximumf %122, %123 : vector<8x1xf32>
    %125 = vector.broadcast %115 : vector<8x1xf32> to vector<8x32xf32>
    %126 = arith.subf %109, %125 : vector<8x32xf32>
    %cst_50 = arith.constant 9.99999974E-6 : f32
    %127 = vector.broadcast %cst_50 : f32 to vector<8x1xf32>
    %128 = arith.addf %124, %127 : vector<8x1xf32>
    %129 = math.rsqrt %128 : vector<8x1xf32>
    %130 = vector.broadcast %129 : vector<8x1xf32> to vector<8x32xf32>
    %131 = arith.mulf %126, %130 : vector<8x32xf32>
    %132 = vector.broadcast %110 : vector<1x32xf32> to vector<8x32xf32>
    %133 = arith.mulf %131, %132 : vector<8x32xf32>
    %134 = vector.broadcast %111 : vector<1x32xf32> to vector<8x32xf32>
    %135 = arith.addf %133, %134 : vector<8x32xf32>
    %c0_51 = arith.constant 0 : index
    %c0_52 = arith.constant 0 : index
    %c0_53 = arith.constant 0 : index
    %136 = vector.load %arg2[%c0_51, %c0_52, %c0_53] : memref<1x8x32xf32, #tpu.memory_space<vmem>>, vector<1x8x32xf32>
    %137 = vector.shape_cast %136 : vector<1x8x32xf32> to vector<8x32xf32>
    %138 = arith.truncf %137 : vector<8x32xf32> to vector<8x32xbf16>
    %139 = arith.truncf %135 : vector<8x32xf32> to vector<8x32xbf16>
    %c0_54 = arith.constant 0 : index
    %c0_55 = arith.constant 0 : index
    %c0_56 = arith.constant 0 : index
    %140 = vector.load %arg4[%c0_54, %c0_55, %c0_56] : memref<1x8x8xf32, #tpu.memory_space<vmem>>, vector<1x8x8xf32>
    %141 = vector.shape_cast %140 : vector<1x8x8xf32> to vector<8x8xf32>
    %c0_57 = arith.constant 0 : index
    %c0_58 = arith.constant 0 : index
    %142 = vector.load %arg15[%c0_57, %c0_58] : memref<32x32xbf16, #tpu.memory_space<vmem>>, vector<32x32xbf16>
    %c0_59 = arith.constant 0 : index
    %c0_60 = arith.constant 0 : index
    %143 = vector.load %arg16[%c0_59, %c0_60] : memref<32x32xbf16, #tpu.memory_space<vmem>>, vector<32x32xbf16>
    %c0_61 = arith.constant 0 : index
    %c0_62 = arith.constant 0 : index
    %144 = vector.load %arg17[%c0_61, %c0_62] : memref<32x32xbf16, #tpu.memory_space<vmem>>, vector<32x32xbf16>
    %c0_63 = arith.constant 0 : index
    %c0_64 = arith.constant 0 : index
    %145 = vector.load %arg18[%c0_63, %c0_64] : memref<32x32xbf16, #tpu.memory_space<vmem>>, vector<32x32xbf16>
    %c0_65 = arith.constant 0 : index
    %c0_66 = arith.constant 0 : index
    %146 = vector.load %arg19[%c0_65, %c0_66] : memref<1x32xf32, #tpu.memory_space<vmem>>, vector<1x32xf32>
    %c0_67 = arith.constant 0 : index
    %c0_68 = arith.constant 0 : index
    %147 = vector.load %arg20[%c0_67, %c0_68] : memref<1x32xf32, #tpu.memory_space<vmem>>, vector<1x32xf32>
    %c0_69 = arith.constant 0 : index
    %c0_70 = arith.constant 0 : index
    %148 = vector.load %arg21[%c0_69, %c0_70] : memref<1x32xf32, #tpu.memory_space<vmem>>, vector<1x32xf32>
    %c0_71 = arith.constant 0 : index
    %c0_72 = arith.constant 0 : index
    %149 = vector.load %arg22[%c0_71, %c0_72] : memref<1x32xf32, #tpu.memory_space<vmem>>, vector<1x32xf32>
    %cst_73 = arith.constant dense<0.000000e+00> : vector<8x32xf32>
    %150 = tpu.matmul %139, %142, %cst_73 {dimension_numbers = #tpu.dot_dimension_numbers<[1], [0], [0], [1], [0, 0, 1, 1], [], []>} : vector<8x32xbf16>, vector<32x32xbf16>, vector<8x32xf32> -> vector<8x32xf32>
    %151 = vector.broadcast %146 : vector<1x32xf32> to vector<8x32xf32>
    %152 = arith.addf %150, %151 : vector<8x32xf32>
    %cst_74 = arith.constant 0.353553385 : f32
    %153 = vector.broadcast %cst_74 : f32 to vector<8x32xf32>
    %154 = arith.mulf %152, %153 : vector<8x32xf32>
    %cst_75 = arith.constant dense<0.000000e+00> : vector<8x32xf32>
    %155 = tpu.matmul %138, %143, %cst_75 {dimension_numbers = #tpu.dot_dimension_numbers<[1], [0], [0], [1], [0, 0, 1, 1], [], []>} : vector<8x32xbf16>, vector<32x32xbf16>, vector<8x32xf32> -> vector<8x32xf32>
    %156 = vector.broadcast %147 : vector<1x32xf32> to vector<8x32xf32>
    %157 = arith.addf %155, %156 : vector<8x32xf32>
    %cst_76 = arith.constant dense<0.000000e+00> : vector<8x32xf32>
    %158 = tpu.matmul %138, %144, %cst_76 {dimension_numbers = #tpu.dot_dimension_numbers<[1], [0], [0], [1], [0, 0, 1, 1], [], []>} : vector<8x32xbf16>, vector<32x32xbf16>, vector<8x32xf32> -> vector<8x32xf32>
    %159 = vector.broadcast %148 : vector<1x32xf32> to vector<8x32xf32>
    %160 = arith.addf %158, %159 : vector<8x32xf32>
    %161 = vector.extract_strided_slice %154 {offsets = [0, 0], sizes = [8, 8], strides = [1, 1]} : vector<8x32xf32> to vector<8x8xf32>
    %162 = arith.truncf %161 : vector<8x8xf32> to vector<8x8xbf16>
    %163 = vector.extract_strided_slice %157 {offsets = [0, 0], sizes = [8, 8], strides = [1, 1]} : vector<8x32xf32> to vector<8x8xf32>
    %164 = arith.truncf %163 : vector<8x8xf32> to vector<8x8xbf16>
    %165 = vector.extract_strided_slice %160 {offsets = [0, 0], sizes = [8, 8], strides = [1, 1]} : vector<8x32xf32> to vector<8x8xf32>
    %166 = arith.truncf %165 : vector<8x8xf32> to vector<8x8xbf16>
    %cst_77 = arith.constant dense<0.000000e+00> : vector<8x8xf32>
    %167 = tpu.matmul %162, %164, %cst_77 {dimension_numbers = #tpu.dot_dimension_numbers<[1], [1], [0], [0], [0, 0, 1, 0], [], []>} : vector<8x8xbf16>, vector<8x8xbf16>, vector<8x8xf32> -> vector<8x8xf32>
    %168 = arith.addf %167, %141 : vector<8x8xf32>
    %cst_78 = arith.constant dense<0xFF800000> : vector<8xf32>
    %169 = vector.multi_reduction <maximumf>, %168, %cst_78 [1] : vector<8x8xf32> to vector<8xf32>
    %170 = vector.shape_cast %169 : vector<8xf32> to vector<8x1xf32>
    %171 = vector.broadcast %170 : vector<8x1xf32> to vector<8x8xf32>
    %172 = arith.subf %168, %171 : vector<8x8xf32>
    %173 = math.exp %172 : vector<8x8xf32>
    %cst_79 = arith.constant dense<0.000000e+00> : vector<8xf32>
    %174 = vector.multi_reduction <add>, %173, %cst_79 [1] : vector<8x8xf32> to vector<8xf32>
    %175 = vector.shape_cast %174 : vector<8xf32> to vector<8x1xf32>
    %176 = tpu.reciprocal %175 {approx = true} : vector<8x1xf32> -> vector<8x1xf32>
    %177 = vector.broadcast %176 : vector<8x1xf32> to vector<8x8xf32>
    %178 = arith.mulf %173, %177 : vector<8x8xf32>
    %179 = arith.truncf %178 : vector<8x8xf32> to vector<8x8xbf16>
    %cst_80 = arith.constant dense<0.000000e+00> : vector<8x8xf32>
    %180 = tpu.matmul %179, %166, %cst_80 {dimension_numbers = #tpu.dot_dimension_numbers<[1], [0], [0], [1], [0, 0, 1, 1], [], []>} : vector<8x8xbf16>, vector<8x8xbf16>, vector<8x8xf32> -> vector<8x8xf32>
    %181 = vector.extract_strided_slice %154 {offsets = [0, 8], sizes = [8, 8], strides = [1, 1]} : vector<8x32xf32> to vector<8x8xf32>
    %182 = arith.truncf %181 : vector<8x8xf32> to vector<8x8xbf16>
    %183 = vector.extract_strided_slice %157 {offsets = [0, 8], sizes = [8, 8], strides = [1, 1]} : vector<8x32xf32> to vector<8x8xf32>
    %184 = arith.truncf %183 : vector<8x8xf32> to vector<8x8xbf16>
    %185 = vector.extract_strided_slice %160 {offsets = [0, 8], sizes = [8, 8], strides = [1, 1]} : vector<8x32xf32> to vector<8x8xf32>
    %186 = arith.truncf %185 : vector<8x8xf32> to vector<8x8xbf16>
    %cst_81 = arith.constant dense<0.000000e+00> : vector<8x8xf32>
    %187 = tpu.matmul %182, %184, %cst_81 {dimension_numbers = #tpu.dot_dimension_numbers<[1], [1], [0], [0], [0, 0, 1, 0], [], []>} : vector<8x8xbf16>, vector<8x8xbf16>, vector<8x8xf32> -> vector<8x8xf32>
    %188 = arith.addf %187, %141 : vector<8x8xf32>
    %cst_82 = arith.constant dense<0xFF800000> : vector<8xf32>
    %189 = vector.multi_reduction <maximumf>, %188, %cst_82 [1] : vector<8x8xf32> to vector<8xf32>
    %190 = vector.shape_cast %189 : vector<8xf32> to vector<8x1xf32>
    %191 = vector.broadcast %190 : vector<8x1xf32> to vector<8x8xf32>
    %192 = arith.subf %188, %191 : vector<8x8xf32>
    %193 = math.exp %192 : vector<8x8xf32>
    %cst_83 = arith.constant dense<0.000000e+00> : vector<8xf32>
    %194 = vector.multi_reduction <add>, %193, %cst_83 [1] : vector<8x8xf32> to vector<8xf32>
    %195 = vector.shape_cast %194 : vector<8xf32> to vector<8x1xf32>
    %196 = tpu.reciprocal %195 {approx = true} : vector<8x1xf32> -> vector<8x1xf32>
    %197 = vector.broadcast %196 : vector<8x1xf32> to vector<8x8xf32>
    %198 = arith.mulf %193, %197 : vector<8x8xf32>
    %199 = arith.truncf %198 : vector<8x8xf32> to vector<8x8xbf16>
    %cst_84 = arith.constant dense<0.000000e+00> : vector<8x8xf32>
    %200 = tpu.matmul %199, %186, %cst_84 {dimension_numbers = #tpu.dot_dimension_numbers<[1], [0], [0], [1], [0, 0, 1, 1], [], []>} : vector<8x8xbf16>, vector<8x8xbf16>, vector<8x8xf32> -> vector<8x8xf32>
    %201 = vector.extract_strided_slice %154 {offsets = [0, 16], sizes = [8, 8], strides = [1, 1]} : vector<8x32xf32> to vector<8x8xf32>
    %202 = arith.truncf %201 : vector<8x8xf32> to vector<8x8xbf16>
    %203 = vector.extract_strided_slice %157 {offsets = [0, 16], sizes = [8, 8], strides = [1, 1]} : vector<8x32xf32> to vector<8x8xf32>
    %204 = arith.truncf %203 : vector<8x8xf32> to vector<8x8xbf16>
    %205 = vector.extract_strided_slice %160 {offsets = [0, 16], sizes = [8, 8], strides = [1, 1]} : vector<8x32xf32> to vector<8x8xf32>
    %206 = arith.truncf %205 : vector<8x8xf32> to vector<8x8xbf16>
    %cst_85 = arith.constant dense<0.000000e+00> : vector<8x8xf32>
    %207 = tpu.matmul %202, %204, %cst_85 {dimension_numbers = #tpu.dot_dimension_numbers<[1], [1], [0], [0], [0, 0, 1, 0], [], []>} : vector<8x8xbf16>, vector<8x8xbf16>, vector<8x8xf32> -> vector<8x8xf32>
    %208 = arith.addf %207, %141 : vector<8x8xf32>
    %cst_86 = arith.constant dense<0xFF800000> : vector<8xf32>
    %209 = vector.multi_reduction <maximumf>, %208, %cst_86 [1] : vector<8x8xf32> to vector<8xf32>
    %210 = vector.shape_cast %209 : vector<8xf32> to vector<8x1xf32>
    %211 = vector.broadcast %210 : vector<8x1xf32> to vector<8x8xf32>
    %212 = arith.subf %208, %211 : vector<8x8xf32>
    %213 = math.exp %212 : vector<8x8xf32>
    %cst_87 = arith.constant dense<0.000000e+00> : vector<8xf32>
    %214 = vector.multi_reduction <add>, %213, %cst_87 [1] : vector<8x8xf32> to vector<8xf32>
    %215 = vector.shape_cast %214 : vector<8xf32> to vector<8x1xf32>
    %216 = tpu.reciprocal %215 {approx = true} : vector<8x1xf32> -> vector<8x1xf32>
    %217 = vector.broadcast %216 : vector<8x1xf32> to vector<8x8xf32>
    %218 = arith.mulf %213, %217 : vector<8x8xf32>
    %219 = arith.truncf %218 : vector<8x8xf32> to vector<8x8xbf16>
    %cst_88 = arith.constant dense<0.000000e+00> : vector<8x8xf32>
    %220 = tpu.matmul %219, %206, %cst_88 {dimension_numbers = #tpu.dot_dimension_numbers<[1], [0], [0], [1], [0, 0, 1, 1], [], []>} : vector<8x8xbf16>, vector<8x8xbf16>, vector<8x8xf32> -> vector<8x8xf32>
    %221 = vector.extract_strided_slice %154 {offsets = [0, 24], sizes = [8, 8], strides = [1, 1]} : vector<8x32xf32> to vector<8x8xf32>
    %222 = arith.truncf %221 : vector<8x8xf32> to vector<8x8xbf16>
    %223 = vector.extract_strided_slice %157 {offsets = [0, 24], sizes = [8, 8], strides = [1, 1]} : vector<8x32xf32> to vector<8x8xf32>
    %224 = arith.truncf %223 : vector<8x8xf32> to vector<8x8xbf16>
    %225 = vector.extract_strided_slice %160 {offsets = [0, 24], sizes = [8, 8], strides = [1, 1]} : vector<8x32xf32> to vector<8x8xf32>
    %226 = arith.truncf %225 : vector<8x8xf32> to vector<8x8xbf16>
    %cst_89 = arith.constant dense<0.000000e+00> : vector<8x8xf32>
    %227 = tpu.matmul %222, %224, %cst_89 {dimension_numbers = #tpu.dot_dimension_numbers<[1], [1], [0], [0], [0, 0, 1, 0], [], []>} : vector<8x8xbf16>, vector<8x8xbf16>, vector<8x8xf32> -> vector<8x8xf32>
    %228 = arith.addf %227, %141 : vector<8x8xf32>
    %cst_90 = arith.constant dense<0xFF800000> : vector<8xf32>
    %229 = vector.multi_reduction <maximumf>, %228, %cst_90 [1] : vector<8x8xf32> to vector<8xf32>
    %230 = vector.shape_cast %229 : vector<8xf32> to vector<8x1xf32>
    %231 = vector.broadcast %230 : vector<8x1xf32> to vector<8x8xf32>
    %232 = arith.subf %228, %231 : vector<8x8xf32>
    %233 = math.exp %232 : vector<8x8xf32>
    %cst_91 = arith.constant dense<0.000000e+00> : vector<8xf32>
    %234 = vector.multi_reduction <add>, %233, %cst_91 [1] : vector<8x8xf32> to vector<8xf32>
    %235 = vector.shape_cast %234 : vector<8xf32> to vector<8x1xf32>
    %236 = tpu.reciprocal %235 {approx = true} : vector<8x1xf32> -> vector<8x1xf32>
    %237 = vector.broadcast %236 : vector<8x1xf32> to vector<8x8xf32>
    %238 = arith.mulf %233, %237 : vector<8x8xf32>
    %239 = arith.truncf %238 : vector<8x8xf32> to vector<8x8xbf16>
    %cst_92 = arith.constant dense<0.000000e+00> : vector<8x8xf32>
    %240 = tpu.matmul %239, %226, %cst_92 {dimension_numbers = #tpu.dot_dimension_numbers<[1], [0], [0], [1], [0, 0, 1, 1], [], []>} : vector<8x8xbf16>, vector<8x8xbf16>, vector<8x8xf32> -> vector<8x8xf32>
    %241 = tpu.concatenate %180, %200, %220, %240 in 1 : vector<8x8xf32>, vector<8x8xf32>, vector<8x8xf32>, vector<8x8xf32> -> vector<8x32xf32>
    %242 = arith.truncf %241 : vector<8x32xf32> to vector<8x32xbf16>
    %cst_93 = arith.constant dense<0.000000e+00> : vector<8x32xf32>
    %243 = tpu.matmul %242, %145, %cst_93 {dimension_numbers = #tpu.dot_dimension_numbers<[1], [0], [0], [1], [0, 0, 1, 1], [], []>} : vector<8x32xbf16>, vector<32x32xbf16>, vector<8x32xf32> -> vector<8x32xf32>
    %244 = vector.broadcast %149 : vector<1x32xf32> to vector<8x32xf32>
    %245 = arith.addf %243, %244 : vector<8x32xf32>
    %246 = arith.addf %135, %245 : vector<8x32xf32>
    %c0_94 = arith.constant 0 : index
    %c0_95 = arith.constant 0 : index
    %247 = vector.load %arg23[%c0_94, %c0_95] : memref<1x32xf32, #tpu.memory_space<vmem>>, vector<1x32xf32>
    %c0_96 = arith.constant 0 : index
    %c0_97 = arith.constant 0 : index
    %248 = vector.load %arg24[%c0_96, %c0_97] : memref<1x32xf32, #tpu.memory_space<vmem>>, vector<1x32xf32>
    %cst_98 = arith.constant dense<0.000000e+00> : vector<8xf32>
    %249 = vector.multi_reduction <add>, %246, %cst_98 [1] : vector<8x32xf32> to vector<8xf32>
    %250 = vector.shape_cast %249 : vector<8xf32> to vector<8x1xf32>
    %cst_99 = arith.constant 3.200000e+01 : f32
    %251 = vector.broadcast %cst_99 : f32 to vector<8x1xf32>
    %252 = arith.divf %250, %251 : vector<8x1xf32>
    %253 = arith.mulf %246, %246 : vector<8x32xf32>
    %cst_100 = arith.constant dense<0.000000e+00> : vector<8xf32>
    %254 = vector.multi_reduction <add>, %253, %cst_100 [1] : vector<8x32xf32> to vector<8xf32>
    %255 = vector.shape_cast %254 : vector<8xf32> to vector<8x1xf32>
    %cst_101 = arith.constant 3.200000e+01 : f32
    %256 = vector.broadcast %cst_101 : f32 to vector<8x1xf32>
    %257 = arith.divf %255, %256 : vector<8x1xf32>
    %258 = arith.mulf %252, %252 : vector<8x1xf32>
    %259 = arith.subf %257, %258 : vector<8x1xf32>
    %cst_102 = arith.constant 0.000000e+00 : f32
    %260 = vector.broadcast %cst_102 : f32 to vector<8x1xf32>
    %261 = arith.maximumf %259, %260 : vector<8x1xf32>
    %262 = vector.broadcast %252 : vector<8x1xf32> to vector<8x32xf32>
    %263 = arith.subf %246, %262 : vector<8x32xf32>
    %cst_103 = arith.constant 9.99999974E-6 : f32
    %264 = vector.broadcast %cst_103 : f32 to vector<8x1xf32>
    %265 = arith.addf %261, %264 : vector<8x1xf32>
    %266 = math.rsqrt %265 : vector<8x1xf32>
    %267 = vector.broadcast %266 : vector<8x1xf32> to vector<8x32xf32>
    %268 = arith.mulf %263, %267 : vector<8x32xf32>
    %269 = vector.broadcast %247 : vector<1x32xf32> to vector<8x32xf32>
    %270 = arith.mulf %268, %269 : vector<8x32xf32>
    %271 = vector.broadcast %248 : vector<1x32xf32> to vector<8x32xf32>
    %272 = arith.addf %270, %271 : vector<8x32xf32>
    %c0_104 = arith.constant 0 : index
    %c0_105 = arith.constant 0 : index
    %273 = vector.load %arg25[%c0_104, %c0_105] : memref<32x64xbf16, #tpu.memory_space<vmem>>, vector<32x64xbf16>
    %c0_106 = arith.constant 0 : index
    %c0_107 = arith.constant 0 : index
    %274 = vector.load %arg26[%c0_106, %c0_107] : memref<1x64xf32, #tpu.memory_space<vmem>>, vector<1x64xf32>
    %c0_108 = arith.constant 0 : index
    %c0_109 = arith.constant 0 : index
    %275 = vector.load %arg27[%c0_108, %c0_109] : memref<64x32xbf16, #tpu.memory_space<vmem>>, vector<64x32xbf16>
    %c0_110 = arith.constant 0 : index
    %c0_111 = arith.constant 0 : index
    %276 = vector.load %arg28[%c0_110, %c0_111] : memref<1x32xf32, #tpu.memory_space<vmem>>, vector<1x32xf32>
    %277 = arith.truncf %272 : vector<8x32xf32> to vector<8x32xbf16>
    %cst_112 = arith.constant dense<0.000000e+00> : vector<8x64xf32>
    %278 = tpu.matmul %277, %273, %cst_112 {dimension_numbers = #tpu.dot_dimension_numbers<[1], [0], [0], [1], [0, 0, 1, 1], [], []>} : vector<8x32xbf16>, vector<32x64xbf16>, vector<8x64xf32> -> vector<8x64xf32>
    %279 = vector.broadcast %274 : vector<1x64xf32> to vector<8x64xf32>
    %280 = arith.addf %278, %279 : vector<8x64xf32>
    %cst_113 = arith.constant 0.000000e+00 : f32
    %281 = vector.broadcast %cst_113 : f32 to vector<8x64xf32>
    %282 = arith.maximumf %280, %281 : vector<8x64xf32>
    %283 = arith.truncf %282 : vector<8x64xf32> to vector<8x64xbf16>
    %cst_114 = arith.constant dense<0.000000e+00> : vector<8x32xf32>
    %284 = tpu.matmul %283, %275, %cst_114 {dimension_numbers = #tpu.dot_dimension_numbers<[1], [0], [0], [1], [0, 0, 1, 1], [], []>} : vector<8x64xbf16>, vector<64x32xbf16>, vector<8x32xf32> -> vector<8x32xf32>
    %285 = vector.broadcast %276 : vector<1x32xf32> to vector<8x32xf32>
    %286 = arith.addf %284, %285 : vector<8x32xf32>
    %287 = arith.addf %272, %286 : vector<8x32xf32>
    %c0_115 = arith.constant 0 : index
    %c0_116 = arith.constant 0 : index
    %288 = vector.load %arg29[%c0_115, %c0_116] : memref<1x32xf32, #tpu.memory_space<vmem>>, vector<1x32xf32>
    %c0_117 = arith.constant 0 : index
    %c0_118 = arith.constant 0 : index
    %289 = vector.load %arg30[%c0_117, %c0_118] : memref<1x32xf32, #tpu.memory_space<vmem>>, vector<1x32xf32>
    %cst_119 = arith.constant dense<0.000000e+00> : vector<8xf32>
    %290 = vector.multi_reduction <add>, %287, %cst_119 [1] : vector<8x32xf32> to vector<8xf32>
    %291 = vector.shape_cast %290 : vector<8xf32> to vector<8x1xf32>
    %cst_120 = arith.constant 3.200000e+01 : f32
    %292 = vector.broadcast %cst_120 : f32 to vector<8x1xf32>
    %293 = arith.divf %291, %292 : vector<8x1xf32>
    %294 = arith.mulf %287, %287 : vector<8x32xf32>
    %cst_121 = arith.constant dense<0.000000e+00> : vector<8xf32>
    %295 = vector.multi_reduction <add>, %294, %cst_121 [1] : vector<8x32xf32> to vector<8xf32>
    %296 = vector.shape_cast %295 : vector<8xf32> to vector<8x1xf32>
    %cst_122 = arith.constant 3.200000e+01 : f32
    %297 = vector.broadcast %cst_122 : f32 to vector<8x1xf32>
    %298 = arith.divf %296, %297 : vector<8x1xf32>
    %299 = arith.mulf %293, %293 : vector<8x1xf32>
    %300 = arith.subf %298, %299 : vector<8x1xf32>
    %cst_123 = arith.constant 0.000000e+00 : f32
    %301 = vector.broadcast %cst_123 : f32 to vector<8x1xf32>
    %302 = arith.maximumf %300, %301 : vector<8x1xf32>
    %303 = vector.broadcast %293 : vector<8x1xf32> to vector<8x32xf32>
    %304 = arith.subf %287, %303 : vector<8x32xf32>
    %cst_124 = arith.constant 9.99999974E-6 : f32
    %305 = vector.broadcast %cst_124 : f32 to vector<8x1xf32>
    %306 = arith.addf %302, %305 : vector<8x1xf32>
    %307 = math.rsqrt %306 : vector<8x1xf32>
    %308 = vector.broadcast %307 : vector<8x1xf32> to vector<8x32xf32>
    %309 = arith.mulf %304, %308 : vector<8x32xf32>
    %310 = vector.broadcast %288 : vector<1x32xf32> to vector<8x32xf32>
    %311 = arith.mulf %309, %310 : vector<8x32xf32>
    %312 = vector.broadcast %289 : vector<1x32xf32> to vector<8x32xf32>
    %313 = arith.addf %311, %312 : vector<8x32xf32>
    %c0_125 = arith.constant 0 : index
    %c0_126 = arith.constant 0 : index
    %c0_127 = arith.constant 0 : index
    %314 = vector.load %arg31[%c0_125, %c0_126, %c0_127] : memref<1x8x32xf32, #tpu.memory_space<vmem>>, vector<1x8x32xf32>
    %315 = vector.shape_cast %314 : vector<1x8x32xf32> to vector<8x32xf32>
    %316 = vector.shape_cast %313 : vector<8x32xf32> to vector<1x8x32xf32>
    tpu.vector_store %arg31[%c0_125, %c0_126, %c0_127], %316 {strides = array<i32>} : memref<1x8x32xf32, #tpu.memory_space<vmem>>, vector<1x8x32xf32>,
    return
  }
  func.func @transform_0(%arg0: i32) -> (i32, i32, i32) {
    %c0_i32 = arith.constant 0 : i32
    %c0_i32_0 = arith.constant 0 : i32
    %c0_i32_1 = arith.constant 0 : i32
    return %arg0, %c0_i32, %c0_i32_0 : i32, i32, i32
  }
  func.func @transform_1(%arg0: i32) -> (i32, i32, i32) {
    %c0_i32 = arith.constant 0 : i32
    %c0_i32_0 = arith.constant 0 : i32
    %c0_i32_1 = arith.constant 0 : i32
    return %arg0, %c0_i32, %c0_i32_0 : i32, i32, i32
  }
  func.func @transform_2(%arg0: i32) -> (i32, i32, i32) {
    %c0_i32 = arith.constant 0 : i32
    %c0_i32_0 = arith.constant 0 : i32
    %c0_i32_1 = arith.constant 0 : i32
    return %arg0, %c0_i32, %c0_i32_0 : i32, i32, i32
  }
  func.func @transform_3(%arg0: i32) -> (i32, i32, i32) {
    %c0_i32 = arith.constant 0 : i32
    %c0_i32_0 = arith.constant 0 : i32
    %c0_i32_1 = arith.constant 0 : i32
    return %arg0, %c0_i32, %c0_i32_0 : i32, i32, i32
  }
  func.func @transform_4(%arg0: i32) -> (i32, i32) {
    %c0_i32 = arith.constant 0 : i32
    %c0_i32_0 = arith.constant 0 : i32
    %c0_i32_1 = arith.constant 0 : i32
    return %c0_i32, %c0_i32_0 : i32, i32
  }
  func.func @transform_5(%arg0: i32) -> (i32, i32) {
    %c0_i32 = arith.constant 0 : i32
    %c0_i32_0 = arith.constant 0 : i32
    %c0_i32_1 = arith.constant 0 : i32
    return %c0_i32, %c0_i32_0 : i32, i32
  }
  func.func @transform_6(%arg0: i32) -> (i32, i32) {
    %c0_i32 = arith.constant 0 : i32
    %c0_i32_0 = arith.constant 0 : i32
    %c0_i32_1 = arith.constant 0 : i32
    return %c0_i32, %c0_i32_0 : i32, i32
  }
  func.func @transform_7(%arg0: i32) -> (i32, i32) {
    %c0_i32 = arith.constant 0 : i32
    %c0_i32_0 = arith.constant 0 : i32
    %c0_i32_1 = arith.constant 0 : i32
    return %c0_i32, %c0_i32_0 : i32, i32
  }
  func.func @transform_8(%arg0: i32) -> (i32, i32) {
    %c0_i32 = arith.constant 0 : i32
    %c0_i32_0 = arith.constant 0 : i32
    %c0_i32_1 = arith.constant 0 : i32
    return %c0_i32, %c0_i32_0 : i32, i32
  }
  func.func @transform_9(%arg0: i32) -> (i32, i32) {
    %c0_i32 = arith.constant 0 : i32
    %c0_i32_0 = arith.constant 0 : i32
    %c0_i32_1 = arith.constant 0 : i32
    return %c0_i32, %c0_i32_0 : i32, i32
  }
  func.func @transform_10(%arg0: i32) -> (i32, i32) {
    %c0_i32 = arith.constant 0 : i32
    %c0_i32_0 = arith.constant 0 : i32
    %c0_i32_1 = arith.constant 0 : i32
    return %c0_i32, %c0_i32_0 : i32, i32
  }
  func.func @transform_11(%arg0: i32) -> (i32, i32) {
    %c0_i32 = arith.constant 0 : i32
    %c0_i32_0 = arith.constant 0 : i32
    %c0_i32_1 = arith.constant 0 : i32
    return %c0_i32, %c0_i32_0 : i32, i32
  }
  func.func @transform_12(%arg0: i32) -> (i32, i32) {
    %c0_i32 = arith.constant 0 : i32
    %c0_i32_0 = arith.constant 0 : i32
    %c0_i32_1 = arith.constant 0 : i32
    return %c0_i32, %c0_i32_0 : i32, i32
  }
  func.func @transform_13(%arg0: i32) -> (i32, i32) {
    %c0_i32 = arith.constant 0 : i32
    %c0_i32_0 = arith.constant 0 : i32
    %c0_i32_1 = arith.constant 0 : i32
    return %c0_i32, %c0_i32_0 : i32, i32
  }
  func.func @transform_14(%arg0: i32) -> (i32, i32) {
    %c0_i32 = arith.constant 0 : i32
    %c0_i32_0 = arith.constant 0 : i32
    %c0_i32_1 = arith.constant 0 : i32
    return %c0_i32, %c0_i32_0 : i32, i32
  }
  func.func @transform_15(%arg0: i32) -> (i32, i32) {
    %c0_i32 = arith.constant 0 : i32
    %c0_i32_0 = arith.constant 0 : i32
    %c0_i32_1 = arith.constant 0 : i32
    return %c0_i32, %c0_i32_0 : i32, i32
  }
  func.func @transform_16(%arg0: i32) -> (i32, i32) {
    %c0_i32 = arith.constant 0 : i32
    %c0_i32_0 = arith.constant 0 : i32
    %c0_i32_1 = arith.constant 0 : i32
    return %c0_i32, %c0_i32_0 : i32, i32
  }
  func.func @transform_17(%arg0: i32) -> (i32, i32) {
    %c0_i32 = arith.constant 0 : i32
    %c0_i32_0 = arith.constant 0 : i32
    %c0_i32_1 = arith.constant 0 : i32
    return %c0_i32, %c0_i32_0 : i32, i32
  }
  func.func @transform_18(%arg0: i32) -> (i32, i32) {
    %c0_i32 = arith.constant 0 : i32
    %c0_i32_0 = arith.constant 0 : i32
    %c0_i32_1 = arith.constant 0 : i32
    return %c0_i32, %c0_i32_0 : i32, i32
  }
  func.func @transform_19(%arg0: i32) -> (i32, i32) {
    %c0_i32 = arith.constant 0 : i32
    %c0_i32_0 = arith.constant 0 : i32
    %c0_i32_1 = arith.constant 0 : i32
    return %c0_i32, %c0_i32_0 : i32, i32
  }
  func.func @transform_20(%arg0: i32) -> (i32, i32) {
    %c0_i32 = arith.constant 0 : i32
    %c0_i32_0 = arith.constant 0 : i32
    %c0_i32_1 = arith.constant 0 : i32
    return %c0_i32, %c0_i32_0 : i32, i32
  }
  func.func @transform_21(%arg0: i32) -> (i32, i32) {
    %c0_i32 = arith.constant 0 : i32
    %c0_i32_0 = arith.constant 0 : i32
    %c0_i32_1 = arith.constant 0 : i32
    return %c0_i32, %c0_i32_0 : i32, i32
  }
  func.func @transform_22(%arg0: i32) -> (i32, i32) {
    %c0_i32 = arith.constant 0 : i32
    %c0_i32_0 = arith.constant 0 : i32
    %c0_i32_1 = arith.constant 0 : i32
    return %c0_i32, %c0_i32_0 : i32, i32
  }
  func.func @transform_23(%arg0: i32) -> (i32, i32) {
    %c0_i32 = arith.constant 0 : i32
    %c0_i32_0 = arith.constant 0 : i32
    %c0_i32_1 = arith.constant 0 : i32
    return %c0_i32, %c0_i32_0 : i32, i32
  }
  func.func @transform_24(%arg0: i32) -> (i32, i32) {
    %c0_i32 = arith.constant 0 : i32
    %c0_i32_0 = arith.constant 0 : i32
    %c0_i32_1 = arith.constant 0 : i32
    return %c0_i32, %c0_i32_0 : i32, i32
  }
  func.func @transform_25(%arg0: i32) -> (i32, i32) {
    %c0_i32 = arith.constant 0 : i32
    %c0_i32_0 = arith.constant 0 : i32
    %c0_i32_1 = arith.constant 0 : i32
    return %c0_i32, %c0_i32_0 : i32, i32
  }
  func.func @transform_26(%arg0: i32) -> (i32, i32) {
    %c0_i32 = arith.constant 0 : i32
    %c0_i32_0 = arith.constant 0 : i32
    %c0_i32_1 = arith.constant 0 : i32
    return %c0_i32, %c0_i32_0 : i32, i32
  }
  func.func @transform_27(%arg0: i32) -> (i32, i32) {
    %c0_i32 = arith.constant 0 : i32
    %c0_i32_0 = arith.constant 0 : i32
    %c0_i32_1 = arith.constant 0 : i32
    return %c0_i32, %c0_i32_0 : i32, i32
  }
  func.func @transform_28(%arg0: i32) -> (i32, i32) {
    %c0_i32 = arith.constant 0 : i32
    %c0_i32_0 = arith.constant 0 : i32
    %c0_i32_1 = arith.constant 0 : i32
    return %c0_i32, %c0_i32_0 : i32, i32
  }
  func.func @transform_29(%arg0: i32) -> (i32, i32) {
    %c0_i32 = arith.constant 0 : i32
    %c0_i32_0 = arith.constant 0 : i32
    %c0_i32_1 = arith.constant 0 : i32
    return %c0_i32, %c0_i32_0 : i32, i32
  }
  func.func @transform_30(%arg0: i32) -> (i32, i32, i32) {
    %c0_i32 = arith.constant 0 : i32
    %c0_i32_0 = arith.constant 0 : i32
    %c0_i32_1 = arith.constant 0 : i32
    return %arg0, %c0_i32, %c0_i32_0 : i32, i32, i32
  }
}

</mosaic_0001>

<llo_original>
// kernel: seq2seq_forward.9
$region0: #{seq2seq_forward.9}
  #allocation0 [shape = 'u32[]', space=smem, size = 0x4, offset = 0x4, fixed_abs, tag = 'smem constant byte address 0x4 - core index']
  #allocation1 [shape = 'u32[144,128]{1,0:T(1,128)}', space=vmem, size = 0x12000, scoped, tag = 'internal scratch']
  %s0 = inlined_call_operand.vmem [shape: f32[2,8,32], index: 0, kind: input, shape index: {}]
  %s1 = inlined_call_operand.vmem [shape: bf16[32,128], index: 1, kind: input, shape index: {}]
  %s2 = inlined_call_operand.vmem [shape: f32[1,128], index: 2, kind: input, shape index: {}]
  %s3 = inlined_call_operand.hbm [shape: f32[2,8,128], index: 3, kind: output, shape index: {}]
  %s4 = sld [smem:[#allocation0]]
  $region45: #{seq2seq_forward.9} parent=0
    _
  %s6 = ssub.s32 1, %s4
  %s7 = scalar_select 0, %s6, %s4
  $region1: #{seq2seq_forward.9} parent=0
    #allocation2 [shape = 'u8[8192]{0}', space=vmem, size = 0x2000, scoped, tag = 'output window, operand 0']
    #allocation3 [shape = 's32[2]{0}', space=sflag, size = 0x8, scoped, tag = 'scoped memory for seq2seq_forward.9']
    %8 = vsyncpa [#allocation3], 0
    %s9 = scalar_lea.sflag [#allocation3], 1
    %10 = vsyncpa %s9, 0
    loop: start=0, step=1, limit=4
    $region2: #{seq2seq_forward.9} parent=1 // loop_pre_header
      _
    $region3: #{seq2seq_forward.9} parent=1 // loop_header
      %s12 = sphi 0, %s16
      %p13 = scmp.ge.s32.totalorder %s12, 4
      %s22 = sphi 0, %s24
      %s25 = sphi 0, %s22
      %s26 = sphi 0, %s25
      %s42 = sphi 0, %s26
      %s46 = sphi 0, %s46
      %s48 = sphi 0, %s46
      %s49 = sphi 0, %s48
      %s63 = sphi 0, %s49
      %s67 = sphi 0, %s67
      %s69 = sphi 0, %s67
      %s70 = sphi 0, %s69
      %s84 = sphi 0, %s70
      %s90 = sphi 0, %s92
      %s93 = sphi 0, %s90
      %s94 = sphi 0, %s93
      %s110 = sphi 0, %s94
    $region4: #{seq2seq_forward.9} parent=1 // loop_header_branch
      %15 = sbr.rel (%p13) target = $region8
    $region5: #{seq2seq_forward.9} parent=1 // loop_body
      %s17 = ssub.s32 %s12, 1
      %s18 = ssub.s32 %s12, 2
      %s19 = sadd.s32 %s12, 1
      %s20 = ssub.s32 %s12, %s19
      %p21 = scmp.eq.s32.totalorder %s20, 0
      %s23 = sadd.s32 %s22, 1
      %s24 = scalar_select %p21, %s22, %s23
      %p27 = pneg %p21
      %p28 = scmp.eq.s32.totalorder %s12, 1
      %p29 = por %p27, %p28
      %p30 = scmp.ne.s32.totalorder %s22, %s25
      %p31 = scmp.eq.s32.totalorder %s12, 0
      %p32 = por %p30, %p31
      %p33 = scmp.ne.s32.totalorder %s22, %s25
      %p34 = scmp.eq.s32.totalorder %s17, 1
      %p35 = por %p33, %p34
      %p36 = scmp.ne.s32.totalorder %s25, %s26
      %p37 = scmp.eq.s32.totalorder %s17, 0
      %p38 = por %p36, %p37
      %p39 = scmp.ne.s32.totalorder %s25, %s26
      %p40 = scmp.eq.s32.totalorder %s18, 1
      %p41 = por %p39, %p40
      %p43 = scmp.ne.s32.totalorder %s26, %s42
      %p44 = scmp.eq.s32.totalorder %s18, 0
      %p45 = por %p43, %p44
      %s47 = sadd.s32 %s46, 1
      %p50 = scmp.eq.s32.totalorder %s12, 1
      %p51 = scmp.ne.s32.totalorder %s46, %s48
      %p52 = scmp.eq.s32.totalorder %s12, 0
      %p53 = por %p51, %p52
      %p54 = scmp.ne.s32.totalorder %s46, %s48
      %p55 = scmp.eq.s32.totalorder %s17, 1
      %p56 = por %p54, %p55
      %p57 = scmp.ne.s32.totalorder %s48, %s49
      %p58 = scmp.eq.s32.totalorder %s17, 0
      %p59 = por %p57, %p58
      %p60 = scmp.ne.s32.totalorder %s48, %s49
      %p61 = scmp.eq.s32.totalorder %s18, 1
      %p62 = por %p60, %p61
      %p64 = scmp.ne.s32.totalorder %s49, %s63
      %p65 = scmp.eq.s32.totalorder %s18, 0
      %p66 = por %p64, %p65
      %s68 = sadd.s32 %s67, 1
      %p71 = scmp.eq.s32.totalorder %s12, 1
      %p72 = scmp.ne.s32.totalorder %s67, %s69
      %p73 = scmp.eq.s32.totalorder %s12, 0
      %p74 = por %p72, %p73
      %p75 = scmp.ne.s32.totalorder %s67, %s69
      %p76 = scmp.eq.s32.totalorder %s17, 1
      %p77 = por %p75, %p76
      %p78 = scmp.ne.s32.totalorder %s69, %s70
      %p79 = scmp.eq.s32.totalorder %s17, 0
      %p80 = por %p78, %p79
      %p81 = scmp.ne.s32.totalorder %s69, %s70
      %p82 = scmp.eq.s32.totalorder %s18, 1
      %p83 = por %p81, %p82
      %p85 = scmp.ne.s32.totalorder %s70, %s84
      %p86 = scmp.eq.s32.totalorder %s18, 0
      %p87 = por %p85, %p86
      %s88 = ssub.s32 %s12, %s19
      %p89 = scmp.eq.s32.totalorder %s88, 0
      %s91 = sadd.s32 %s90, 1
      %s92 = scalar_select %p89, %s90, %s91
      %p95 = pneg %p89
      %p96 = scmp.eq.s32.totalorder %s12, 1
      %p97 = por %p95, %p96
      %p98 = scmp.ne.s32.totalorder %s90, %s93
      %p99 = scmp.eq.s32.totalorder %s12, 0
      %p100 = por %p98, %p99
      %p101 = scmp.ne.s32.totalorder %s90, %s93
      %p102 = scmp.eq.s32.totalorder %s17, 1
      %p103 = por %p101, %p102
      %p104 = scmp.ne.s32.totalorder %s93, %s94
      %p105 = scmp.eq.s32.totalorder %s17, 0
      %p106 = por %p104, %p105
      %p107 = scmp.ne.s32.totalorder %s93, %s94
      %p108 = scmp.eq.s32.totalorder %s18, 1
      %p109 = por %p107, %p108
      %p111 = scmp.ne.s32.totalorder %s94, %s110
      %p112 = scmp.eq.s32.totalorder %s18, 0
      %p113 = por %p111, %p112
      %p114 = scmp.le.s32.totalorder 1, %s12
      %p115 = scmp.lt.s32.totalorder %s12, 3
      %p116 = pnand %p114, %p115
      %p117 = pneg %p116
      // Predicated region
      $region9: #{seq2seq_forward.9} parent=5 // pred_check
        _
      $region10: #{seq2seq_forward.9} parent=5 // pred_check_branch
        %119 = sbr.rel (%p116) target = $region12
      $region11: #{seq2seq_forward.9} parent=5 // pred_region
        %s120 = ssub.s32 %s12, 1
        // Predicated region
        $region13: #{seq2seq_forward.9} parent=11 // pred_check
          %p121 = pneg %p59
        $region14: #{seq2seq_forward.9} parent=11 // pred_check_branch
          %123 = sbr.rel (%p121) target = $region16
        $region15: #{seq2seq_forward.9} parent=11 // pred_region
          _
        $region16: #{seq2seq_forward.9} parent=11 // pred_fallthru
          _
        // Predicated region
        $region17: #{seq2seq_forward.9} parent=11 // pred_check
          %p124 = pneg %p80
        $region18: #{seq2seq_forward.9} parent=11 // pred_check_branch
          %126 = sbr.rel (%p124) target = $region20
        $region19: #{seq2seq_forward.9} parent=11 // pred_region
          _
        $region20: #{seq2seq_forward.9} parent=11 // pred_fallthru
          _
      $region12: #{seq2seq_forward.9} parent=5 // pred_fallthru
        _
      %p127 = scmp.lt.s32.totalorder %s12, 2
      // Predicated region
      $region21: #{seq2seq_forward.9} parent=5 // pred_check
        %p128 = pneg %p127
      $region22: #{seq2seq_forward.9} parent=5 // pred_check_branch
        %130 = sbr.rel (%p128) target = $region24
      $region23: #{seq2seq_forward.9} parent=5 // pred_region
        // Predicated region
        $region25: #{seq2seq_forward.9} parent=23 // pred_check
          %p131 = pneg %p32
        $region26: #{seq2seq_forward.9} parent=23 // pred_check_branch
          %133 = sbr.rel (%p131) target = $region28
        $region27: #{seq2seq_forward.9} parent=23 // pred_region
          %p134 = scmp.lt.s32.totalorder %s12, 1
          %s135 = scalar_select %p134, %s12, 1
          %s136 = smul.addr %s135, 8
          %s137 = scalar_lea.vmem %s0, %s136
        $region28: #{seq2seq_forward.9} parent=23 // pred_fallthru
          _
      $region24: #{seq2seq_forward.9} parent=5 // pred_fallthru
        _
      %p138 = scmp.le.s32.totalorder 1, %s12
      %p139 = scmp.lt.s32.totalorder %s12, 3
      %p140 = pnand %p138, %p139
      %p141 = pneg %p140
      // Predicated region
      $region29: #{seq2seq_forward.9} parent=5 // pred_check
        _
      $region30: #{seq2seq_forward.9} parent=5 // pred_check_branch
        %143 = sbr.rel (%p140) target = $region32
      $region31: #{seq2seq_forward.9} parent=5 // pred_region
        %s144 = ssub.s32 %s12, 1
        %p145 = scmp.lt.s32.totalorder %s17, 1
        %s146 = scalar_select %p145, %s17, 1
        %s147 = smul.addr %s146, 8
        %s148 = scalar_lea.vmem %s0, %s147
        %p149 = pneg %p38
        %p150 = pneg %p35
        %p151 = pneg %p59
        %p152 = pneg %p56
        %p153 = pneg %p80
        %p154 = pneg %p77
        %p155 = pneg %p106
        %p156 = pneg %p103
        %s157 = sand.u32 %s93, 1
        %s158 = scalar_lea.sflag [#allocation3], %s157
        %s159 = sand.u32 %s93, 1
        %s160 = smul.addr %s159, 8
        %s161 = scalar_lea.vmem [#allocation2], %s160
        %p162 = scmp.lt.s32.totalorder %s17, 1
        %s163 = scalar_select %p162, %s17, 1
        %s164 = smul.addr %s163, 8
        %s165 = scalar_lea.vmem %s0, %s164
        %v167 = vld [vmem:[%s165] sm:$0xff]
        %v168 = vpack.c.bf16 %v167, %v167
        %v169 = vld [vmem:[%s1] sm:$0xf]
        %v170 = vld [vmem:[%s1 + $0x4] sm:$0xf]
        %v171 = vld [vmem:[%s1 + $0x8] sm:$0xf]
        %v172 = vld [vmem:[%s1 + $0xc] sm:$0xf]
        %v173 = vld [vmem:[%s2] sm:$0x1]
        %v175 = vlaneseq
        %v176 = vshrl.u32 %v175, 7
        %v177 = vsub.s32 0, %v176
        %v178 = vrot.slane %v173, %v177
        %v184 = vunpack.c.l.b16 %v169
        %v185 = vunpack.c.l.b16 %v170
        %v186 = vunpack.c.l.b16 %v171
        %v187 = vunpack.c.l.b16 %v172
        %v188 = vpack.c.b16 %v185, %v184
        %v189 = vpack.c.b16 %v187, %v186
        %vm192 = vcmask 261120
        %v194 = vsel %vm192, %v168, 0
        %196 = vmatprep.subr.bf16.mxu0 0
        %197 = vmatpush1.bf16.msra.mxu0 %v188
        %198 = vmatprep.subr.bf16.mxu0 0
        %199 = vmatpush1.bf16.msra.mxu0 %v189
        %200 = vmatprep.subr.bf16.mxu0 0
        %201 = vmatpush1.bf16.msra.mxu0 0
        %202 = vmatprep.subr.bf16.mxu0 0
        %203 = vmatpush1.bf16.msra.mxu0 0
        %204 = vmatprep.subr.bf16.mxu0 0
        %205 = vmatpush1.bf16.msra.mxu0 0
        %206 = vmatprep.subr.bf16.mxu0 0
        %207 = vmatpush1.bf16.msra.mxu0 0
        %208 = vmatprep.subr.bf16.mxu0 0
        %209 = vmatpush1.bf16.msra.mxu0 0
        %210 = vmatprep.subr.bf16.mxu0 0
        %211 = vmatpush1.bf16.msra.mxu0 0
        %212 = vmatprep.subr.bf16.mxu0 0
        %213 = vmatpush1.bf16.msra.mxu0 0
        %214 = vmatprep.subr.bf16.mxu0 0
        %215 = vmatpush1.bf16.msra.mxu0 0
        %216 = vmatprep.subr.bf16.mxu0 0
        %217 = vmatpush1.bf16.msra.mxu0 0
        %218 = vmatprep.subr.bf16.mxu0 0
        %219 = vmatpush1.bf16.msra.mxu0 0
        %220 = vmatprep.subr.bf16.mxu0 0
        %221 = vmatpush1.bf16.msra.mxu0 0
        %222 = vmatprep.subr.bf16.mxu0 0
        %223 = vmatpush1.bf16.msra.mxu0 0
        %224 = vmatprep.subr.bf16.mxu0 0
        %225 = vmatpush1.bf16.msra.mxu0 0
        %226 = vmatprep.subr.bf16.mxu0 0
        %227 = vmatpush1.bf16.msra.mxu0 0
        %228 = vmatprep.mubr.bf16.mxu0 0
        %229 = vmatmul.mubr.bf16.gmra.mrb[0].mxu0 %v194
        %v230 = vpop.f32.mrb[0].mxu0
        %v231 = vadd.f32 %v178, %v230
        %v232 = vpop.f32.mrb[0].mxu0
        %v233 = vpop.f32.mrb[0].mxu0
        %v234 = vpop.f32.mrb[0].mxu0
        %235 = vdwg.mxu0
        %236 = vst [vmem:[%s161] sm:$0xff] %v231
        %s237 = sand.u32 %s93, 1
        %s238 = scalar_lea.sflag [#allocation3], %s237
        %s239 = sand.u32 %s93, 1
        %s240 = smul.addr %s239, 8
        %s241 = scalar_lea.vmem [#allocation2], %s240
        // Predicated region
        $region33: #{seq2seq_forward.9} parent=31 // pred_check
          %p242 = pneg %p103
        $region34: #{seq2seq_forward.9} parent=31 // pred_check_branch
          %244 = sbr.rel (%p242) target = $region36
        $region35: #{seq2seq_forward.9} parent=31 // pred_region
          %s246 = ssub.s32 128, 128
          %247 = vsyncadd %s238, %s246
          %s248 = smul.addr %s17, 128
          %s249 = scalar_lea.hbm %s3, %s248
          %s251 = sshll.u32 %s241, 4
          %s252 = int_to_ptr.vmem [resolvable:$true] %s251
          %254 = dma.vmem_to_hbm [thread:$0]  %s252, 128, %s249, %s238
        $region36: #{seq2seq_forward.9} parent=31 // pred_fallthru
          _
      $region32: #{seq2seq_forward.9} parent=5 // pred_fallthru
        _
      %p255 = scmp.le.s32.totalorder 2, %s12
      // Predicated region
      $region37: #{seq2seq_forward.9} parent=5 // pred_check
        %p256 = pneg %p255
      $region38: #{seq2seq_forward.9} parent=5 // pred_check_branch
        %258 = sbr.rel (%p256) target = $region40
      $region39: #{seq2seq_forward.9} parent=5 // pred_region
        %s259 = ssub.s32 %s12, 2
        // Predicated region
        $region41: #{seq2seq_forward.9} parent=39 // pred_check
          %p260 = pneg %p109
        $region42: #{seq2seq_forward.9} parent=39 // pred_check_branch
          %262 = sbr.rel (%p260) target = $region44
        $region43: #{seq2seq_forward.9} parent=39 // pred_region
          %s263 = sand.u32 %s94, 1
          %s264 = scalar_lea.sflag [#allocation3], %s263
          %s265 = sand.u32 %s94, 1
          %s266 = smul.addr %s265, 8
          %s267 = scalar_lea.vmem [#allocation2], %s266
          %268 = dma.done %s264, 128
        $region44: #{seq2seq_forward.9} parent=39 // pred_fallthru
          _
      $region40: #{seq2seq_forward.9} parent=5 // pred_fallthru
        _
    $region6: #{seq2seq_forward.9} parent=1 // loop_footer
      %s16 = sadd.s32 1, %s12
    $region7: #{seq2seq_forward.9} parent=1 // loop_footer_branch
      %11 = sbr.rel target = $region3
    $region8: #{seq2seq_forward.9} parent=1 // loop_exit
      _
    %269 = vsyncpa [#allocation3], 1
    %s270 = scalar_lea.sflag [#allocation3], 1
    %271 = vsyncpa %s270, 1

// kernel: seq2seq_forward.5
$region0: #{seq2seq_forward.5}
  #allocation0 [shape = 'u32[]', space=smem, size = 0x4, offset = 0x4, fixed_abs, tag = 'smem constant byte address 0x4 - core index']
  #allocation1 [shape = 'u32[144,128]{1,0:T(1,128)}', space=vmem, size = 0x12000, scoped, tag = 'internal scratch']
  %s0 = inlined_call_operand.vmem [shape: f32[2,8,32], index: 0, kind: input, shape index: {}]
  %s1 = inlined_call_operand.vmem [shape: f32[2,8,8], index: 1, kind: input, shape index: {}]
  %s2 = inlined_call_operand.vmem [shape: bf16[32,32], index: 2, kind: input, shape index: {}]
  %s3 = inlined_call_operand.vmem [shape: bf16[32,32], index: 3, kind: input, shape index: {}]
  %s4 = inlined_call_operand.vmem [shape: bf16[32,32], index: 4, kind: input, shape index: {}]
  %s5 = inlined_call_operand.vmem [shape: bf16[32,32], index: 5, kind: input, shape index: {}]
  %s6 = inlined_call_operand.vmem [shape: f32[1,32], index: 6, kind: input, shape index: {}]
  %s7 = inlined_call_operand.vmem [shape: f32[1,32], index: 7, kind: input, shape index: {}]
  %s8 = inlined_call_operand.vmem [shape: f32[1,32], index: 8, kind: input, shape index: {}]
  %s9 = inlined_call_operand.vmem [shape: f32[1,32], index: 9, kind: input, shape index: {}]
  %s10 = inlined_call_operand.vmem [shape: f32[1,32], index: 10, kind: input, shape index: {}]
  %s11 = inlined_call_operand.vmem [shape: f32[1,32], index: 11, kind: input, shape index: {}]
  %s12 = inlined_call_operand.vmem [shape: bf16[32,64], index: 12, kind: input, shape index: {}]
  %s13 = inlined_call_operand.vmem [shape: f32[1,64], index: 13, kind: input, shape index: {}]
  %s14 = inlined_call_operand.vmem [shape: bf16[64,32], index: 14, kind: input, shape index: {}]
  %s15 = inlined_call_operand.vmem [shape: f32[1,32], index: 15, kind: input, shape index: {}]
  %s16 = inlined_call_operand.vmem [shape: f32[1,32], index: 16, kind: input, shape index: {}]
  %s17 = inlined_call_operand.vmem [shape: f32[1,32], index: 17, kind: input, shape index: {}]
  %s18 = inlined_call_operand.vmem [shape: f32[2,8,32], index: 18, kind: output, shape index: {}]
  %s19 = sld [smem:[#allocation0]]
  $region105: #{seq2seq_forward.5} parent=0
    _
  %s21 = ssub.s32 1, %s19
  %s22 = scalar_select 0, %s21, %s19
  loop: start=0, step=1, limit=4
  $region2: #{seq2seq_forward.5} parent=0 // loop_pre_header
    _
  $region3: #{seq2seq_forward.5} parent=0 // loop_header
    %s24 = sphi 0, %s28
    %p25 = scmp.ge.s32.totalorder %s24, 4
    %s34 = sphi 0, %s36
    %s37 = sphi 0, %s34
    %s38 = sphi 0, %s37
    %s54 = sphi 0, %s38
    %s60 = sphi 0, %s62
    %s63 = sphi 0, %s60
    %s64 = sphi 0, %s63
    %s80 = sphi 0, %s64
    %s84 = sphi 0, %s84
    %s86 = sphi 0, %s84
    %s87 = sphi 0, %s86
    %s101 = sphi 0, %s87
    %s105 = sphi 0, %s105
    %s107 = sphi 0, %s105
    %s108 = sphi 0, %s107
    %s122 = sphi 0, %s108
    %s126 = sphi 0, %s126
    %s128 = sphi 0, %s126
    %s129 = sphi 0, %s128
    %s143 = sphi 0, %s129
    %s147 = sphi 0, %s147
    %s149 = sphi 0, %s147
    %s150 = sphi 0, %s149
    %s164 = sphi 0, %s150
    %s168 = sphi 0, %s168
    %s170 = sphi 0, %s168
    %s171 = sphi 0, %s170
    %s185 = sphi 0, %s171
    %s189 = sphi 0, %s189
    %s191 = sphi 0, %s189
    %s192 = sphi 0, %s191
    %s206 = sphi 0, %s192
    %s210 = sphi 0, %s210
    %s212 = sphi 0, %s210
    %s213 = sphi 0, %s212
    %s227 = sphi 0, %s213
    %s231 = sphi 0, %s231
    %s233 = sphi 0, %s231
    %s234 = sphi 0, %s233
    %s248 = sphi 0, %s234
    %s252 = sphi 0, %s252
    %s254 = sphi 0, %s252
    %s255 = sphi 0, %s254
    %s269 = sphi 0, %s255
    %s273 = sphi 0, %s273
    %s275 = sphi 0, %s273
    %s276 = sphi 0, %s275
    %s290 = sphi 0, %s276
    %s294 = sphi 0, %s294
    %s296 = sphi 0, %s294
    %s297 = sphi 0, %s296
    %s311 = sphi 0, %s297
    %s315 = sphi 0, %s315
    %s317 = sphi 0, %s315
    %s318 = sphi 0, %s317
    %s332 = sphi 0, %s318
    %s336 = sphi 0, %s336
    %s338 = sphi 0, %s336
    %s339 = sphi 0, %s338
    %s353 = sphi 0, %s339
    %s357 = sphi 0, %s357
    %s359 = sphi 0, %s357
    %s360 = sphi 0, %s359
    %s374 = sphi 0, %s360
    %s378 = sphi 0, %s378
    %s380 = sphi 0, %s378
    %s381 = sphi 0, %s380
    %s395 = sphi 0, %s381
    %s399 = sphi 0, %s399
    %s401 = sphi 0, %s399
    %s402 = sphi 0, %s401
    %s416 = sphi 0, %s402
    %s422 = sphi 0, %s424
    %s425 = sphi 0, %s422
    %s426 = sphi 0, %s425
    %s442 = sphi 0, %s426
  $region4: #{seq2seq_forward.5} parent=0 // loop_header_branch
    %27 = sbr.rel (%p25) target = $region8
  $region5: #{seq2seq_forward.5} parent=0 // loop_body
    %s29 = ssub.s32 %s24, 1
    %s30 = ssub.s32 %s24, 2
    %s31 = sadd.s32 %s24, 1
    %s32 = ssub.s32 %s24, %s31
    %p33 = scmp.eq.s32.totalorder %s32, 0
    %s35 = sadd.s32 %s34, 1
    %s36 = scalar_select %p33, %s34, %s35
    %p39 = pneg %p33
    %p40 = scmp.eq.s32.totalorder %s24, 1
    %p41 = por %p39, %p40
    %p42 = scmp.ne.s32.totalorder %s34, %s37
    %p43 = scmp.eq.s32.totalorder %s24, 0
    %p44 = por %p42, %p43
    %p45 = scmp.ne.s32.totalorder %s34, %s37
    %p46 = scmp.eq.s32.totalorder %s29, 1
    %p47 = por %p45, %p46
    %p48 = scmp.ne.s32.totalorder %s37, %s38
    %p49 = scmp.eq.s32.totalorder %s29, 0
    %p50 = por %p48, %p49
    %p51 = scmp.ne.s32.totalorder %s37, %s38
    %p52 = scmp.eq.s32.totalorder %s30, 1
    %p53 = por %p51, %p52
    %p55 = scmp.ne.s32.totalorder %s38, %s54
    %p56 = scmp.eq.s32.totalorder %s30, 0
    %p57 = por %p55, %p56
    %s58 = ssub.s32 %s24, %s31
    %p59 = scmp.eq.s32.totalorder %s58, 0
    %s61 = sadd.s32 %s60, 1
    %s62 = scalar_select %p59, %s60, %s61
    %p65 = pneg %p59
    %p66 = scmp.eq.s32.totalorder %s24, 1
    %p67 = por %p65, %p66
    %p68 = scmp.ne.s32.totalorder %s60, %s63
    %p69 = scmp.eq.s32.totalorder %s24, 0
    %p70 = por %p68, %p69
    %p71 = scmp.ne.s32.totalorder %s60, %s63
    %p72 = scmp.eq.s32.totalorder %s29, 1
    %p73 = por %p71, %p72
    %p74 = scmp.ne.s32.totalorder %s63, %s64
    %p75 = scmp.eq.s32.totalorder %s29, 0
    %p76 = por %p74, %p75
    %p77 = scmp.ne.s32.totalorder %s63, %s64
    %p78 = scmp.eq.s32.totalorder %s30, 1
    %p79 = por %p77, %p78
    %p81 = scmp.ne.s32.totalorder %s64, %s80
    %p82 = scmp.eq.s32.totalorder %s30, 0
    %p83 = por %p81, %p82
    %s85 = sadd.s32 %s84, 1
    %p88 = scmp.eq.s32.totalorder %s24, 1
    %p89 = scmp.ne.s32.totalorder %s84, %s86
    %p90 = scmp.eq.s32.totalorder %s24, 0
    %p91 = por %p89, %p90
    %p92 = scmp.ne.s32.totalorder %s84, %s86
    %p93 = scmp.eq.s32.totalorder %s29, 1
    %p94 = por %p92, %p93
    %p95 = scmp.ne.s32.totalorder %s86, %s87
    %p96 = scmp.eq.s32.totalorder %s29, 0
    %p97 = por %p95, %p96
    %p98 = scmp.ne.s32.totalorder %s86, %s87
    %p99 = scmp.eq.s32.totalorder %s30, 1
    %p100 = por %p98, %p99
    %p102 = scmp.ne.s32.totalorder %s87, %s101
    %p103 = scmp.eq.s32.totalorder %s30, 0
    %p104 = por %p102, %p103
    %s106 = sadd.s32 %s105, 1
    %p109 = scmp.eq.s32.totalorder %s24, 1
    %p110 = scmp.ne.s32.totalorder %s105, %s107
    %p111 = scmp.eq.s32.totalorder %s24, 0
    %p112 = por %p110, %p111
    %p113 = scmp.ne.s32.totalorder %s105, %s107
    %p114 = scmp.eq.s32.totalorder %s29, 1
    %p115 = por %p113, %p114
    %p116 = scmp.ne.s32.totalorder %s107, %s108
    %p117 = scmp.eq.s32.totalorder %s29, 0
    %p118 = por %p116, %p117
    %p119 = scmp.ne.s32.totalorder %s107, %s108
    %p120 = scmp.eq.s32.totalorder %s30, 1
    %p121 = por %p119, %p120
    %p123 = scmp.ne.s32.totalorder %s108, %s122
    %p124 = scmp.eq.s32.totalorder %s30, 0
    %p125 = por %p123, %p124
    %s127 = sadd.s32 %s126, 1
    %p130 = scmp.eq.s32.totalorder %s24, 1
    %p131 = scmp.ne.s32.totalorder %s126, %s128
    %p132 = scmp.eq.s32.totalorder %s24, 0
    %p133 = por %p131, %p132
    %p134 = scmp.ne.s32.totalorder %s126, %s128
    %p135 = scmp.eq.s32.totalorder %s29, 1
    %p136 = por %p134, %p135
    %p137 = scmp.ne.s32.totalorder %s128, %s129
    %p138 = scmp.eq.s32.totalorder %s29, 0
    %p139 = por %p137, %p138
    %p140 = scmp.ne.s32.totalorder %s128, %s129
    %p141 = scmp.eq.s32.totalorder %s30, 1
    %p142 = por %p140, %p141
    %p144 = scmp.ne.s32.totalorder %s129, %s143
    %p145 = scmp.eq.s32.totalorder %s30, 0
    %p146 = por %p144, %p145
    %s148 = sadd.s32 %s147, 1
    %p151 = scmp.eq.s32.totalorder %s24, 1
    %p152 = scmp.ne.s32.totalorder %s147, %s149
    %p153 = scmp.eq.s32.totalorder %s24, 0
    %p154 = por %p152, %p153
    %p155 = scmp.ne.s32.totalorder %s147, %s149
    %p156 = scmp.eq.s32.totalorder %s29, 1
    %p157 = por %p155, %p156
    %p158 = scmp.ne.s32.totalorder %s149, %s150
    %p159 = scmp.eq.s32.totalorder %s29, 0
    %p160 = por %p158, %p159
    %p161 = scmp.ne.s32.totalorder %s149, %s150
    %p162 = scmp.eq.s32.totalorder %s30, 1
    %p163 = por %p161, %p162
    %p165 = scmp.ne.s32.totalorder %s150, %s164
    %p166 = scmp.eq.s32.totalorder %s30, 0
    %p167 = por %p165, %p166
    %s169 = sadd.s32 %s168, 1
    %p172 = scmp.eq.s32.totalorder %s24, 1
    %p173 = scmp.ne.s32.totalorder %s168, %s170
    %p174 = scmp.eq.s32.totalorder %s24, 0
    %p175 = por %p173, %p174
    %p176 = scmp.ne.s32.totalorder %s168, %s170
    %p177 = scmp.eq.s32.totalorder %s29, 1
    %p178 = por %p176, %p177
    %p179 = scmp.ne.s32.totalorder %s170, %s171
    %p180 = scmp.eq.s32.totalorder %s29, 0
    %p181 = por %p179, %p180
    %p182 = scmp.ne.s32.totalorder %s170, %s171
    %p183 = scmp.eq.s32.totalorder %s30, 1
    %p184 = por %p182, %p183
    %p186 = scmp.ne.s32.totalorder %s171, %s185
    %p187 = scmp.eq.s32.totalorder %s30, 0
    %p188 = por %p186, %p187
    %s190 = sadd.s32 %s189, 1
    %p193 = scmp.eq.s32.totalorder %s24, 1
    %p194 = scmp.ne.s32.totalorder %s189, %s191
    %p195 = scmp.eq.s32.totalorder %s24, 0
    %p196 = por %p194, %p195
    %p197 = scmp.ne.s32.totalorder %s189, %s191
    %p198 = scmp.eq.s32.totalorder %s29, 1
    %p199 = por %p197, %p198
    %p200 = scmp.ne.s32.totalorder %s191, %s192
    %p201 = scmp.eq.s32.totalorder %s29, 0
    %p202 = por %p200, %p201
    %p203 = scmp.ne.s32.totalorder %s191, %s192
    %p204 = scmp.eq.s32.totalorder %s30, 1
    %p205 = por %p203, %p204
    %p207 = scmp.ne.s32.totalorder %s192, %s206
    %p208 = scmp.eq.s32.totalorder %s30, 0
    %p209 = por %p207, %p208
    %s211 = sadd.s32 %s210, 1
    %p214 = scmp.eq.s32.totalorder %s24, 1
    %p215 = scmp.ne.s32.totalorder %s210, %s212
    %p216 = scmp.eq.s32.totalorder %s24, 0
    %p217 = por %p215, %p216
    %p218 = scmp.ne.s32.totalorder %s210, %s212
    %p219 = scmp.eq.s32.totalorder %s29, 1
    %p220 = por %p218, %p219
    %p221 = scmp.ne.s32.totalorder %s212, %s213
    %p222 = scmp.eq.s32.totalorder %s29, 0
    %p223 = por %p221, %p222
    %p224 = scmp.ne.s32.totalorder %s212, %s213
    %p225 = scmp.eq.s32.totalorder %s30, 1
    %p226 = por %p224, %p225
    %p228 = scmp.ne.s32.totalorder %s213, %s227
    %p229 = scmp.eq.s32.totalorder %s30, 0
    %p230 = por %p228, %p229
    %s232 = sadd.s32 %s231, 1
    %p235 = scmp.eq.s32.totalorder %s24, 1
    %p236 = scmp.ne.s32.totalorder %s231, %s233
    %p237 = scmp.eq.s32.totalorder %s24, 0
    %p238 = por %p236, %p237
    %p239 = scmp.ne.s32.totalorder %s231, %s233
    %p240 = scmp.eq.s32.totalorder %s29, 1
    %p241 = por %p239, %p240
    %p242 = scmp.ne.s32.totalorder %s233, %s234
    %p243 = scmp.eq.s32.totalorder %s29, 0
    %p244 = por %p242, %p243
    %p245 = scmp.ne.s32.totalorder %s233, %s234
    %p246 = scmp.eq.s32.totalorder %s30, 1
    %p247 = por %p245, %p246
    %p249 = scmp.ne.s32.totalorder %s234, %s248
    %p250 = scmp.eq.s32.totalorder %s30, 0
    %p251 = por %p249, %p250
    %s253 = sadd.s32 %s252, 1
    %p256 = scmp.eq.s32.totalorder %s24, 1
    %p257 = scmp.ne.s32.totalorder %s252, %s254
    %p258 = scmp.eq.s32.totalorder %s24, 0
    %p259 = por %p257, %p258
    %p260 = scmp.ne.s32.totalorder %s252, %s254
    %p261 = scmp.eq.s32.totalorder %s29, 1
    %p262 = por %p260, %p261
    %p263 = scmp.ne.s32.totalorder %s254, %s255
    %p264 = scmp.eq.s32.totalorder %s29, 0
    %p265 = por %p263, %p264
    %p266 = scmp.ne.s32.totalorder %s254, %s255
    %p267 = scmp.eq.s32.totalorder %s30, 1
    %p268 = por %p266, %p267
    %p270 = scmp.ne.s32.totalorder %s255, %s269
    %p271 = scmp.eq.s32.totalorder %s30, 0
    %p272 = por %p270, %p271
    %s274 = sadd.s32 %s273, 1
    %p277 = scmp.eq.s32.totalorder %s24, 1
    %p278 = scmp.ne.s32.totalorder %s273, %s275
    %p279 = scmp.eq.s32.totalorder %s24, 0
    %p280 = por %p278, %p279
    %p281 = scmp.ne.s32.totalorder %s273, %s275
    %p282 = scmp.eq.s32.totalorder %s29, 1
    %p283 = por %p281, %p282
    %p284 = scmp.ne.s32.totalorder %s275, %s276
    %p285 = scmp.eq.s32.totalorder %s29, 0
    %p286 = por %p284, %p285
    %p287 = scmp.ne.s32.totalorder %s275, %s276
    %p288 = scmp.eq.s32.totalorder %s30, 1
    %p289 = por %p287, %p288
    %p291 = scmp.ne.s32.totalorder %s276, %s290
    %p292 = scmp.eq.s32.totalorder %s30, 0
    %p293 = por %p291, %p292
    %s295 = sadd.s32 %s294, 1
    %p298 = scmp.eq.s32.totalorder %s24, 1
    %p299 = scmp.ne.s32.totalorder %s294, %s296
    %p300 = scmp.eq.s32.totalorder %s24, 0
    %p301 = por %p299, %p300
    %p302 = scmp.ne.s32.totalorder %s294, %s296
    %p303 = scmp.eq.s32.totalorder %s29, 1
    %p304 = por %p302, %p303
    %p305 = scmp.ne.s32.totalorder %s296, %s297
    %p306 = scmp.eq.s32.totalorder %s29, 0
    %p307 = por %p305, %p306
    %p308 = scmp.ne.s32.totalorder %s296, %s297
    %p309 = scmp.eq.s32.totalorder %s30, 1
    %p310 = por %p308, %p309
    %p312 = scmp.ne.s32.totalorder %s297, %s311
    %p313 = scmp.eq.s32.totalorder %s30, 0
    %p314 = por %p312, %p313
    %s316 = sadd.s32 %s315, 1
    %p319 = scmp.eq.s32.totalorder %s24, 1
    %p320 = scmp.ne.s32.totalorder %s315, %s317
    %p321 = scmp.eq.s32.totalorder %s24, 0
    %p322 = por %p320, %p321
    %p323 = scmp.ne.s32.totalorder %s315, %s317
    %p324 = scmp.eq.s32.totalorder %s29, 1
    %p325 = por %p323, %p324
    %p326 = scmp.ne.s32.totalorder %s317, %s318
    %p327 = scmp.eq.s32.totalorder %s29, 0
    %p328 = por %p326, %p327
    %p329 = scmp.ne.s32.totalorder %s317, %s318
    %p330 = scmp.eq.s32.totalorder %s30, 1
    %p331 = por %p329, %p330
    %p333 = scmp.ne.s32.totalorder %s318, %s332
    %p334 = scmp.eq.s32.totalorder %s30, 0
    %p335 = por %p333, %p334
    %s337 = sadd.s32 %s336, 1
    %p340 = scmp.eq.s32.totalorder %s24, 1
    %p341 = scmp.ne.s32.totalorder %s336, %s338
    %p342 = scmp.eq.s32.totalorder %s24, 0
    %p343 = por %p341, %p342
    %p344 = scmp.ne.s32.totalorder %s336, %s338
    %p345 = scmp.eq.s32.totalorder %s29, 1
    %p346 = por %p344, %p345
    %p347 = scmp.ne.s32.totalorder %s338, %s339
    %p348 = scmp.eq.s32.totalorder %s29, 0
    %p349 = por %p347, %p348
    %p350 = scmp.ne.s32.totalorder %s338, %s339
    %p351 = scmp.eq.s32.totalorder %s30, 1
    %p352 = por %p350, %p351
    %p354 = scmp.ne.s32.totalorder %s339, %s353
    %p355 = scmp.eq.s32.totalorder %s30, 0
    %p356 = por %p354, %p355
    %s358 = sadd.s32 %s357, 1
    %p361 = scmp.eq.s32.totalorder %s24, 1
    %p362 = scmp.ne.s32.totalorder %s357, %s359
    %p363 = scmp.eq.s32.totalorder %s24, 0
    %p364 = por %p362, %p363
    %p365 = scmp.ne.s32.totalorder %s357, %s359
    %p366 = scmp.eq.s32.totalorder %s29, 1
    %p367 = por %p365, %p366
    %p368 = scmp.ne.s32.totalorder %s359, %s360
    %p369 = scmp.eq.s32.totalorder %s29, 0
    %p370 = por %p368, %p369
    %p371 = scmp.ne.s32.totalorder %s359, %s360
    %p372 = scmp.eq.s32.totalorder %s30, 1
    %p373 = por %p371, %p372
    %p375 = scmp.ne.s32.totalorder %s360, %s374
    %p376 = scmp.eq.s32.totalorder %s30, 0
    %p377 = por %p375, %p376
    %s379 = sadd.s32 %s378, 1
    %p382 = scmp.eq.s32.totalorder %s24, 1
    %p383 = scmp.ne.s32.totalorder %s378, %s380
    %p384 = scmp.eq.s32.totalorder %s24, 0
    %p385 = por %p383, %p384
    %p386 = scmp.ne.s32.totalorder %s378, %s380
    %p387 = scmp.eq.s32.totalorder %s29, 1
    %p388 = por %p386, %p387
    %p389 = scmp.ne.s32.totalorder %s380, %s381
    %p390 = scmp.eq.s32.totalorder %s29, 0
    %p391 = por %p389, %p390
    %p392 = scmp.ne.s32.totalorder %s380, %s381
    %p393 = scmp.eq.s32.totalorder %s30, 1
    %p394 = por %p392, %p393
    %p396 = scmp.ne.s32.totalorder %s381, %s395
    %p397 = scmp.eq.s32.totalorder %s30, 0
    %p398 = por %p396, %p397
    %s400 = sadd.s32 %s399, 1
    %p403 = scmp.eq.s32.totalorder %s24, 1
    %p404 = scmp.ne.s32.totalorder %s399, %s401
    %p405 = scmp.eq.s32.totalorder %s24, 0
    %p406 = por %p404, %p405
    %p407 = scmp.ne.s32.totalorder %s399, %s401
    %p408 = scmp.eq.s32.totalorder %s29, 1
    %p409 = por %p407, %p408
    %p410 = scmp.ne.s32.totalorder %s401, %s402
    %p411 = scmp.eq.s32.totalorder %s29, 0
    %p412 = por %p410, %p411
    %p413 = scmp.ne.s32.totalorder %s401, %s402
    %p414 = scmp.eq.s32.totalorder %s30, 1
    %p415 = por %p413, %p414
    %p417 = scmp.ne.s32.totalorder %s402, %s416
    %p418 = scmp.eq.s32.totalorder %s30, 0
    %p419 = por %p417, %p418
    %s420 = ssub.s32 %s24, %s31
    %p421 = scmp.eq.s32.totalorder %s420, 0
    %s423 = sadd.s32 %s422, 1
    %s424 = scalar_select %p421, %s422, %s423
    %p427 = pneg %p421
    %p428 = scmp.eq.s32.totalorder %s24, 1
    %p429 = por %p427, %p428
    %p430 = scmp.ne.s32.totalorder %s422, %s425
    %p431 = scmp.eq.s32.totalorder %s24, 0
    %p432 = por %p430, %p431
    %p433 = scmp.ne.s32.totalorder %s422, %s425
    %p434 = scmp.eq.s32.totalorder %s29, 1
    %p435 = por %p433, %p434
    %p436 = scmp.ne.s32.totalorder %s425, %s426
    %p437 = scmp.eq.s32.totalorder %s29, 0
    %p438 = por %p436, %p437
    %p439 = scmp.ne.s32.totalorder %s425, %s426
    %p440 = scmp.eq.s32.totalorder %s30, 1
    %p441 = por %p439, %p440
    %p443 = scmp.ne.s32.totalorder %s426, %s442
    %p444 = scmp.eq.s32.totalorder %s30, 0
    %p445 = por %p443, %p444
    %p446 = scmp.le.s32.totalorder 1, %s24
    %p447 = scmp.lt.s32.totalorder %s24, 3
    %p448 = pnand %p446, %p447
    %p449 = pneg %p448
    // Predicated region
    $region9: #{seq2seq_forward.5} parent=5 // pred_check
      _
    $region10: #{seq2seq_forward.5} parent=5 // pred_check_branch
      %451 = sbr.rel (%p448) target = $region12
    $region11: #{seq2seq_forward.5} parent=5 // pred_region
      %s452 = ssub.s32 %s24, 1
      // Predicated region
      $region13: #{seq2seq_forward.5} parent=11 // pred_check
        %p453 = pneg %p97
      $region14: #{seq2seq_forward.5} parent=11 // pred_check_branch
        %455 = sbr.rel (%p453) target = $region16
      $region15: #{seq2seq_forward.5} parent=11 // pred_region
        _
      $region16: #{seq2seq_forward.5} parent=11 // pred_fallthru
        _
      // Predicated region
      $region17: #{seq2seq_forward.5} parent=11 // pred_check
        %p456 = pneg %p118
      $region18: #{seq2seq_forward.5} parent=11 // pred_check_branch
        %458 = sbr.rel (%p456) target = $region20
      $region19: #{seq2seq_forward.5} parent=11 // pred_region
        _
      $region20: #{seq2seq_forward.5} parent=11 // pred_fallthru
        _
      // Predicated region
      $region21: #{seq2seq_forward.5} parent=11 // pred_check
        %p459 = pneg %p139
      $region22: #{seq2seq_forward.5} parent=11 // pred_check_branch
        %461 = sbr.rel (%p459) target = $region24
      $region23: #{seq2seq_forward.5} parent=11 // pred_region
        _
      $region24: #{seq2seq_forward.5} parent=11 // pred_fallthru
        _
      // Predicated region
      $region25: #{seq2seq_forward.5} parent=11 // pred_check
        %p462 = pneg %p160
      $region26: #{seq2seq_forward.5} parent=11 // pred_check_branch
        %464 = sbr.rel (%p462) target = $region28
      $region27: #{seq2seq_forward.5} parent=11 // pred_region
        _
      $region28: #{seq2seq_forward.5} parent=11 // pred_fallthru
        _
      // Predicated region
      $region29: #{seq2seq_forward.5} parent=11 // pred_check
        %p465 = pneg %p181
      $region30: #{seq2seq_forward.5} parent=11 // pred_check_branch
        %467 = sbr.rel (%p465) target = $region32
      $region31: #{seq2seq_forward.5} parent=11 // pred_region
        _
      $region32: #{seq2seq_forward.5} parent=11 // pred_fallthru
        _
      // Predicated region
      $region33: #{seq2seq_forward.5} parent=11 // pred_check
        %p468 = pneg %p202
      $region34: #{seq2seq_forward.5} parent=11 // pred_check_branch
        %470 = sbr.rel (%p468) target = $region36
      $region35: #{seq2seq_forward.5} parent=11 // pred_region
        _
      $region36: #{seq2seq_forward.5} parent=11 // pred_fallthru
        _
      // Predicated region
      $region37: #{seq2seq_forward.5} parent=11 // pred_check
        %p471 = pneg %p223
      $region38: #{seq2seq_forward.5} parent=11 // pred_check_branch
        %473 = sbr.rel (%p471) target = $region40
      $region39: #{seq2seq_forward.5} parent=11 // pred_region
        _
      $region40: #{seq2seq_forward.5} parent=11 // pred_fallthru
        _
      // Predicated region
      $region41: #{seq2seq_forward.5} parent=11 // pred_check
        %p474 = pneg %p244
      $region42: #{seq2seq_forward.5} parent=11 // pred_check_branch
        %476 = sbr.rel (%p474) target = $region44
      $region43: #{seq2seq_forward.5} parent=11 // pred_region
        _
      $region44: #{seq2seq_forward.5} parent=11 // pred_fallthru
        _
      // Predicated region
      $region45: #{seq2seq_forward.5} parent=11 // pred_check
        %p477 = pneg %p265
      $region46: #{seq2seq_forward.5} parent=11 // pred_check_branch
        %479 = sbr.rel (%p477) target = $region48
      $region47: #{seq2seq_forward.5} parent=11 // pred_region
        _
      $region48: #{seq2seq_forward.5} parent=11 // pred_fallthru
        _
      // Predicated region
      $region49: #{seq2seq_forward.5} parent=11 // pred_check
        %p480 = pneg %p286
      $region50: #{seq2seq_forward.5} parent=11 // pred_check_branch
        %482 = sbr.rel (%p480) target = $region52
      $region51: #{seq2seq_forward.5} parent=11 // pred_region
        _
      $region52: #{seq2seq_forward.5} parent=11 // pred_fallthru
        _
      // Predicated region
      $region53: #{seq2seq_forward.5} parent=11 // pred_check
        %p483 = pneg %p307
      $region54: #{seq2seq_forward.5} parent=11 // pred_check_branch
        %485 = sbr.rel (%p483) target = $region56
      $region55: #{seq2seq_forward.5} parent=11 // pred_region
        _
      $region56: #{seq2seq_forward.5} parent=11 // pred_fallthru
        _
      // Predicated region
      $region57: #{seq2seq_forward.5} parent=11 // pred_check
        %p486 = pneg %p328
      $region58: #{seq2seq_forward.5} parent=11 // pred_check_branch
        %488 = sbr.rel (%p486) target = $region60
      $region59: #{seq2seq_forward.5} parent=11 // pred_region
        _
      $region60: #{seq2seq_forward.5} parent=11 // pred_fallthru
        _
      // Predicated region
      $region61: #{seq2seq_forward.5} parent=11 // pred_check
        %p489 = pneg %p349
      $region62: #{seq2seq_forward.5} parent=11 // pred_check_branch
        %491 = sbr.rel (%p489) target = $region64
      $region63: #{seq2seq_forward.5} parent=11 // pred_region
        _
      $region64: #{seq2seq_forward.5} parent=11 // pred_fallthru
        _
      // Predicated region
      $region65: #{seq2seq_forward.5} parent=11 // pred_check
        %p492 = pneg %p370
      $region66: #{seq2seq_forward.5} parent=11 // pred_check_branch
        %494 = sbr.rel (%p492) target = $region68
      $region67: #{seq2seq_forward.5} parent=11 // pred_region
        _
      $region68: #{seq2seq_forward.5} parent=11 // pred_fallthru
        _
      // Predicated region
      $region69: #{seq2seq_forward.5} parent=11 // pred_check
        %p495 = pneg %p391
      $region70: #{seq2seq_forward.5} parent=11 // pred_check_branch
        %497 = sbr.rel (%p495) target = $region72
      $region71: #{seq2seq_forward.5} parent=11 // pred_region
        _
      $region72: #{seq2seq_forward.5} parent=11 // pred_fallthru
        _
      // Predicated region
      $region73: #{seq2seq_forward.5} parent=11 // pred_check
        %p498 = pneg %p412
      $region74: #{seq2seq_forward.5} parent=11 // pred_check_branch
        %500 = sbr.rel (%p498) target = $region76
      $region75: #{seq2seq_forward.5} parent=11 // pred_region
        _
      $region76: #{seq2seq_forward.5} parent=11 // pred_fallthru
        _
    $region12: #{seq2seq_forward.5} parent=5 // pred_fallthru
      _
    %p501 = scmp.lt.s32.totalorder %s24, 2
    // Predicated region
    $region77: #{seq2seq_forward.5} parent=5 // pred_check
      %p502 = pneg %p501
    $region78: #{seq2seq_forward.5} parent=5 // pred_check_branch
      %504 = sbr.rel (%p502) target = $region80
    $region79: #{seq2seq_forward.5} parent=5 // pred_region
      // Predicated region
      $region81: #{seq2seq_forward.5} parent=79 // pred_check
        %p505 = pneg %p44
      $region82: #{seq2seq_forward.5} parent=79 // pred_check_branch
        %507 = sbr.rel (%p505) target = $region84
      $region83: #{seq2seq_forward.5} parent=79 // pred_region
        %p508 = scmp.lt.s32.totalorder %s24, 1
        %s509 = scalar_select %p508, %s24, 1
        %s510 = smul.addr %s509, 8
        %s511 = scalar_lea.vmem %s0, %s510
      $region84: #{seq2seq_forward.5} parent=79 // pred_fallthru
        _
      // Predicated region
      $region85: #{seq2seq_forward.5} parent=79 // pred_check
        %p512 = pneg %p70
      $region86: #{seq2seq_forward.5} parent=79 // pred_check_branch
        %514 = sbr.rel (%p512) target = $region88
      $region87: #{seq2seq_forward.5} parent=79 // pred_region
        %p515 = scmp.lt.s32.totalorder %s24, 1
        %s516 = scalar_select %p515, %s24, 1
        %s517 = smul.addr %s516, 8
        %s518 = scalar_lea.vmem %s1, %s517
      $region88: #{seq2seq_forward.5} parent=79 // pred_fallthru
        _
    $region80: #{seq2seq_forward.5} parent=5 // pred_fallthru
      _
    %p519 = scmp.le.s32.totalorder 1, %s24
    %p520 = scmp.lt.s32.totalorder %s24, 3
    %p521 = pnand %p519, %p520
    %p522 = pneg %p521
    // Predicated region
    $region89: #{seq2seq_forward.5} parent=5 // pred_check
      _
    $region90: #{seq2seq_forward.5} parent=5 // pred_check_branch
      %524 = sbr.rel (%p521) target = $region92
    $region91: #{seq2seq_forward.5} parent=5 // pred_region
      %s525 = ssub.s32 %s24, 1
      %p526 = scmp.lt.s32.totalorder %s29, 1
      %s527 = scalar_select %p526, %s29, 1
      %s528 = smul.addr %s527, 8
      %s529 = scalar_lea.vmem %s0, %s528
      %p530 = pneg %p50
      %p531 = pneg %p47
      %p532 = scmp.lt.s32.totalorder %s29, 1
      %s533 = scalar_select %p532, %s29, 1
      %s534 = smul.addr %s533, 8
      %s535 = scalar_lea.vmem %s1, %s534
      %p536 = pneg %p76
      %p537 = pneg %p73
      %p538 = pneg %p97
      %p539 = pneg %p94
      %p540 = pneg %p118
      %p541 = pneg %p115
      %p542 = pneg %p139
      %p543 = pneg %p136
      %p544 = pneg %p160
      %p545 = pneg %p157
      %p546 = pneg %p181
      %p547 = pneg %p178
      %p548 = pneg %p202
      %p549 = pneg %p199
      %p550 = pneg %p223
      %p551 = pneg %p220
      %p552 = pneg %p244
      %p553 = pneg %p241
      %p554 = pneg %p265
      %p555 = pneg %p262
      %p556 = pneg %p286
      %p557 = pneg %p283
      %p558 = pneg %p307
      %p559 = pneg %p304
      %p560 = pneg %p328
      %p561 = pneg %p325
      %p562 = pneg %p349
      %p563 = pneg %p346
      %p564 = pneg %p370
      %p565 = pneg %p367
      %p566 = pneg %p391
      %p567 = pneg %p388
      %p568 = pneg %p412
      %p569 = pneg %p409
      %p570 = pneg %p438
      %p571 = pneg %p435
      %p572 = scmp.lt.s32.totalorder %s29, 1
      %s573 = scalar_select %p572, %s29, 1
      %s574 = smul.addr %s573, 8
      %s575 = scalar_lea.vmem %s18, %s574
      %p576 = scmp.lt.s32.totalorder %s29, 1
      %s577 = scalar_select %p576, %s29, 1
      %s578 = smul.addr %s577, 8
      %s579 = scalar_lea.vmem %s0, %s578
      %p580 = scmp.lt.s32.totalorder %s29, 1
      %s581 = scalar_select %p580, %s29, 1
      %s582 = smul.addr %s581, 8
      %s583 = scalar_lea.vmem %s1, %s582
      %p584 = scmp.lt.s32.totalorder %s29, 1
      %s585 = scalar_select %p584, %s29, 1
      %s586 = smul.addr %s585, 8
      %s587 = scalar_lea.vmem %s18, %s586
      %v589 = vld [vmem:[%s579] sm:$0xff]
      %v590 = vpack.c.bf16 %v589, %v589
      %v591 = vld [vmem:[%s583] sm:$0xff]
      %v592 = vld [vmem:[%s2] sm:$0xf]
      %v593 = vld [vmem:[%s2 + $0x4] sm:$0xf]
      %v594 = vld [vmem:[%s2 + $0x8] sm:$0xf]
      %v595 = vld [vmem:[%s2 + $0xc] sm:$0xf]
      %v596 = vld [vmem:[%s3] sm:$0xf]
      %v597 = vld [vmem:[%s3 + $0x4] sm:$0xf]
      %v598 = vld [vmem:[%s3 + $0x8] sm:$0xf]
      %v599 = vld [vmem:[%s3 + $0xc] sm:$0xf]
      %v600 = vld [vmem:[%s4] sm:$0xf]
      %v601 = vld [vmem:[%s4 + $0x4] sm:$0xf]
      %v602 = vld [vmem:[%s4 + $0x8] sm:$0xf]
      %v603 = vld [vmem:[%s4 + $0xc] sm:$0xf]
      %v604 = vld [vmem:[%s5] sm:$0xf]
      %v605 = vld [vmem:[%s5 + $0x4] sm:$0xf]
      %v606 = vld [vmem:[%s5 + $0x8] sm:$0xf]
      %v607 = vld [vmem:[%s5 + $0xc] sm:$0xf]
      %v608 = vld [vmem:[%s6] sm:$0x1]
      %v609 = vld [vmem:[%s7] sm:$0x1]
      %v610 = vld [vmem:[%s8] sm:$0x1]
      %v611 = vld [vmem:[%s9] sm:$0x1]
      %v613 = vlaneseq
      %v614 = vshrl.u32 %v613, 7
      %v615 = vsub.s32 0, %v614
      %v616 = vrot.slane %v608, %v615
      %v622 = vunpack.c.l.b16 %v592
      %v623 = vunpack.c.l.b16 %v593
      %v624 = vunpack.c.l.b16 %v594
      %v625 = vunpack.c.l.b16 %v595
      %v626 = vpack.c.b16 %v623, %v622
      %v627 = vpack.c.b16 %v625, %v624
      %vm630 = vcmask 261120
      %v632 = vsel %vm630, %v590, 0
      %634 = vmatprep.subr.bf16.mxu0 0
      %635 = vmatpush1.bf16.msra.mxu0 %v626
      %636 = vmatprep.subr.bf16.mxu0 0
      %637 = vmatpush1.bf16.msra.mxu0 %v627
      %638 = vmatprep.subr.bf16.mxu0 0
      %639 = vmatpush1.bf16.msra.mxu0 0
      %640 = vmatprep.subr.bf16.mxu0 0
      %641 = vmatpush1.bf16.msra.mxu0 0
      %642 = vmatprep.subr.bf16.mxu0 0
      %643 = vmatpush1.bf16.msra.mxu0 0
      %644 = vmatprep.subr.bf16.mxu0 0
      %645 = vmatpush1.bf16.msra.mxu0 0
      %646 = vmatprep.subr.bf16.mxu0 0
      %647 = vmatpush1.bf16.msra.mxu0 0
      %648 = vmatprep.subr.bf16.mxu0 0
      %649 = vmatpush1.bf16.msra.mxu0 0
      %650 = vmatprep.subr.bf16.mxu0 0
      %651 = vmatpush1.bf16.msra.mxu0 0
      %652 = vmatprep.subr.bf16.mxu0 0
      %653 = vmatpush1.bf16.msra.mxu0 0
      %654 = vmatprep.subr.bf16.mxu0 0
      %655 = vmatpush1.bf16.msra.mxu0 0
      %656 = vmatprep.subr.bf16.mxu0 0
      %657 = vmatpush1.bf16.msra.mxu0 0
      %658 = vmatprep.subr.bf16.mxu0 0
      %659 = vmatpush1.bf16.msra.mxu0 0
      %660 = vmatprep.subr.bf16.mxu0 0
      %661 = vmatpush1.bf16.msra.mxu0 0
      %662 = vmatprep.subr.bf16.mxu0 0
      %663 = vmatpush1.bf16.msra.mxu0 0
      %664 = vmatprep.subr.bf16.mxu0 0
      %665 = vmatpush1.bf16.msra.mxu0 0
      %666 = vmatprep.mubr.bf16.mxu0 0
      %667 = vmatmul.mubr.bf16.gmra.mrb[0].mxu0 %v632
      %v668 = vpop.f32.mrb[0].mxu0
      %v669 = vadd.f32 %v616, %v668
      %v670 = vpop.f32.mrb[0].mxu0
      %v671 = vpop.f32.mrb[0].mxu0
      %v672 = vpop.f32.mrb[0].mxu0
      %673 = vdwg.mxu0
      %v674 = vmul.f32 %v669, 0.35355338
      %v676 = vlaneseq
      %v677 = vshrl.u32 %v676, 7
      %v678 = vsub.s32 0, %v677
      %v679 = vrot.slane %v609, %v678
      %v685 = vunpack.c.l.b16 %v596
      %v686 = vunpack.c.l.b16 %v597
      %v687 = vunpack.c.l.b16 %v598
      %v688 = vunpack.c.l.b16 %v599
      %v689 = vpack.c.b16 %v686, %v685
      %v690 = vpack.c.b16 %v688, %v687
      %693 = vmatprep.subr.bf16.mxu0 0
      %694 = vmatpush1.bf16.msra.mxu0 %v689
      %695 = vmatprep.subr.bf16.mxu0 0
      %696 = vmatpush1.bf16.msra.mxu0 %v690
      %697 = vmatprep.subr.bf16.mxu0 0
      %698 = vmatpush1.bf16.msra.mxu0 0
      %699 = vmatprep.subr.bf16.mxu0 0
      %700 = vmatpush1.bf16.msra.mxu0 0
      %701 = vmatprep.subr.bf16.mxu0 0
      %702 = vmatpush1.bf16.msra.mxu0 0
      %703 = vmatprep.subr.bf16.mxu0 0
      %704 = vmatpush1.bf16.msra.mxu0 0
      %705 = vmatprep.subr.bf16.mxu0 0
      %706 = vmatpush1.bf16.msra.mxu0 0
      %707 = vmatprep.subr.bf16.mxu0 0
      %708 = vmatpush1.bf16.msra.mxu0 0
      %709 = vmatprep.subr.bf16.mxu0 0
      %710 = vmatpush1.bf16.msra.mxu0 0
      %711 = vmatprep.subr.bf16.mxu0 0
      %712 = vmatpush1.bf16.msra.mxu0 0
      %713 = vmatprep.subr.bf16.mxu0 0
      %714 = vmatpush1.bf16.msra.mxu0 0
      %715 = vmatprep.subr.bf16.mxu0 0
      %716 = vmatpush1.bf16.msra.mxu0 0
      %717 = vmatprep.subr.bf16.mxu0 0
      %718 = vmatpush1.bf16.msra.mxu0 0
      %719 = vmatprep.subr.bf16.mxu0 0
      %720 = vmatpush1.bf16.msra.mxu0 0
      %721 = vmatprep.subr.bf16.mxu0 0
      %722 = vmatpush1.bf16.msra.mxu0 0
      %723 = vmatprep.subr.bf16.mxu0 0
      %724 = vmatpush1.bf16.msra.mxu0 0
      %725 = vmatprep.mubr.bf16.mxu0 0
      %726 = vmatmul.mubr.bf16.gmra.mrb[0].mxu0 %v632
      %v727 = vpop.f32.mrb[0].mxu0
      %v728 = vadd.f32 %v679, %v727
      %v729 = vpop.f32.mrb[0].mxu0
      %v730 = vpop.f32.mrb[0].mxu0
      %v731 = vpop.f32.mrb[0].mxu0
      %732 = vdwg.mxu0
      %v734 = vlaneseq
      %v735 = vshrl.u32 %v734, 7
      %v736 = vsub.s32 0, %v735
      %v737 = vrot.slane %v610, %v736
      %v743 = vunpack.c.l.b16 %v600
      %v744 = vunpack.c.l.b16 %v601
      %v745 = vunpack.c.l.b16 %v602
      %v746 = vunpack.c.l.b16 %v603
      %v747 = vpack.c.b16 %v744, %v743
      %v748 = vpack.c.b16 %v746, %v745
      %751 = vmatprep.subr.bf16.mxu0 0
      %752 = vmatpush1.bf16.msra.mxu0 %v747
      %753 = vmatprep.subr.bf16.mxu0 0
      %754 = vmatpush1.bf16.msra.mxu0 %v748
      %755 = vmatprep.subr.bf16.mxu0 0
      %756 = vmatpush1.bf16.msra.mxu0 0
      %757 = vmatprep.subr.bf16.mxu0 0
      %758 = vmatpush1.bf16.msra.mxu0 0
      %759 = vmatprep.subr.bf16.mxu0 0
      %760 = vmatpush1.bf16.msra.mxu0 0
      %761 = vmatprep.subr.bf16.mxu0 0
      %762 = vmatpush1.bf16.msra.mxu0 0
      %763 = vmatprep.subr.bf16.mxu0 0
      %764 = vmatpush1.bf16.msra.mxu0 0
      %765 = vmatprep.subr.bf16.mxu0 0
      %766 = vmatpush1.bf16.msra.mxu0 0
      %767 = vmatprep.subr.bf16.mxu0 0
      %768 = vmatpush1.bf16.msra.mxu0 0
      %769 = vmatprep.subr.bf16.mxu0 0
      %770 = vmatpush1.bf16.msra.mxu0 0
      %771 = vmatprep.subr.bf16.mxu0 0
      %772 = vmatpush1.bf16.msra.mxu0 0
      %773 = vmatprep.subr.bf16.mxu0 0
      %774 = vmatpush1.bf16.msra.mxu0 0
      %775 = vmatprep.subr.bf16.mxu0 0
      %776 = vmatpush1.bf16.msra.mxu0 0
      %777 = vmatprep.subr.bf16.mxu0 0
      %778 = vmatpush1.bf16.msra.mxu0 0
      %779 = vmatprep.subr.bf16.mxu0 0
      %780 = vmatpush1.bf16.msra.mxu0 0
      %781 = vmatprep.subr.bf16.mxu0 0
      %782 = vmatpush1.bf16.msra.mxu0 0
      %783 = vmatprep.mubr.bf16.mxu0 0
      %784 = vmatmul.mubr.bf16.gmra.mrb[0].mxu0 %v632
      %v785 = vpop.f32.mrb[0].mxu0
      %v786 = vadd.f32 %v737, %v785
      %v787 = vpop.f32.mrb[0].mxu0
      %v788 = vpop.f32.mrb[0].mxu0
      %v789 = vpop.f32.mrb[0].mxu0
      %790 = vdwg.mxu0
      %v791 = vpack.c.bf16 %v674, %v674
      %v792 = vpack.c.bf16 %v728, %v728
      %v793 = vpack.c.bf16 %v786, %v786
      %vm794 = vcmask 64512
      %v796 = vsel %vm794, %v791, 0
      %v799 = vsel %vm794, %v792, 0
      %801 = vmatprep.subr.bf16.mxu0 0
      %802 = vmatpush1.bf16.xpose.msra.mxu0 %v799
      %803 = vmatprep.subr.bf16.mxu0 0
      %804 = vmatpush1.bf16.xpose.msra.mxu0 0
      %805 = vmatprep.subr.bf16.mxu0 0
      %806 = vmatpush1.bf16.xpose.msra.mxu0 0
      %807 = vmatprep.subr.bf16.mxu0 0
      %808 = vmatpush1.bf16.xpose.msra.mxu0 0
      %809 = vmatprep.subr.bf16.mxu0 0
      %810 = vmatpush1.bf16.xpose.msra.mxu0 0
      %811 = vmatprep.subr.bf16.mxu0 0
      %812 = vmatpush1.bf16.xpose.msra.mxu0 0
      %813 = vmatprep.subr.bf16.mxu0 0
      %814 = vmatpush1.bf16.xpose.msra.mxu0 0
      %815 = vmatprep.subr.bf16.mxu0 0
      %816 = vmatpush1.bf16.xpose.msra.mxu0 0
      %817 = vmatprep.subr.bf16.mxu0 0
      %818 = vmatpush1.bf16.xpose.msra.mxu0 0
      %819 = vmatprep.subr.bf16.mxu0 0
      %820 = vmatpush1.bf16.xpose.msra.mxu0 0
      %821 = vmatprep.subr.bf16.mxu0 0
      %822 = vmatpush1.bf16.xpose.msra.mxu0 0
      %823 = vmatprep.subr.bf16.mxu0 0
      %824 = vmatpush1.bf16.xpose.msra.mxu0 0
      %825 = vmatprep.subr.bf16.mxu0 0
      %826 = vmatpush1.bf16.xpose.msra.mxu0 0
      %827 = vmatprep.subr.bf16.mxu0 0
      %828 = vmatpush1.bf16.xpose.msra.mxu0 0
      %829 = vmatprep.subr.bf16.mxu0 0
      %830 = vmatpush1.bf16.xpose.msra.mxu0 0
      %831 = vmatprep.subr.bf16.mxu0 0
      %832 = vmatpush1.bf16.xpose.msra.mxu0 0
      %833 = vmatprep.mubr.bf16.mxu0 0
      %834 = vmatmul.mubr.bf16.gmra.mrb[0].mxu0 %v796
      %v835 = vpop.f32.mrb[0].mxu0
      %v836 = vadd.f32 %v591, %v835
      %v837 = vpop.f32.mrb[0].mxu0
      %v838 = vpop.f32.mrb[0].mxu0
      %v839 = vpop.f32.mrb[0].mxu0
      %840 = vdwg.mxu0
      %v841 = vsel %vm794, %v836, -inf
      %842 = vmax.xlane.f32.xlu0 %v841
      %v843 = vpop.xlane.xlu0 %842
      %v844 = vsub.f32 %v836, %v843
      %v845 = vmul.f32 %v844, 1.442695
      %v846 = vpow.pop %v845
      %v847 = vsel %vm794, %v846, 0.0
      %848 = vadd.xlane.f32.xlu0 %v847
      %v849 = vpop.xlane.xlu0 %848
      %v850 = vrcp.pop %v849
      %v851 = vmul.f32 %v846, %v850
      %v852 = vpack.c.bf16 %v851, %v851
      %v854 = vsel %vm794, %v852, 0
      %vm856 = vcmask 1043456
      %v858 = vsel %vm856, %v793, 0
      %860 = vmatprep.subr.bf16.mxu0 0
      %861 = vmatpush1.bf16.msra.mxu0 %v858
      %862 = vmatprep.subr.bf16.mxu0 0
      %863 = vmatpush1.bf16.msra.mxu0 0
      %864 = vmatprep.subr.bf16.mxu0 0
      %865 = vmatpush1.bf16.msra.mxu0 0
      %866 = vmatprep.subr.bf16.mxu0 0
      %867 = vmatpush1.bf16.msra.mxu0 0
      %868 = vmatprep.subr.bf16.mxu0 0
      %869 = vmatpush1.bf16.msra.mxu0 0
      %870 = vmatprep.subr.bf16.mxu0 0
      %871 = vmatpush1.bf16.msra.mxu0 0
      %872 = vmatprep.subr.bf16.mxu0 0
      %873 = vmatpush1.bf16.msra.mxu0 0
      %874 = vmatprep.subr.bf16.mxu0 0
      %875 = vmatpush1.bf16.msra.mxu0 0
      %876 = vmatprep.subr.bf16.mxu0 0
      %877 = vmatpush1.bf16.msra.mxu0 0
      %878 = vmatprep.subr.bf16.mxu0 0
      %879 = vmatpush1.bf16.msra.mxu0 0
      %880 = vmatprep.subr.bf16.mxu0 0
      %881 = vmatpush1.bf16.msra.mxu0 0
      %882 = vmatprep.subr.bf16.mxu0 0
      %883 = vmatpush1.bf16.msra.mxu0 0
      %884 = vmatprep.subr.bf16.mxu0 0
      %885 = vmatpush1.bf16.msra.mxu0 0
      %886 = vmatprep.subr.bf16.mxu0 0
      %887 = vmatpush1.bf16.msra.mxu0 0
      %888 = vmatprep.subr.bf16.mxu0 0
      %889 = vmatpush1.bf16.msra.mxu0 0
      %890 = vmatprep.subr.bf16.mxu0 0
      %891 = vmatpush1.bf16.msra.mxu0 0
      %892 = vmatprep.mubr.bf16.mxu0 0
      %893 = vmatmul.mubr.bf16.gmra.mrb[0].mxu0 %v854
      %v894 = vpop.f32.mrb[0].mxu0
      %v895 = vadd.f32 0.0, %v894
      %v896 = vpop.f32.mrb[0].mxu0
      %v897 = vpop.f32.mrb[0].mxu0
      %v898 = vpop.f32.mrb[0].mxu0
      %899 = vdwg.mxu0
      %901 = vrot.lane.b32.xlu0 %v791, 120
      %v902 = vpop.permute.xlu0 %901
      %904 = vrot.lane.b32.xlu0 %v792, 120
      %v905 = vpop.permute.xlu0 %904
      %v907 = vsel %vm794, %v902, 0
      %v910 = vsel %vm794, %v905, 0
      %912 = vmatprep.subr.bf16.mxu0 0
      %913 = vmatpush1.bf16.xpose.msra.mxu0 %v910
      %914 = vmatprep.subr.bf16.mxu0 0
      %915 = vmatpush1.bf16.xpose.msra.mxu0 0
      %916 = vmatprep.subr.bf16.mxu0 0
      %917 = vmatpush1.bf16.xpose.msra.mxu0 0
      %918 = vmatprep.subr.bf16.mxu0 0
      %919 = vmatpush1.bf16.xpose.msra.mxu0 0
      %920 = vmatprep.subr.bf16.mxu0 0
      %921 = vmatpush1.bf16.xpose.msra.mxu0 0
      %922 = vmatprep.subr.bf16.mxu0 0
      %923 = vmatpush1.bf16.xpose.msra.mxu0 0
      %924 = vmatprep.subr.bf16.mxu0 0
      %925 = vmatpush1.bf16.xpose.msra.mxu0 0
      %926 = vmatprep.subr.bf16.mxu0 0
      %927 = vmatpush1.bf16.xpose.msra.mxu0 0
      %928 = vmatprep.subr.bf16.mxu0 0
      %929 = vmatpush1.bf16.xpose.msra.mxu0 0
      %930 = vmatprep.subr.bf16.mxu0 0
      %931 = vmatpush1.bf16.xpose.msra.mxu0 0
      %932 = vmatprep.subr.bf16.mxu0 0
      %933 = vmatpush1.bf16.xpose.msra.mxu0 0
      %934 = vmatprep.subr.bf16.mxu0 0
      %935 = vmatpush1.bf16.xpose.msra.mxu0 0
      %936 = vmatprep.subr.bf16.mxu0 0
      %937 = vmatpush1.bf16.xpose.msra.mxu0 0
      %938 = vmatprep.subr.bf16.mxu0 0
      %939 = vmatpush1.bf16.xpose.msra.mxu0 0
      %940 = vmatprep.subr.bf16.mxu0 0
      %941 = vmatpush1.bf16.xpose.msra.mxu0 0
      %942 = vmatprep.subr.bf16.mxu0 0
      %943 = vmatpush1.bf16.xpose.msra.mxu0 0
      %944 = vmatprep.mubr.bf16.mxu0 0
      %945 = vmatmul.mubr.bf16.gmra.mrb[0].mxu0 %v907
      %v946 = vpop.f32.mrb[0].mxu0
      %v947 = vadd.f32 %v591, %v946
      %v948 = vpop.f32.mrb[0].mxu0
      %v949 = vpop.f32.mrb[0].mxu0
      %v950 = vpop.f32.mrb[0].mxu0
      %951 = vdwg.mxu0
      %v952 = vsel %vm794, %v947, -inf
      %953 = vmax.xlane.f32.xlu0 %v952
      %v954 = vpop.xlane.xlu0 %953
      %v955 = vsub.f32 %v947, %v954
      %v956 = vmul.f32 %v955, 1.442695
      %v957 = vpow.pop %v956
      %v958 = vsel %vm794, %v957, 0.0
      %959 = vadd.xlane.f32.xlu0 %v958
      %v960 = vpop.xlane.xlu0 %959
      %v961 = vrcp.pop %v960
      %v962 = vmul.f32 %v957, %v961
      %v963 = vpack.c.bf16 %v962, %v962
      %965 = vrot.lane.b32.xlu0 %v793, 120
      %v966 = vpop.permute.xlu0 %965
      %v968 = vsel %vm794, %v963, 0
      %v971 = vsel %vm856, %v966, 0
      %973 = vmatprep.subr.bf16.mxu0 0
      %974 = vmatpush1.bf16.msra.mxu0 %v971
      %975 = vmatprep.subr.bf16.mxu0 0
      %976 = vmatpush1.bf16.msra.mxu0 0
      %977 = vmatprep.subr.bf16.mxu0 0
      %978 = vmatpush1.bf16.msra.mxu0 0
      %979 = vmatprep.subr.bf16.mxu0 0
      %980 = vmatpush1.bf16.msra.mxu0 0
      %981 = vmatprep.subr.bf16.mxu0 0
      %982 = vmatpush1.bf16.msra.mxu0 0
      %983 = vmatprep.subr.bf16.mxu0 0
      %984 = vmatpush1.bf16.msra.mxu0 0
      %985 = vmatprep.subr.bf16.mxu0 0
      %986 = vmatpush1.bf16.msra.mxu0 0
      %987 = vmatprep.subr.bf16.mxu0 0
      %988 = vmatpush1.bf16.msra.mxu0 0
      %989 = vmatprep.subr.bf16.mxu0 0
      %990 = vmatpush1.bf16.msra.mxu0 0
      %991 = vmatprep.subr.bf16.mxu0 0
      %992 = vmatpush1.bf16.msra.mxu0 0
      %993 = vmatprep.subr.bf16.mxu0 0
      %994 = vmatpush1.bf16.msra.mxu0 0
      %995 = vmatprep.subr.bf16.mxu0 0
      %996 = vmatpush1.bf16.msra.mxu0 0
      %997 = vmatprep.subr.bf16.mxu0 0
      %998 = vmatpush1.bf16.msra.mxu0 0
      %999 = vmatprep.subr.bf16.mxu0 0
      %1000 = vmatpush1.bf16.msra.mxu0 0
      %1001 = vmatprep.subr.bf16.mxu0 0
      %1002 = vmatpush1.bf16.msra.mxu0 0
      %1003 = vmatprep.subr.bf16.mxu0 0
      %1004 = vmatpush1.bf16.msra.mxu0 0
      %1005 = vmatprep.mubr.bf16.mxu0 0
      %1006 = vmatmul.mubr.bf16.gmra.mrb[0].mxu0 %v968
      %v1007 = vpop.f32.mrb[0].mxu0
      %v1008 = vadd.f32 0.0, %v1007
      %v1009 = vpop.f32.mrb[0].mxu0
      %v1010 = vpop.f32.mrb[0].mxu0
      %v1011 = vpop.f32.mrb[0].mxu0
      %1012 = vdwg.mxu0
      %1013 = vrot.lane.b32.xlu0 %v791, 112
      %v1014 = vpop.permute.xlu0 %1013
      %1015 = vrot.lane.b32.xlu0 %v792, 112
      %v1016 = vpop.permute.xlu0 %1015
      %v1018 = vsel %vm794, %v1014, 0
      %v1021 = vsel %vm794, %v1016, 0
      %1023 = vmatprep.subr.bf16.mxu0 0
      %1024 = vmatpush1.bf16.xpose.msra.mxu0 %v1021
      %1025 = vmatprep.subr.bf16.mxu0 0
      %1026 = vmatpush1.bf16.xpose.msra.mxu0 0
      %1027 = vmatprep.subr.bf16.mxu0 0
      %1028 = vmatpush1.bf16.xpose.msra.mxu0 0
      %1029 = vmatprep.subr.bf16.mxu0 0
      %1030 = vmatpush1.bf16.xpose.msra.mxu0 0
      %1031 = vmatprep.subr.bf16.mxu0 0
      %1032 = vmatpush1.bf16.xpose.msra.mxu0 0
      %1033 = vmatprep.subr.bf16.mxu0 0
      %1034 = vmatpush1.bf16.xpose.msra.mxu0 0
      %1035 = vmatprep.subr.bf16.mxu0 0
      %1036 = vmatpush1.bf16.xpose.msra.mxu0 0
      %1037 = vmatprep.subr.bf16.mxu0 0
      %1038 = vmatpush1.bf16.xpose.msra.mxu0 0
      %1039 = vmatprep.subr.bf16.mxu0 0
      %1040 = vmatpush1.bf16.xpose.msra.mxu0 0
      %1041 = vmatprep.subr.bf16.mxu0 0
      %1042 = vmatpush1.bf16.xpose.msra.mxu0 0
      %1043 = vmatprep.subr.bf16.mxu0 0
      %1044 = vmatpush1.bf16.xpose.msra.mxu0 0
      %1045 = vmatprep.subr.bf16.mxu0 0
      %1046 = vmatpush1.bf16.xpose.msra.mxu0 0
      %1047 = vmatprep.subr.bf16.mxu0 0
      %1048 = vmatpush1.bf16.xpose.msra.mxu0 0
      %1049 = vmatprep.subr.bf16.mxu0 0
      %1050 = vmatpush1.bf16.xpose.msra.mxu0 0
      %1051 = vmatprep.subr.bf16.mxu0 0
      %1052 = vmatpush1.bf16.xpose.msra.mxu0 0
      %1053 = vmatprep.subr.bf16.mxu0 0
      %1054 = vmatpush1.bf16.xpose.msra.mxu0 0
      %1055 = vmatprep.mubr.bf16.mxu0 0
      %1056 = vmatmul.mubr.bf16.gmra.mrb[0].mxu0 %v1018
      %v1057 = vpop.f32.mrb[0].mxu0
      %v1058 = vadd.f32 %v591, %v1057
      %v1059 = vpop.f32.mrb[0].mxu0
      %v1060 = vpop.f32.mrb[0].mxu0
      %v1061 = vpop.f32.mrb[0].mxu0
      %1062 = vdwg.mxu0
      %v1063 = vsel %vm794, %v1058, -inf
      %1064 = vmax.xlane.f32.xlu0 %v1063
      %v1065 = vpop.xlane.xlu0 %1064
      %v1066 = vsub.f32 %v1058, %v1065
      %v1067 = vmul.f32 %v1066, 1.442695
      %v1068 = vpow.pop %v1067
      %v1069 = vsel %vm794, %v1068, 0.0
      %1070 = vadd.xlane.f32.xlu0 %v1069
      %v1071 = vpop.xlane.xlu0 %1070
      %v1072 = vrcp.pop %v1071
      %v1073 = vmul.f32 %v1068, %v1072
      %v1074 = vpack.c.bf16 %v1073, %v1073
      %1075 = vrot.lane.b32.xlu0 %v793, 112
      %v1076 = vpop.permute.xlu0 %1075
      %v1078 = vsel %vm794, %v1074, 0
      %v1081 = vsel %vm856, %v1076, 0
      %1083 = vmatprep.subr.bf16.mxu0 0
      %1084 = vmatpush1.bf16.msra.mxu0 %v1081
      %1085 = vmatprep.subr.bf16.mxu0 0
      %1086 = vmatpush1.bf16.msra.mxu0 0
      %1087 = vmatprep.subr.bf16.mxu0 0
      %1088 = vmatpush1.bf16.msra.mxu0 0
      %1089 = vmatprep.subr.bf16.mxu0 0
      %1090 = vmatpush1.bf16.msra.mxu0 0
      %1091 = vmatprep.subr.bf16.mxu0 0
      %1092 = vmatpush1.bf16.msra.mxu0 0
      %1093 = vmatprep.subr.bf16.mxu0 0
      %1094 = vmatpush1.bf16.msra.mxu0 0
      %1095 = vmatprep.subr.bf16.mxu0 0
      %1096 = vmatpush1.bf16.msra.mxu0 0
      %1097 = vmatprep.subr.bf16.mxu0 0
      %1098 = vmatpush1.bf16.msra.mxu0 0
      %1099 = vmatprep.subr.bf16.mxu0 0
      %1100 = vmatpush1.bf16.msra.mxu0 0
      %1101 = vmatprep.subr.bf16.mxu0 0
      %1102 = vmatpush1.bf16.msra.mxu0 0
      %1103 = vmatprep.subr.bf16.mxu0 0
      %1104 = vmatpush1.bf16.msra.mxu0 0
      %1105 = vmatprep.subr.bf16.mxu0 0
      %1106 = vmatpush1.bf16.msra.mxu0 0
      %1107 = vmatprep.subr.bf16.mxu0 0
      %1108 = vmatpush1.bf16.msra.mxu0 0
      %1109 = vmatprep.subr.bf16.mxu0 0
      %1110 = vmatpush1.bf16.msra.mxu0 0
      %1111 = vmatprep.subr.bf16.mxu0 0
      %1112 = vmatpush1.bf16.msra.mxu0 0
      %1113 = vmatprep.subr.bf16.mxu0 0
      %1114 = vmatpush1.bf16.msra.mxu0 0
      %1115 = vmatprep.mubr.bf16.mxu0 0
      %1116 = vmatmul.mubr.bf16.gmra.mrb[0].mxu0 %v1078
      %v1117 = vpop.f32.mrb[0].mxu0
      %v1118 = vadd.f32 0.0, %v1117
      %v1119 = vpop.f32.mrb[0].mxu0
      %v1120 = vpop.f32.mrb[0].mxu0
      %v1121 = vpop.f32.mrb[0].mxu0
      %1122 = vdwg.mxu0
      %1123 = vrot.lane.b32.xlu0 %v791, 104
      %v1124 = vpop.permute.xlu0 %1123
      %1125 = vrot.lane.b32.xlu0 %v792, 104
      %v1126 = vpop.permute.xlu0 %1125
      %v1128 = vsel %vm794, %v1124, 0
      %v1131 = vsel %vm794, %v1126, 0
      %1133 = vmatprep.subr.bf16.mxu0 0
      %1134 = vmatpush1.bf16.xpose.msra.mxu0 %v1131
      %1135 = vmatprep.subr.bf16.mxu0 0
      %1136 = vmatpush1.bf16.xpose.msra.mxu0 0
      %1137 = vmatprep.subr.bf16.mxu0 0
      %1138 = vmatpush1.bf16.xpose.msra.mxu0 0
      %1139 = vmatprep.subr.bf16.mxu0 0
      %1140 = vmatpush1.bf16.xpose.msra.mxu0 0
      %1141 = vmatprep.subr.bf16.mxu0 0
      %1142 = vmatpush1.bf16.xpose.msra.mxu0 0
      %1143 = vmatprep.subr.bf16.mxu0 0
      %1144 = vmatpush1.bf16.xpose.msra.mxu0 0
      %1145 = vmatprep.subr.bf16.mxu0 0
      %1146 = vmatpush1.bf16.xpose.msra.mxu0 0
      %1147 = vmatprep.subr.bf16.mxu0 0
      %1148 = vmatpush1.bf16.xpose.msra.mxu0 0
      %1149 = vmatprep.subr.bf16.mxu0 0
      %1150 = vmatpush1.bf16.xpose.msra.mxu0 0
      %1151 = vmatprep.subr.bf16.mxu0 0
      %1152 = vmatpush1.bf16.xpose.msra.mxu0 0
      %1153 = vmatprep.subr.bf16.mxu0 0
      %1154 = vmatpush1.bf16.xpose.msra.mxu0 0
      %1155 = vmatprep.subr.bf16.mxu0 0
      %1156 = vmatpush1.bf16.xpose.msra.mxu0 0
      %1157 = vmatprep.subr.bf16.mxu0 0
      %1158 = vmatpush1.bf16.xpose.msra.mxu0 0
      %1159 = vmatprep.subr.bf16.mxu0 0
      %1160 = vmatpush1.bf16.xpose.msra.mxu0 0
      %1161 = vmatprep.subr.bf16.mxu0 0
      %1162 = vmatpush1.bf16.xpose.msra.mxu0 0
      %1163 = vmatprep.subr.bf16.mxu0 0
      %1164 = vmatpush1.bf16.xpose.msra.mxu0 0
      %1165 = vmatprep.mubr.bf16.mxu0 0
      %1166 = vmatmul.mubr.bf16.gmra.mrb[0].mxu0 %v1128
      %v1167 = vpop.f32.mrb[0].mxu0
      %v1168 = vadd.f32 %v591, %v1167
      %v1169 = vpop.f32.mrb[0].mxu0
      %v1170 = vpop.f32.mrb[0].mxu0
      %v1171 = vpop.f32.mrb[0].mxu0
      %1172 = vdwg.mxu0
      %v1173 = vsel %vm794, %v1168, -inf
      %1174 = vmax.xlane.f32.xlu0 %v1173
      %v1175 = vpop.xlane.xlu0 %1174
      %v1176 = vsub.f32 %v1168, %v1175
      %v1177 = vmul.f32 %v1176, 1.442695
      %v1178 = vpow.pop %v1177
      %v1179 = vsel %vm794, %v1178, 0.0
      %1180 = vadd.xlane.f32.xlu0 %v1179
      %v1181 = vpop.xlane.xlu0 %1180
      %v1182 = vrcp.pop %v1181
      %v1183 = vmul.f32 %v1178, %v1182
      %v1184 = vpack.c.bf16 %v1183, %v1183
      %1185 = vrot.lane.b32.xlu0 %v793, 104
      %v1186 = vpop.permute.xlu0 %1185
      %v1188 = vsel %vm794, %v1184, 0
      %v1191 = vsel %vm856, %v1186, 0
      %1193 = vmatprep.subr.bf16.mxu0 0
      %1194 = vmatpush1.bf16.msra.mxu0 %v1191
      %1195 = vmatprep.subr.bf16.mxu0 0
      %1196 = vmatpush1.bf16.msra.mxu0 0
      %1197 = vmatprep.subr.bf16.mxu0 0
      %1198 = vmatpush1.bf16.msra.mxu0 0
      %1199 = vmatprep.subr.bf16.mxu0 0
      %1200 = vmatpush1.bf16.msra.mxu0 0
      %1201 = vmatprep.subr.bf16.mxu0 0
      %1202 = vmatpush1.bf16.msra.mxu0 0
      %1203 = vmatprep.subr.bf16.mxu0 0
      %1204 = vmatpush1.bf16.msra.mxu0 0
      %1205 = vmatprep.subr.bf16.mxu0 0
      %1206 = vmatpush1.bf16.msra.mxu0 0
      %1207 = vmatprep.subr.bf16.mxu0 0
      %1208 = vmatpush1.bf16.msra.mxu0 0
      %1209 = vmatprep.subr.bf16.mxu0 0
      %1210 = vmatpush1.bf16.msra.mxu0 0
      %1211 = vmatprep.subr.bf16.mxu0 0
      %1212 = vmatpush1.bf16.msra.mxu0 0
      %1213 = vmatprep.subr.bf16.mxu0 0
      %1214 = vmatpush1.bf16.msra.mxu0 0
      %1215 = vmatprep.subr.bf16.mxu0 0
      %1216 = vmatpush1.bf16.msra.mxu0 0
      %1217 = vmatprep.subr.bf16.mxu0 0
      %1218 = vmatpush1.bf16.msra.mxu0 0
      %1219 = vmatprep.subr.bf16.mxu0 0
      %1220 = vmatpush1.bf16.msra.mxu0 0
      %1221 = vmatprep.subr.bf16.mxu0 0
      %1222 = vmatpush1.bf16.msra.mxu0 0
      %1223 = vmatprep.subr.bf16.mxu0 0
      %1224 = vmatpush1.bf16.msra.mxu0 0
      %1225 = vmatprep.mubr.bf16.mxu0 0
      %1226 = vmatmul.mubr.bf16.gmra.mrb[0].mxu0 %v1188
      %v1227 = vpop.f32.mrb[0].mxu0
      %v1228 = vadd.f32 0.0, %v1227
      %v1229 = vpop.f32.mrb[0].mxu0
      %v1230 = vpop.f32.mrb[0].mxu0
      %v1231 = vpop.f32.mrb[0].mxu0
      %1232 = vdwg.mxu0
      %1234 = vrot.lane.b32.xlu0 %v1008, 8
      %v1235 = vpop.permute.xlu0 %1234
      %1238 = vrot.lane.b32.xlu0 %v1118, 16
      %v1239 = vpop.permute.xlu0 %1238
      %1242 = vrot.lane.b32.xlu0 %v1228, 24
      %v1243 = vpop.permute.xlu0 %1242
      %v1245 = vsel %vm794, %v895, %v1235
      %vm1246 = vcmask 130048
      %v1247 = vsel %vm1246, %v1245, %v1239
      %vm1248 = vcmask 195584
      %v1249 = vsel %vm1248, %v1247, %v1243
      %v1250 = vpack.c.bf16 %v1249, %v1249
      %v1252 = vlaneseq
      %v1253 = vshrl.u32 %v1252, 7
      %v1254 = vsub.s32 0, %v1253
      %v1255 = vrot.slane %v611, %v1254
      %v1261 = vunpack.c.l.b16 %v604
      %v1262 = vunpack.c.l.b16 %v605
      %v1263 = vunpack.c.l.b16 %v606
      %v1264 = vunpack.c.l.b16 %v607
      %v1265 = vpack.c.b16 %v1262, %v1261
      %v1266 = vpack.c.b16 %v1264, %v1263
      %v1270 = vsel %vm630, %v1250, 0
      %1272 = vmatprep.subr.bf16.mxu0 0
      %1273 = vmatpush1.bf16.msra.mxu0 %v1265
      %1274 = vmatprep.subr.bf16.mxu0 0
      %1275 = vmatpush1.bf16.msra.mxu0 %v1266
      %1276 = vmatprep.subr.bf16.mxu0 0
      %1277 = vmatpush1.bf16.msra.mxu0 0
      %1278 = vmatprep.subr.bf16.mxu0 0
      %1279 = vmatpush1.bf16.msra.mxu0 0
      %1280 = vmatprep.subr.bf16.mxu0 0
      %1281 = vmatpush1.bf16.msra.mxu0 0
      %1282 = vmatprep.subr.bf16.mxu0 0
      %1283 = vmatpush1.bf16.msra.mxu0 0
      %1284 = vmatprep.subr.bf16.mxu0 0
      %1285 = vmatpush1.bf16.msra.mxu0 0
      %1286 = vmatprep.subr.bf16.mxu0 0
      %1287 = vmatpush1.bf16.msra.mxu0 0
      %1288 = vmatprep.subr.bf16.mxu0 0
      %1289 = vmatpush1.bf16.msra.mxu0 0
      %1290 = vmatprep.subr.bf16.mxu0 0
      %1291 = vmatpush1.bf16.msra.mxu0 0
      %1292 = vmatprep.subr.bf16.mxu0 0
      %1293 = vmatpush1.bf16.msra.mxu0 0
      %1294 = vmatprep.subr.bf16.mxu0 0
      %1295 = vmatpush1.bf16.msra.mxu0 0
      %1296 = vmatprep.subr.bf16.mxu0 0
      %1297 = vmatpush1.bf16.msra.mxu0 0
      %1298 = vmatprep.subr.bf16.mxu0 0
      %1299 = vmatpush1.bf16.msra.mxu0 0
      %1300 = vmatprep.subr.bf16.mxu0 0
      %1301 = vmatpush1.bf16.msra.mxu0 0
      %1302 = vmatprep.subr.bf16.mxu0 0
      %1303 = vmatpush1.bf16.msra.mxu0 0
      %1304 = vmatprep.mubr.bf16.mxu0 0
      %1305 = vmatmul.mubr.bf16.gmra.mrb[0].mxu0 %v1270
      %v1306 = vpop.f32.mrb[0].mxu0
      %v1307 = vadd.f32 %v1255, %v1306
      %v1308 = vpop.f32.mrb[0].mxu0
      %v1309 = vpop.f32.mrb[0].mxu0
      %v1310 = vpop.f32.mrb[0].mxu0
      %1311 = vdwg.mxu0
      %v1312 = vadd.f32 %v589, %v1307
      %v1313 = vld [vmem:[%s10] sm:$0x1]
      %v1314 = vld [vmem:[%s11] sm:$0x1]
      %v1315 = vsel %vm630, %v1312, 0.0
      %1316 = vadd.xlane.f32.xlu0 %v1315
      %v1317 = vpop.xlane.xlu0 %1316
      %v1318 = vrcp.pop 32.0
      %v1319 = vmul.f32 %v1317, %v1318
      %v1320 = vmul.f32 %v1312, %v1312
      %v1321 = vsel %vm630, %v1320, 0.0
      %1322 = vadd.xlane.f32.xlu0 %v1321
      %v1323 = vpop.xlane.xlu0 %1322
      %v1324 = vmul.f32 %v1323, %v1318
      %v1325 = vmul.f32 %v1319, %v1319
      %v1326 = vsub.f32 %v1324, %v1325
      %v1327 = vmax.f32 %v1326, 0.0
      %v1328 = vsub.f32 %v1312, %v1319
      %v1329 = vadd.f32 %v1327, 1e-05
      %v1330 = vrsqrt.pop %v1329
      %v1331 = vmul.f32 %v1328, %v1330
      %v1333 = vlaneseq
      %v1334 = vshrl.u32 %v1333, 7
      %v1335 = vsub.s32 0, %v1334
      %v1336 = vrot.slane %v1313, %v1335
      %v1338 = vmul.f32 %v1331, %v1336
      %v1340 = vlaneseq
      %v1341 = vshrl.u32 %v1340, 7
      %v1342 = vsub.s32 0, %v1341
      %v1343 = vrot.slane %v1314, %v1342
      %v1345 = vadd.f32 %v1338, %v1343
      %v1346 = vld [vmem:[%s12] sm:$0xf]
      %v1347 = vld [vmem:[%s12 + $0x4] sm:$0xf]
      %v1348 = vld [vmem:[%s12 + $0x8] sm:$0xf]
      %v1349 = vld [vmem:[%s12 + $0xc] sm:$0xf]
      %v1350 = vld [vmem:[%s13] sm:$0x1]
      %v1351 = vld [vmem:[%s14] sm:$0xf]
      %v1352 = vld [vmem:[%s14 + $0x4] sm:$0xf]
      %v1353 = vld [vmem:[%s14 + $0x8] sm:$0xf]
      %v1354 = vld [vmem:[%s14 + $0xc] sm:$0xf]
      %v1355 = vld [vmem:[%s14 + $0x10] sm:$0xf]
      %v1356 = vld [vmem:[%s14 + $0x14] sm:$0xf]
      %v1357 = vld [vmem:[%s14 + $0x18] sm:$0xf]
      %v1358 = vld [vmem:[%s14 + $0x1c] sm:$0xf]
      %v1359 = vld [vmem:[%s15] sm:$0x1]
      %v1360 = vpack.c.bf16 %v1345, %v1345
      %v1362 = vlaneseq
      %v1363 = vshrl.u32 %v1362, 7
      %v1364 = vsub.s32 0, %v1363
      %v1365 = vrot.slane %v1350, %v1364
      %v1371 = vunpack.c.l.b16 %v1346
      %v1372 = vunpack.c.l.b16 %v1347
      %v1373 = vunpack.c.l.b16 %v1348
      %v1374 = vunpack.c.l.b16 %v1349
      %v1375 = vpack.c.b16 %v1372, %v1371
      %v1376 = vpack.c.b16 %v1374, %v1373
      %v1380 = vsel %vm630, %v1360, 0
      %1382 = vmatprep.subr.bf16.mxu0 0
      %1383 = vmatpush1.bf16.msra.mxu0 %v1375
      %1384 = vmatprep.subr.bf16.mxu0 0
      %1385 = vmatpush1.bf16.msra.mxu0 %v1376
      %1386 = vmatprep.subr.bf16.mxu0 0
      %1387 = vmatpush1.bf16.msra.mxu0 0
      %1388 = vmatprep.subr.bf16.mxu0 0
      %1389 = vmatpush1.bf16.msra.mxu0 0
      %1390 = vmatprep.subr.bf16.mxu0 0
      %1391 = vmatpush1.bf16.msra.mxu0 0
      %1392 = vmatprep.subr.bf16.mxu0 0
      %1393 = vmatpush1.bf16.msra.mxu0 0
      %1394 = vmatprep.subr.bf16.mxu0 0
      %1395 = vmatpush1.bf16.msra.mxu0 0
      %1396 = vmatprep.subr.bf16.mxu0 0
      %1397 = vmatpush1.bf16.msra.mxu0 0
      %1398 = vmatprep.subr.bf16.mxu0 0
      %1399 = vmatpush1.bf16.msra.mxu0 0
      %1400 = vmatprep.subr.bf16.mxu0 0
      %1401 = vmatpush1.bf16.msra.mxu0 0
      %1402 = vmatprep.subr.bf16.mxu0 0
      %1403 = vmatpush1.bf16.msra.mxu0 0
      %1404 = vmatprep.subr.bf16.mxu0 0
      %1405 = vmatpush1.bf16.msra.mxu0 0
      %1406 = vmatprep.subr.bf16.mxu0 0
      %1407 = vmatpush1.bf16.msra.mxu0 0
      %1408 = vmatprep.subr.bf16.mxu0 0
      %1409 = vmatpush1.bf16.msra.mxu0 0
      %1410 = vmatprep.subr.bf16.mxu0 0
      %1411 = vmatpush1.bf16.msra.mxu0 0
      %1412 = vmatprep.subr.bf16.mxu0 0
      %1413 = vmatpush1.bf16.msra.mxu0 0
      %1414 = vmatprep.mubr.bf16.mxu0 0
      %1415 = vmatmul.mubr.bf16.gmra.mrb[0].mxu0 %v1380
      %v1416 = vpop.f32.mrb[0].mxu0
      %v1417 = vadd.f32 %v1365, %v1416
      %v1418 = vpop.f32.mrb[0].mxu0
      %v1419 = vpop.f32.mrb[0].mxu0
      %v1420 = vpop.f32.mrb[0].mxu0
      %1421 = vdwg.mxu0
      %v1422 = vmax.f32 %v1417, 0.0
      %v1423 = vpack.c.bf16 %v1422, %v1422
      %v1425 = vlaneseq
      %v1426 = vshrl.u32 %v1425, 7
      %v1427 = vsub.s32 0, %v1426
      %v1428 = vrot.slane %v1359, %v1427
      %v1438 = vunpack.c.l.b16 %v1351
      %v1439 = vunpack.c.l.b16 %v1352
      %v1440 = vunpack.c.l.b16 %v1353
      %v1441 = vunpack.c.l.b16 %v1354
      %v1442 = vunpack.c.l.b16 %v1355
      %v1443 = vunpack.c.l.b16 %v1356
      %v1444 = vunpack.c.l.b16 %v1357
      %v1445 = vunpack.c.l.b16 %v1358
      %v1446 = vpack.c.b16 %v1439, %v1438
      %v1447 = vpack.c.b16 %v1441, %v1440
      %v1448 = vpack.c.b16 %v1443, %v1442
      %v1449 = vpack.c.b16 %v1445, %v1444
      %vm1454 = vcmask 523264
      %v1456 = vsel %vm1454, %v1423, 0
      %1458 = vmatprep.subr.bf16.mxu0 0
      %1459 = vmatpush1.bf16.msra.mxu0 %v1446
      %1460 = vmatprep.subr.bf16.mxu0 0
      %1461 = vmatpush1.bf16.msra.mxu0 %v1447
      %1462 = vmatprep.subr.bf16.mxu0 0
      %1463 = vmatpush1.bf16.msra.mxu0 %v1448
      %1464 = vmatprep.subr.bf16.mxu0 0
      %1465 = vmatpush1.bf16.msra.mxu0 %v1449
      %1466 = vmatprep.subr.bf16.mxu0 0
      %1467 = vmatpush1.bf16.msra.mxu0 0
      %1468 = vmatprep.subr.bf16.mxu0 0
      %1469 = vmatpush1.bf16.msra.mxu0 0
      %1470 = vmatprep.subr.bf16.mxu0 0
      %1471 = vmatpush1.bf16.msra.mxu0 0
      %1472 = vmatprep.subr.bf16.mxu0 0
      %1473 = vmatpush1.bf16.msra.mxu0 0
      %1474 = vmatprep.subr.bf16.mxu0 0
      %1475 = vmatpush1.bf16.msra.mxu0 0
      %1476 = vmatprep.subr.bf16.mxu0 0
      %1477 = vmatpush1.bf16.msra.mxu0 0
      %1478 = vmatprep.subr.bf16.mxu0 0
      %1479 = vmatpush1.bf16.msra.mxu0 0
      %1480 = vmatprep.subr.bf16.mxu0 0
      %1481 = vmatpush1.bf16.msra.mxu0 0
      %1482 = vmatprep.subr.bf16.mxu0 0
      %1483 = vmatpush1.bf16.msra.mxu0 0
      %1484 = vmatprep.subr.bf16.mxu0 0
      %1485 = vmatpush1.bf16.msra.mxu0 0
      %1486 = vmatprep.subr.bf16.mxu0 0
      %1487 = vmatpush1.bf16.msra.mxu0 0
      %1488 = vmatprep.subr.bf16.mxu0 0
      %1489 = vmatpush1.bf16.msra.mxu0 0
      %1490 = vmatprep.mubr.bf16.mxu0 0
      %1491 = vmatmul.mubr.bf16.gmra.mrb[0].mxu0 %v1456
      %v1492 = vpop.f32.mrb[0].mxu0
      %v1493 = vadd.f32 %v1428, %v1492
      %v1494 = vpop.f32.mrb[0].mxu0
      %v1495 = vpop.f32.mrb[0].mxu0
      %v1496 = vpop.f32.mrb[0].mxu0
      %1497 = vdwg.mxu0
      %v1498 = vadd.f32 %v1345, %v1493
      %v1499 = vld [vmem:[%s16] sm:$0x1]
      %v1500 = vld [vmem:[%s17] sm:$0x1]
      %v1501 = vsel %vm630, %v1498, 0.0
      %1502 = vadd.xlane.f32.xlu0 %v1501
      %v1503 = vpop.xlane.xlu0 %1502
      %v1504 = vmul.f32 %v1503, %v1318
      %v1505 = vmul.f32 %v1498, %v1498
      %v1506 = vsel %vm630, %v1505, 0.0
      %1507 = vadd.xlane.f32.xlu0 %v1506
      %v1508 = vpop.xlane.xlu0 %1507
      %v1509 = vmul.f32 %v1508, %v1318
      %v1510 = vmul.f32 %v1504, %v1504
      %v1511 = vsub.f32 %v1509, %v1510
      %v1512 = vmax.f32 %v1511, 0.0
      %v1513 = vsub.f32 %v1498, %v1504
      %v1514 = vadd.f32 %v1512, 1e-05
      %v1515 = vrsqrt.pop %v1514
      %v1516 = vmul.f32 %v1513, %v1515
      %v1518 = vlaneseq
      %v1519 = vshrl.u32 %v1518, 7
      %v1520 = vsub.s32 0, %v1519
      %v1521 = vrot.slane %v1499, %v1520
      %v1523 = vmul.f32 %v1516, %v1521
      %v1525 = vlaneseq
      %v1526 = vshrl.u32 %v1525, 7
      %v1527 = vsub.s32 0, %v1526
      %v1528 = vrot.slane %v1500, %v1527
      %v1530 = vadd.f32 %v1523, %v1528
      %1531 = vst.msk [vmem:[%s587] sm:$0xff] %vm630, %v1530
      %p1532 = scmp.lt.s32.totalorder %s29, 1
      %s1533 = scalar_select %p1532, %s29, 1
      %s1534 = smul.addr %s1533, 8
      %s1535 = scalar_lea.vmem %s18, %s1534
      // Predicated region
      $region93: #{seq2seq_forward.5} parent=91 // pred_check
        %p1536 = pneg %p435
      $region94: #{seq2seq_forward.5} parent=91 // pred_check_branch
        %1538 = sbr.rel (%p1536) target = $region96
      $region95: #{seq2seq_forward.5} parent=91 // pred_region
        _
      $region96: #{seq2seq_forward.5} parent=91 // pred_fallthru
        _
    $region92: #{seq2seq_forward.5} parent=5 // pred_fallthru
      _
    %p1539 = scmp.le.s32.totalorder 2, %s24
    // Predicated region
    $region97: #{seq2seq_forward.5} parent=5 // pred_check
      %p1540 = pneg %p1539
    $region98: #{seq2seq_forward.5} parent=5 // pred_check_branch
      %1542 = sbr.rel (%p1540) target = $region100
    $region99: #{seq2seq_forward.5} parent=5 // pred_region
      %s1543 = ssub.s32 %s24, 2
      // Predicated region
      $region101: #{seq2seq_forward.5} parent=99 // pred_check
        %p1544 = pneg %p441
      $region102: #{seq2seq_forward.5} parent=99 // pred_check_branch
        %1546 = sbr.rel (%p1544) target = $region104
      $region103: #{seq2seq_forward.5} parent=99 // pred_region
        %p1547 = scmp.lt.s32.totalorder %s30, 1
        %s1548 = scalar_select %p1547, %s30, 1
        %s1549 = smul.addr %s1548, 8
        %s1550 = scalar_lea.vmem %s18, %s1549
      $region104: #{seq2seq_forward.5} parent=99 // pred_fallthru
        _
    $region100: #{seq2seq_forward.5} parent=5 // pred_fallthru
      _
  $region6: #{seq2seq_forward.5} parent=0 // loop_footer
    %s28 = sadd.s32 1, %s24
  $region7: #{seq2seq_forward.5} parent=0 // loop_footer_branch
    %23 = sbr.rel target = $region3
  $region8: #{seq2seq_forward.5} parent=0 // loop_exit
    _

// kernel: seq2seq_forward.8
$region0: #{seq2seq_forward.8}
  #allocation0 [shape = 'u32[]', space=smem, size = 0x4, offset = 0x4, fixed_abs, tag = 'smem constant byte address 0x4 - core index']
  #allocation1 [shape = 'u32[144,128]{1,0:T(1,128)}', space=vmem, size = 0x12000, scoped, tag = 'internal scratch']
  %s0 = inlined_call_operand.smem [shape: u32[32], index: -1, kind: input, shape index: {}]
  %s1 = sld [smem:[%s0]]
  %s2 = scalar_lea.smem %s0, 1
  %s3 = sld [smem:[%s2]]
  %s4 = scalar_lea.smem %s0, 2
  %s5 = sld [smem:[%s4]]
  %s6 = scalar_lea.smem %s0, 3
  %s7 = sld [smem:[%s6]]
  %s8 = scalar_lea.smem %s0, 4
  %s9 = sld [smem:[%s8]]
  %s10 = scalar_lea.smem %s0, 5
  %s11 = sld [smem:[%s10]]
  %s12 = scalar_lea.smem %s0, 6
  %s13 = sld [smem:[%s12]]
  %s14 = scalar_lea.smem %s0, 7
  %s15 = sld [smem:[%s14]]
  %s16 = scalar_lea.smem %s0, 8
  %s17 = sld [smem:[%s16]]
  %s18 = scalar_lea.smem %s0, 9
  %s19 = sld [smem:[%s18]]
  %s20 = scalar_lea.smem %s0, 10
  %s21 = sld [smem:[%s20]]
  %s22 = scalar_lea.smem %s0, 11
  %s23 = sld [smem:[%s22]]
  %s24 = scalar_lea.smem %s0, 12
  %s25 = sld [smem:[%s24]]
  %s26 = scalar_lea.smem %s0, 13
  %s27 = sld [smem:[%s26]]
  %s28 = scalar_lea.smem %s0, 14
  %s29 = sld [smem:[%s28]]
  %s30 = scalar_lea.smem %s0, 15
  %s31 = sld [smem:[%s30]]
  %s32 = scalar_lea.smem %s0, 16
  %s33 = sld [smem:[%s32]]
  %s34 = scalar_lea.smem %s0, 17
  %s35 = sld [smem:[%s34]]
  %s36 = scalar_lea.smem %s0, 18
  %s37 = sld [smem:[%s36]]
  %s38 = scalar_lea.smem %s0, 19
  %s39 = sld [smem:[%s38]]
  %s40 = scalar_lea.smem %s0, 20
  %s41 = sld [smem:[%s40]]
  %s42 = scalar_lea.smem %s0, 21
  %s43 = sld [smem:[%s42]]
  %s44 = scalar_lea.smem %s0, 22
  %s45 = sld [smem:[%s44]]
  %s46 = scalar_lea.smem %s0, 23
  %s47 = sld [smem:[%s46]]
  %s48 = scalar_lea.smem %s0, 24
  %s49 = sld [smem:[%s48]]
  %s50 = scalar_lea.smem %s0, 25
  %s51 = sld [smem:[%s50]]
  %s52 = scalar_lea.smem %s0, 26
  %s53 = sld [smem:[%s52]]
  %s54 = scalar_lea.smem %s0, 27
  %s55 = sld [smem:[%s54]]
  %s56 = scalar_lea.smem %s0, 28
  %s57 = sld [smem:[%s56]]
  %s58 = scalar_lea.smem %s0, 29
  %s59 = sld [smem:[%s58]]
  %s60 = scalar_lea.smem %s0, 30
  %s61 = sld [smem:[%s60]]
  %s62 = scalar_lea.smem %s0, 31
  %s63 = sld [smem:[%s62]]
  %64 = xla_tuple %s61, %s63
  %s65 = sld [smem:[#allocation0]]
  $region213: #{seq2seq_forward.8} parent=0
    _
  %s67 = ssub.s32 1, %s65
  %s68 = scalar_select 0, %s67, %s65
  $region1: #{seq2seq_forward.8} parent=0
    #allocation2 [shape = 'u8[512]{0}', space=vmem, size = 0x400, scoped, tag = 'input window, operand 11, single buffered']
    #allocation3 [shape = 's32[2]{0}', space=sflag, size = 0x8, scoped, tag = 'scoped memory for seq2seq_forward.8']
    #allocation4 [shape = 's32[2]{0}', space=sflag, size = 0x8, scoped, tag = 'scoped memory for seq2seq_forward.8']
    #allocation5 [shape = 'u8[512]{0}', space=vmem, size = 0x400, scoped, tag = 'input window, operand 12, single buffered']
    #allocation6 [shape = 's32[1]{0}', space=sflag, size = 0x4, scoped, tag = 'scoped memory for seq2seq_forward.8']
    #allocation7 [shape = 'u8[512]{0}', space=vmem, size = 0x400, scoped, tag = 'input window, operand 13, single buffered']
    #allocation8 [shape = 'u8[512]{0}', space=vmem, size = 0x400, scoped, tag = 'input window, operand 18, single buffered']
    #allocation9 [shape = 's32[1]{0}', space=sflag, size = 0x4, scoped, tag = 'scoped memory for seq2seq_forward.8']
    #allocation10 [shape = 'u8[512]{0}', space=vmem, size = 0x400, scoped, tag = 'input window, operand 19, single buffered']
    #allocation11 [shape = 'u8[512]{0}', space=vmem, size = 0x400, scoped, tag = 'input window, operand 20, single buffered']
    #allocation12 [shape = 's32[1]{0}', space=sflag, size = 0x4, scoped, tag = 'scoped memory for seq2seq_forward.8']
    #allocation13 [shape = 'u8[512]{0}', space=vmem, size = 0x400, scoped, tag = 'input window, operand 21, single buffered']
    #allocation14 [shape = 'u8[512]{0}', space=vmem, size = 0x400, scoped, tag = 'input window, operand 22, single buffered']
    #allocation15 [shape = 's32[1]{0}', space=sflag, size = 0x4, scoped, tag = 'scoped memory for seq2seq_forward.8']
    #allocation16 [shape = 'u8[512]{0}', space=vmem, size = 0x400, scoped, tag = 'input window, operand 23, single buffered']
    #allocation17 [shape = 'u8[512]{0}', space=vmem, size = 0x400, scoped, tag = 'input window, operand 25, single buffered']
    #allocation18 [shape = 's32[1]{0}', space=sflag, size = 0x4, scoped, tag = 'scoped memory for seq2seq_forward.8']
    #allocation19 [shape = 'u8[512]{0}', space=vmem, size = 0x400, scoped, tag = 'input window, operand 27, single buffered']
    #allocation20 [shape = 'u8[512]{0}', space=vmem, size = 0x400, scoped, tag = 'input window, operand 28, single buffered']
    #allocation21 [shape = 's32[1]{0}', space=sflag, size = 0x4, scoped, tag = 'scoped memory for seq2seq_forward.8']
    #allocation22 [shape = 'u8[512]{0}', space=vmem, size = 0x400, scoped, tag = 'input window, operand 29, single buffered']
    #allocation23 [shape = 'u8[32768]{0}', space=vmem, size = 0x8000, scoped, tag = 'output window, operand 1']
    %69 = vsyncpa [#allocation3], 0
    %70 = vsyncpa [#allocation6], 0
    %71 = vsyncpa [#allocation9], 0
    %72 = vsyncpa [#allocation12], 0
    %73 = vsyncpa [#allocation15], 0
    %74 = vsyncpa [#allocation18], 0
    %75 = vsyncpa [#allocation21], 0
    %76 = vsyncpa [#allocation4], 0
    %s77 = scalar_lea.sflag [#allocation4], 1
    %78 = vsyncpa %s77, 0
    loop: start=0, step=1, limit=4
    $region2: #{seq2seq_forward.8} parent=1 // loop_pre_header
      _
    $region3: #{seq2seq_forward.8} parent=1 // loop_header
      %s80 = sphi 0, %s84
      %p81 = scmp.ge.s32.totalorder %s80, 4
      %s90 = sphi 0, %s92
      %s93 = sphi 0, %s90
      %s94 = sphi 0, %s93
      %s110 = sphi 0, %s94
      %s116 = sphi 0, %s118
      %s119 = sphi 0, %s116
      %s120 = sphi 0, %s119
      %s136 = sphi 0, %s120
      %s142 = sphi 0, %s144
      %s145 = sphi 0, %s142
      %s146 = sphi 0, %s145
      %s162 = sphi 0, %s146
      %s168 = sphi 0, %s170
      %s171 = sphi 0, %s168
      %s172 = sphi 0, %s171
      %s188 = sphi 0, %s172
      %s192 = sphi 0, %s192
      %s194 = sphi 0, %s192
      %s195 = sphi 0, %s194
      %s209 = sphi 0, %s195
      %s213 = sphi 0, %s213
      %s215 = sphi 0, %s213
      %s216 = sphi 0, %s215
      %s230 = sphi 0, %s216
      %s234 = sphi 0, %s234
      %s236 = sphi 0, %s234
      %s237 = sphi 0, %s236
      %s251 = sphi 0, %s237
      %s255 = sphi 0, %s255
      %s257 = sphi 0, %s255
      %s258 = sphi 0, %s257
      %s272 = sphi 0, %s258
      %s276 = sphi 0, %s276
      %s278 = sphi 0, %s276
      %s279 = sphi 0, %s278
      %s293 = sphi 0, %s279
      %s297 = sphi 0, %s297
      %s299 = sphi 0, %s297
      %s300 = sphi 0, %s299
      %s314 = sphi 0, %s300
      %s318 = sphi 0, %s318
      %s320 = sphi 0, %s318
      %s321 = sphi 0, %s320
      %s335 = sphi 0, %s321
      %s339 = sphi 0, %s339
      %s341 = sphi 0, %s339
      %s342 = sphi 0, %s341
      %s356 = sphi 0, %s342
      %s360 = sphi 0, %s360
      %s362 = sphi 0, %s360
      %s363 = sphi 0, %s362
      %s377 = sphi 0, %s363
      %s381 = sphi 0, %s381
      %s383 = sphi 0, %s381
      %s384 = sphi 0, %s383
      %s398 = sphi 0, %s384
      %s402 = sphi 0, %s402
      %s404 = sphi 0, %s402
      %s405 = sphi 0, %s404
      %s419 = sphi 0, %s405
      %s423 = sphi 0, %s423
      %s425 = sphi 0, %s423
      %s426 = sphi 0, %s425
      %s440 = sphi 0, %s426
      %s444 = sphi 0, %s444
      %s446 = sphi 0, %s444
      %s447 = sphi 0, %s446
      %s461 = sphi 0, %s447
      %s465 = sphi 0, %s465
      %s467 = sphi 0, %s465
      %s468 = sphi 0, %s467
      %s482 = sphi 0, %s468
      %s486 = sphi 0, %s486
      %s488 = sphi 0, %s486
      %s489 = sphi 0, %s488
      %s503 = sphi 0, %s489
      %s507 = sphi 0, %s507
      %s509 = sphi 0, %s507
      %s510 = sphi 0, %s509
      %s524 = sphi 0, %s510
      %s528 = sphi 0, %s528
      %s530 = sphi 0, %s528
      %s531 = sphi 0, %s530
      %s545 = sphi 0, %s531
      %s549 = sphi 0, %s549
      %s551 = sphi 0, %s549
      %s552 = sphi 0, %s551
      %s566 = sphi 0, %s552
      %s570 = sphi 0, %s570
      %s572 = sphi 0, %s570
      %s573 = sphi 0, %s572
      %s587 = sphi 0, %s573
      %s591 = sphi 0, %s591
      %s593 = sphi 0, %s591
      %s594 = sphi 0, %s593
      %s608 = sphi 0, %s594
      %s612 = sphi 0, %s612
      %s614 = sphi 0, %s612
      %s615 = sphi 0, %s614
      %s629 = sphi 0, %s615
      %s633 = sphi 0, %s633
      %s635 = sphi 0, %s633
      %s636 = sphi 0, %s635
      %s650 = sphi 0, %s636
      %s654 = sphi 0, %s654
      %s656 = sphi 0, %s654
      %s657 = sphi 0, %s656
      %s671 = sphi 0, %s657
      %s675 = sphi 0, %s675
      %s677 = sphi 0, %s675
      %s678 = sphi 0, %s677
      %s692 = sphi 0, %s678
      %s696 = sphi 0, %s696
      %s698 = sphi 0, %s696
      %s699 = sphi 0, %s698
      %s713 = sphi 0, %s699
      %s717 = sphi 0, %s717
      %s719 = sphi 0, %s717
      %s720 = sphi 0, %s719
      %s734 = sphi 0, %s720
      %s740 = sphi 0, %s742
      %s743 = sphi 0, %s740
      %s744 = sphi 0, %s743
      %s760 = sphi 0, %s744
      %s766 = sphi 0, %s768
      %s769 = sphi 0, %s766
      %s770 = sphi 0, %s769
      %s786 = sphi 0, %s770
    $region4: #{seq2seq_forward.8} parent=1 // loop_header_branch
      %83 = sbr.rel (%p81) target = $region8
    $region5: #{seq2seq_forward.8} parent=1 // loop_body
      %s85 = ssub.s32 %s80, 1
      %s86 = ssub.s32 %s80, 2
      %s87 = sadd.s32 %s80, 1
      %s88 = ssub.s32 %s80, %s87
      %p89 = scmp.eq.s32.totalorder %s88, 0
      %s91 = sadd.s32 %s90, 1
      %s92 = scalar_select %p89, %s90, %s91
      %p95 = pneg %p89
      %p96 = scmp.eq.s32.totalorder %s80, 1
      %p97 = por %p95, %p96
      %p98 = scmp.ne.s32.totalorder %s90, %s93
      %p99 = scmp.eq.s32.totalorder %s80, 0
      %p100 = por %p98, %p99
      %p101 = scmp.ne.s32.totalorder %s90, %s93
      %p102 = scmp.eq.s32.totalorder %s85, 1
      %p103 = por %p101, %p102
      %p104 = scmp.ne.s32.totalorder %s93, %s94
      %p105 = scmp.eq.s32.totalorder %s85, 0
      %p106 = por %p104, %p105
      %p107 = scmp.ne.s32.totalorder %s93, %s94
      %p108 = scmp.eq.s32.totalorder %s86, 1
      %p109 = por %p107, %p108
      %p111 = scmp.ne.s32.totalorder %s94, %s110
      %p112 = scmp.eq.s32.totalorder %s86, 0
      %p113 = por %p111, %p112
      %s114 = ssub.s32 %s80, %s87
      %p115 = scmp.eq.s32.totalorder %s114, 0
      %s117 = sadd.s32 %s116, 1
      %s118 = scalar_select %p115, %s116, %s117
      %p121 = pneg %p115
      %p122 = scmp.eq.s32.totalorder %s80, 1
      %p123 = por %p121, %p122
      %p124 = scmp.ne.s32.totalorder %s116, %s119
      %p125 = scmp.eq.s32.totalorder %s80, 0
      %p126 = por %p124, %p125
      %p127 = scmp.ne.s32.totalorder %s116, %s119
      %p128 = scmp.eq.s32.totalorder %s85, 1
      %p129 = por %p127, %p128
      %p130 = scmp.ne.s32.totalorder %s119, %s120
      %p131 = scmp.eq.s32.totalorder %s85, 0
      %p132 = por %p130, %p131
      %p133 = scmp.ne.s32.totalorder %s119, %s120
      %p134 = scmp.eq.s32.totalorder %s86, 1
      %p135 = por %p133, %p134
      %p137 = scmp.ne.s32.totalorder %s120, %s136
      %p138 = scmp.eq.s32.totalorder %s86, 0
      %p139 = por %p137, %p138
      %s140 = ssub.s32 %s80, %s87
      %p141 = scmp.eq.s32.totalorder %s140, 0
      %s143 = sadd.s32 %s142, 1
      %s144 = scalar_select %p141, %s142, %s143
      %p147 = pneg %p141
      %p148 = scmp.eq.s32.totalorder %s80, 1
      %p149 = por %p147, %p148
      %p150 = scmp.ne.s32.totalorder %s142, %s145
      %p151 = scmp.eq.s32.totalorder %s80, 0
      %p152 = por %p150, %p151
      %p153 = scmp.ne.s32.totalorder %s142, %s145
      %p154 = scmp.eq.s32.totalorder %s85, 1
      %p155 = por %p153, %p154
      %p156 = scmp.ne.s32.totalorder %s145, %s146
      %p157 = scmp.eq.s32.totalorder %s85, 0
      %p158 = por %p156, %p157
      %p159 = scmp.ne.s32.totalorder %s145, %s146
      %p160 = scmp.eq.s32.totalorder %s86, 1
      %p161 = por %p159, %p160
      %p163 = scmp.ne.s32.totalorder %s146, %s162
      %p164 = scmp.eq.s32.totalorder %s86, 0
      %p165 = por %p163, %p164
      %s166 = ssub.s32 %s80, %s87
      %p167 = scmp.eq.s32.totalorder %s166, 0
      %s169 = sadd.s32 %s168, 1
      %s170 = scalar_select %p167, %s168, %s169
      %p173 = pneg %p167
      %p174 = scmp.eq.s32.totalorder %s80, 1
      %p175 = por %p173, %p174
      %p176 = scmp.ne.s32.totalorder %s168, %s171
      %p177 = scmp.eq.s32.totalorder %s80, 0
      %p178 = por %p176, %p177
      %p179 = scmp.ne.s32.totalorder %s168, %s171
      %p180 = scmp.eq.s32.totalorder %s85, 1
      %p181 = por %p179, %p180
      %p182 = scmp.ne.s32.totalorder %s171, %s172
      %p183 = scmp.eq.s32.totalorder %s85, 0
      %p184 = por %p182, %p183
      %p185 = scmp.ne.s32.totalorder %s171, %s172
      %p186 = scmp.eq.s32.totalorder %s86, 1
      %p187 = por %p185, %p186
      %p189 = scmp.ne.s32.totalorder %s172, %s188
      %p190 = scmp.eq.s32.totalorder %s86, 0
      %p191 = por %p189, %p190
      %s193 = sadd.s32 %s192, 1
      %p196 = scmp.eq.s32.totalorder %s80, 1
      %p197 = scmp.ne.s32.totalorder %s192, %s194
      %p198 = scmp.eq.s32.totalorder %s80, 0
      %p199 = por %p197, %p198
      %p200 = scmp.ne.s32.totalorder %s192, %s194
      %p201 = scmp.eq.s32.totalorder %s85, 1
      %p202 = por %p200, %p201
      %p203 = scmp.ne.s32.totalorder %s194, %s195
      %p204 = scmp.eq.s32.totalorder %s85, 0
      %p205 = por %p203, %p204
      %p206 = scmp.ne.s32.totalorder %s194, %s195
      %p207 = scmp.eq.s32.totalorder %s86, 1
      %p208 = por %p206, %p207
      %p210 = scmp.ne.s32.totalorder %s195, %s209
      %p211 = scmp.eq.s32.totalorder %s86, 0
      %p212 = por %p210, %p211
      %s214 = sadd.s32 %s213, 1
      %p217 = scmp.eq.s32.totalorder %s80, 1
      %p218 = scmp.ne.s32.totalorder %s213, %s215
      %p219 = scmp.eq.s32.totalorder %s80, 0
      %p220 = por %p218, %p219
      %p221 = scmp.ne.s32.totalorder %s213, %s215
      %p222 = scmp.eq.s32.totalorder %s85, 1
      %p223 = por %p221, %p222
      %p224 = scmp.ne.s32.totalorder %s215, %s216
      %p225 = scmp.eq.s32.totalorder %s85, 0
      %p226 = por %p224, %p225
      %p227 = scmp.ne.s32.totalorder %s215, %s216
      %p228 = scmp.eq.s32.totalorder %s86, 1
      %p229 = por %p227, %p228
      %p231 = scmp.ne.s32.totalorder %s216, %s230
      %p232 = scmp.eq.s32.totalorder %s86, 0
      %p233 = por %p231, %p232
      %s235 = sadd.s32 %s234, 1
      %p238 = scmp.eq.s32.totalorder %s80, 1
      %p239 = scmp.ne.s32.totalorder %s234, %s236
      %p240 = scmp.eq.s32.totalorder %s80, 0
      %p241 = por %p239, %p240
      %p242 = scmp.ne.s32.totalorder %s234, %s236
      %p243 = scmp.eq.s32.totalorder %s85, 1
      %p244 = por %p242, %p243
      %p245 = scmp.ne.s32.totalorder %s236, %s237
      %p246 = scmp.eq.s32.totalorder %s85, 0
      %p247 = por %p245, %p246
      %p248 = scmp.ne.s32.totalorder %s236, %s237
      %p249 = scmp.eq.s32.totalorder %s86, 1
      %p250 = por %p248, %p249
      %p252 = scmp.ne.s32.totalorder %s237, %s251
      %p253 = scmp.eq.s32.totalorder %s86, 0
      %p254 = por %p252, %p253
      %s256 = sadd.s32 %s255, 1
      %p259 = scmp.eq.s32.totalorder %s80, 1
      %p260 = scmp.ne.s32.totalorder %s255, %s257
      %p261 = scmp.eq.s32.totalorder %s80, 0
      %p262 = por %p260, %p261
      %p263 = scmp.ne.s32.totalorder %s255, %s257
      %p264 = scmp.eq.s32.totalorder %s85, 1
      %p265 = por %p263, %p264
      %p266 = scmp.ne.s32.totalorder %s257, %s258
      %p267 = scmp.eq.s32.totalorder %s85, 0
      %p268 = por %p266, %p267
      %p269 = scmp.ne.s32.totalorder %s257, %s258
      %p270 = scmp.eq.s32.totalorder %s86, 1
      %p271 = por %p269, %p270
      %p273 = scmp.ne.s32.totalorder %s258, %s272
      %p274 = scmp.eq.s32.totalorder %s86, 0
      %p275 = por %p273, %p274
      %s277 = sadd.s32 %s276, 1
      %p280 = scmp.eq.s32.totalorder %s80, 1
      %p281 = scmp.ne.s32.totalorder %s276, %s278
      %p282 = scmp.eq.s32.totalorder %s80, 0
      %p283 = por %p281, %p282
      %p284 = scmp.ne.s32.totalorder %s276, %s278
      %p285 = scmp.eq.s32.totalorder %s85, 1
      %p286 = por %p284, %p285
      %p287 = scmp.ne.s32.totalorder %s278, %s279
      %p288 = scmp.eq.s32.totalorder %s85, 0
      %p289 = por %p287, %p288
      %p290 = scmp.ne.s32.totalorder %s278, %s279
      %p291 = scmp.eq.s32.totalorder %s86, 1
      %p292 = por %p290, %p291
      %p294 = scmp.ne.s32.totalorder %s279, %s293
      %p295 = scmp.eq.s32.totalorder %s86, 0
      %p296 = por %p294, %p295
      %s298 = sadd.s32 %s297, 1
      %p301 = scmp.eq.s32.totalorder %s80, 1
      %p302 = scmp.ne.s32.totalorder %s297, %s299
      %p303 = scmp.eq.s32.totalorder %s80, 0
      %p304 = por %p302, %p303
      %p305 = scmp.ne.s32.totalorder %s297, %s299
      %p306 = scmp.eq.s32.totalorder %s85, 1
      %p307 = por %p305, %p306
      %p308 = scmp.ne.s32.totalorder %s299, %s300
      %p309 = scmp.eq.s32.totalorder %s85, 0
      %p310 = por %p308, %p309
      %p311 = scmp.ne.s32.totalorder %s299, %s300
      %p312 = scmp.eq.s32.totalorder %s86, 1
      %p313 = por %p311, %p312
      %p315 = scmp.ne.s32.totalorder %s300, %s314
      %p316 = scmp.eq.s32.totalorder %s86, 0
      %p317 = por %p315, %p316
      %s319 = sadd.s32 %s318, 1
      %p322 = scmp.eq.s32.totalorder %s80, 1
      %p323 = scmp.ne.s32.totalorder %s318, %s320
      %p324 = scmp.eq.s32.totalorder %s80, 0
      %p325 = por %p323, %p324
      %p326 = scmp.ne.s32.totalorder %s318, %s320
      %p327 = scmp.eq.s32.totalorder %s85, 1
      %p328 = por %p326, %p327
      %p329 = scmp.ne.s32.totalorder %s320, %s321
      %p330 = scmp.eq.s32.totalorder %s85, 0
      %p331 = por %p329, %p330
      %p332 = scmp.ne.s32.totalorder %s320, %s321
      %p333 = scmp.eq.s32.totalorder %s86, 1
      %p334 = por %p332, %p333
      %p336 = scmp.ne.s32.totalorder %s321, %s335
      %p337 = scmp.eq.s32.totalorder %s86, 0
      %p338 = por %p336, %p337
      %s340 = sadd.s32 %s339, 1
      %p343 = scmp.eq.s32.totalorder %s80, 1
      %p344 = scmp.ne.s32.totalorder %s339, %s341
      %p345 = scmp.eq.s32.totalorder %s80, 0
      %p346 = por %p344, %p345
      %p347 = scmp.ne.s32.totalorder %s339, %s341
      %p348 = scmp.eq.s32.totalorder %s85, 1
      %p349 = por %p347, %p348
      %p350 = scmp.ne.s32.totalorder %s341, %s342
      %p351 = scmp.eq.s32.totalorder %s85, 0
      %p352 = por %p350, %p351
      %p353 = scmp.ne.s32.totalorder %s341, %s342
      %p354 = scmp.eq.s32.totalorder %s86, 1
      %p355 = por %p353, %p354
      %p357 = scmp.ne.s32.totalorder %s342, %s356
      %p358 = scmp.eq.s32.totalorder %s86, 0
      %p359 = por %p357, %p358
      %s361 = sadd.s32 %s360, 1
      %p364 = scmp.eq.s32.totalorder %s80, 1
      %p365 = scmp.ne.s32.totalorder %s360, %s362
      %p366 = scmp.eq.s32.totalorder %s80, 0
      %p367 = por %p365, %p366
      %p368 = scmp.ne.s32.totalorder %s360, %s362
      %p369 = scmp.eq.s32.totalorder %s85, 1
      %p370 = por %p368, %p369
      %p371 = scmp.ne.s32.totalorder %s362, %s363
      %p372 = scmp.eq.s32.totalorder %s85, 0
      %p373 = por %p371, %p372
      %p374 = scmp.ne.s32.totalorder %s362, %s363
      %p375 = scmp.eq.s32.totalorder %s86, 1
      %p376 = por %p374, %p375
      %p378 = scmp.ne.s32.totalorder %s363, %s377
      %p379 = scmp.eq.s32.totalorder %s86, 0
      %p380 = por %p378, %p379
      %s382 = sadd.s32 %s381, 1
      %p385 = scmp.eq.s32.totalorder %s80, 1
      %p386 = scmp.ne.s32.totalorder %s381, %s383
      %p387 = scmp.eq.s32.totalorder %s80, 0
      %p388 = por %p386, %p387
      %p389 = scmp.ne.s32.totalorder %s381, %s383
      %p390 = scmp.eq.s32.totalorder %s85, 1
      %p391 = por %p389, %p390
      %p392 = scmp.ne.s32.totalorder %s383, %s384
      %p393 = scmp.eq.s32.totalorder %s85, 0
      %p394 = por %p392, %p393
      %p395 = scmp.ne.s32.totalorder %s383, %s384
      %p396 = scmp.eq.s32.totalorder %s86, 1
      %p397 = por %p395, %p396
      %p399 = scmp.ne.s32.totalorder %s384, %s398
      %p400 = scmp.eq.s32.totalorder %s86, 0
      %p401 = por %p399, %p400
      %s403 = sadd.s32 %s402, 1
      %p406 = scmp.eq.s32.totalorder %s80, 1
      %p407 = scmp.ne.s32.totalorder %s402, %s404
      %p408 = scmp.eq.s32.totalorder %s80, 0
      %p409 = por %p407, %p408
      %p410 = scmp.ne.s32.totalorder %s402, %s404
      %p411 = scmp.eq.s32.totalorder %s85, 1
      %p412 = por %p410, %p411
      %p413 = scmp.ne.s32.totalorder %s404, %s405
      %p414 = scmp.eq.s32.totalorder %s85, 0
      %p415 = por %p413, %p414
      %p416 = scmp.ne.s32.totalorder %s404, %s405
      %p417 = scmp.eq.s32.totalorder %s86, 1
      %p418 = por %p416, %p417
      %p420 = scmp.ne.s32.totalorder %s405, %s419
      %p421 = scmp.eq.s32.totalorder %s86, 0
      %p422 = por %p420, %p421
      %s424 = sadd.s32 %s423, 1
      %p427 = scmp.eq.s32.totalorder %s80, 1
      %p428 = scmp.ne.s32.totalorder %s423, %s425
      %p429 = scmp.eq.s32.totalorder %s80, 0
      %p430 = por %p428, %p429
      %p431 = scmp.ne.s32.totalorder %s423, %s425
      %p432 = scmp.eq.s32.totalorder %s85, 1
      %p433 = por %p431, %p432
      %p434 = scmp.ne.s32.totalorder %s425, %s426
      %p435 = scmp.eq.s32.totalorder %s85, 0
      %p436 = por %p434, %p435
      %p437 = scmp.ne.s32.totalorder %s425, %s426
      %p438 = scmp.eq.s32.totalorder %s86, 1
      %p439 = por %p437, %p438
      %p441 = scmp.ne.s32.totalorder %s426, %s440
      %p442 = scmp.eq.s32.totalorder %s86, 0
      %p443 = por %p441, %p442
      %s445 = sadd.s32 %s444, 1
      %p448 = scmp.eq.s32.totalorder %s80, 1
      %p449 = scmp.ne.s32.totalorder %s444, %s446
      %p450 = scmp.eq.s32.totalorder %s80, 0
      %p451 = por %p449, %p450
      %p452 = scmp.ne.s32.totalorder %s444, %s446
      %p453 = scmp.eq.s32.totalorder %s85, 1
      %p454 = por %p452, %p453
      %p455 = scmp.ne.s32.totalorder %s446, %s447
      %p456 = scmp.eq.s32.totalorder %s85, 0
      %p457 = por %p455, %p456
      %p458 = scmp.ne.s32.totalorder %s446, %s447
      %p459 = scmp.eq.s32.totalorder %s86, 1
      %p460 = por %p458, %p459
      %p462 = scmp.ne.s32.totalorder %s447, %s461
      %p463 = scmp.eq.s32.totalorder %s86, 0
      %p464 = por %p462, %p463
      %s466 = sadd.s32 %s465, 1
      %p469 = scmp.eq.s32.totalorder %s80, 1
      %p470 = scmp.ne.s32.totalorder %s465, %s467
      %p471 = scmp.eq.s32.totalorder %s80, 0
      %p472 = por %p470, %p471
      %p473 = scmp.ne.s32.totalorder %s465, %s467
      %p474 = scmp.eq.s32.totalorder %s85, 1
      %p475 = por %p473, %p474
      %p476 = scmp.ne.s32.totalorder %s467, %s468
      %p477 = scmp.eq.s32.totalorder %s85, 0
      %p478 = por %p476, %p477
      %p479 = scmp.ne.s32.totalorder %s467, %s468
      %p480 = scmp.eq.s32.totalorder %s86, 1
      %p481 = por %p479, %p480
      %p483 = scmp.ne.s32.totalorder %s468, %s482
      %p484 = scmp.eq.s32.totalorder %s86, 0
      %p485 = por %p483, %p484
      %s487 = sadd.s32 %s486, 1
      %p490 = scmp.eq.s32.totalorder %s80, 1
      %p491 = scmp.ne.s32.totalorder %s486, %s488
      %p492 = scmp.eq.s32.totalorder %s80, 0
      %p493 = por %p491, %p492
      %p494 = scmp.ne.s32.totalorder %s486, %s488
      %p495 = scmp.eq.s32.totalorder %s85, 1
      %p496 = por %p494, %p495
      %p497 = scmp.ne.s32.totalorder %s488, %s489
      %p498 = scmp.eq.s32.totalorder %s85, 0
      %p499 = por %p497, %p498
      %p500 = scmp.ne.s32.totalorder %s488, %s489
      %p501 = scmp.eq.s32.totalorder %s86, 1
      %p502 = por %p500, %p501
      %p504 = scmp.ne.s32.totalorder %s489, %s503
      %p505 = scmp.eq.s32.totalorder %s86, 0
      %p506 = por %p504, %p505
      %s508 = sadd.s32 %s507, 1
      %p511 = scmp.eq.s32.totalorder %s80, 1
      %p512 = scmp.ne.s32.totalorder %s507, %s509
      %p513 = scmp.eq.s32.totalorder %s80, 0
      %p514 = por %p512, %p513
      %p515 = scmp.ne.s32.totalorder %s507, %s509
      %p516 = scmp.eq.s32.totalorder %s85, 1
      %p517 = por %p515, %p516
      %p518 = scmp.ne.s32.totalorder %s509, %s510
      %p519 = scmp.eq.s32.totalorder %s85, 0
      %p520 = por %p518, %p519
      %p521 = scmp.ne.s32.totalorder %s509, %s510
      %p522 = scmp.eq.s32.totalorder %s86, 1
      %p523 = por %p521, %p522
      %p525 = scmp.ne.s32.totalorder %s510, %s524
      %p526 = scmp.eq.s32.totalorder %s86, 0
      %p527 = por %p525, %p526
      %s529 = sadd.s32 %s528, 1
      %p532 = scmp.eq.s32.totalorder %s80, 1
      %p533 = scmp.ne.s32.totalorder %s528, %s530
      %p534 = scmp.eq.s32.totalorder %s80, 0
      %p535 = por %p533, %p534
      %p536 = scmp.ne.s32.totalorder %s528, %s530
      %p537 = scmp.eq.s32.totalorder %s85, 1
      %p538 = por %p536, %p537
      %p539 = scmp.ne.s32.totalorder %s530, %s531
      %p540 = scmp.eq.s32.totalorder %s85, 0
      %p541 = por %p539, %p540
      %p542 = scmp.ne.s32.totalorder %s530, %s531
      %p543 = scmp.eq.s32.totalorder %s86, 1
      %p544 = por %p542, %p543
      %p546 = scmp.ne.s32.totalorder %s531, %s545
      %p547 = scmp.eq.s32.totalorder %s86, 0
      %p548 = por %p546, %p547
      %s550 = sadd.s32 %s549, 1
      %p553 = scmp.eq.s32.totalorder %s80, 1
      %p554 = scmp.ne.s32.totalorder %s549, %s551
      %p555 = scmp.eq.s32.totalorder %s80, 0
      %p556 = por %p554, %p555
      %p557 = scmp.ne.s32.totalorder %s549, %s551
      %p558 = scmp.eq.s32.totalorder %s85, 1
      %p559 = por %p557, %p558
      %p560 = scmp.ne.s32.totalorder %s551, %s552
      %p561 = scmp.eq.s32.totalorder %s85, 0
      %p562 = por %p560, %p561
      %p563 = scmp.ne.s32.totalorder %s551, %s552
      %p564 = scmp.eq.s32.totalorder %s86, 1
      %p565 = por %p563, %p564
      %p567 = scmp.ne.s32.totalorder %s552, %s566
      %p568 = scmp.eq.s32.totalorder %s86, 0
      %p569 = por %p567, %p568
      %s571 = sadd.s32 %s570, 1
      %p574 = scmp.eq.s32.totalorder %s80, 1
      %p575 = scmp.ne.s32.totalorder %s570, %s572
      %p576 = scmp.eq.s32.totalorder %s80, 0
      %p577 = por %p575, %p576
      %p578 = scmp.ne.s32.totalorder %s570, %s572
      %p579 = scmp.eq.s32.totalorder %s85, 1
      %p580 = por %p578, %p579
      %p581 = scmp.ne.s32.totalorder %s572, %s573
      %p582 = scmp.eq.s32.totalorder %s85, 0
      %p583 = por %p581, %p582
      %p584 = scmp.ne.s32.totalorder %s572, %s573
      %p585 = scmp.eq.s32.totalorder %s86, 1
      %p586 = por %p584, %p585
      %p588 = scmp.ne.s32.totalorder %s573, %s587
      %p589 = scmp.eq.s32.totalorder %s86, 0
      %p590 = por %p588, %p589
      %s592 = sadd.s32 %s591, 1
      %p595 = scmp.eq.s32.totalorder %s80, 1
      %p596 = scmp.ne.s32.totalorder %s591, %s593
      %p597 = scmp.eq.s32.totalorder %s80, 0
      %p598 = por %p596, %p597
      %p599 = scmp.ne.s32.totalorder %s591, %s593
      %p600 = scmp.eq.s32.totalorder %s85, 1
      %p601 = por %p599, %p600
      %p602 = scmp.ne.s32.totalorder %s593, %s594
      %p603 = scmp.eq.s32.totalorder %s85, 0
      %p604 = por %p602, %p603
      %p605 = scmp.ne.s32.totalorder %s593, %s594
      %p606 = scmp.eq.s32.totalorder %s86, 1
      %p607 = por %p605, %p606
      %p609 = scmp.ne.s32.totalorder %s594, %s608
      %p610 = scmp.eq.s32.totalorder %s86, 0
      %p611 = por %p609, %p610
      %s613 = sadd.s32 %s612, 1
      %p616 = scmp.eq.s32.totalorder %s80, 1
      %p617 = scmp.ne.s32.totalorder %s612, %s614
      %p618 = scmp.eq.s32.totalorder %s80, 0
      %p619 = por %p617, %p618
      %p620 = scmp.ne.s32.totalorder %s612, %s614
      %p621 = scmp.eq.s32.totalorder %s85, 1
      %p622 = por %p620, %p621
      %p623 = scmp.ne.s32.totalorder %s614, %s615
      %p624 = scmp.eq.s32.totalorder %s85, 0
      %p625 = por %p623, %p624
      %p626 = scmp.ne.s32.totalorder %s614, %s615
      %p627 = scmp.eq.s32.totalorder %s86, 1
      %p628 = por %p626, %p627
      %p630 = scmp.ne.s32.totalorder %s615, %s629
      %p631 = scmp.eq.s32.totalorder %s86, 0
      %p632 = por %p630, %p631
      %s634 = sadd.s32 %s633, 1
      %p637 = scmp.eq.s32.totalorder %s80, 1
      %p638 = scmp.ne.s32.totalorder %s633, %s635
      %p639 = scmp.eq.s32.totalorder %s80, 0
      %p640 = por %p638, %p639
      %p641 = scmp.ne.s32.totalorder %s633, %s635
      %p642 = scmp.eq.s32.totalorder %s85, 1
      %p643 = por %p641, %p642
      %p644 = scmp.ne.s32.totalorder %s635, %s636
      %p645 = scmp.eq.s32.totalorder %s85, 0
      %p646 = por %p644, %p645
      %p647 = scmp.ne.s32.totalorder %s635, %s636
      %p648 = scmp.eq.s32.totalorder %s86, 1
      %p649 = por %p647, %p648
      %p651 = scmp.ne.s32.totalorder %s636, %s650
      %p652 = scmp.eq.s32.totalorder %s86, 0
      %p653 = por %p651, %p652
      %s655 = sadd.s32 %s654, 1
      %p658 = scmp.eq.s32.totalorder %s80, 1
      %p659 = scmp.ne.s32.totalorder %s654, %s656
      %p660 = scmp.eq.s32.totalorder %s80, 0
      %p661 = por %p659, %p660
      %p662 = scmp.ne.s32.totalorder %s654, %s656
      %p663 = scmp.eq.s32.totalorder %s85, 1
      %p664 = por %p662, %p663
      %p665 = scmp.ne.s32.totalorder %s656, %s657
      %p666 = scmp.eq.s32.totalorder %s85, 0
      %p667 = por %p665, %p666
      %p668 = scmp.ne.s32.totalorder %s656, %s657
      %p669 = scmp.eq.s32.totalorder %s86, 1
      %p670 = por %p668, %p669
      %p672 = scmp.ne.s32.totalorder %s657, %s671
      %p673 = scmp.eq.s32.totalorder %s86, 0
      %p674 = por %p672, %p673
      %s676 = sadd.s32 %s675, 1
      %p679 = scmp.eq.s32.totalorder %s80, 1
      %p680 = scmp.ne.s32.totalorder %s675, %s677
      %p681 = scmp.eq.s32.totalorder %s80, 0
      %p682 = por %p680, %p681
      %p683 = scmp.ne.s32.totalorder %s675, %s677
      %p684 = scmp.eq.s32.totalorder %s85, 1
      %p685 = por %p683, %p684
      %p686 = scmp.ne.s32.totalorder %s677, %s678
      %p687 = scmp.eq.s32.totalorder %s85, 0
      %p688 = por %p686, %p687
      %p689 = scmp.ne.s32.totalorder %s677, %s678
      %p690 = scmp.eq.s32.totalorder %s86, 1
      %p691 = por %p689, %p690
      %p693 = scmp.ne.s32.totalorder %s678, %s692
      %p694 = scmp.eq.s32.totalorder %s86, 0
      %p695 = por %p693, %p694
      %s697 = sadd.s32 %s696, 1
      %p700 = scmp.eq.s32.totalorder %s80, 1
      %p701 = scmp.ne.s32.totalorder %s696, %s698
      %p702 = scmp.eq.s32.totalorder %s80, 0
      %p703 = por %p701, %p702
      %p704 = scmp.ne.s32.totalorder %s696, %s698
      %p705 = scmp.eq.s32.totalorder %s85, 1
      %p706 = por %p704, %p705
      %p707 = scmp.ne.s32.totalorder %s698, %s699
      %p708 = scmp.eq.s32.totalorder %s85, 0
      %p709 = por %p707, %p708
      %p710 = scmp.ne.s32.totalorder %s698, %s699
      %p711 = scmp.eq.s32.totalorder %s86, 1
      %p712 = por %p710, %p711
      %p714 = scmp.ne.s32.totalorder %s699, %s713
      %p715 = scmp.eq.s32.totalorder %s86, 0
      %p716 = por %p714, %p715
      %s718 = sadd.s32 %s717, 1
      %p721 = scmp.eq.s32.totalorder %s80, 1
      %p722 = scmp.ne.s32.totalorder %s717, %s719
      %p723 = scmp.eq.s32.totalorder %s80, 0
      %p724 = por %p722, %p723
      %p725 = scmp.ne.s32.totalorder %s717, %s719
      %p726 = scmp.eq.s32.totalorder %s85, 1
      %p727 = por %p725, %p726
      %p728 = scmp.ne.s32.totalorder %s719, %s720
      %p729 = scmp.eq.s32.totalorder %s85, 0
      %p730 = por %p728, %p729
      %p731 = scmp.ne.s32.totalorder %s719, %s720
      %p732 = scmp.eq.s32.totalorder %s86, 1
      %p733 = por %p731, %p732
      %p735 = scmp.ne.s32.totalorder %s720, %s734
      %p736 = scmp.eq.s32.totalorder %s86, 0
      %p737 = por %p735, %p736
      %s738 = ssub.s32 %s80, %s87
      %p739 = scmp.eq.s32.totalorder %s738, 0
      %s741 = sadd.s32 %s740, 1
      %s742 = scalar_select %p739, %s740, %s741
      %p745 = pneg %p739
      %p746 = scmp.eq.s32.totalorder %s80, 1
      %p747 = por %p745, %p746
      %p748 = scmp.ne.s32.totalorder %s740, %s743
      %p749 = scmp.eq.s32.totalorder %s80, 0
      %p750 = por %p748, %p749
      %p751 = scmp.ne.s32.totalorder %s740, %s743
      %p752 = scmp.eq.s32.totalorder %s85, 1
      %p753 = por %p751, %p752
      %p754 = scmp.ne.s32.totalorder %s743, %s744
      %p755 = scmp.eq.s32.totalorder %s85, 0
      %p756 = por %p754, %p755
      %p757 = scmp.ne.s32.totalorder %s743, %s744
      %p758 = scmp.eq.s32.totalorder %s86, 1
      %p759 = por %p757, %p758
      %p761 = scmp.ne.s32.totalorder %s744, %s760
      %p762 = scmp.eq.s32.totalorder %s86, 0
      %p763 = por %p761, %p762
      %s764 = ssub.s32 %s80, %s87
      %p765 = scmp.eq.s32.totalorder %s764, 0
      %s767 = sadd.s32 %s766, 1
      %s768 = scalar_select %p765, %s766, %s767
      %p771 = pneg %p765
      %p772 = scmp.eq.s32.totalorder %s80, 1
      %p773 = por %p771, %p772
      %p774 = scmp.ne.s32.totalorder %s766, %s769
      %p775 = scmp.eq.s32.totalorder %s80, 0
      %p776 = por %p774, %p775
      %p777 = scmp.ne.s32.totalorder %s766, %s769
      %p778 = scmp.eq.s32.totalorder %s85, 1
      %p779 = por %p777, %p778
      %p780 = scmp.ne.s32.totalorder %s769, %s770
      %p781 = scmp.eq.s32.totalorder %s85, 0
      %p782 = por %p780, %p781
      %p783 = scmp.ne.s32.totalorder %s769, %s770
      %p784 = scmp.eq.s32.totalorder %s86, 1
      %p785 = por %p783, %p784
      %p787 = scmp.ne.s32.totalorder %s770, %s786
      %p788 = scmp.eq.s32.totalorder %s86, 0
      %p789 = por %p787, %p788
      %p790 = scmp.le.s32.totalorder 1, %s80
      %p791 = scmp.lt.s32.totalorder %s80, 3
      %p792 = pnand %p790, %p791
      %p793 = pneg %p792
      // Predicated region
      $region9: #{seq2seq_forward.8} parent=5 // pred_check
        _
      $region10: #{seq2seq_forward.8} parent=5 // pred_check_branch
        %795 = sbr.rel (%p792) target = $region12
      $region11: #{seq2seq_forward.8} parent=5 // pred_region
        %s796 = ssub.s32 %s80, 1
        // Predicated region
        $region13: #{seq2seq_forward.8} parent=11 // pred_check
          %p797 = pneg %p205
        $region14: #{seq2seq_forward.8} parent=11 // pred_check_branch
          %799 = sbr.rel (%p797) target = $region16
        $region15: #{seq2seq_forward.8} parent=11 // pred_region
          _
        $region16: #{seq2seq_forward.8} parent=11 // pred_fallthru
          _
        // Predicated region
        $region17: #{seq2seq_forward.8} parent=11 // pred_check
          %p800 = pneg %p226
        $region18: #{seq2seq_forward.8} parent=11 // pred_check_branch
          %802 = sbr.rel (%p800) target = $region20
        $region19: #{seq2seq_forward.8} parent=11 // pred_region
          _
        $region20: #{seq2seq_forward.8} parent=11 // pred_fallthru
          _
        // Predicated region
        $region21: #{seq2seq_forward.8} parent=11 // pred_check
          %p803 = pneg %p247
        $region22: #{seq2seq_forward.8} parent=11 // pred_check_branch
          %805 = sbr.rel (%p803) target = $region24
        $region23: #{seq2seq_forward.8} parent=11 // pred_region
          _
        $region24: #{seq2seq_forward.8} parent=11 // pred_fallthru
          _
        // Predicated region
        $region25: #{seq2seq_forward.8} parent=11 // pred_check
          %p806 = pneg %p268
        $region26: #{seq2seq_forward.8} parent=11 // pred_check_branch
          %808 = sbr.rel (%p806) target = $region28
        $region27: #{seq2seq_forward.8} parent=11 // pred_region
          _
        $region28: #{seq2seq_forward.8} parent=11 // pred_fallthru
          _
        // Predicated region
        $region29: #{seq2seq_forward.8} parent=11 // pred_check
          %p809 = pneg %p289
        $region30: #{seq2seq_forward.8} parent=11 // pred_check_branch
          %811 = sbr.rel (%p809) target = $region32
        $region31: #{seq2seq_forward.8} parent=11 // pred_region
          _
        $region32: #{seq2seq_forward.8} parent=11 // pred_fallthru
          _
        // Predicated region
        $region33: #{seq2seq_forward.8} parent=11 // pred_check
          %p812 = pneg %p310
        $region34: #{seq2seq_forward.8} parent=11 // pred_check_branch
          %814 = sbr.rel (%p812) target = $region36
        $region35: #{seq2seq_forward.8} parent=11 // pred_region
          _
        $region36: #{seq2seq_forward.8} parent=11 // pred_fallthru
          _
        // Predicated region
        $region37: #{seq2seq_forward.8} parent=11 // pred_check
          %p815 = pneg %p331
        $region38: #{seq2seq_forward.8} parent=11 // pred_check_branch
          %817 = sbr.rel (%p815) target = $region40
        $region39: #{seq2seq_forward.8} parent=11 // pred_region
          _
        $region40: #{seq2seq_forward.8} parent=11 // pred_fallthru
          _
        // Predicated region
        $region41: #{seq2seq_forward.8} parent=11 // pred_check
          %p818 = pneg %p352
        $region42: #{seq2seq_forward.8} parent=11 // pred_check_branch
          %820 = sbr.rel (%p818) target = $region44
        $region43: #{seq2seq_forward.8} parent=11 // pred_region
          %s822 = ssub.s32 16, 16
          %823 = vsyncadd [#allocation3], %s822
          %s825 = sshll.u32 [#allocation2], 4
          %s826 = int_to_ptr.vmem [resolvable:$true] %s825
          %828 = dma.hbm_to_vmem [thread:$0]  %s23, 16, %s826, [#allocation3]
        $region44: #{seq2seq_forward.8} parent=11 // pred_fallthru
          _
        // Predicated region
        $region45: #{seq2seq_forward.8} parent=11 // pred_check
          %p829 = pneg %p373
        $region46: #{seq2seq_forward.8} parent=11 // pred_check_branch
          %831 = sbr.rel (%p829) target = $region48
        $region47: #{seq2seq_forward.8} parent=11 // pred_region
          %s833 = ssub.s32 16, 16
          %834 = vsyncadd [#allocation6], %s833
          %s836 = sshll.u32 [#allocation5], 4
          %s837 = int_to_ptr.vmem [resolvable:$true] %s836
          %839 = dma.hbm_to_vmem [thread:$0]  %s25, 16, %s837, [#allocation6]
        $region48: #{seq2seq_forward.8} parent=11 // pred_fallthru
          _
        // Predicated region
        $region49: #{seq2seq_forward.8} parent=11 // pred_check
          %p840 = pneg %p394
        $region50: #{seq2seq_forward.8} parent=11 // pred_check_branch
          %842 = sbr.rel (%p840) target = $region52
        $region51: #{seq2seq_forward.8} parent=11 // pred_region
          %s844 = ssub.s32 16, 16
          %845 = vsyncadd [#allocation6], %s844
          %s847 = sshll.u32 [#allocation7], 4
          %s848 = int_to_ptr.vmem [resolvable:$true] %s847
          %850 = dma.hbm_to_vmem [thread:$0]  %s27, 16, %s848, [#allocation6]
        $region52: #{seq2seq_forward.8} parent=11 // pred_fallthru
          _
        // Predicated region
        $region53: #{seq2seq_forward.8} parent=11 // pred_check
          %p851 = pneg %p415
        $region54: #{seq2seq_forward.8} parent=11 // pred_check_branch
          %853 = sbr.rel (%p851) target = $region56
        $region55: #{seq2seq_forward.8} parent=11 // pred_region
          _
        $region56: #{seq2seq_forward.8} parent=11 // pred_fallthru
          _
        // Predicated region
        $region57: #{seq2seq_forward.8} parent=11 // pred_check
          %p854 = pneg %p436
        $region58: #{seq2seq_forward.8} parent=11 // pred_check_branch
          %856 = sbr.rel (%p854) target = $region60
        $region59: #{seq2seq_forward.8} parent=11 // pred_region
          _
        $region60: #{seq2seq_forward.8} parent=11 // pred_fallthru
          _
        // Predicated region
        $region61: #{seq2seq_forward.8} parent=11 // pred_check
          %p857 = pneg %p457
        $region62: #{seq2seq_forward.8} parent=11 // pred_check_branch
          %859 = sbr.rel (%p857) target = $region64
        $region63: #{seq2seq_forward.8} parent=11 // pred_region
          _
        $region64: #{seq2seq_forward.8} parent=11 // pred_fallthru
          _
        // Predicated region
        $region65: #{seq2seq_forward.8} parent=11 // pred_check
          %p860 = pneg %p478
        $region66: #{seq2seq_forward.8} parent=11 // pred_check_branch
          %862 = sbr.rel (%p860) target = $region68
        $region67: #{seq2seq_forward.8} parent=11 // pred_region
          _
        $region68: #{seq2seq_forward.8} parent=11 // pred_fallthru
          _
        // Predicated region
        $region69: #{seq2seq_forward.8} parent=11 // pred_check
          %p863 = pneg %p499
        $region70: #{seq2seq_forward.8} parent=11 // pred_check_branch
          %865 = sbr.rel (%p863) target = $region72
        $region71: #{seq2seq_forward.8} parent=11 // pred_region
          %s867 = ssub.s32 16, 16
          %868 = vsyncadd [#allocation9], %s867
          %s870 = sshll.u32 [#allocation8], 4
          %s871 = int_to_ptr.vmem [resolvable:$true] %s870
          %873 = dma.hbm_to_vmem [thread:$0]  %s37, 16, %s871, [#allocation9]
        $region72: #{seq2seq_forward.8} parent=11 // pred_fallthru
          _
        // Predicated region
        $region73: #{seq2seq_forward.8} parent=11 // pred_check
          %p874 = pneg %p520
        $region74: #{seq2seq_forward.8} parent=11 // pred_check_branch
          %876 = sbr.rel (%p874) target = $region76
        $region75: #{seq2seq_forward.8} parent=11 // pred_region
          %s878 = ssub.s32 16, 16
          %879 = vsyncadd [#allocation9], %s878
          %s881 = sshll.u32 [#allocation10], 4
          %s882 = int_to_ptr.vmem [resolvable:$true] %s881
          %884 = dma.hbm_to_vmem [thread:$0]  %s39, 16, %s882, [#allocation9]
        $region76: #{seq2seq_forward.8} parent=11 // pred_fallthru
          _
        // Predicated region
        $region77: #{seq2seq_forward.8} parent=11 // pred_check
          %p885 = pneg %p541
        $region78: #{seq2seq_forward.8} parent=11 // pred_check_branch
          %887 = sbr.rel (%p885) target = $region80
        $region79: #{seq2seq_forward.8} parent=11 // pred_region
          %s889 = ssub.s32 16, 16
          %890 = vsyncadd [#allocation12], %s889
          %s892 = sshll.u32 [#allocation11], 4
          %s893 = int_to_ptr.vmem [resolvable:$true] %s892
          %895 = dma.hbm_to_vmem [thread:$0]  %s41, 16, %s893, [#allocation12]
        $region80: #{seq2seq_forward.8} parent=11 // pred_fallthru
          _
        // Predicated region
        $region81: #{seq2seq_forward.8} parent=11 // pred_check
          %p896 = pneg %p562
        $region82: #{seq2seq_forward.8} parent=11 // pred_check_branch
          %898 = sbr.rel (%p896) target = $region84
        $region83: #{seq2seq_forward.8} parent=11 // pred_region
          %s900 = ssub.s32 16, 16
          %901 = vsyncadd [#allocation12], %s900
          %s903 = sshll.u32 [#allocation13], 4
          %s904 = int_to_ptr.vmem [resolvable:$true] %s903
          %906 = dma.hbm_to_vmem [thread:$0]  %s43, 16, %s904, [#allocation12]
        $region84: #{seq2seq_forward.8} parent=11 // pred_fallthru
          _
        // Predicated region
        $region85: #{seq2seq_forward.8} parent=11 // pred_check
          %p907 = pneg %p583
        $region86: #{seq2seq_forward.8} parent=11 // pred_check_branch
          %909 = sbr.rel (%p907) target = $region88
        $region87: #{seq2seq_forward.8} parent=11 // pred_region
          %s911 = ssub.s32 16, 16
          %912 = vsyncadd [#allocation15], %s911
          %s914 = sshll.u32 [#allocation14], 4
          %s915 = int_to_ptr.vmem [resolvable:$true] %s914
          %917 = dma.hbm_to_vmem [thread:$0]  %s45, 16, %s915, [#allocation15]
        $region88: #{seq2seq_forward.8} parent=11 // pred_fallthru
          _
        // Predicated region
        $region89: #{seq2seq_forward.8} parent=11 // pred_check
          %p918 = pneg %p604
        $region90: #{seq2seq_forward.8} parent=11 // pred_check_branch
          %920 = sbr.rel (%p918) target = $region92
        $region91: #{seq2seq_forward.8} parent=11 // pred_region
          %s922 = ssub.s32 16, 16
          %923 = vsyncadd [#allocation15], %s922
          %s925 = sshll.u32 [#allocation16], 4
          %s926 = int_to_ptr.vmem [resolvable:$true] %s925
          %928 = dma.hbm_to_vmem [thread:$0]  %s47, 16, %s926, [#allocation15]
        $region92: #{seq2seq_forward.8} parent=11 // pred_fallthru
          _
        // Predicated region
        $region93: #{seq2seq_forward.8} parent=11 // pred_check
          %p929 = pneg %p625
        $region94: #{seq2seq_forward.8} parent=11 // pred_check_branch
          %931 = sbr.rel (%p929) target = $region96
        $region95: #{seq2seq_forward.8} parent=11 // pred_region
          _
        $region96: #{seq2seq_forward.8} parent=11 // pred_fallthru
          _
        // Predicated region
        $region97: #{seq2seq_forward.8} parent=11 // pred_check
          %p932 = pneg %p646
        $region98: #{seq2seq_forward.8} parent=11 // pred_check_branch
          %934 = sbr.rel (%p932) target = $region100
        $region99: #{seq2seq_forward.8} parent=11 // pred_region
          %s936 = ssub.s32 16, 16
          %937 = vsyncadd [#allocation18], %s936
          %s939 = sshll.u32 [#allocation17], 4
          %s940 = int_to_ptr.vmem [resolvable:$true] %s939
          %942 = dma.hbm_to_vmem [thread:$0]  %s51, 16, %s940, [#allocation18]
        $region100: #{seq2seq_forward.8} parent=11 // pred_fallthru
          _
        // Predicated region
        $region101: #{seq2seq_forward.8} parent=11 // pred_check
          %p943 = pneg %p667
        $region102: #{seq2seq_forward.8} parent=11 // pred_check_branch
          %945 = sbr.rel (%p943) target = $region104
        $region103: #{seq2seq_forward.8} parent=11 // pred_region
          _
        $region104: #{seq2seq_forward.8} parent=11 // pred_fallthru
          _
        // Predicated region
        $region105: #{seq2seq_forward.8} parent=11 // pred_check
          %p946 = pneg %p688
        $region106: #{seq2seq_forward.8} parent=11 // pred_check_branch
          %948 = sbr.rel (%p946) target = $region108
        $region107: #{seq2seq_forward.8} parent=11 // pred_region
          %s950 = ssub.s32 16, 16
          %951 = vsyncadd [#allocation18], %s950
          %s953 = sshll.u32 [#allocation19], 4
          %s954 = int_to_ptr.vmem [resolvable:$true] %s953
          %956 = dma.hbm_to_vmem [thread:$0]  %s55, 16, %s954, [#allocation18]
        $region108: #{seq2seq_forward.8} parent=11 // pred_fallthru
          _
        // Predicated region
        $region109: #{seq2seq_forward.8} parent=11 // pred_check
          %p957 = pneg %p709
        $region110: #{seq2seq_forward.8} parent=11 // pred_check_branch
          %959 = sbr.rel (%p957) target = $region112
        $region111: #{seq2seq_forward.8} parent=11 // pred_region
          %s961 = ssub.s32 16, 16
          %962 = vsyncadd [#allocation21], %s961
          %s964 = sshll.u32 [#allocation20], 4
          %s965 = int_to_ptr.vmem [resolvable:$true] %s964
          %967 = dma.hbm_to_vmem [thread:$0]  %s57, 16, %s965, [#allocation21]
        $region112: #{seq2seq_forward.8} parent=11 // pred_fallthru
          _
        // Predicated region
        $region113: #{seq2seq_forward.8} parent=11 // pred_check
          %p968 = pneg %p730
        $region114: #{seq2seq_forward.8} parent=11 // pred_check_branch
          %970 = sbr.rel (%p968) target = $region116
        $region115: #{seq2seq_forward.8} parent=11 // pred_region
          %s972 = ssub.s32 16, 16
          %973 = vsyncadd [#allocation21], %s972
          %s975 = sshll.u32 [#allocation22], 4
          %s976 = int_to_ptr.vmem [resolvable:$true] %s975
          %978 = dma.hbm_to_vmem [thread:$0]  %s59, 16, %s976, [#allocation21]
        $region116: #{seq2seq_forward.8} parent=11 // pred_fallthru
          _
      $region12: #{seq2seq_forward.8} parent=5 // pred_fallthru
        _
      %p979 = scmp.lt.s32.totalorder %s80, 2
      // Predicated region
      $region117: #{seq2seq_forward.8} parent=5 // pred_check
        %p980 = pneg %p979
      $region118: #{seq2seq_forward.8} parent=5 // pred_check_branch
        %982 = sbr.rel (%p980) target = $region120
      $region119: #{seq2seq_forward.8} parent=5 // pred_region
        // Predicated region
        $region121: #{seq2seq_forward.8} parent=119 // pred_check
          %p983 = pneg %p100
        $region122: #{seq2seq_forward.8} parent=119 // pred_check_branch
          %985 = sbr.rel (%p983) target = $region124
        $region123: #{seq2seq_forward.8} parent=119 // pred_region
          %p986 = scmp.lt.s32.totalorder %s80, 1
          %s987 = scalar_select %p986, %s80, 1
          %s988 = smul.addr %s987, 8
          %s989 = scalar_lea.vmem %s1, %s988
        $region124: #{seq2seq_forward.8} parent=119 // pred_fallthru
          _
        // Predicated region
        $region125: #{seq2seq_forward.8} parent=119 // pred_check
          %p990 = pneg %p126
        $region126: #{seq2seq_forward.8} parent=119 // pred_check_branch
          %992 = sbr.rel (%p990) target = $region128
        $region127: #{seq2seq_forward.8} parent=119 // pred_region
          %p993 = scmp.lt.s32.totalorder %s80, 1
          %s994 = scalar_select %p993, %s80, 1
          %s995 = smul.addr %s994, 8
          %s996 = scalar_lea.vmem %s3, %s995
        $region128: #{seq2seq_forward.8} parent=119 // pred_fallthru
          _
        // Predicated region
        $region129: #{seq2seq_forward.8} parent=119 // pred_check
          %p997 = pneg %p152
        $region130: #{seq2seq_forward.8} parent=119 // pred_check_branch
          %999 = sbr.rel (%p997) target = $region132
        $region131: #{seq2seq_forward.8} parent=119 // pred_region
          %p1000 = scmp.lt.s32.totalorder %s80, 1
          %s1001 = scalar_select %p1000, %s80, 1
          %s1002 = smul.addr %s1001, 8
          %s1003 = scalar_lea.vmem %s5, %s1002
        $region132: #{seq2seq_forward.8} parent=119 // pred_fallthru
          _
        // Predicated region
        $region133: #{seq2seq_forward.8} parent=119 // pred_check
          %p1004 = pneg %p178
        $region134: #{seq2seq_forward.8} parent=119 // pred_check_branch
          %1006 = sbr.rel (%p1004) target = $region136
        $region135: #{seq2seq_forward.8} parent=119 // pred_region
          %p1007 = scmp.lt.s32.totalorder %s80, 1
          %s1008 = scalar_select %p1007, %s80, 1
          %s1009 = smul.addr %s1008, 8
          %s1010 = scalar_lea.vmem %s7, %s1009
        $region136: #{seq2seq_forward.8} parent=119 // pred_fallthru
          _
      $region120: #{seq2seq_forward.8} parent=5 // pred_fallthru
        _
      %p1011 = scmp.le.s32.totalorder 1, %s80
      %p1012 = scmp.lt.s32.totalorder %s80, 3
      %p1013 = pnand %p1011, %p1012
      %p1014 = pneg %p1013
      // Predicated region
      $region137: #{seq2seq_forward.8} parent=5 // pred_check
        _
      $region138: #{seq2seq_forward.8} parent=5 // pred_check_branch
        %1016 = sbr.rel (%p1013) target = $region140
      $region139: #{seq2seq_forward.8} parent=5 // pred_region
        %s1017 = ssub.s32 %s80, 1
        // Predicated region
        $region141: #{seq2seq_forward.8} parent=139 // pred_check
          %p1018 = pneg %p352
        $region142: #{seq2seq_forward.8} parent=139 // pred_check_branch
          %1020 = sbr.rel (%p1018) target = $region144
        $region143: #{seq2seq_forward.8} parent=139 // pred_region
          %1021 = dma.done [#allocation3], 16
        $region144: #{seq2seq_forward.8} parent=139 // pred_fallthru
          _
        // Predicated region
        $region145: #{seq2seq_forward.8} parent=139 // pred_check
          %p1022 = pneg %p373
        $region146: #{seq2seq_forward.8} parent=139 // pred_check_branch
          %1024 = sbr.rel (%p1022) target = $region148
        $region147: #{seq2seq_forward.8} parent=139 // pred_region
          %1025 = dma.done [#allocation6], 16
        $region148: #{seq2seq_forward.8} parent=139 // pred_fallthru
          _
        // Predicated region
        $region149: #{seq2seq_forward.8} parent=139 // pred_check
          %p1026 = pneg %p394
        $region150: #{seq2seq_forward.8} parent=139 // pred_check_branch
          %1028 = sbr.rel (%p1026) target = $region152
        $region151: #{seq2seq_forward.8} parent=139 // pred_region
          %1029 = dma.done [#allocation6], 16
        $region152: #{seq2seq_forward.8} parent=139 // pred_fallthru
          _
        // Predicated region
        $region153: #{seq2seq_forward.8} parent=139 // pred_check
          %p1030 = pneg %p499
        $region154: #{seq2seq_forward.8} parent=139 // pred_check_branch
          %1032 = sbr.rel (%p1030) target = $region156
        $region155: #{seq2seq_forward.8} parent=139 // pred_region
          %1033 = dma.done [#allocation9], 16
        $region156: #{seq2seq_forward.8} parent=139 // pred_fallthru
          _
        // Predicated region
        $region157: #{seq2seq_forward.8} parent=139 // pred_check
          %p1034 = pneg %p520
        $region158: #{seq2seq_forward.8} parent=139 // pred_check_branch
          %1036 = sbr.rel (%p1034) target = $region160
        $region159: #{seq2seq_forward.8} parent=139 // pred_region
          %1037 = dma.done [#allocation9], 16
        $region160: #{seq2seq_forward.8} parent=139 // pred_fallthru
          _
        // Predicated region
        $region161: #{seq2seq_forward.8} parent=139 // pred_check
          %p1038 = pneg %p541
        $region162: #{seq2seq_forward.8} parent=139 // pred_check_branch
          %1040 = sbr.rel (%p1038) target = $region164
        $region163: #{seq2seq_forward.8} parent=139 // pred_region
          %1041 = dma.done [#allocation12], 16
        $region164: #{seq2seq_forward.8} parent=139 // pred_fallthru
          _
        // Predicated region
        $region165: #{seq2seq_forward.8} parent=139 // pred_check
          %p1042 = pneg %p562
        $region166: #{seq2seq_forward.8} parent=139 // pred_check_branch
          %1044 = sbr.rel (%p1042) target = $region168
        $region167: #{seq2seq_forward.8} parent=139 // pred_region
          %1045 = dma.done [#allocation12], 16
        $region168: #{seq2seq_forward.8} parent=139 // pred_fallthru
          _
        // Predicated region
        $region169: #{seq2seq_forward.8} parent=139 // pred_check
          %p1046 = pneg %p583
        $region170: #{seq2seq_forward.8} parent=139 // pred_check_branch
          %1048 = sbr.rel (%p1046) target = $region172
        $region171: #{seq2seq_forward.8} parent=139 // pred_region
          %1049 = dma.done [#allocation15], 16
        $region172: #{seq2seq_forward.8} parent=139 // pred_fallthru
          _
        // Predicated region
        $region173: #{seq2seq_forward.8} parent=139 // pred_check
          %p1050 = pneg %p604
        $region174: #{seq2seq_forward.8} parent=139 // pred_check_branch
          %1052 = sbr.rel (%p1050) target = $region176
        $region175: #{seq2seq_forward.8} parent=139 // pred_region
          %1053 = dma.done [#allocation15], 16
        $region176: #{seq2seq_forward.8} parent=139 // pred_fallthru
          _
        // Predicated region
        $region177: #{seq2seq_forward.8} parent=139 // pred_check
          %p1054 = pneg %p646
        $region178: #{seq2seq_forward.8} parent=139 // pred_check_branch
          %1056 = sbr.rel (%p1054) target = $region180
        $region179: #{seq2seq_forward.8} parent=139 // pred_region
          %1057 = dma.done [#allocation18], 16
        $region180: #{seq2seq_forward.8} parent=139 // pred_fallthru
          _
        // Predicated region
        $region181: #{seq2seq_forward.8} parent=139 // pred_check
          %p1058 = pneg %p688
        $region182: #{seq2seq_forward.8} parent=139 // pred_check_branch
          %1060 = sbr.rel (%p1058) target = $region184
        $region183: #{seq2seq_forward.8} parent=139 // pred_region
          %1061 = dma.done [#allocation18], 16
        $region184: #{seq2seq_forward.8} parent=139 // pred_fallthru
          _
        // Predicated region
        $region185: #{seq2seq_forward.8} parent=139 // pred_check
          %p1062 = pneg %p709
        $region186: #{seq2seq_forward.8} parent=139 // pred_check_branch
          %1064 = sbr.rel (%p1062) target = $region188
        $region187: #{seq2seq_forward.8} parent=139 // pred_region
          %1065 = dma.done [#allocation21], 16
        $region188: #{seq2seq_forward.8} parent=139 // pred_fallthru
          _
        // Predicated region
        $region189: #{seq2seq_forward.8} parent=139 // pred_check
          %p1066 = pneg %p730
        $region190: #{seq2seq_forward.8} parent=139 // pred_check_branch
          %1068 = sbr.rel (%p1066) target = $region192
        $region191: #{seq2seq_forward.8} parent=139 // pred_region
          %1069 = dma.done [#allocation21], 16
        $region192: #{seq2seq_forward.8} parent=139 // pred_fallthru
          _
        %p1070 = scmp.lt.s32.totalorder %s85, 1
        %s1071 = scalar_select %p1070, %s85, 1
        %s1072 = smul.addr %s1071, 8
        %s1073 = scalar_lea.vmem %s1, %s1072
        %p1074 = pneg %p106
        %p1075 = pneg %p103
        %p1076 = scmp.lt.s32.totalorder %s85, 1
        %s1077 = scalar_select %p1076, %s85, 1
        %s1078 = smul.addr %s1077, 8
        %s1079 = scalar_lea.vmem %s3, %s1078
        %p1080 = pneg %p132
        %p1081 = pneg %p129
        %p1082 = scmp.lt.s32.totalorder %s85, 1
        %s1083 = scalar_select %p1082, %s85, 1
        %s1084 = smul.addr %s1083, 8
        %s1085 = scalar_lea.vmem %s5, %s1084
        %p1086 = pneg %p158
        %p1087 = pneg %p155
        %p1088 = scmp.lt.s32.totalorder %s85, 1
        %s1089 = scalar_select %p1088, %s85, 1
        %s1090 = smul.addr %s1089, 8
        %s1091 = scalar_lea.vmem %s7, %s1090
        %p1092 = pneg %p184
        %p1093 = pneg %p181
        %p1094 = pneg %p205
        %p1095 = pneg %p202
        %p1096 = pneg %p226
        %p1097 = pneg %p223
        %p1098 = pneg %p247
        %p1099 = pneg %p244
        %p1100 = pneg %p268
        %p1101 = pneg %p265
        %p1102 = pneg %p289
        %p1103 = pneg %p286
        %p1104 = pneg %p310
        %p1105 = pneg %p307
        %p1106 = pneg %p331
        %p1107 = pneg %p328
        %p1108 = pneg %p352
        %p1109 = pneg %p349
        %p1110 = pneg %p373
        %p1111 = pneg %p370
        %p1112 = pneg %p394
        %p1113 = pneg %p391
        %p1114 = pneg %p415
        %p1115 = pneg %p412
        %p1116 = pneg %p436
        %p1117 = pneg %p433
        %p1118 = pneg %p457
        %p1119 = pneg %p454
        %p1120 = pneg %p478
        %p1121 = pneg %p475
        %p1122 = pneg %p499
        %p1123 = pneg %p496
        %p1124 = pneg %p520
        %p1125 = pneg %p517
        %p1126 = pneg %p541
        %p1127 = pneg %p538
        %p1128 = pneg %p562
        %p1129 = pneg %p559
        %p1130 = pneg %p583
        %p1131 = pneg %p580
        %p1132 = pneg %p604
        %p1133 = pneg %p601
        %p1134 = pneg %p625
        %p1135 = pneg %p622
        %p1136 = pneg %p646
        %p1137 = pneg %p643
        %p1138 = pneg %p667
        %p1139 = pneg %p664
        %p1140 = pneg %p688
        %p1141 = pneg %p685
        %p1142 = pneg %p709
        %p1143 = pneg %p706
        %p1144 = pneg %p730
        %p1145 = pneg %p727
        %p1146 = pneg %p756
        %p1147 = pneg %p753
        %p1148 = scmp.lt.s32.totalorder %s85, 1
        %s1149 = scalar_select %p1148, %s85, 1
        %s1150 = smul.addr %s1149, 8
        %s1151 = scalar_lea.vmem %s61, %s1150
        %p1152 = pneg %p782
        %p1153 = pneg %p779
        %s1154 = sand.u32 %s769, 1
        %s1155 = scalar_lea.sflag [#allocation4], %s1154
        %s1156 = sand.u32 %s769, 1
        %s1157 = smul.addr %s1156, 32
        %s1158 = scalar_lea.vmem [#allocation23], %s1157
        %p1159 = scmp.lt.s32.totalorder %s85, 1
        %s1160 = scalar_select %p1159, %s85, 1
        %s1161 = smul.addr %s1160, 8
        %s1162 = scalar_lea.vmem %s1, %s1161
        %p1163 = scmp.lt.s32.totalorder %s85, 1
        %s1164 = scalar_select %p1163, %s85, 1
        %s1165 = smul.addr %s1164, 8
        %s1166 = scalar_lea.vmem %s3, %s1165
        %p1167 = scmp.lt.s32.totalorder %s85, 1
        %s1168 = scalar_select %p1167, %s85, 1
        %s1169 = smul.addr %s1168, 8
        %s1170 = scalar_lea.vmem %s5, %s1169
        %p1171 = scmp.lt.s32.totalorder %s85, 1
        %s1172 = scalar_select %p1171, %s85, 1
        %s1173 = smul.addr %s1172, 8
        %s1174 = scalar_lea.vmem %s7, %s1173
        %p1175 = scmp.lt.s32.totalorder %s85, 1
        %s1176 = scalar_select %p1175, %s85, 1
        %s1177 = smul.addr %s1176, 8
        %s1178 = scalar_lea.vmem %s61, %s1177
        %v1180 = vld [vmem:[%s1162] sm:$0xff]
        %v1181 = vpack.c.bf16 %v1180, %v1180
        %v1182 = vld [vmem:[%s1170] sm:$0xff]
        %v1183 = vld [vmem:[%s9] sm:$0xf]
        %v1184 = vld [vmem:[%s9 + $0x4] sm:$0xf]
        %v1185 = vld [vmem:[%s9 + $0x8] sm:$0xf]
        %v1186 = vld [vmem:[%s9 + $0xc] sm:$0xf]
        %v1187 = vld [vmem:[%s11] sm:$0xf]
        %v1188 = vld [vmem:[%s11 + $0x4] sm:$0xf]
        %v1189 = vld [vmem:[%s11 + $0x8] sm:$0xf]
        %v1190 = vld [vmem:[%s11 + $0xc] sm:$0xf]
        %v1191 = vld [vmem:[%s13] sm:$0xf]
        %v1192 = vld [vmem:[%s13 + $0x4] sm:$0xf]
        %v1193 = vld [vmem:[%s13 + $0x8] sm:$0xf]
        %v1194 = vld [vmem:[%s13 + $0xc] sm:$0xf]
        %v1195 = vld [vmem:[%s15] sm:$0xf]
        %v1196 = vld [vmem:[%s15 + $0x4] sm:$0xf]
        %v1197 = vld [vmem:[%s15 + $0x8] sm:$0xf]
        %v1198 = vld [vmem:[%s15 + $0xc] sm:$0xf]
        %v1199 = vld [vmem:[%s17] sm:$0x1]
        %v1200 = vld [vmem:[%s19] sm:$0x1]
        %v1201 = vld [vmem:[%s21] sm:$0x1]
        %v1202 = vld [vmem:[#allocation2] sm:$0x1]
        %v1204 = vlaneseq
        %v1205 = vshrl.u32 %v1204, 7
        %v1206 = vsub.s32 0, %v1205
        %v1207 = vrot.slane %v1199, %v1206
        %v1213 = vunpack.c.l.b16 %v1183
        %v1214 = vunpack.c.l.b16 %v1184
        %v1215 = vunpack.c.l.b16 %v1185
        %v1216 = vunpack.c.l.b16 %v1186
        %v1217 = vpack.c.b16 %v1214, %v1213
        %v1218 = vpack.c.b16 %v1216, %v1215
        %vm1221 = vcmask 261120
        %v1223 = vsel %vm1221, %v1181, 0
        %1225 = vmatprep.subr.bf16.mxu0 0
        %1226 = vmatpush1.bf16.msra.mxu0 %v1217
        %1227 = vmatprep.subr.bf16.mxu0 0
        %1228 = vmatpush1.bf16.msra.mxu0 %v1218
        %1229 = vmatprep.subr.bf16.mxu0 0
        %1230 = vmatpush1.bf16.msra.mxu0 0
        %1231 = vmatprep.subr.bf16.mxu0 0
        %1232 = vmatpush1.bf16.msra.mxu0 0
        %1233 = vmatprep.subr.bf16.mxu0 0
        %1234 = vmatpush1.bf16.msra.mxu0 0
        %1235 = vmatprep.subr.bf16.mxu0 0
        %1236 = vmatpush1.bf16.msra.mxu0 0
        %1237 = vmatprep.subr.bf16.mxu0 0
        %1238 = vmatpush1.bf16.msra.mxu0 0
        %1239 = vmatprep.subr.bf16.mxu0 0
        %1240 = vmatpush1.bf16.msra.mxu0 0
        %1241 = vmatprep.subr.bf16.mxu0 0
        %1242 = vmatpush1.bf16.msra.mxu0 0
        %1243 = vmatprep.subr.bf16.mxu0 0
        %1244 = vmatpush1.bf16.msra.mxu0 0
        %1245 = vmatprep.subr.bf16.mxu0 0
        %1246 = vmatpush1.bf16.msra.mxu0 0
        %1247 = vmatprep.subr.bf16.mxu0 0
        %1248 = vmatpush1.bf16.msra.mxu0 0
        %1249 = vmatprep.subr.bf16.mxu0 0
        %1250 = vmatpush1.bf16.msra.mxu0 0
        %1251 = vmatprep.subr.bf16.mxu0 0
        %1252 = vmatpush1.bf16.msra.mxu0 0
        %1253 = vmatprep.subr.bf16.mxu0 0
        %1254 = vmatpush1.bf16.msra.mxu0 0
        %1255 = vmatprep.subr.bf16.mxu0 0
        %1256 = vmatpush1.bf16.msra.mxu0 0
        %1257 = vmatprep.mubr.bf16.mxu0 0
        %1258 = vmatmul.mubr.bf16.gmra.mrb[0].mxu0 %v1223
        %v1259 = vpop.f32.mrb[0].mxu0
        %v1260 = vadd.f32 %v1207, %v1259
        %v1261 = vpop.f32.mrb[0].mxu0
        %v1262 = vpop.f32.mrb[0].mxu0
        %v1263 = vpop.f32.mrb[0].mxu0
        %1264 = vdwg.mxu0
        %v1265 = vmul.f32 %v1260, 0.35355338
        %v1267 = vlaneseq
        %v1268 = vshrl.u32 %v1267, 7
        %v1269 = vsub.s32 0, %v1268
        %v1270 = vrot.slane %v1200, %v1269
        %v1276 = vunpack.c.l.b16 %v1187
        %v1277 = vunpack.c.l.b16 %v1188
        %v1278 = vunpack.c.l.b16 %v1189
        %v1279 = vunpack.c.l.b16 %v1190
        %v1280 = vpack.c.b16 %v1277, %v1276
        %v1281 = vpack.c.b16 %v1279, %v1278
        %1284 = vmatprep.subr.bf16.mxu0 0
        %1285 = vmatpush1.bf16.msra.mxu0 %v1280
        %1286 = vmatprep.subr.bf16.mxu0 0
        %1287 = vmatpush1.bf16.msra.mxu0 %v1281
        %1288 = vmatprep.subr.bf16.mxu0 0
        %1289 = vmatpush1.bf16.msra.mxu0 0
        %1290 = vmatprep.subr.bf16.mxu0 0
        %1291 = vmatpush1.bf16.msra.mxu0 0
        %1292 = vmatprep.subr.bf16.mxu0 0
        %1293 = vmatpush1.bf16.msra.mxu0 0
        %1294 = vmatprep.subr.bf16.mxu0 0
        %1295 = vmatpush1.bf16.msra.mxu0 0
        %1296 = vmatprep.subr.bf16.mxu0 0
        %1297 = vmatpush1.bf16.msra.mxu0 0
        %1298 = vmatprep.subr.bf16.mxu0 0
        %1299 = vmatpush1.bf16.msra.mxu0 0
        %1300 = vmatprep.subr.bf16.mxu0 0
        %1301 = vmatpush1.bf16.msra.mxu0 0
        %1302 = vmatprep.subr.bf16.mxu0 0
        %1303 = vmatpush1.bf16.msra.mxu0 0
        %1304 = vmatprep.subr.bf16.mxu0 0
        %1305 = vmatpush1.bf16.msra.mxu0 0
        %1306 = vmatprep.subr.bf16.mxu0 0
        %1307 = vmatpush1.bf16.msra.mxu0 0
        %1308 = vmatprep.subr.bf16.mxu0 0
        %1309 = vmatpush1.bf16.msra.mxu0 0
        %1310 = vmatprep.subr.bf16.mxu0 0
        %1311 = vmatpush1.bf16.msra.mxu0 0
        %1312 = vmatprep.subr.bf16.mxu0 0
        %1313 = vmatpush1.bf16.msra.mxu0 0
        %1314 = vmatprep.subr.bf16.mxu0 0
        %1315 = vmatpush1.bf16.msra.mxu0 0
        %1316 = vmatprep.mubr.bf16.mxu0 0
        %1317 = vmatmul.mubr.bf16.gmra.mrb[0].mxu0 %v1223
        %v1318 = vpop.f32.mrb[0].mxu0
        %v1319 = vadd.f32 %v1270, %v1318
        %v1320 = vpop.f32.mrb[0].mxu0
        %v1321 = vpop.f32.mrb[0].mxu0
        %v1322 = vpop.f32.mrb[0].mxu0
        %1323 = vdwg.mxu0
        %v1325 = vlaneseq
        %v1326 = vshrl.u32 %v1325, 7
        %v1327 = vsub.s32 0, %v1326
        %v1328 = vrot.slane %v1201, %v1327
        %v1334 = vunpack.c.l.b16 %v1191
        %v1335 = vunpack.c.l.b16 %v1192
        %v1336 = vunpack.c.l.b16 %v1193
        %v1337 = vunpack.c.l.b16 %v1194
        %v1338 = vpack.c.b16 %v1335, %v1334
        %v1339 = vpack.c.b16 %v1337, %v1336
        %1342 = vmatprep.subr.bf16.mxu0 0
        %1343 = vmatpush1.bf16.msra.mxu0 %v1338
        %1344 = vmatprep.subr.bf16.mxu0 0
        %1345 = vmatpush1.bf16.msra.mxu0 %v1339
        %1346 = vmatprep.subr.bf16.mxu0 0
        %1347 = vmatpush1.bf16.msra.mxu0 0
        %1348 = vmatprep.subr.bf16.mxu0 0
        %1349 = vmatpush1.bf16.msra.mxu0 0
        %1350 = vmatprep.subr.bf16.mxu0 0
        %1351 = vmatpush1.bf16.msra.mxu0 0
        %1352 = vmatprep.subr.bf16.mxu0 0
        %1353 = vmatpush1.bf16.msra.mxu0 0
        %1354 = vmatprep.subr.bf16.mxu0 0
        %1355 = vmatpush1.bf16.msra.mxu0 0
        %1356 = vmatprep.subr.bf16.mxu0 0
        %1357 = vmatpush1.bf16.msra.mxu0 0
        %1358 = vmatprep.subr.bf16.mxu0 0
        %1359 = vmatpush1.bf16.msra.mxu0 0
        %1360 = vmatprep.subr.bf16.mxu0 0
        %1361 = vmatpush1.bf16.msra.mxu0 0
        %1362 = vmatprep.subr.bf16.mxu0 0
        %1363 = vmatpush1.bf16.msra.mxu0 0
        %1364 = vmatprep.subr.bf16.mxu0 0
        %1365 = vmatpush1.bf16.msra.mxu0 0
        %1366 = vmatprep.subr.bf16.mxu0 0
        %1367 = vmatpush1.bf16.msra.mxu0 0
        %1368 = vmatprep.subr.bf16.mxu0 0
        %1369 = vmatpush1.bf16.msra.mxu0 0
        %1370 = vmatprep.subr.bf16.mxu0 0
        %1371 = vmatpush1.bf16.msra.mxu0 0
        %1372 = vmatprep.subr.bf16.mxu0 0
        %1373 = vmatpush1.bf16.msra.mxu0 0
        %1374 = vmatprep.mubr.bf16.mxu0 0
        %1375 = vmatmul.mubr.bf16.gmra.mrb[0].mxu0 %v1223
        %v1376 = vpop.f32.mrb[0].mxu0
        %v1377 = vadd.f32 %v1328, %v1376
        %v1378 = vpop.f32.mrb[0].mxu0
        %v1379 = vpop.f32.mrb[0].mxu0
        %v1380 = vpop.f32.mrb[0].mxu0
        %1381 = vdwg.mxu0
        %v1382 = vpack.c.bf16 %v1265, %v1265
        %v1383 = vpack.c.bf16 %v1319, %v1319
        %v1384 = vpack.c.bf16 %v1377, %v1377
        %vm1385 = vcmask 64512
        %v1387 = vsel %vm1385, %v1382, 0
        %v1390 = vsel %vm1385, %v1383, 0
        %1392 = vmatprep.subr.bf16.mxu0 0
        %1393 = vmatpush1.bf16.xpose.msra.mxu0 %v1390
        %1394 = vmatprep.subr.bf16.mxu0 0
        %1395 = vmatpush1.bf16.xpose.msra.mxu0 0
        %1396 = vmatprep.subr.bf16.mxu0 0
        %1397 = vmatpush1.bf16.xpose.msra.mxu0 0
        %1398 = vmatprep.subr.bf16.mxu0 0
        %1399 = vmatpush1.bf16.xpose.msra.mxu0 0
        %1400 = vmatprep.subr.bf16.mxu0 0
        %1401 = vmatpush1.bf16.xpose.msra.mxu0 0
        %1402 = vmatprep.subr.bf16.mxu0 0
        %1403 = vmatpush1.bf16.xpose.msra.mxu0 0
        %1404 = vmatprep.subr.bf16.mxu0 0
        %1405 = vmatpush1.bf16.xpose.msra.mxu0 0
        %1406 = vmatprep.subr.bf16.mxu0 0
        %1407 = vmatpush1.bf16.xpose.msra.mxu0 0
        %1408 = vmatprep.subr.bf16.mxu0 0
        %1409 = vmatpush1.bf16.xpose.msra.mxu0 0
        %1410 = vmatprep.subr.bf16.mxu0 0
        %1411 = vmatpush1.bf16.xpose.msra.mxu0 0
        %1412 = vmatprep.subr.bf16.mxu0 0
        %1413 = vmatpush1.bf16.xpose.msra.mxu0 0
        %1414 = vmatprep.subr.bf16.mxu0 0
        %1415 = vmatpush1.bf16.xpose.msra.mxu0 0
        %1416 = vmatprep.subr.bf16.mxu0 0
        %1417 = vmatpush1.bf16.xpose.msra.mxu0 0
        %1418 = vmatprep.subr.bf16.mxu0 0
        %1419 = vmatpush1.bf16.xpose.msra.mxu0 0
        %1420 = vmatprep.subr.bf16.mxu0 0
        %1421 = vmatpush1.bf16.xpose.msra.mxu0 0
        %1422 = vmatprep.subr.bf16.mxu0 0
        %1423 = vmatpush1.bf16.xpose.msra.mxu0 0
        %1424 = vmatprep.mubr.bf16.mxu0 0
        %1425 = vmatmul.mubr.bf16.gmra.mrb[0].mxu0 %v1387
        %v1426 = vpop.f32.mrb[0].mxu0
        %v1427 = vadd.f32 %v1182, %v1426
        %v1428 = vpop.f32.mrb[0].mxu0
        %v1429 = vpop.f32.mrb[0].mxu0
        %v1430 = vpop.f32.mrb[0].mxu0
        %1431 = vdwg.mxu0
        %v1432 = vsel %vm1385, %v1427, -inf
        %1433 = vmax.xlane.f32.xlu0 %v1432
        %v1434 = vpop.xlane.xlu0 %1433
        %v1435 = vsub.f32 %v1427, %v1434
        %v1436 = vmul.f32 %v1435, 1.442695
        %v1437 = vpow.pop %v1436
        %v1438 = vsel %vm1385, %v1437, 0.0
        %1439 = vadd.xlane.f32.xlu0 %v1438
        %v1440 = vpop.xlane.xlu0 %1439
        %v1441 = vrcp.pop %v1440
        %v1442 = vmul.f32 %v1437, %v1441
        %v1443 = vpack.c.bf16 %v1442, %v1442
        %v1445 = vsel %vm1385, %v1443, 0
        %vm1447 = vcmask 1043456
        %v1449 = vsel %vm1447, %v1384, 0
        %1451 = vmatprep.subr.bf16.mxu0 0
        %1452 = vmatpush1.bf16.msra.mxu0 %v1449
        %1453 = vmatprep.subr.bf16.mxu0 0
        %1454 = vmatpush1.bf16.msra.mxu0 0
        %1455 = vmatprep.subr.bf16.mxu0 0
        %1456 = vmatpush1.bf16.msra.mxu0 0
        %1457 = vmatprep.subr.bf16.mxu0 0
        %1458 = vmatpush1.bf16.msra.mxu0 0
        %1459 = vmatprep.subr.bf16.mxu0 0
        %1460 = vmatpush1.bf16.msra.mxu0 0
        %1461 = vmatprep.subr.bf16.mxu0 0
        %1462 = vmatpush1.bf16.msra.mxu0 0
        %1463 = vmatprep.subr.bf16.mxu0 0
        %1464 = vmatpush1.bf16.msra.mxu0 0
        %1465 = vmatprep.subr.bf16.mxu0 0
        %1466 = vmatpush1.bf16.msra.mxu0 0
        %1467 = vmatprep.subr.bf16.mxu0 0
        %1468 = vmatpush1.bf16.msra.mxu0 0
        %1469 = vmatprep.subr.bf16.mxu0 0
        %1470 = vmatpush1.bf16.msra.mxu0 0
        %1471 = vmatprep.subr.bf16.mxu0 0
        %1472 = vmatpush1.bf16.msra.mxu0 0
        %1473 = vmatprep.subr.bf16.mxu0 0
        %1474 = vmatpush1.bf16.msra.mxu0 0
        %1475 = vmatprep.subr.bf16.mxu0 0
        %1476 = vmatpush1.bf16.msra.mxu0 0
        %1477 = vmatprep.subr.bf16.mxu0 0
        %1478 = vmatpush1.bf16.msra.mxu0 0
        %1479 = vmatprep.subr.bf16.mxu0 0
        %1480 = vmatpush1.bf16.msra.mxu0 0
        %1481 = vmatprep.subr.bf16.mxu0 0
        %1482 = vmatpush1.bf16.msra.mxu0 0
        %1483 = vmatprep.mubr.bf16.mxu0 0
        %1484 = vmatmul.mubr.bf16.gmra.mrb[0].mxu0 %v1445
        %v1485 = vpop.f32.mrb[0].mxu0
        %v1486 = vadd.f32 0.0, %v1485
        %v1487 = vpop.f32.mrb[0].mxu0
        %v1488 = vpop.f32.mrb[0].mxu0
        %v1489 = vpop.f32.mrb[0].mxu0
        %1490 = vdwg.mxu0
        %1492 = vrot.lane.b32.xlu0 %v1382, 120
        %v1493 = vpop.permute.xlu0 %1492
        %1495 = vrot.lane.b32.xlu0 %v1383, 120
        %v1496 = vpop.permute.xlu0 %1495
        %v1498 = vsel %vm1385, %v1493, 0
        %v1501 = vsel %vm1385, %v1496, 0
        %1503 = vmatprep.subr.bf16.mxu0 0
        %1504 = vmatpush1.bf16.xpose.msra.mxu0 %v1501
        %1505 = vmatprep.subr.bf16.mxu0 0
        %1506 = vmatpush1.bf16.xpose.msra.mxu0 0
        %1507 = vmatprep.subr.bf16.mxu0 0
        %1508 = vmatpush1.bf16.xpose.msra.mxu0 0
        %1509 = vmatprep.subr.bf16.mxu0 0
        %1510 = vmatpush1.bf16.xpose.msra.mxu0 0
        %1511 = vmatprep.subr.bf16.mxu0 0
        %1512 = vmatpush1.bf16.xpose.msra.mxu0 0
        %1513 = vmatprep.subr.bf16.mxu0 0
        %1514 = vmatpush1.bf16.xpose.msra.mxu0 0
        %1515 = vmatprep.subr.bf16.mxu0 0
        %1516 = vmatpush1.bf16.xpose.msra.mxu0 0
        %1517 = vmatprep.subr.bf16.mxu0 0
        %1518 = vmatpush1.bf16.xpose.msra.mxu0 0
        %1519 = vmatprep.subr.bf16.mxu0 0
        %1520 = vmatpush1.bf16.xpose.msra.mxu0 0
        %1521 = vmatprep.subr.bf16.mxu0 0
        %1522 = vmatpush1.bf16.xpose.msra.mxu0 0
        %1523 = vmatprep.subr.bf16.mxu0 0
        %1524 = vmatpush1.bf16.xpose.msra.mxu0 0
        %1525 = vmatprep.subr.bf16.mxu0 0
        %1526 = vmatpush1.bf16.xpose.msra.mxu0 0
        %1527 = vmatprep.subr.bf16.mxu0 0
        %1528 = vmatpush1.bf16.xpose.msra.mxu0 0
        %1529 = vmatprep.subr.bf16.mxu0 0
        %1530 = vmatpush1.bf16.xpose.msra.mxu0 0
        %1531 = vmatprep.subr.bf16.mxu0 0
        %1532 = vmatpush1.bf16.xpose.msra.mxu0 0
        %1533 = vmatprep.subr.bf16.mxu0 0
        %1534 = vmatpush1.bf16.xpose.msra.mxu0 0
        %1535 = vmatprep.mubr.bf16.mxu0 0
        %1536 = vmatmul.mubr.bf16.gmra.mrb[0].mxu0 %v1498
        %v1537 = vpop.f32.mrb[0].mxu0
        %v1538 = vadd.f32 %v1182, %v1537
        %v1539 = vpop.f32.mrb[0].mxu0
        %v1540 = vpop.f32.mrb[0].mxu0
        %v1541 = vpop.f32.mrb[0].mxu0
        %1542 = vdwg.mxu0
        %v1543 = vsel %vm1385, %v1538, -inf
        %1544 = vmax.xlane.f32.xlu0 %v1543
        %v1545 = vpop.xlane.xlu0 %1544
        %v1546 = vsub.f32 %v1538, %v1545
        %v1547 = vmul.f32 %v1546, 1.442695
        %v1548 = vpow.pop %v1547
        %v1549 = vsel %vm1385, %v1548, 0.0
        %1550 = vadd.xlane.f32.xlu0 %v1549
        %v1551 = vpop.xlane.xlu0 %1550
        %v1552 = vrcp.pop %v1551
        %v1553 = vmul.f32 %v1548, %v1552
        %v1554 = vpack.c.bf16 %v1553, %v1553
        %1556 = vrot.lane.b32.xlu0 %v1384, 120
        %v1557 = vpop.permute.xlu0 %1556
        %v1559 = vsel %vm1385, %v1554, 0
        %v1562 = vsel %vm1447, %v1557, 0
        %1564 = vmatprep.subr.bf16.mxu0 0
        %1565 = vmatpush1.bf16.msra.mxu0 %v1562
        %1566 = vmatprep.subr.bf16.mxu0 0
        %1567 = vmatpush1.bf16.msra.mxu0 0
        %1568 = vmatprep.subr.bf16.mxu0 0
        %1569 = vmatpush1.bf16.msra.mxu0 0
        %1570 = vmatprep.subr.bf16.mxu0 0
        %1571 = vmatpush1.bf16.msra.mxu0 0
        %1572 = vmatprep.subr.bf16.mxu0 0
        %1573 = vmatpush1.bf16.msra.mxu0 0
        %1574 = vmatprep.subr.bf16.mxu0 0
        %1575 = vmatpush1.bf16.msra.mxu0 0
        %1576 = vmatprep.subr.bf16.mxu0 0
        %1577 = vmatpush1.bf16.msra.mxu0 0
        %1578 = vmatprep.subr.bf16.mxu0 0
        %1579 = vmatpush1.bf16.msra.mxu0 0
        %1580 = vmatprep.subr.bf16.mxu0 0
        %1581 = vmatpush1.bf16.msra.mxu0 0
        %1582 = vmatprep.subr.bf16.mxu0 0
        %1583 = vmatpush1.bf16.msra.mxu0 0
        %1584 = vmatprep.subr.bf16.mxu0 0
        %1585 = vmatpush1.bf16.msra.mxu0 0
        %1586 = vmatprep.subr.bf16.mxu0 0
        %1587 = vmatpush1.bf16.msra.mxu0 0
        %1588 = vmatprep.subr.bf16.mxu0 0
        %1589 = vmatpush1.bf16.msra.mxu0 0
        %1590 = vmatprep.subr.bf16.mxu0 0
        %1591 = vmatpush1.bf16.msra.mxu0 0
        %1592 = vmatprep.subr.bf16.mxu0 0
        %1593 = vmatpush1.bf16.msra.mxu0 0
        %1594 = vmatprep.subr.bf16.mxu0 0
        %1595 = vmatpush1.bf16.msra.mxu0 0
        %1596 = vmatprep.mubr.bf16.mxu0 0
        %1597 = vmatmul.mubr.bf16.gmra.mrb[0].mxu0 %v1559
        %v1598 = vpop.f32.mrb[0].mxu0
        %v1599 = vadd.f32 0.0, %v1598
        %v1600 = vpop.f32.mrb[0].mxu0
        %v1601 = vpop.f32.mrb[0].mxu0
        %v1602 = vpop.f32.mrb[0].mxu0
        %1603 = vdwg.mxu0
        %1604 = vrot.lane.b32.xlu0 %v1382, 112
        %v1605 = vpop.permute.xlu0 %1604
        %1606 = vrot.lane.b32.xlu0 %v1383, 112
        %v1607 = vpop.permute.xlu0 %1606
        %v1609 = vsel %vm1385, %v1605, 0
        %v1612 = vsel %vm1385, %v1607, 0
        %1614 = vmatprep.subr.bf16.mxu0 0
        %1615 = vmatpush1.bf16.xpose.msra.mxu0 %v1612
        %1616 = vmatprep.subr.bf16.mxu0 0
        %1617 = vmatpush1.bf16.xpose.msra.mxu0 0
        %1618 = vmatprep.subr.bf16.mxu0 0
        %1619 = vmatpush1.bf16.xpose.msra.mxu0 0
        %1620 = vmatprep.subr.bf16.mxu0 0
        %1621 = vmatpush1.bf16.xpose.msra.mxu0 0
        %1622 = vmatprep.subr.bf16.mxu0 0
        %1623 = vmatpush1.bf16.xpose.msra.mxu0 0
        %1624 = vmatprep.subr.bf16.mxu0 0
        %1625 = vmatpush1.bf16.xpose.msra.mxu0 0
        %1626 = vmatprep.subr.bf16.mxu0 0
        %1627 = vmatpush1.bf16.xpose.msra.mxu0 0
        %1628 = vmatprep.subr.bf16.mxu0 0
        %1629 = vmatpush1.bf16.xpose.msra.mxu0 0
        %1630 = vmatprep.subr.bf16.mxu0 0
        %1631 = vmatpush1.bf16.xpose.msra.mxu0 0
        %1632 = vmatprep.subr.bf16.mxu0 0
        %1633 = vmatpush1.bf16.xpose.msra.mxu0 0
        %1634 = vmatprep.subr.bf16.mxu0 0
        %1635 = vmatpush1.bf16.xpose.msra.mxu0 0
        %1636 = vmatprep.subr.bf16.mxu0 0
        %1637 = vmatpush1.bf16.xpose.msra.mxu0 0
        %1638 = vmatprep.subr.bf16.mxu0 0
        %1639 = vmatpush1.bf16.xpose.msra.mxu0 0
        %1640 = vmatprep.subr.bf16.mxu0 0
        %1641 = vmatpush1.bf16.xpose.msra.mxu0 0
        %1642 = vmatprep.subr.bf16.mxu0 0
        %1643 = vmatpush1.bf16.xpose.msra.mxu0 0
        %1644 = vmatprep.subr.bf16.mxu0 0
        %1645 = vmatpush1.bf16.xpose.msra.mxu0 0
        %1646 = vmatprep.mubr.bf16.mxu0 0
        %1647 = vmatmul.mubr.bf16.gmra.mrb[0].mxu0 %v1609
        %v1648 = vpop.f32.mrb[0].mxu0
        %v1649 = vadd.f32 %v1182, %v1648
        %v1650 = vpop.f32.mrb[0].mxu0
        %v1651 = vpop.f32.mrb[0].mxu0
        %v1652 = vpop.f32.mrb[0].mxu0
        %1653 = vdwg.mxu0
        %v1654 = vsel %vm1385, %v1649, -inf
        %1655 = vmax.xlane.f32.xlu0 %v1654
        %v1656 = vpop.xlane.xlu0 %1655
        %v1657 = vsub.f32 %v1649, %v1656
        %v1658 = vmul.f32 %v1657, 1.442695
        %v1659 = vpow.pop %v1658
        %v1660 = vsel %vm1385, %v1659, 0.0
        %1661 = vadd.xlane.f32.xlu0 %v1660
        %v1662 = vpop.xlane.xlu0 %1661
        %v1663 = vrcp.pop %v1662
        %v1664 = vmul.f32 %v1659, %v1663
        %v1665 = vpack.c.bf16 %v1664, %v1664
        %1666 = vrot.lane.b32.xlu0 %v1384, 112
        %v1667 = vpop.permute.xlu0 %1666
        %v1669 = vsel %vm1385, %v1665, 0
        %v1672 = vsel %vm1447, %v1667, 0
        %1674 = vmatprep.subr.bf16.mxu0 0
        %1675 = vmatpush1.bf16.msra.mxu0 %v1672
        %1676 = vmatprep.subr.bf16.mxu0 0
        %1677 = vmatpush1.bf16.msra.mxu0 0
        %1678 = vmatprep.subr.bf16.mxu0 0
        %1679 = vmatpush1.bf16.msra.mxu0 0
        %1680 = vmatprep.subr.bf16.mxu0 0
        %1681 = vmatpush1.bf16.msra.mxu0 0
        %1682 = vmatprep.subr.bf16.mxu0 0
        %1683 = vmatpush1.bf16.msra.mxu0 0
        %1684 = vmatprep.subr.bf16.mxu0 0
        %1685 = vmatpush1.bf16.msra.mxu0 0
        %1686 = vmatprep.subr.bf16.mxu0 0
        %1687 = vmatpush1.bf16.msra.mxu0 0
        %1688 = vmatprep.subr.bf16.mxu0 0
        %1689 = vmatpush1.bf16.msra.mxu0 0
        %1690 = vmatprep.subr.bf16.mxu0 0
        %1691 = vmatpush1.bf16.msra.mxu0 0
        %1692 = vmatprep.subr.bf16.mxu0 0
        %1693 = vmatpush1.bf16.msra.mxu0 0
        %1694 = vmatprep.subr.bf16.mxu0 0
        %1695 = vmatpush1.bf16.msra.mxu0 0
        %1696 = vmatprep.subr.bf16.mxu0 0
        %1697 = vmatpush1.bf16.msra.mxu0 0
        %1698 = vmatprep.subr.bf16.mxu0 0
        %1699 = vmatpush1.bf16.msra.mxu0 0
        %1700 = vmatprep.subr.bf16.mxu0 0
        %1701 = vmatpush1.bf16.msra.mxu0 0
        %1702 = vmatprep.subr.bf16.mxu0 0
        %1703 = vmatpush1.bf16.msra.mxu0 0
        %1704 = vmatprep.subr.bf16.mxu0 0
        %1705 = vmatpush1.bf16.msra.mxu0 0
        %1706 = vmatprep.mubr.bf16.mxu0 0
        %1707 = vmatmul.mubr.bf16.gmra.mrb[0].mxu0 %v1669
        %v1708 = vpop.f32.mrb[0].mxu0
        %v1709 = vadd.f32 0.0, %v1708
        %v1710 = vpop.f32.mrb[0].mxu0
        %v1711 = vpop.f32.mrb[0].mxu0
        %v1712 = vpop.f32.mrb[0].mxu0
        %1713 = vdwg.mxu0
        %1714 = vrot.lane.b32.xlu0 %v1382, 104
        %v1715 = vpop.permute.xlu0 %1714
        %1716 = vrot.lane.b32.xlu0 %v1383, 104
        %v1717 = vpop.permute.xlu0 %1716
        %v1719 = vsel %vm1385, %v1715, 0
        %v1722 = vsel %vm1385, %v1717, 0
        %1724 = vmatprep.subr.bf16.mxu0 0
        %1725 = vmatpush1.bf16.xpose.msra.mxu0 %v1722
        %1726 = vmatprep.subr.bf16.mxu0 0
        %1727 = vmatpush1.bf16.xpose.msra.mxu0 0
        %1728 = vmatprep.subr.bf16.mxu0 0
        %1729 = vmatpush1.bf16.xpose.msra.mxu0 0
        %1730 = vmatprep.subr.bf16.mxu0 0
        %1731 = vmatpush1.bf16.xpose.msra.mxu0 0
        %1732 = vmatprep.subr.bf16.mxu0 0
        %1733 = vmatpush1.bf16.xpose.msra.mxu0 0
        %1734 = vmatprep.subr.bf16.mxu0 0
        %1735 = vmatpush1.bf16.xpose.msra.mxu0 0
        %1736 = vmatprep.subr.bf16.mxu0 0
        %1737 = vmatpush1.bf16.xpose.msra.mxu0 0
        %1738 = vmatprep.subr.bf16.mxu0 0
        %1739 = vmatpush1.bf16.xpose.msra.mxu0 0
        %1740 = vmatprep.subr.bf16.mxu0 0
        %1741 = vmatpush1.bf16.xpose.msra.mxu0 0
        %1742 = vmatprep.subr.bf16.mxu0 0
        %1743 = vmatpush1.bf16.xpose.msra.mxu0 0
        %1744 = vmatprep.subr.bf16.mxu0 0
        %1745 = vmatpush1.bf16.xpose.msra.mxu0 0
        %1746 = vmatprep.subr.bf16.mxu0 0
        %1747 = vmatpush1.bf16.xpose.msra.mxu0 0
        %1748 = vmatprep.subr.bf16.mxu0 0
        %1749 = vmatpush1.bf16.xpose.msra.mxu0 0
        %1750 = vmatprep.subr.bf16.mxu0 0
        %1751 = vmatpush1.bf16.xpose.msra.mxu0 0
        %1752 = vmatprep.subr.bf16.mxu0 0
        %1753 = vmatpush1.bf16.xpose.msra.mxu0 0
        %1754 = vmatprep.subr.bf16.mxu0 0
        %1755 = vmatpush1.bf16.xpose.msra.mxu0 0
        %1756 = vmatprep.mubr.bf16.mxu0 0
        %1757 = vmatmul.mubr.bf16.gmra.mrb[0].mxu0 %v1719
        %v1758 = vpop.f32.mrb[0].mxu0
        %v1759 = vadd.f32 %v1182, %v1758
        %v1760 = vpop.f32.mrb[0].mxu0
        %v1761 = vpop.f32.mrb[0].mxu0
        %v1762 = vpop.f32.mrb[0].mxu0
        %1763 = vdwg.mxu0
        %v1764 = vsel %vm1385, %v1759, -inf
        %1765 = vmax.xlane.f32.xlu0 %v1764
        %v1766 = vpop.xlane.xlu0 %1765
        %v1767 = vsub.f32 %v1759, %v1766
        %v1768 = vmul.f32 %v1767, 1.442695
        %v1769 = vpow.pop %v1768
        %v1770 = vsel %vm1385, %v1769, 0.0
        %1771 = vadd.xlane.f32.xlu0 %v1770
        %v1772 = vpop.xlane.xlu0 %1771
        %v1773 = vrcp.pop %v1772
        %v1774 = vmul.f32 %v1769, %v1773
        %v1775 = vpack.c.bf16 %v1774, %v1774
        %1776 = vrot.lane.b32.xlu0 %v1384, 104
        %v1777 = vpop.permute.xlu0 %1776
        %v1779 = vsel %vm1385, %v1775, 0
        %v1782 = vsel %vm1447, %v1777, 0
        %1784 = vmatprep.subr.bf16.mxu0 0
        %1785 = vmatpush1.bf16.msra.mxu0 %v1782
        %1786 = vmatprep.subr.bf16.mxu0 0
        %1787 = vmatpush1.bf16.msra.mxu0 0
        %1788 = vmatprep.subr.bf16.mxu0 0
        %1789 = vmatpush1.bf16.msra.mxu0 0
        %1790 = vmatprep.subr.bf16.mxu0 0
        %1791 = vmatpush1.bf16.msra.mxu0 0
        %1792 = vmatprep.subr.bf16.mxu0 0
        %1793 = vmatpush1.bf16.msra.mxu0 0
        %1794 = vmatprep.subr.bf16.mxu0 0
        %1795 = vmatpush1.bf16.msra.mxu0 0
        %1796 = vmatprep.subr.bf16.mxu0 0
        %1797 = vmatpush1.bf16.msra.mxu0 0
        %1798 = vmatprep.subr.bf16.mxu0 0
        %1799 = vmatpush1.bf16.msra.mxu0 0
        %1800 = vmatprep.subr.bf16.mxu0 0
        %1801 = vmatpush1.bf16.msra.mxu0 0
        %1802 = vmatprep.subr.bf16.mxu0 0
        %1803 = vmatpush1.bf16.msra.mxu0 0
        %1804 = vmatprep.subr.bf16.mxu0 0
        %1805 = vmatpush1.bf16.msra.mxu0 0
        %1806 = vmatprep.subr.bf16.mxu0 0
        %1807 = vmatpush1.bf16.msra.mxu0 0
        %1808 = vmatprep.subr.bf16.mxu0 0
        %1809 = vmatpush1.bf16.msra.mxu0 0
        %1810 = vmatprep.subr.bf16.mxu0 0
        %1811 = vmatpush1.bf16.msra.mxu0 0
        %1812 = vmatprep.subr.bf16.mxu0 0
        %1813 = vmatpush1.bf16.msra.mxu0 0
        %1814 = vmatprep.subr.bf16.mxu0 0
        %1815 = vmatpush1.bf16.msra.mxu0 0
        %1816 = vmatprep.mubr.bf16.mxu0 0
        %1817 = vmatmul.mubr.bf16.gmra.mrb[0].mxu0 %v1779
        %v1818 = vpop.f32.mrb[0].mxu0
        %v1819 = vadd.f32 0.0, %v1818
        %v1820 = vpop.f32.mrb[0].mxu0
        %v1821 = vpop.f32.mrb[0].mxu0
        %v1822 = vpop.f32.mrb[0].mxu0
        %1823 = vdwg.mxu0
        %1825 = vrot.lane.b32.xlu0 %v1599, 8
        %v1826 = vpop.permute.xlu0 %1825
        %1829 = vrot.lane.b32.xlu0 %v1709, 16
        %v1830 = vpop.permute.xlu0 %1829
        %1833 = vrot.lane.b32.xlu0 %v1819, 24
        %v1834 = vpop.permute.xlu0 %1833
        %v1836 = vsel %vm1385, %v1486, %v1826
        %vm1837 = vcmask 130048
        %v1838 = vsel %vm1837, %v1836, %v1830
        %vm1839 = vcmask 195584
        %v1840 = vsel %vm1839, %v1838, %v1834
        %v1841 = vpack.c.bf16 %v1840, %v1840
        %v1843 = vlaneseq
        %v1844 = vshrl.u32 %v1843, 7
        %v1845 = vsub.s32 0, %v1844
        %v1846 = vrot.slane %v1202, %v1845
        %v1852 = vunpack.c.l.b16 %v1195
        %v1853 = vunpack.c.l.b16 %v1196
        %v1854 = vunpack.c.l.b16 %v1197
        %v1855 = vunpack.c.l.b16 %v1198
        %v1856 = vpack.c.b16 %v1853, %v1852
        %v1857 = vpack.c.b16 %v1855, %v1854
        %v1861 = vsel %vm1221, %v1841, 0
        %1863 = vmatprep.subr.bf16.mxu0 0
        %1864 = vmatpush1.bf16.msra.mxu0 %v1856
        %1865 = vmatprep.subr.bf16.mxu0 0
        %1866 = vmatpush1.bf16.msra.mxu0 %v1857
        %1867 = vmatprep.subr.bf16.mxu0 0
        %1868 = vmatpush1.bf16.msra.mxu0 0
        %1869 = vmatprep.subr.bf16.mxu0 0
        %1870 = vmatpush1.bf16.msra.mxu0 0
        %1871 = vmatprep.subr.bf16.mxu0 0
        %1872 = vmatpush1.bf16.msra.mxu0 0
        %1873 = vmatprep.subr.bf16.mxu0 0
        %1874 = vmatpush1.bf16.msra.mxu0 0
        %1875 = vmatprep.subr.bf16.mxu0 0
        %1876 = vmatpush1.bf16.msra.mxu0 0
        %1877 = vmatprep.subr.bf16.mxu0 0
        %1878 = vmatpush1.bf16.msra.mxu0 0
        %1879 = vmatprep.subr.bf16.mxu0 0
        %1880 = vmatpush1.bf16.msra.mxu0 0
        %1881 = vmatprep.subr.bf16.mxu0 0
        %1882 = vmatpush1.bf16.msra.mxu0 0
        %1883 = vmatprep.subr.bf16.mxu0 0
        %1884 = vmatpush1.bf16.msra.mxu0 0
        %1885 = vmatprep.subr.bf16.mxu0 0
        %1886 = vmatpush1.bf16.msra.mxu0 0
        %1887 = vmatprep.subr.bf16.mxu0 0
        %1888 = vmatpush1.bf16.msra.mxu0 0
        %1889 = vmatprep.subr.bf16.mxu0 0
        %1890 = vmatpush1.bf16.msra.mxu0 0
        %1891 = vmatprep.subr.bf16.mxu0 0
        %1892 = vmatpush1.bf16.msra.mxu0 0
        %1893 = vmatprep.subr.bf16.mxu0 0
        %1894 = vmatpush1.bf16.msra.mxu0 0
        %1895 = vmatprep.mubr.bf16.mxu0 0
        %1896 = vmatmul.mubr.bf16.gmra.mrb[0].mxu0 %v1861
        %v1897 = vpop.f32.mrb[0].mxu0
        %v1898 = vadd.f32 %v1846, %v1897
        %v1899 = vpop.f32.mrb[0].mxu0
        %v1900 = vpop.f32.mrb[0].mxu0
        %v1901 = vpop.f32.mrb[0].mxu0
        %1902 = vdwg.mxu0
        %v1903 = vadd.f32 %v1180, %v1898
        %v1904 = vld [vmem:[#allocation5] sm:$0x1]
        %v1905 = vld [vmem:[#allocation7] sm:$0x1]
        %v1906 = vsel %vm1221, %v1903, 0.0
        %1907 = vadd.xlane.f32.xlu0 %v1906
        %v1908 = vpop.xlane.xlu0 %1907
        %v1909 = vrcp.pop 32.0
        %v1910 = vmul.f32 %v1908, %v1909
        %v1911 = vmul.f32 %v1903, %v1903
        %v1912 = vsel %vm1221, %v1911, 0.0
        %1913 = vadd.xlane.f32.xlu0 %v1912
        %v1914 = vpop.xlane.xlu0 %1913
        %v1915 = vmul.f32 %v1914, %v1909
        %v1916 = vmul.f32 %v1910, %v1910
        %v1917 = vsub.f32 %v1915, %v1916
        %v1918 = vmax.f32 %v1917, 0.0
        %v1919 = vsub.f32 %v1903, %v1910
        %v1920 = vadd.f32 %v1918, 1e-05
        %v1921 = vrsqrt.pop %v1920
        %v1922 = vmul.f32 %v1919, %v1921
        %v1924 = vlaneseq
        %v1925 = vshrl.u32 %v1924, 7
        %v1926 = vsub.s32 0, %v1925
        %v1927 = vrot.slane %v1904, %v1926
        %v1929 = vmul.f32 %v1922, %v1927
        %v1931 = vlaneseq
        %v1932 = vshrl.u32 %v1931, 7
        %v1933 = vsub.s32 0, %v1932
        %v1934 = vrot.slane %v1905, %v1933
        %v1936 = vadd.f32 %v1929, %v1934
        %v1937 = vld [vmem:[%s1166] sm:$0xff]
        %v1938 = vpack.c.bf16 %v1937, %v1937
        %v1939 = vpack.c.bf16 %v1936, %v1936
        %v1940 = vld [vmem:[%s1174] sm:$0xff]
        %v1941 = vld [vmem:[%s29] sm:$0xf]
        %v1942 = vld [vmem:[%s29 + $0x4] sm:$0xf]
        %v1943 = vld [vmem:[%s29 + $0x8] sm:$0xf]
        %v1944 = vld [vmem:[%s29 + $0xc] sm:$0xf]
        %v1945 = vld [vmem:[%s31] sm:$0xf]
        %v1946 = vld [vmem:[%s31 + $0x4] sm:$0xf]
        %v1947 = vld [vmem:[%s31 + $0x8] sm:$0xf]
        %v1948 = vld [vmem:[%s31 + $0xc] sm:$0xf]
        %v1949 = vld [vmem:[%s33] sm:$0xf]
        %v1950 = vld [vmem:[%s33 + $0x4] sm:$0xf]
        %v1951 = vld [vmem:[%s33 + $0x8] sm:$0xf]
        %v1952 = vld [vmem:[%s33 + $0xc] sm:$0xf]
        %v1953 = vld [vmem:[%s35] sm:$0xf]
        %v1954 = vld [vmem:[%s35 + $0x4] sm:$0xf]
        %v1955 = vld [vmem:[%s35 + $0x8] sm:$0xf]
        %v1956 = vld [vmem:[%s35 + $0xc] sm:$0xf]
        %v1957 = vld [vmem:[#allocation8] sm:$0x1]
        %v1958 = vld [vmem:[#allocation10] sm:$0x1]
        %v1959 = vld [vmem:[#allocation11] sm:$0x1]
        %v1960 = vld [vmem:[#allocation13] sm:$0x1]
        %v1962 = vlaneseq
        %v1963 = vshrl.u32 %v1962, 7
        %v1964 = vsub.s32 0, %v1963
        %v1965 = vrot.slane %v1957, %v1964
        %v1971 = vunpack.c.l.b16 %v1941
        %v1972 = vunpack.c.l.b16 %v1942
        %v1973 = vunpack.c.l.b16 %v1943
        %v1974 = vunpack.c.l.b16 %v1944
        %v1975 = vpack.c.b16 %v1972, %v1971
        %v1976 = vpack.c.b16 %v1974, %v1973
        %v1980 = vsel %vm1221, %v1939, 0
        %1982 = vmatprep.subr.bf16.mxu0 0
        %1983 = vmatpush1.bf16.msra.mxu0 %v1975
        %1984 = vmatprep.subr.bf16.mxu0 0
        %1985 = vmatpush1.bf16.msra.mxu0 %v1976
        %1986 = vmatprep.subr.bf16.mxu0 0
        %1987 = vmatpush1.bf16.msra.mxu0 0
        %1988 = vmatprep.subr.bf16.mxu0 0
        %1989 = vmatpush1.bf16.msra.mxu0 0
        %1990 = vmatprep.subr.bf16.mxu0 0
        %1991 = vmatpush1.bf16.msra.mxu0 0
        %1992 = vmatprep.subr.bf16.mxu0 0
        %1993 = vmatpush1.bf16.msra.mxu0 0
        %1994 = vmatprep.subr.bf16.mxu0 0
        %1995 = vmatpush1.bf16.msra.mxu0 0
        %1996 = vmatprep.subr.bf16.mxu0 0
        %1997 = vmatpush1.bf16.msra.mxu0 0
        %1998 = vmatprep.subr.bf16.mxu0 0
        %1999 = vmatpush1.bf16.msra.mxu0 0
        %2000 = vmatprep.subr.bf16.mxu0 0
        %2001 = vmatpush1.bf16.msra.mxu0 0
        %2002 = vmatprep.subr.bf16.mxu0 0
        %2003 = vmatpush1.bf16.msra.mxu0 0
        %2004 = vmatprep.subr.bf16.mxu0 0
        %2005 = vmatpush1.bf16.msra.mxu0 0
        %2006 = vmatprep.subr.bf16.mxu0 0
        %2007 = vmatpush1.bf16.msra.mxu0 0
        %2008 = vmatprep.subr.bf16.mxu0 0
        %2009 = vmatpush1.bf16.msra.mxu0 0
        %2010 = vmatprep.subr.bf16.mxu0 0
        %2011 = vmatpush1.bf16.msra.mxu0 0
        %2012 = vmatprep.subr.bf16.mxu0 0
        %2013 = vmatpush1.bf16.msra.mxu0 0
        %2014 = vmatprep.mubr.bf16.mxu0 0
        %2015 = vmatmul.mubr.bf16.gmra.mrb[0].mxu0 %v1980
        %v2016 = vpop.f32.mrb[0].mxu0
        %v2017 = vadd.f32 %v1965, %v2016
        %v2018 = vpop.f32.mrb[0].mxu0
        %v2019 = vpop.f32.mrb[0].mxu0
        %v2020 = vpop.f32.mrb[0].mxu0
        %2021 = vdwg.mxu0
        %v2022 = vmul.f32 %v2017, 0.35355338
        %v2024 = vlaneseq
        %v2025 = vshrl.u32 %v2024, 7
        %v2026 = vsub.s32 0, %v2025
        %v2027 = vrot.slane %v1958, %v2026
        %v2033 = vunpack.c.l.b16 %v1945
        %v2034 = vunpack.c.l.b16 %v1946
        %v2035 = vunpack.c.l.b16 %v1947
        %v2036 = vunpack.c.l.b16 %v1948
        %v2037 = vpack.c.b16 %v2034, %v2033
        %v2038 = vpack.c.b16 %v2036, %v2035
        %v2042 = vsel %vm1221, %v1938, 0
        %2044 = vmatprep.subr.bf16.mxu0 0
        %2045 = vmatpush1.bf16.msra.mxu0 %v2037
        %2046 = vmatprep.subr.bf16.mxu0 0
        %2047 = vmatpush1.bf16.msra.mxu0 %v2038
        %2048 = vmatprep.subr.bf16.mxu0 0
        %2049 = vmatpush1.bf16.msra.mxu0 0
        %2050 = vmatprep.subr.bf16.mxu0 0
        %2051 = vmatpush1.bf16.msra.mxu0 0
        %2052 = vmatprep.subr.bf16.mxu0 0
        %2053 = vmatpush1.bf16.msra.mxu0 0
        %2054 = vmatprep.subr.bf16.mxu0 0
        %2055 = vmatpush1.bf16.msra.mxu0 0
        %2056 = vmatprep.subr.bf16.mxu0 0
        %2057 = vmatpush1.bf16.msra.mxu0 0
        %2058 = vmatprep.subr.bf16.mxu0 0
        %2059 = vmatpush1.bf16.msra.mxu0 0
        %2060 = vmatprep.subr.bf16.mxu0 0
        %2061 = vmatpush1.bf16.msra.mxu0 0
        %2062 = vmatprep.subr.bf16.mxu0 0
        %2063 = vmatpush1.bf16.msra.mxu0 0
        %2064 = vmatprep.subr.bf16.mxu0 0
        %2065 = vmatpush1.bf16.msra.mxu0 0
        %2066 = vmatprep.subr.bf16.mxu0 0
        %2067 = vmatpush1.bf16.msra.mxu0 0
        %2068 = vmatprep.subr.bf16.mxu0 0
        %2069 = vmatpush1.bf16.msra.mxu0 0
        %2070 = vmatprep.subr.bf16.mxu0 0
        %2071 = vmatpush1.bf16.msra.mxu0 0
        %2072 = vmatprep.subr.bf16.mxu0 0
        %2073 = vmatpush1.bf16.msra.mxu0 0
        %2074 = vmatprep.subr.bf16.mxu0 0
        %2075 = vmatpush1.bf16.msra.mxu0 0
        %2076 = vmatprep.mubr.bf16.mxu0 0
        %2077 = vmatmul.mubr.bf16.gmra.mrb[0].mxu0 %v2042
        %v2078 = vpop.f32.mrb[0].mxu0
        %v2079 = vadd.f32 %v2027, %v2078
        %v2080 = vpop.f32.mrb[0].mxu0
        %v2081 = vpop.f32.mrb[0].mxu0
        %v2082 = vpop.f32.mrb[0].mxu0
        %2083 = vdwg.mxu0
        %v2085 = vlaneseq
        %v2086 = vshrl.u32 %v2085, 7
        %v2087 = vsub.s32 0, %v2086
        %v2088 = vrot.slane %v1959, %v2087
        %v2094 = vunpack.c.l.b16 %v1949
        %v2095 = vunpack.c.l.b16 %v1950
        %v2096 = vunpack.c.l.b16 %v1951
        %v2097 = vunpack.c.l.b16 %v1952
        %v2098 = vpack.c.b16 %v2095, %v2094
        %v2099 = vpack.c.b16 %v2097, %v2096
        %2102 = vmatprep.subr.bf16.mxu0 0
        %2103 = vmatpush1.bf16.msra.mxu0 %v2098
        %2104 = vmatprep.subr.bf16.mxu0 0
        %2105 = vmatpush1.bf16.msra.mxu0 %v2099
        %2106 = vmatprep.subr.bf16.mxu0 0
        %2107 = vmatpush1.bf16.msra.mxu0 0
        %2108 = vmatprep.subr.bf16.mxu0 0
        %2109 = vmatpush1.bf16.msra.mxu0 0
        %2110 = vmatprep.subr.bf16.mxu0 0
        %2111 = vmatpush1.bf16.msra.mxu0 0
        %2112 = vmatprep.subr.bf16.mxu0 0
        %2113 = vmatpush1.bf16.msra.mxu0 0
        %2114 = vmatprep.subr.bf16.mxu0 0
        %2115 = vmatpush1.bf16.msra.mxu0 0
        %2116 = vmatprep.subr.bf16.mxu0 0
        %2117 = vmatpush1.bf16.msra.mxu0 0
        %2118 = vmatprep.subr.bf16.mxu0 0
        %2119 = vmatpush1.bf16.msra.mxu0 0
        %2120 = vmatprep.subr.bf16.mxu0 0
        %2121 = vmatpush1.bf16.msra.mxu0 0
        %2122 = vmatprep.subr.bf16.mxu0 0
        %2123 = vmatpush1.bf16.msra.mxu0 0
        %2124 = vmatprep.subr.bf16.mxu0 0
        %2125 = vmatpush1.bf16.msra.mxu0 0
        %2126 = vmatprep.subr.bf16.mxu0 0
        %2127 = vmatpush1.bf16.msra.mxu0 0
        %2128 = vmatprep.subr.bf16.mxu0 0
        %2129 = vmatpush1.bf16.msra.mxu0 0
        %2130 = vmatprep.subr.bf16.mxu0 0
        %2131 = vmatpush1.bf16.msra.mxu0 0
        %2132 = vmatprep.subr.bf16.mxu0 0
        %2133 = vmatpush1.bf16.msra.mxu0 0
        %2134 = vmatprep.mubr.bf16.mxu0 0
        %2135 = vmatmul.mubr.bf16.gmra.mrb[0].mxu0 %v2042
        %v2136 = vpop.f32.mrb[0].mxu0
        %v2137 = vadd.f32 %v2088, %v2136
        %v2138 = vpop.f32.mrb[0].mxu0
        %v2139 = vpop.f32.mrb[0].mxu0
        %v2140 = vpop.f32.mrb[0].mxu0
        %2141 = vdwg.mxu0
        %v2142 = vpack.c.bf16 %v2022, %v2022
        %v2143 = vpack.c.bf16 %v2079, %v2079
        %v2144 = vpack.c.bf16 %v2137, %v2137
        %v2146 = vsel %vm1385, %v2142, 0
        %v2149 = vsel %vm1385, %v2143, 0
        %2151 = vmatprep.subr.bf16.mxu0 0
        %2152 = vmatpush1.bf16.xpose.msra.mxu0 %v2149
        %2153 = vmatprep.subr.bf16.mxu0 0
        %2154 = vmatpush1.bf16.xpose.msra.mxu0 0
        %2155 = vmatprep.subr.bf16.mxu0 0
        %2156 = vmatpush1.bf16.xpose.msra.mxu0 0
        %2157 = vmatprep.subr.bf16.mxu0 0
        %2158 = vmatpush1.bf16.xpose.msra.mxu0 0
        %2159 = vmatprep.subr.bf16.mxu0 0
        %2160 = vmatpush1.bf16.xpose.msra.mxu0 0
        %2161 = vmatprep.subr.bf16.mxu0 0
        %2162 = vmatpush1.bf16.xpose.msra.mxu0 0
        %2163 = vmatprep.subr.bf16.mxu0 0
        %2164 = vmatpush1.bf16.xpose.msra.mxu0 0
        %2165 = vmatprep.subr.bf16.mxu0 0
        %2166 = vmatpush1.bf16.xpose.msra.mxu0 0
        %2167 = vmatprep.subr.bf16.mxu0 0
        %2168 = vmatpush1.bf16.xpose.msra.mxu0 0
        %2169 = vmatprep.subr.bf16.mxu0 0
        %2170 = vmatpush1.bf16.xpose.msra.mxu0 0
        %2171 = vmatprep.subr.bf16.mxu0 0
        %2172 = vmatpush1.bf16.xpose.msra.mxu0 0
        %2173 = vmatprep.subr.bf16.mxu0 0
        %2174 = vmatpush1.bf16.xpose.msra.mxu0 0
        %2175 = vmatprep.subr.bf16.mxu0 0
        %2176 = vmatpush1.bf16.xpose.msra.mxu0 0
        %2177 = vmatprep.subr.bf16.mxu0 0
        %2178 = vmatpush1.bf16.xpose.msra.mxu0 0
        %2179 = vmatprep.subr.bf16.mxu0 0
        %2180 = vmatpush1.bf16.xpose.msra.mxu0 0
        %2181 = vmatprep.subr.bf16.mxu0 0
        %2182 = vmatpush1.bf16.xpose.msra.mxu0 0
        %2183 = vmatprep.mubr.bf16.mxu0 0
        %2184 = vmatmul.mubr.bf16.gmra.mrb[0].mxu0 %v2146
        %v2185 = vpop.f32.mrb[0].mxu0
        %v2186 = vadd.f32 %v1940, %v2185
        %v2187 = vpop.f32.mrb[0].mxu0
        %v2188 = vpop.f32.mrb[0].mxu0
        %v2189 = vpop.f32.mrb[0].mxu0
        %2190 = vdwg.mxu0
        %v2191 = vsel %vm1385, %v2186, -inf
        %2192 = vmax.xlane.f32.xlu0 %v2191
        %v2193 = vpop.xlane.xlu0 %2192
        %v2194 = vsub.f32 %v2186, %v2193
        %v2195 = vmul.f32 %v2194, 1.442695
        %v2196 = vpow.pop %v2195
        %v2197 = vsel %vm1385, %v2196, 0.0
        %2198 = vadd.xlane.f32.xlu0 %v2197
        %v2199 = vpop.xlane.xlu0 %2198
        %v2200 = vrcp.pop %v2199
        %v2201 = vmul.f32 %v2196, %v2200
        %2202 = vst.msk [vmem:[%s1158] sm:$0xff] %vm1385, %v2201
        %v2203 = vpack.c.bf16 %v2201, %v2201
        %v2205 = vsel %vm1385, %v2203, 0
        %v2208 = vsel %vm1447, %v2144, 0
        %2210 = vmatprep.subr.bf16.mxu0 0
        %2211 = vmatpush1.bf16.msra.mxu0 %v2208
        %2212 = vmatprep.subr.bf16.mxu0 0
        %2213 = vmatpush1.bf16.msra.mxu0 0
        %2214 = vmatprep.subr.bf16.mxu0 0
        %2215 = vmatpush1.bf16.msra.mxu0 0
        %2216 = vmatprep.subr.bf16.mxu0 0
        %2217 = vmatpush1.bf16.msra.mxu0 0
        %2218 = vmatprep.subr.bf16.mxu0 0
        %2219 = vmatpush1.bf16.msra.mxu0 0
        %2220 = vmatprep.subr.bf16.mxu0 0
        %2221 = vmatpush1.bf16.msra.mxu0 0
        %2222 = vmatprep.subr.bf16.mxu0 0
        %2223 = vmatpush1.bf16.msra.mxu0 0
        %2224 = vmatprep.subr.bf16.mxu0 0
        %2225 = vmatpush1.bf16.msra.mxu0 0
        %2226 = vmatprep.subr.bf16.mxu0 0
        %2227 = vmatpush1.bf16.msra.mxu0 0
        %2228 = vmatprep.subr.bf16.mxu0 0
        %2229 = vmatpush1.bf16.msra.mxu0 0
        %2230 = vmatprep.subr.bf16.mxu0 0
        %2231 = vmatpush1.bf16.msra.mxu0 0
        %2232 = vmatprep.subr.bf16.mxu0 0
        %2233 = vmatpush1.bf16.msra.mxu0 0
        %2234 = vmatprep.subr.bf16.mxu0 0
        %2235 = vmatpush1.bf16.msra.mxu0 0
        %2236 = vmatprep.subr.bf16.mxu0 0
        %2237 = vmatpush1.bf16.msra.mxu0 0
        %2238 = vmatprep.subr.bf16.mxu0 0
        %2239 = vmatpush1.bf16.msra.mxu0 0
        %2240 = vmatprep.subr.bf16.mxu0 0
        %2241 = vmatpush1.bf16.msra.mxu0 0
        %2242 = vmatprep.mubr.bf16.mxu0 0
        %2243 = vmatmul.mubr.bf16.gmra.mrb[0].mxu0 %v2205
        %v2244 = vpop.f32.mrb[0].mxu0
        %v2245 = vadd.f32 0.0, %v2244
        %v2246 = vpop.f32.mrb[0].mxu0
        %v2247 = vpop.f32.mrb[0].mxu0
        %v2248 = vpop.f32.mrb[0].mxu0
        %2249 = vdwg.mxu0
        %2251 = vrot.lane.b32.xlu0 %v2142, 120
        %v2252 = vpop.permute.xlu0 %2251
        %2254 = vrot.lane.b32.xlu0 %v2143, 120
        %v2255 = vpop.permute.xlu0 %2254
        %v2257 = vsel %vm1385, %v2252, 0
        %v2260 = vsel %vm1385, %v2255, 0
        %2262 = vmatprep.subr.bf16.mxu0 0
        %2263 = vmatpush1.bf16.xpose.msra.mxu0 %v2260
        %2264 = vmatprep.subr.bf16.mxu0 0
        %2265 = vmatpush1.bf16.xpose.msra.mxu0 0
        %2266 = vmatprep.subr.bf16.mxu0 0
        %2267 = vmatpush1.bf16.xpose.msra.mxu0 0
        %2268 = vmatprep.subr.bf16.mxu0 0
        %2269 = vmatpush1.bf16.xpose.msra.mxu0 0
        %2270 = vmatprep.subr.bf16.mxu0 0
        %2271 = vmatpush1.bf16.xpose.msra.mxu0 0
        %2272 = vmatprep.subr.bf16.mxu0 0
        %2273 = vmatpush1.bf16.xpose.msra.mxu0 0
        %2274 = vmatprep.subr.bf16.mxu0 0
        %2275 = vmatpush1.bf16.xpose.msra.mxu0 0
        %2276 = vmatprep.subr.bf16.mxu0 0
        %2277 = vmatpush1.bf16.xpose.msra.mxu0 0
        %2278 = vmatprep.subr.bf16.mxu0 0
        %2279 = vmatpush1.bf16.xpose.msra.mxu0 0
        %2280 = vmatprep.subr.bf16.mxu0 0
        %2281 = vmatpush1.bf16.xpose.msra.mxu0 0
        %2282 = vmatprep.subr.bf16.mxu0 0
        %2283 = vmatpush1.bf16.xpose.msra.mxu0 0
        %2284 = vmatprep.subr.bf16.mxu0 0
        %2285 = vmatpush1.bf16.xpose.msra.mxu0 0
        %2286 = vmatprep.subr.bf16.mxu0 0
        %2287 = vmatpush1.bf16.xpose.msra.mxu0 0
        %2288 = vmatprep.subr.bf16.mxu0 0
        %2289 = vmatpush1.bf16.xpose.msra.mxu0 0
        %2290 = vmatprep.subr.bf16.mxu0 0
        %2291 = vmatpush1.bf16.xpose.msra.mxu0 0
        %2292 = vmatprep.subr.bf16.mxu0 0
        %2293 = vmatpush1.bf16.xpose.msra.mxu0 0
        %2294 = vmatprep.mubr.bf16.mxu0 0
        %2295 = vmatmul.mubr.bf16.gmra.mrb[0].mxu0 %v2257
        %v2296 = vpop.f32.mrb[0].mxu0
        %v2297 = vadd.f32 %v1940, %v2296
        %v2298 = vpop.f32.mrb[0].mxu0
        %v2299 = vpop.f32.mrb[0].mxu0
        %v2300 = vpop.f32.mrb[0].mxu0
        %2301 = vdwg.mxu0
        %v2302 = vsel %vm1385, %v2297, -inf
        %2303 = vmax.xlane.f32.xlu0 %v2302
        %v2304 = vpop.xlane.xlu0 %2303
        %v2305 = vsub.f32 %v2297, %v2304
        %v2306 = vmul.f32 %v2305, 1.442695
        %v2307 = vpow.pop %v2306
        %v2308 = vsel %vm1385, %v2307, 0.0
        %2309 = vadd.xlane.f32.xlu0 %v2308
        %v2310 = vpop.xlane.xlu0 %2309
        %v2311 = vrcp.pop %v2310
        %v2312 = vmul.f32 %v2307, %v2311
        %s2313 = scalar_lea.vmem %s1158, 8 [#allocation23]
        %2314 = vst.msk [vmem:[%s2313] sm:$0xff] %vm1385, %v2312
        %v2315 = vpack.c.bf16 %v2312, %v2312
        %2317 = vrot.lane.b32.xlu0 %v2144, 120
        %v2318 = vpop.permute.xlu0 %2317
        %v2320 = vsel %vm1385, %v2315, 0
        %v2323 = vsel %vm1447, %v2318, 0
        %2325 = vmatprep.subr.bf16.mxu0 0
        %2326 = vmatpush1.bf16.msra.mxu0 %v2323
        %2327 = vmatprep.subr.bf16.mxu0 0
        %2328 = vmatpush1.bf16.msra.mxu0 0
        %2329 = vmatprep.subr.bf16.mxu0 0
        %2330 = vmatpush1.bf16.msra.mxu0 0
        %2331 = vmatprep.subr.bf16.mxu0 0
        %2332 = vmatpush1.bf16.msra.mxu0 0
        %2333 = vmatprep.subr.bf16.mxu0 0
        %2334 = vmatpush1.bf16.msra.mxu0 0
        %2335 = vmatprep.subr.bf16.mxu0 0
        %2336 = vmatpush1.bf16.msra.mxu0 0
        %2337 = vmatprep.subr.bf16.mxu0 0
        %2338 = vmatpush1.bf16.msra.mxu0 0
        %2339 = vmatprep.subr.bf16.mxu0 0
        %2340 = vmatpush1.bf16.msra.mxu0 0
        %2341 = vmatprep.subr.bf16.mxu0 0
        %2342 = vmatpush1.bf16.msra.mxu0 0
        %2343 = vmatprep.subr.bf16.mxu0 0
        %2344 = vmatpush1.bf16.msra.mxu0 0
        %2345 = vmatprep.subr.bf16.mxu0 0
        %2346 = vmatpush1.bf16.msra.mxu0 0
        %2347 = vmatprep.subr.bf16.mxu0 0
        %2348 = vmatpush1.bf16.msra.mxu0 0
        %2349 = vmatprep.subr.bf16.mxu0 0
        %2350 = vmatpush1.bf16.msra.mxu0 0
        %2351 = vmatprep.subr.bf16.mxu0 0
        %2352 = vmatpush1.bf16.msra.mxu0 0
        %2353 = vmatprep.subr.bf16.mxu0 0
        %2354 = vmatpush1.bf16.msra.mxu0 0
        %2355 = vmatprep.subr.bf16.mxu0 0
        %2356 = vmatpush1.bf16.msra.mxu0 0
        %2357 = vmatprep.mubr.bf16.mxu0 0
        %2358 = vmatmul.mubr.bf16.gmra.mrb[0].mxu0 %v2320
        %v2359 = vpop.f32.mrb[0].mxu0
        %v2360 = vadd.f32 0.0, %v2359
        %v2361 = vpop.f32.mrb[0].mxu0
        %v2362 = vpop.f32.mrb[0].mxu0
        %v2363 = vpop.f32.mrb[0].mxu0
        %2364 = vdwg.mxu0
        %2365 = vrot.lane.b32.xlu0 %v2142, 112
        %v2366 = vpop.permute.xlu0 %2365
        %2367 = vrot.lane.b32.xlu0 %v2143, 112
        %v2368 = vpop.permute.xlu0 %2367
        %v2370 = vsel %vm1385, %v2366, 0
        %v2373 = vsel %vm1385, %v2368, 0
        %2375 = vmatprep.subr.bf16.mxu0 0
        %2376 = vmatpush1.bf16.xpose.msra.mxu0 %v2373
        %2377 = vmatprep.subr.bf16.mxu0 0
        %2378 = vmatpush1.bf16.xpose.msra.mxu0 0
        %2379 = vmatprep.subr.bf16.mxu0 0
        %2380 = vmatpush1.bf16.xpose.msra.mxu0 0
        %2381 = vmatprep.subr.bf16.mxu0 0
        %2382 = vmatpush1.bf16.xpose.msra.mxu0 0
        %2383 = vmatprep.subr.bf16.mxu0 0
        %2384 = vmatpush1.bf16.xpose.msra.mxu0 0
        %2385 = vmatprep.subr.bf16.mxu0 0
        %2386 = vmatpush1.bf16.xpose.msra.mxu0 0
        %2387 = vmatprep.subr.bf16.mxu0 0
        %2388 = vmatpush1.bf16.xpose.msra.mxu0 0
        %2389 = vmatprep.subr.bf16.mxu0 0
        %2390 = vmatpush1.bf16.xpose.msra.mxu0 0
        %2391 = vmatprep.subr.bf16.mxu0 0
        %2392 = vmatpush1.bf16.xpose.msra.mxu0 0
        %2393 = vmatprep.subr.bf16.mxu0 0
        %2394 = vmatpush1.bf16.xpose.msra.mxu0 0
        %2395 = vmatprep.subr.bf16.mxu0 0
        %2396 = vmatpush1.bf16.xpose.msra.mxu0 0
        %2397 = vmatprep.subr.bf16.mxu0 0
        %2398 = vmatpush1.bf16.xpose.msra.mxu0 0
        %2399 = vmatprep.subr.bf16.mxu0 0
        %2400 = vmatpush1.bf16.xpose.msra.mxu0 0
        %2401 = vmatprep.subr.bf16.mxu0 0
        %2402 = vmatpush1.bf16.xpose.msra.mxu0 0
        %2403 = vmatprep.subr.bf16.mxu0 0
        %2404 = vmatpush1.bf16.xpose.msra.mxu0 0
        %2405 = vmatprep.subr.bf16.mxu0 0
        %2406 = vmatpush1.bf16.xpose.msra.mxu0 0
        %2407 = vmatprep.mubr.bf16.mxu0 0
        %2408 = vmatmul.mubr.bf16.gmra.mrb[0].mxu0 %v2370
        %v2409 = vpop.f32.mrb[0].mxu0
        %v2410 = vadd.f32 %v1940, %v2409
        %v2411 = vpop.f32.mrb[0].mxu0
        %v2412 = vpop.f32.mrb[0].mxu0
        %v2413 = vpop.f32.mrb[0].mxu0
        %2414 = vdwg.mxu0
        %v2415 = vsel %vm1385, %v2410, -inf
        %2416 = vmax.xlane.f32.xlu0 %v2415
        %v2417 = vpop.xlane.xlu0 %2416
        %v2418 = vsub.f32 %v2410, %v2417
        %v2419 = vmul.f32 %v2418, 1.442695
        %v2420 = vpow.pop %v2419
        %v2421 = vsel %vm1385, %v2420, 0.0
        %2422 = vadd.xlane.f32.xlu0 %v2421
        %v2423 = vpop.xlane.xlu0 %2422
        %v2424 = vrcp.pop %v2423
        %v2425 = vmul.f32 %v2420, %v2424
        %s2426 = scalar_lea.vmem %s1158, 16 [#allocation23]
        %2427 = vst.msk [vmem:[%s2426] sm:$0xff] %vm1385, %v2425
        %v2428 = vpack.c.bf16 %v2425, %v2425
        %2429 = vrot.lane.b32.xlu0 %v2144, 112
        %v2430 = vpop.permute.xlu0 %2429
        %v2432 = vsel %vm1385, %v2428, 0
        %v2435 = vsel %vm1447, %v2430, 0
        %2437 = vmatprep.subr.bf16.mxu0 0
        %2438 = vmatpush1.bf16.msra.mxu0 %v2435
        %2439 = vmatprep.subr.bf16.mxu0 0
        %2440 = vmatpush1.bf16.msra.mxu0 0
        %2441 = vmatprep.subr.bf16.mxu0 0
        %2442 = vmatpush1.bf16.msra.mxu0 0
        %2443 = vmatprep.subr.bf16.mxu0 0
        %2444 = vmatpush1.bf16.msra.mxu0 0
        %2445 = vmatprep.subr.bf16.mxu0 0
        %2446 = vmatpush1.bf16.msra.mxu0 0
        %2447 = vmatprep.subr.bf16.mxu0 0
        %2448 = vmatpush1.bf16.msra.mxu0 0
        %2449 = vmatprep.subr.bf16.mxu0 0
        %2450 = vmatpush1.bf16.msra.mxu0 0
        %2451 = vmatprep.subr.bf16.mxu0 0
        %2452 = vmatpush1.bf16.msra.mxu0 0
        %2453 = vmatprep.subr.bf16.mxu0 0
        %2454 = vmatpush1.bf16.msra.mxu0 0
        %2455 = vmatprep.subr.bf16.mxu0 0
        %2456 = vmatpush1.bf16.msra.mxu0 0
        %2457 = vmatprep.subr.bf16.mxu0 0
        %2458 = vmatpush1.bf16.msra.mxu0 0
        %2459 = vmatprep.subr.bf16.mxu0 0
        %2460 = vmatpush1.bf16.msra.mxu0 0
        %2461 = vmatprep.subr.bf16.mxu0 0
        %2462 = vmatpush1.bf16.msra.mxu0 0
        %2463 = vmatprep.subr.bf16.mxu0 0
        %2464 = vmatpush1.bf16.msra.mxu0 0
        %2465 = vmatprep.subr.bf16.mxu0 0
        %2466 = vmatpush1.bf16.msra.mxu0 0
        %2467 = vmatprep.subr.bf16.mxu0 0
        %2468 = vmatpush1.bf16.msra.mxu0 0
        %2469 = vmatprep.mubr.bf16.mxu0 0
        %2470 = vmatmul.mubr.bf16.gmra.mrb[0].mxu0 %v2432
        %v2471 = vpop.f32.mrb[0].mxu0
        %v2472 = vadd.f32 0.0, %v2471
        %v2473 = vpop.f32.mrb[0].mxu0
        %v2474 = vpop.f32.mrb[0].mxu0
        %v2475 = vpop.f32.mrb[0].mxu0
        %2476 = vdwg.mxu0
        %2477 = vrot.lane.b32.xlu0 %v2142, 104
        %v2478 = vpop.permute.xlu0 %2477
        %2479 = vrot.lane.b32.xlu0 %v2143, 104
        %v2480 = vpop.permute.xlu0 %2479
        %v2482 = vsel %vm1385, %v2478, 0
        %v2485 = vsel %vm1385, %v2480, 0
        %2487 = vmatprep.subr.bf16.mxu0 0
        %2488 = vmatpush1.bf16.xpose.msra.mxu0 %v2485
        %2489 = vmatprep.subr.bf16.mxu0 0
        %2490 = vmatpush1.bf16.xpose.msra.mxu0 0
        %2491 = vmatprep.subr.bf16.mxu0 0
        %2492 = vmatpush1.bf16.xpose.msra.mxu0 0
        %2493 = vmatprep.subr.bf16.mxu0 0
        %2494 = vmatpush1.bf16.xpose.msra.mxu0 0
        %2495 = vmatprep.subr.bf16.mxu0 0
        %2496 = vmatpush1.bf16.xpose.msra.mxu0 0
        %2497 = vmatprep.subr.bf16.mxu0 0
        %2498 = vmatpush1.bf16.xpose.msra.mxu0 0
        %2499 = vmatprep.subr.bf16.mxu0 0
        %2500 = vmatpush1.bf16.xpose.msra.mxu0 0
        %2501 = vmatprep.subr.bf16.mxu0 0
        %2502 = vmatpush1.bf16.xpose.msra.mxu0 0
        %2503 = vmatprep.subr.bf16.mxu0 0
        %2504 = vmatpush1.bf16.xpose.msra.mxu0 0
        %2505 = vmatprep.subr.bf16.mxu0 0
        %2506 = vmatpush1.bf16.xpose.msra.mxu0 0
        %2507 = vmatprep.subr.bf16.mxu0 0
        %2508 = vmatpush1.bf16.xpose.msra.mxu0 0
        %2509 = vmatprep.subr.bf16.mxu0 0
        %2510 = vmatpush1.bf16.xpose.msra.mxu0 0
        %2511 = vmatprep.subr.bf16.mxu0 0
        %2512 = vmatpush1.bf16.xpose.msra.mxu0 0
        %2513 = vmatprep.subr.bf16.mxu0 0
        %2514 = vmatpush1.bf16.xpose.msra.mxu0 0
        %2515 = vmatprep.subr.bf16.mxu0 0
        %2516 = vmatpush1.bf16.xpose.msra.mxu0 0
        %2517 = vmatprep.subr.bf16.mxu0 0
        %2518 = vmatpush1.bf16.xpose.msra.mxu0 0
        %2519 = vmatprep.mubr.bf16.mxu0 0
        %2520 = vmatmul.mubr.bf16.gmra.mrb[0].mxu0 %v2482
        %v2521 = vpop.f32.mrb[0].mxu0
        %v2522 = vadd.f32 %v1940, %v2521
        %v2523 = vpop.f32.mrb[0].mxu0
        %v2524 = vpop.f32.mrb[0].mxu0
        %v2525 = vpop.f32.mrb[0].mxu0
        %2526 = vdwg.mxu0
        %v2527 = vsel %vm1385, %v2522, -inf
        %2528 = vmax.xlane.f32.xlu0 %v2527
        %v2529 = vpop.xlane.xlu0 %2528
        %v2530 = vsub.f32 %v2522, %v2529
        %v2531 = vmul.f32 %v2530, 1.442695
        %v2532 = vpow.pop %v2531
        %v2533 = vsel %vm1385, %v2532, 0.0
        %2534 = vadd.xlane.f32.xlu0 %v2533
        %v2535 = vpop.xlane.xlu0 %2534
        %v2536 = vrcp.pop %v2535
        %v2537 = vmul.f32 %v2532, %v2536
        %s2538 = scalar_lea.vmem %s1158, 24 [#allocation23]
        %2539 = vst.msk [vmem:[%s2538] sm:$0xff] %vm1385, %v2537
        %v2540 = vpack.c.bf16 %v2537, %v2537
        %2541 = vrot.lane.b32.xlu0 %v2144, 104
        %v2542 = vpop.permute.xlu0 %2541
        %v2544 = vsel %vm1385, %v2540, 0
        %v2547 = vsel %vm1447, %v2542, 0
        %2549 = vmatprep.subr.bf16.mxu0 0
        %2550 = vmatpush1.bf16.msra.mxu0 %v2547
        %2551 = vmatprep.subr.bf16.mxu0 0
        %2552 = vmatpush1.bf16.msra.mxu0 0
        %2553 = vmatprep.subr.bf16.mxu0 0
        %2554 = vmatpush1.bf16.msra.mxu0 0
        %2555 = vmatprep.subr.bf16.mxu0 0
        %2556 = vmatpush1.bf16.msra.mxu0 0
        %2557 = vmatprep.subr.bf16.mxu0 0
        %2558 = vmatpush1.bf16.msra.mxu0 0
        %2559 = vmatprep.subr.bf16.mxu0 0
        %2560 = vmatpush1.bf16.msra.mxu0 0
        %2561 = vmatprep.subr.bf16.mxu0 0
        %2562 = vmatpush1.bf16.msra.mxu0 0
        %2563 = vmatprep.subr.bf16.mxu0 0
        %2564 = vmatpush1.bf16.msra.mxu0 0
        %2565 = vmatprep.subr.bf16.mxu0 0
        %2566 = vmatpush1.bf16.msra.mxu0 0
        %2567 = vmatprep.subr.bf16.mxu0 0
        %2568 = vmatpush1.bf16.msra.mxu0 0
        %2569 = vmatprep.subr.bf16.mxu0 0
        %2570 = vmatpush1.bf16.msra.mxu0 0
        %2571 = vmatprep.subr.bf16.mxu0 0
        %2572 = vmatpush1.bf16.msra.mxu0 0
        %2573 = vmatprep.subr.bf16.mxu0 0
        %2574 = vmatpush1.bf16.msra.mxu0 0
        %2575 = vmatprep.subr.bf16.mxu0 0
        %2576 = vmatpush1.bf16.msra.mxu0 0
        %2577 = vmatprep.subr.bf16.mxu0 0
        %2578 = vmatpush1.bf16.msra.mxu0 0
        %2579 = vmatprep.subr.bf16.mxu0 0
        %2580 = vmatpush1.bf16.msra.mxu0 0
        %2581 = vmatprep.mubr.bf16.mxu0 0
        %2582 = vmatmul.mubr.bf16.gmra.mrb[0].mxu0 %v2544
        %v2583 = vpop.f32.mrb[0].mxu0
        %v2584 = vadd.f32 0.0, %v2583
        %v2585 = vpop.f32.mrb[0].mxu0
        %v2586 = vpop.f32.mrb[0].mxu0
        %v2587 = vpop.f32.mrb[0].mxu0
        %2588 = vdwg.mxu0
        %2590 = vrot.lane.b32.xlu0 %v2360, 8
        %v2591 = vpop.permute.xlu0 %2590
        %2594 = vrot.lane.b32.xlu0 %v2472, 16
        %v2595 = vpop.permute.xlu0 %2594
        %2598 = vrot.lane.b32.xlu0 %v2584, 24
        %v2599 = vpop.permute.xlu0 %2598
        %v2601 = vsel %vm1385, %v2245, %v2591
        %v2602 = vsel %vm1837, %v2601, %v2595
        %v2603 = vsel %vm1839, %v2602, %v2599
        %v2604 = vpack.c.bf16 %v2603, %v2603
        %v2606 = vlaneseq
        %v2607 = vshrl.u32 %v2606, 7
        %v2608 = vsub.s32 0, %v2607
        %v2609 = vrot.slane %v1960, %v2608
        %v2615 = vunpack.c.l.b16 %v1953
        %v2616 = vunpack.c.l.b16 %v1954
        %v2617 = vunpack.c.l.b16 %v1955
        %v2618 = vunpack.c.l.b16 %v1956
        %v2619 = vpack.c.b16 %v2616, %v2615
        %v2620 = vpack.c.b16 %v2618, %v2617
        %v2624 = vsel %vm1221, %v2604, 0
        %2626 = vmatprep.subr.bf16.mxu0 0
        %2627 = vmatpush1.bf16.msra.mxu0 %v2619
        %2628 = vmatprep.subr.bf16.mxu0 0
        %2629 = vmatpush1.bf16.msra.mxu0 %v2620
        %2630 = vmatprep.subr.bf16.mxu0 0
        %2631 = vmatpush1.bf16.msra.mxu0 0
        %2632 = vmatprep.subr.bf16.mxu0 0
        %2633 = vmatpush1.bf16.msra.mxu0 0
        %2634 = vmatprep.subr.bf16.mxu0 0
        %2635 = vmatpush1.bf16.msra.mxu0 0
        %2636 = vmatprep.subr.bf16.mxu0 0
        %2637 = vmatpush1.bf16.msra.mxu0 0
        %2638 = vmatprep.subr.bf16.mxu0 0
        %2639 = vmatpush1.bf16.msra.mxu0 0
        %2640 = vmatprep.subr.bf16.mxu0 0
        %2641 = vmatpush1.bf16.msra.mxu0 0
        %2642 = vmatprep.subr.bf16.mxu0 0
        %2643 = vmatpush1.bf16.msra.mxu0 0
        %2644 = vmatprep.subr.bf16.mxu0 0
        %2645 = vmatpush1.bf16.msra.mxu0 0
        %2646 = vmatprep.subr.bf16.mxu0 0
        %2647 = vmatpush1.bf16.msra.mxu0 0
        %2648 = vmatprep.subr.bf16.mxu0 0
        %2649 = vmatpush1.bf16.msra.mxu0 0
        %2650 = vmatprep.subr.bf16.mxu0 0
        %2651 = vmatpush1.bf16.msra.mxu0 0
        %2652 = vmatprep.subr.bf16.mxu0 0
        %2653 = vmatpush1.bf16.msra.mxu0 0
        %2654 = vmatprep.subr.bf16.mxu0 0
        %2655 = vmatpush1.bf16.msra.mxu0 0
        %2656 = vmatprep.subr.bf16.mxu0 0
        %2657 = vmatpush1.bf16.msra.mxu0 0
        %2658 = vmatprep.mubr.bf16.mxu0 0
        %2659 = vmatmul.mubr.bf16.gmra.mrb[0].mxu0 %v2624
        %v2660 = vpop.f32.mrb[0].mxu0
        %v2661 = vadd.f32 %v2609, %v2660
        %v2662 = vpop.f32.mrb[0].mxu0
        %v2663 = vpop.f32.mrb[0].mxu0
        %v2664 = vpop.f32.mrb[0].mxu0
        %2665 = vdwg.mxu0
        %v2666 = vadd.f32 %v1936, %v2661
        %v2667 = vld [vmem:[#allocation14] sm:$0x1]
        %v2668 = vld [vmem:[#allocation16] sm:$0x1]
        %v2669 = vsel %vm1221, %v2666, 0.0
        %2670 = vadd.xlane.f32.xlu0 %v2669
        %v2671 = vpop.xlane.xlu0 %2670
        %v2672 = vmul.f32 %v2671, %v1909
        %v2673 = vmul.f32 %v2666, %v2666
        %v2674 = vsel %vm1221, %v2673, 0.0
        %2675 = vadd.xlane.f32.xlu0 %v2674
        %v2676 = vpop.xlane.xlu0 %2675
        %v2677 = vmul.f32 %v2676, %v1909
        %v2678 = vmul.f32 %v2672, %v2672
        %v2679 = vsub.f32 %v2677, %v2678
        %v2680 = vmax.f32 %v2679, 0.0
        %v2681 = vsub.f32 %v2666, %v2672
        %v2682 = vadd.f32 %v2680, 1e-05
        %v2683 = vrsqrt.pop %v2682
        %v2684 = vmul.f32 %v2681, %v2683
        %v2686 = vlaneseq
        %v2687 = vshrl.u32 %v2686, 7
        %v2688 = vsub.s32 0, %v2687
        %v2689 = vrot.slane %v2667, %v2688
        %v2691 = vmul.f32 %v2684, %v2689
        %v2693 = vlaneseq
        %v2694 = vshrl.u32 %v2693, 7
        %v2695 = vsub.s32 0, %v2694
        %v2696 = vrot.slane %v2668, %v2695
        %v2698 = vadd.f32 %v2691, %v2696
        %v2699 = vld [vmem:[%s49] sm:$0xf]
        %v2700 = vld [vmem:[%s49 + $0x4] sm:$0xf]
        %v2701 = vld [vmem:[%s49 + $0x8] sm:$0xf]
        %v2702 = vld [vmem:[%s49 + $0xc] sm:$0xf]
        %v2703 = vld [vmem:[#allocation17] sm:$0x1]
        %v2704 = vld [vmem:[%s53] sm:$0xf]
        %v2705 = vld [vmem:[%s53 + $0x4] sm:$0xf]
        %v2706 = vld [vmem:[%s53 + $0x8] sm:$0xf]
        %v2707 = vld [vmem:[%s53 + $0xc] sm:$0xf]
        %v2708 = vld [vmem:[%s53 + $0x10] sm:$0xf]
        %v2709 = vld [vmem:[%s53 + $0x14] sm:$0xf]
        %v2710 = vld [vmem:[%s53 + $0x18] sm:$0xf]
        %v2711 = vld [vmem:[%s53 + $0x1c] sm:$0xf]
        %v2712 = vld [vmem:[#allocation19] sm:$0x1]
        %v2713 = vpack.c.bf16 %v2698, %v2698
        %v2715 = vlaneseq
        %v2716 = vshrl.u32 %v2715, 7
        %v2717 = vsub.s32 0, %v2716
        %v2718 = vrot.slane %v2703, %v2717
        %v2724 = vunpack.c.l.b16 %v2699
        %v2725 = vunpack.c.l.b16 %v2700
        %v2726 = vunpack.c.l.b16 %v2701
        %v2727 = vunpack.c.l.b16 %v2702
        %v2728 = vpack.c.b16 %v2725, %v2724
        %v2729 = vpack.c.b16 %v2727, %v2726
        %v2733 = vsel %vm1221, %v2713, 0
        %2735 = vmatprep.subr.bf16.mxu0 0
        %2736 = vmatpush1.bf16.msra.mxu0 %v2728
        %2737 = vmatprep.subr.bf16.mxu0 0
        %2738 = vmatpush1.bf16.msra.mxu0 %v2729
        %2739 = vmatprep.subr.bf16.mxu0 0
        %2740 = vmatpush1.bf16.msra.mxu0 0
        %2741 = vmatprep.subr.bf16.mxu0 0
        %2742 = vmatpush1.bf16.msra.mxu0 0
        %2743 = vmatprep.subr.bf16.mxu0 0
        %2744 = vmatpush1.bf16.msra.mxu0 0
        %2745 = vmatprep.subr.bf16.mxu0 0
        %2746 = vmatpush1.bf16.msra.mxu0 0
        %2747 = vmatprep.subr.bf16.mxu0 0
        %2748 = vmatpush1.bf16.msra.mxu0 0
        %2749 = vmatprep.subr.bf16.mxu0 0
        %2750 = vmatpush1.bf16.msra.mxu0 0
        %2751 = vmatprep.subr.bf16.mxu0 0
        %2752 = vmatpush1.bf16.msra.mxu0 0
        %2753 = vmatprep.subr.bf16.mxu0 0
        %2754 = vmatpush1.bf16.msra.mxu0 0
        %2755 = vmatprep.subr.bf16.mxu0 0
        %2756 = vmatpush1.bf16.msra.mxu0 0
        %2757 = vmatprep.subr.bf16.mxu0 0
        %2758 = vmatpush1.bf16.msra.mxu0 0
        %2759 = vmatprep.subr.bf16.mxu0 0
        %2760 = vmatpush1.bf16.msra.mxu0 0
        %2761 = vmatprep.subr.bf16.mxu0 0
        %2762 = vmatpush1.bf16.msra.mxu0 0
        %2763 = vmatprep.subr.bf16.mxu0 0
        %2764 = vmatpush1.bf16.msra.mxu0 0
        %2765 = vmatprep.subr.bf16.mxu0 0
        %2766 = vmatpush1.bf16.msra.mxu0 0
        %2767 = vmatprep.mubr.bf16.mxu0 0
        %2768 = vmatmul.mubr.bf16.gmra.mrb[0].mxu0 %v2733
        %v2769 = vpop.f32.mrb[0].mxu0
        %v2770 = vadd.f32 %v2718, %v2769
        %v2771 = vpop.f32.mrb[0].mxu0
        %v2772 = vpop.f32.mrb[0].mxu0
        %v2773 = vpop.f32.mrb[0].mxu0
        %2774 = vdwg.mxu0
        %v2775 = vmax.f32 %v2770, 0.0
        %v2776 = vpack.c.bf16 %v2775, %v2775
        %v2778 = vlaneseq
        %v2779 = vshrl.u32 %v2778, 7
        %v2780 = vsub.s32 0, %v2779
        %v2781 = vrot.slane %v2712, %v2780
        %v2791 = vunpack.c.l.b16 %v2704
        %v2792 = vunpack.c.l.b16 %v2705
        %v2793 = vunpack.c.l.b16 %v2706
        %v2794 = vunpack.c.l.b16 %v2707
        %v2795 = vunpack.c.l.b16 %v2708
        %v2796 = vunpack.c.l.b16 %v2709
        %v2797 = vunpack.c.l.b16 %v2710
        %v2798 = vunpack.c.l.b16 %v2711
        %v2799 = vpack.c.b16 %v2792, %v2791
        %v2800 = vpack.c.b16 %v2794, %v2793
        %v2801 = vpack.c.b16 %v2796, %v2795
        %v2802 = vpack.c.b16 %v2798, %v2797
        %vm2807 = vcmask 523264
        %v2809 = vsel %vm2807, %v2776, 0
        %2811 = vmatprep.subr.bf16.mxu0 0
        %2812 = vmatpush1.bf16.msra.mxu0 %v2799
        %2813 = vmatprep.subr.bf16.mxu0 0
        %2814 = vmatpush1.bf16.msra.mxu0 %v2800
        %2815 = vmatprep.subr.bf16.mxu0 0
        %2816 = vmatpush1.bf16.msra.mxu0 %v2801
        %2817 = vmatprep.subr.bf16.mxu0 0
        %2818 = vmatpush1.bf16.msra.mxu0 %v2802
        %2819 = vmatprep.subr.bf16.mxu0 0
        %2820 = vmatpush1.bf16.msra.mxu0 0
        %2821 = vmatprep.subr.bf16.mxu0 0
        %2822 = vmatpush1.bf16.msra.mxu0 0
        %2823 = vmatprep.subr.bf16.mxu0 0
        %2824 = vmatpush1.bf16.msra.mxu0 0
        %2825 = vmatprep.subr.bf16.mxu0 0
        %2826 = vmatpush1.bf16.msra.mxu0 0
        %2827 = vmatprep.subr.bf16.mxu0 0
        %2828 = vmatpush1.bf16.msra.mxu0 0
        %2829 = vmatprep.subr.bf16.mxu0 0
        %2830 = vmatpush1.bf16.msra.mxu0 0
        %2831 = vmatprep.subr.bf16.mxu0 0
        %2832 = vmatpush1.bf16.msra.mxu0 0
        %2833 = vmatprep.subr.bf16.mxu0 0
        %2834 = vmatpush1.bf16.msra.mxu0 0
        %2835 = vmatprep.subr.bf16.mxu0 0
        %2836 = vmatpush1.bf16.msra.mxu0 0
        %2837 = vmatprep.subr.bf16.mxu0 0
        %2838 = vmatpush1.bf16.msra.mxu0 0
        %2839 = vmatprep.subr.bf16.mxu0 0
        %2840 = vmatpush1.bf16.msra.mxu0 0
        %2841 = vmatprep.subr.bf16.mxu0 0
        %2842 = vmatpush1.bf16.msra.mxu0 0
        %2843 = vmatprep.mubr.bf16.mxu0 0
        %2844 = vmatmul.mubr.bf16.gmra.mrb[0].mxu0 %v2809
        %v2845 = vpop.f32.mrb[0].mxu0
        %v2846 = vadd.f32 %v2781, %v2845
        %v2847 = vpop.f32.mrb[0].mxu0
        %v2848 = vpop.f32.mrb[0].mxu0
        %v2849 = vpop.f32.mrb[0].mxu0
        %2850 = vdwg.mxu0
        %v2851 = vadd.f32 %v2698, %v2846
        %v2852 = vld [vmem:[#allocation20] sm:$0x1]
        %v2853 = vld [vmem:[#allocation22] sm:$0x1]
        %v2854 = vsel %vm1221, %v2851, 0.0
        %2855 = vadd.xlane.f32.xlu0 %v2854
        %v2856 = vpop.xlane.xlu0 %2855
        %v2857 = vmul.f32 %v2856, %v1909
        %v2858 = vmul.f32 %v2851, %v2851
        %v2859 = vsel %vm1221, %v2858, 0.0
        %2860 = vadd.xlane.f32.xlu0 %v2859
        %v2861 = vpop.xlane.xlu0 %2860
        %v2862 = vmul.f32 %v2861, %v1909
        %v2863 = vmul.f32 %v2857, %v2857
        %v2864 = vsub.f32 %v2862, %v2863
        %v2865 = vmax.f32 %v2864, 0.0
        %v2866 = vsub.f32 %v2851, %v2857
        %v2867 = vadd.f32 %v2865, 1e-05
        %v2868 = vrsqrt.pop %v2867
        %v2869 = vmul.f32 %v2866, %v2868
        %v2871 = vlaneseq
        %v2872 = vshrl.u32 %v2871, 7
        %v2873 = vsub.s32 0, %v2872
        %v2874 = vrot.slane %v2852, %v2873
        %v2876 = vmul.f32 %v2869, %v2874
        %v2878 = vlaneseq
        %v2879 = vshrl.u32 %v2878, 7
        %v2880 = vsub.s32 0, %v2879
        %v2881 = vrot.slane %v2853, %v2880
        %v2883 = vadd.f32 %v2876, %v2881
        %2884 = vst.msk [vmem:[%s1178] sm:$0xff] %vm1221, %v2883
        %p2885 = scmp.lt.s32.totalorder %s85, 1
        %s2886 = scalar_select %p2885, %s85, 1
        %s2887 = smul.addr %s2886, 8
        %s2888 = scalar_lea.vmem %s61, %s2887
        %s2889 = sand.u32 %s769, 1
        %s2890 = scalar_lea.sflag [#allocation4], %s2889
        %s2891 = sand.u32 %s769, 1
        %s2892 = smul.addr %s2891, 32
        %s2893 = scalar_lea.vmem [#allocation23], %s2892
        // Predicated region
        $region193: #{seq2seq_forward.8} parent=139 // pred_check
          %p2894 = pneg %p753
        $region194: #{seq2seq_forward.8} parent=139 // pred_check_branch
          %2896 = sbr.rel (%p2894) target = $region196
        $region195: #{seq2seq_forward.8} parent=139 // pred_region
          _
        $region196: #{seq2seq_forward.8} parent=139 // pred_fallthru
          _
        // Predicated region
        $region197: #{seq2seq_forward.8} parent=139 // pred_check
          %p2897 = pneg %p779
        $region198: #{seq2seq_forward.8} parent=139 // pred_check_branch
          %2899 = sbr.rel (%p2897) target = $region200
        $region199: #{seq2seq_forward.8} parent=139 // pred_region
          %s2901 = ssub.s32 512, 512
          %2902 = vsyncadd %s2890, %s2901
          %s2903 = smul.addr %s85, 4
          %s2904 = smul.addr %s2903, 128
          %s2905 = scalar_lea.hbm %s63, %s2904
          %s2906 = sshll.u32 %s2893, 4
          %s2907 = int_to_ptr.vmem [resolvable:$true] %s2906
          %2912 = dma.vmem_to_hbm [thread:$0]  %s2907, 512, %s2905, %s2890, 128, 128, 8
        $region200: #{seq2seq_forward.8} parent=139 // pred_fallthru
          _
      $region140: #{seq2seq_forward.8} parent=5 // pred_fallthru
        _
      %p2913 = scmp.le.s32.totalorder 2, %s80
      // Predicated region
      $region201: #{seq2seq_forward.8} parent=5 // pred_check
        %p2914 = pneg %p2913
      $region202: #{seq2seq_forward.8} parent=5 // pred_check_branch
        %2916 = sbr.rel (%p2914) target = $region204
      $region203: #{seq2seq_forward.8} parent=5 // pred_region
        %s2917 = ssub.s32 %s80, 2
        // Predicated region
        $region205: #{seq2seq_forward.8} parent=203 // pred_check
          %p2918 = pneg %p759
        $region206: #{seq2seq_forward.8} parent=203 // pred_check_branch
          %2920 = sbr.rel (%p2918) target = $region208
        $region207: #{seq2seq_forward.8} parent=203 // pred_region
          %p2921 = scmp.lt.s32.totalorder %s86, 1
          %s2922 = scalar_select %p2921, %s86, 1
          %s2923 = smul.addr %s2922, 8
          %s2924 = scalar_lea.vmem %s61, %s2923
        $region208: #{seq2seq_forward.8} parent=203 // pred_fallthru
          _
        // Predicated region
        $region209: #{seq2seq_forward.8} parent=203 // pred_check
          %p2925 = pneg %p785
        $region210: #{seq2seq_forward.8} parent=203 // pred_check_branch
          %2927 = sbr.rel (%p2925) target = $region212
        $region211: #{seq2seq_forward.8} parent=203 // pred_region
          %s2928 = sand.u32 %s770, 1
          %s2929 = scalar_lea.sflag [#allocation4], %s2928
          %s2930 = sand.u32 %s770, 1
          %s2931 = smul.addr %s2930, 32
          %s2932 = scalar_lea.vmem [#allocation23], %s2931
          %2933 = dma.done %s2929, 512
        $region212: #{seq2seq_forward.8} parent=203 // pred_fallthru
          _
      $region204: #{seq2seq_forward.8} parent=5 // pred_fallthru
        _
    $region6: #{seq2seq_forward.8} parent=1 // loop_footer
      %s84 = sadd.s32 1, %s80
    $region7: #{seq2seq_forward.8} parent=1 // loop_footer_branch
      %79 = sbr.rel target = $region3
    $region8: #{seq2seq_forward.8} parent=1 // loop_exit
      _
    %2934 = vsyncpa [#allocation3], 1
    %s2935 = scalar_lea.sflag [#allocation3], 1
    %2936 = vsyncpa %s2935, 1
    %2937 = vsyncpa [#allocation6], 1
    %2938 = vsyncpa [#allocation9], 1
    %2939 = vsyncpa [#allocation12], 1
    %2940 = vsyncpa [#allocation15], 1
    %2941 = vsyncpa [#allocation18], 1
    %2942 = vsyncpa [#allocation21], 1
    %2943 = vsyncpa [#allocation4], 1
    %s2944 = scalar_lea.sflag [#allocation4], 1
    %2945 = vsyncpa %s2944, 1

// kernel: seq2seq_forward.7
$region0: #{seq2seq_forward.7}
  #allocation0 [shape = 'u32[]', space=smem, size = 0x4, offset = 0x4, fixed_abs, tag = 'smem constant byte address 0x4 - core index']
  #allocation1 [shape = 'u32[144,128]{1,0:T(1,128)}', space=vmem, size = 0x12000, scoped, tag = 'internal scratch']
  %s0 = inlined_call_operand.smem [shape: u32[31], index: -1, kind: input, shape index: {}]
  %s1 = sld [smem:[%s0]]
  %s2 = scalar_lea.smem %s0, 1
  %s3 = sld [smem:[%s2]]
  %s4 = scalar_lea.smem %s0, 2
  %s5 = sld [smem:[%s4]]
  %s6 = scalar_lea.smem %s0, 3
  %s7 = sld [smem:[%s6]]
  %s8 = scalar_lea.smem %s0, 4
  %s9 = sld [smem:[%s8]]
  %s10 = scalar_lea.smem %s0, 5
  %s11 = sld [smem:[%s10]]
  %s12 = scalar_lea.smem %s0, 6
  %s13 = sld [smem:[%s12]]
  %s14 = scalar_lea.smem %s0, 7
  %s15 = sld [smem:[%s14]]
  %s16 = scalar_lea.smem %s0, 8
  %s17 = sld [smem:[%s16]]
  %s18 = scalar_lea.smem %s0, 9
  %s19 = sld [smem:[%s18]]
  %s20 = scalar_lea.smem %s0, 10
  %s21 = sld [smem:[%s20]]
  %s22 = scalar_lea.smem %s0, 11
  %s23 = sld [smem:[%s22]]
  %s24 = scalar_lea.smem %s0, 12
  %s25 = sld [smem:[%s24]]
  %s26 = scalar_lea.smem %s0, 13
  %s27 = sld [smem:[%s26]]
  %s28 = scalar_lea.smem %s0, 14
  %s29 = sld [smem:[%s28]]
  %s30 = scalar_lea.smem %s0, 15
  %s31 = sld [smem:[%s30]]
  %s32 = scalar_lea.smem %s0, 16
  %s33 = sld [smem:[%s32]]
  %s34 = scalar_lea.smem %s0, 17
  %s35 = sld [smem:[%s34]]
  %s36 = scalar_lea.smem %s0, 18
  %s37 = sld [smem:[%s36]]
  %s38 = scalar_lea.smem %s0, 19
  %s39 = sld [smem:[%s38]]
  %s40 = scalar_lea.smem %s0, 20
  %s41 = sld [smem:[%s40]]
  %s42 = scalar_lea.smem %s0, 21
  %s43 = sld [smem:[%s42]]
  %s44 = scalar_lea.smem %s0, 22
  %s45 = sld [smem:[%s44]]
  %s46 = scalar_lea.smem %s0, 23
  %s47 = sld [smem:[%s46]]
  %s48 = scalar_lea.smem %s0, 24
  %s49 = sld [smem:[%s48]]
  %s50 = scalar_lea.smem %s0, 25
  %s51 = sld [smem:[%s50]]
  %s52 = scalar_lea.smem %s0, 26
  %s53 = sld [smem:[%s52]]
  %s54 = scalar_lea.smem %s0, 27
  %s55 = sld [smem:[%s54]]
  %s56 = scalar_lea.smem %s0, 28
  %s57 = sld [smem:[%s56]]
  %s58 = scalar_lea.smem %s0, 29
  %s59 = sld [smem:[%s58]]
  %s60 = scalar_lea.smem %s0, 30
  %s61 = sld [smem:[%s60]]
  %s62 = sld [smem:[#allocation0]]
  $region153: #{seq2seq_forward.7} parent=0
    _
  %s64 = ssub.s32 1, %s62
  %s65 = scalar_select 0, %s64, %s62
  loop: start=0, step=1, limit=4
  $region2: #{seq2seq_forward.7} parent=0 // loop_pre_header
    _
  $region3: #{seq2seq_forward.7} parent=0 // loop_header
    %s67 = sphi 0, %s71
    %p68 = scmp.ge.s32.totalorder %s67, 4
    %s77 = sphi 0, %s79
    %s80 = sphi 0, %s77
    %s81 = sphi 0, %s80
    %s97 = sphi 0, %s81
    %s103 = sphi 0, %s105
    %s106 = sphi 0, %s103
    %s107 = sphi 0, %s106
    %s123 = sphi 0, %s107
    %s129 = sphi 0, %s131
    %s132 = sphi 0, %s129
    %s133 = sphi 0, %s132
    %s149 = sphi 0, %s133
    %s155 = sphi 0, %s157
    %s158 = sphi 0, %s155
    %s159 = sphi 0, %s158
    %s175 = sphi 0, %s159
    %s179 = sphi 0, %s179
    %s181 = sphi 0, %s179
    %s182 = sphi 0, %s181
    %s196 = sphi 0, %s182
    %s200 = sphi 0, %s200
    %s202 = sphi 0, %s200
    %s203 = sphi 0, %s202
    %s217 = sphi 0, %s203
    %s221 = sphi 0, %s221
    %s223 = sphi 0, %s221
    %s224 = sphi 0, %s223
    %s238 = sphi 0, %s224
    %s242 = sphi 0, %s242
    %s244 = sphi 0, %s242
    %s245 = sphi 0, %s244
    %s259 = sphi 0, %s245
    %s263 = sphi 0, %s263
    %s265 = sphi 0, %s263
    %s266 = sphi 0, %s265
    %s280 = sphi 0, %s266
    %s284 = sphi 0, %s284
    %s286 = sphi 0, %s284
    %s287 = sphi 0, %s286
    %s301 = sphi 0, %s287
    %s305 = sphi 0, %s305
    %s307 = sphi 0, %s305
    %s308 = sphi 0, %s307
    %s322 = sphi 0, %s308
    %s326 = sphi 0, %s326
    %s328 = sphi 0, %s326
    %s329 = sphi 0, %s328
    %s343 = sphi 0, %s329
    %s347 = sphi 0, %s347
    %s349 = sphi 0, %s347
    %s350 = sphi 0, %s349
    %s364 = sphi 0, %s350
    %s368 = sphi 0, %s368
    %s370 = sphi 0, %s368
    %s371 = sphi 0, %s370
    %s385 = sphi 0, %s371
    %s389 = sphi 0, %s389
    %s391 = sphi 0, %s389
    %s392 = sphi 0, %s391
    %s406 = sphi 0, %s392
    %s410 = sphi 0, %s410
    %s412 = sphi 0, %s410
    %s413 = sphi 0, %s412
    %s427 = sphi 0, %s413
    %s431 = sphi 0, %s431
    %s433 = sphi 0, %s431
    %s434 = sphi 0, %s433
    %s448 = sphi 0, %s434
    %s452 = sphi 0, %s452
    %s454 = sphi 0, %s452
    %s455 = sphi 0, %s454
    %s469 = sphi 0, %s455
    %s473 = sphi 0, %s473
    %s475 = sphi 0, %s473
    %s476 = sphi 0, %s475
    %s490 = sphi 0, %s476
    %s494 = sphi 0, %s494
    %s496 = sphi 0, %s494
    %s497 = sphi 0, %s496
    %s511 = sphi 0, %s497
    %s515 = sphi 0, %s515
    %s517 = sphi 0, %s515
    %s518 = sphi 0, %s517
    %s532 = sphi 0, %s518
    %s536 = sphi 0, %s536
    %s538 = sphi 0, %s536
    %s539 = sphi 0, %s538
    %s553 = sphi 0, %s539
    %s557 = sphi 0, %s557
    %s559 = sphi 0, %s557
    %s560 = sphi 0, %s559
    %s574 = sphi 0, %s560
    %s578 = sphi 0, %s578
    %s580 = sphi 0, %s578
    %s581 = sphi 0, %s580
    %s595 = sphi 0, %s581
    %s599 = sphi 0, %s599
    %s601 = sphi 0, %s599
    %s602 = sphi 0, %s601
    %s616 = sphi 0, %s602
    %s620 = sphi 0, %s620
    %s622 = sphi 0, %s620
    %s623 = sphi 0, %s622
    %s637 = sphi 0, %s623
    %s641 = sphi 0, %s641
    %s643 = sphi 0, %s641
    %s644 = sphi 0, %s643
    %s658 = sphi 0, %s644
    %s662 = sphi 0, %s662
    %s664 = sphi 0, %s662
    %s665 = sphi 0, %s664
    %s679 = sphi 0, %s665
    %s683 = sphi 0, %s683
    %s685 = sphi 0, %s683
    %s686 = sphi 0, %s685
    %s700 = sphi 0, %s686
    %s704 = sphi 0, %s704
    %s706 = sphi 0, %s704
    %s707 = sphi 0, %s706
    %s721 = sphi 0, %s707
    %s727 = sphi 0, %s729
    %s730 = sphi 0, %s727
    %s731 = sphi 0, %s730
    %s747 = sphi 0, %s731
  $region4: #{seq2seq_forward.7} parent=0 // loop_header_branch
    %70 = sbr.rel (%p68) target = $region8
  $region5: #{seq2seq_forward.7} parent=0 // loop_body
    %s72 = ssub.s32 %s67, 1
    %s73 = ssub.s32 %s67, 2
    %s74 = sadd.s32 %s67, 1
    %s75 = ssub.s32 %s67, %s74
    %p76 = scmp.eq.s32.totalorder %s75, 0
    %s78 = sadd.s32 %s77, 1
    %s79 = scalar_select %p76, %s77, %s78
    %p82 = pneg %p76
    %p83 = scmp.eq.s32.totalorder %s67, 1
    %p84 = por %p82, %p83
    %p85 = scmp.ne.s32.totalorder %s77, %s80
    %p86 = scmp.eq.s32.totalorder %s67, 0
    %p87 = por %p85, %p86
    %p88 = scmp.ne.s32.totalorder %s77, %s80
    %p89 = scmp.eq.s32.totalorder %s72, 1
    %p90 = por %p88, %p89
    %p91 = scmp.ne.s32.totalorder %s80, %s81
    %p92 = scmp.eq.s32.totalorder %s72, 0
    %p93 = por %p91, %p92
    %p94 = scmp.ne.s32.totalorder %s80, %s81
    %p95 = scmp.eq.s32.totalorder %s73, 1
    %p96 = por %p94, %p95
    %p98 = scmp.ne.s32.totalorder %s81, %s97
    %p99 = scmp.eq.s32.totalorder %s73, 0
    %p100 = por %p98, %p99
    %s101 = ssub.s32 %s67, %s74
    %p102 = scmp.eq.s32.totalorder %s101, 0
    %s104 = sadd.s32 %s103, 1
    %s105 = scalar_select %p102, %s103, %s104
    %p108 = pneg %p102
    %p109 = scmp.eq.s32.totalorder %s67, 1
    %p110 = por %p108, %p109
    %p111 = scmp.ne.s32.totalorder %s103, %s106
    %p112 = scmp.eq.s32.totalorder %s67, 0
    %p113 = por %p111, %p112
    %p114 = scmp.ne.s32.totalorder %s103, %s106
    %p115 = scmp.eq.s32.totalorder %s72, 1
    %p116 = por %p114, %p115
    %p117 = scmp.ne.s32.totalorder %s106, %s107
    %p118 = scmp.eq.s32.totalorder %s72, 0
    %p119 = por %p117, %p118
    %p120 = scmp.ne.s32.totalorder %s106, %s107
    %p121 = scmp.eq.s32.totalorder %s73, 1
    %p122 = por %p120, %p121
    %p124 = scmp.ne.s32.totalorder %s107, %s123
    %p125 = scmp.eq.s32.totalorder %s73, 0
    %p126 = por %p124, %p125
    %s127 = ssub.s32 %s67, %s74
    %p128 = scmp.eq.s32.totalorder %s127, 0
    %s130 = sadd.s32 %s129, 1
    %s131 = scalar_select %p128, %s129, %s130
    %p134 = pneg %p128
    %p135 = scmp.eq.s32.totalorder %s67, 1
    %p136 = por %p134, %p135
    %p137 = scmp.ne.s32.totalorder %s129, %s132
    %p138 = scmp.eq.s32.totalorder %s67, 0
    %p139 = por %p137, %p138
    %p140 = scmp.ne.s32.totalorder %s129, %s132
    %p141 = scmp.eq.s32.totalorder %s72, 1
    %p142 = por %p140, %p141
    %p143 = scmp.ne.s32.totalorder %s132, %s133
    %p144 = scmp.eq.s32.totalorder %s72, 0
    %p145 = por %p143, %p144
    %p146 = scmp.ne.s32.totalorder %s132, %s133
    %p147 = scmp.eq.s32.totalorder %s73, 1
    %p148 = por %p146, %p147
    %p150 = scmp.ne.s32.totalorder %s133, %s149
    %p151 = scmp.eq.s32.totalorder %s73, 0
    %p152 = por %p150, %p151
    %s153 = ssub.s32 %s67, %s74
    %p154 = scmp.eq.s32.totalorder %s153, 0
    %s156 = sadd.s32 %s155, 1
    %s157 = scalar_select %p154, %s155, %s156
    %p160 = pneg %p154
    %p161 = scmp.eq.s32.totalorder %s67, 1
    %p162 = por %p160, %p161
    %p163 = scmp.ne.s32.totalorder %s155, %s158
    %p164 = scmp.eq.s32.totalorder %s67, 0
    %p165 = por %p163, %p164
    %p166 = scmp.ne.s32.totalorder %s155, %s158
    %p167 = scmp.eq.s32.totalorder %s72, 1
    %p168 = por %p166, %p167
    %p169 = scmp.ne.s32.totalorder %s158, %s159
    %p170 = scmp.eq.s32.totalorder %s72, 0
    %p171 = por %p169, %p170
    %p172 = scmp.ne.s32.totalorder %s158, %s159
    %p173 = scmp.eq.s32.totalorder %s73, 1
    %p174 = por %p172, %p173
    %p176 = scmp.ne.s32.totalorder %s159, %s175
    %p177 = scmp.eq.s32.totalorder %s73, 0
    %p178 = por %p176, %p177
    %s180 = sadd.s32 %s179, 1
    %p183 = scmp.eq.s32.totalorder %s67, 1
    %p184 = scmp.ne.s32.totalorder %s179, %s181
    %p185 = scmp.eq.s32.totalorder %s67, 0
    %p186 = por %p184, %p185
    %p187 = scmp.ne.s32.totalorder %s179, %s181
    %p188 = scmp.eq.s32.totalorder %s72, 1
    %p189 = por %p187, %p188
    %p190 = scmp.ne.s32.totalorder %s181, %s182
    %p191 = scmp.eq.s32.totalorder %s72, 0
    %p192 = por %p190, %p191
    %p193 = scmp.ne.s32.totalorder %s181, %s182
    %p194 = scmp.eq.s32.totalorder %s73, 1
    %p195 = por %p193, %p194
    %p197 = scmp.ne.s32.totalorder %s182, %s196
    %p198 = scmp.eq.s32.totalorder %s73, 0
    %p199 = por %p197, %p198
    %s201 = sadd.s32 %s200, 1
    %p204 = scmp.eq.s32.totalorder %s67, 1
    %p205 = scmp.ne.s32.totalorder %s200, %s202
    %p206 = scmp.eq.s32.totalorder %s67, 0
    %p207 = por %p205, %p206
    %p208 = scmp.ne.s32.totalorder %s200, %s202
    %p209 = scmp.eq.s32.totalorder %s72, 1
    %p210 = por %p208, %p209
    %p211 = scmp.ne.s32.totalorder %s202, %s203
    %p212 = scmp.eq.s32.totalorder %s72, 0
    %p213 = por %p211, %p212
    %p214 = scmp.ne.s32.totalorder %s202, %s203
    %p215 = scmp.eq.s32.totalorder %s73, 1
    %p216 = por %p214, %p215
    %p218 = scmp.ne.s32.totalorder %s203, %s217
    %p219 = scmp.eq.s32.totalorder %s73, 0
    %p220 = por %p218, %p219
    %s222 = sadd.s32 %s221, 1
    %p225 = scmp.eq.s32.totalorder %s67, 1
    %p226 = scmp.ne.s32.totalorder %s221, %s223
    %p227 = scmp.eq.s32.totalorder %s67, 0
    %p228 = por %p226, %p227
    %p229 = scmp.ne.s32.totalorder %s221, %s223
    %p230 = scmp.eq.s32.totalorder %s72, 1
    %p231 = por %p229, %p230
    %p232 = scmp.ne.s32.totalorder %s223, %s224
    %p233 = scmp.eq.s32.totalorder %s72, 0
    %p234 = por %p232, %p233
    %p235 = scmp.ne.s32.totalorder %s223, %s224
    %p236 = scmp.eq.s32.totalorder %s73, 1
    %p237 = por %p235, %p236
    %p239 = scmp.ne.s32.totalorder %s224, %s238
    %p240 = scmp.eq.s32.totalorder %s73, 0
    %p241 = por %p239, %p240
    %s243 = sadd.s32 %s242, 1
    %p246 = scmp.eq.s32.totalorder %s67, 1
    %p247 = scmp.ne.s32.totalorder %s242, %s244
    %p248 = scmp.eq.s32.totalorder %s67, 0
    %p249 = por %p247, %p248
    %p250 = scmp.ne.s32.totalorder %s242, %s244
    %p251 = scmp.eq.s32.totalorder %s72, 1
    %p252 = por %p250, %p251
    %p253 = scmp.ne.s32.totalorder %s244, %s245
    %p254 = scmp.eq.s32.totalorder %s72, 0
    %p255 = por %p253, %p254
    %p256 = scmp.ne.s32.totalorder %s244, %s245
    %p257 = scmp.eq.s32.totalorder %s73, 1
    %p258 = por %p256, %p257
    %p260 = scmp.ne.s32.totalorder %s245, %s259
    %p261 = scmp.eq.s32.totalorder %s73, 0
    %p262 = por %p260, %p261
    %s264 = sadd.s32 %s263, 1
    %p267 = scmp.eq.s32.totalorder %s67, 1
    %p268 = scmp.ne.s32.totalorder %s263, %s265
    %p269 = scmp.eq.s32.totalorder %s67, 0
    %p270 = por %p268, %p269
    %p271 = scmp.ne.s32.totalorder %s263, %s265
    %p272 = scmp.eq.s32.totalorder %s72, 1
    %p273 = por %p271, %p272
    %p274 = scmp.ne.s32.totalorder %s265, %s266
    %p275 = scmp.eq.s32.totalorder %s72, 0
    %p276 = por %p274, %p275
    %p277 = scmp.ne.s32.totalorder %s265, %s266
    %p278 = scmp.eq.s32.totalorder %s73, 1
    %p279 = por %p277, %p278
    %p281 = scmp.ne.s32.totalorder %s266, %s280
    %p282 = scmp.eq.s32.totalorder %s73, 0
    %p283 = por %p281, %p282
    %s285 = sadd.s32 %s284, 1
    %p288 = scmp.eq.s32.totalorder %s67, 1
    %p289 = scmp.ne.s32.totalorder %s284, %s286
    %p290 = scmp.eq.s32.totalorder %s67, 0
    %p291 = por %p289, %p290
    %p292 = scmp.ne.s32.totalorder %s284, %s286
    %p293 = scmp.eq.s32.totalorder %s72, 1
    %p294 = por %p292, %p293
    %p295 = scmp.ne.s32.totalorder %s286, %s287
    %p296 = scmp.eq.s32.totalorder %s72, 0
    %p297 = por %p295, %p296
    %p298 = scmp.ne.s32.totalorder %s286, %s287
    %p299 = scmp.eq.s32.totalorder %s73, 1
    %p300 = por %p298, %p299
    %p302 = scmp.ne.s32.totalorder %s287, %s301
    %p303 = scmp.eq.s32.totalorder %s73, 0
    %p304 = por %p302, %p303
    %s306 = sadd.s32 %s305, 1
    %p309 = scmp.eq.s32.totalorder %s67, 1
    %p310 = scmp.ne.s32.totalorder %s305, %s307
    %p311 = scmp.eq.s32.totalorder %s67, 0
    %p312 = por %p310, %p311
    %p313 = scmp.ne.s32.totalorder %s305, %s307
    %p314 = scmp.eq.s32.totalorder %s72, 1
    %p315 = por %p313, %p314
    %p316 = scmp.ne.s32.totalorder %s307, %s308
    %p317 = scmp.eq.s32.totalorder %s72, 0
    %p318 = por %p316, %p317
    %p319 = scmp.ne.s32.totalorder %s307, %s308
    %p320 = scmp.eq.s32.totalorder %s73, 1
    %p321 = por %p319, %p320
    %p323 = scmp.ne.s32.totalorder %s308, %s322
    %p324 = scmp.eq.s32.totalorder %s73, 0
    %p325 = por %p323, %p324
    %s327 = sadd.s32 %s326, 1
    %p330 = scmp.eq.s32.totalorder %s67, 1
    %p331 = scmp.ne.s32.totalorder %s326, %s328
    %p332 = scmp.eq.s32.totalorder %s67, 0
    %p333 = por %p331, %p332
    %p334 = scmp.ne.s32.totalorder %s326, %s328
    %p335 = scmp.eq.s32.totalorder %s72, 1
    %p336 = por %p334, %p335
    %p337 = scmp.ne.s32.totalorder %s328, %s329
    %p338 = scmp.eq.s32.totalorder %s72, 0
    %p339 = por %p337, %p338
    %p340 = scmp.ne.s32.totalorder %s328, %s329
    %p341 = scmp.eq.s32.totalorder %s73, 1
    %p342 = por %p340, %p341
    %p344 = scmp.ne.s32.totalorder %s329, %s343
    %p345 = scmp.eq.s32.totalorder %s73, 0
    %p346 = por %p344, %p345
    %s348 = sadd.s32 %s347, 1
    %p351 = scmp.eq.s32.totalorder %s67, 1
    %p352 = scmp.ne.s32.totalorder %s347, %s349
    %p353 = scmp.eq.s32.totalorder %s67, 0
    %p354 = por %p352, %p353
    %p355 = scmp.ne.s32.totalorder %s347, %s349
    %p356 = scmp.eq.s32.totalorder %s72, 1
    %p357 = por %p355, %p356
    %p358 = scmp.ne.s32.totalorder %s349, %s350
    %p359 = scmp.eq.s32.totalorder %s72, 0
    %p360 = por %p358, %p359
    %p361 = scmp.ne.s32.totalorder %s349, %s350
    %p362 = scmp.eq.s32.totalorder %s73, 1
    %p363 = por %p361, %p362
    %p365 = scmp.ne.s32.totalorder %s350, %s364
    %p366 = scmp.eq.s32.totalorder %s73, 0
    %p367 = por %p365, %p366
    %s369 = sadd.s32 %s368, 1
    %p372 = scmp.eq.s32.totalorder %s67, 1
    %p373 = scmp.ne.s32.totalorder %s368, %s370
    %p374 = scmp.eq.s32.totalorder %s67, 0
    %p375 = por %p373, %p374
    %p376 = scmp.ne.s32.totalorder %s368, %s370
    %p377 = scmp.eq.s32.totalorder %s72, 1
    %p378 = por %p376, %p377
    %p379 = scmp.ne.s32.totalorder %s370, %s371
    %p380 = scmp.eq.s32.totalorder %s72, 0
    %p381 = por %p379, %p380
    %p382 = scmp.ne.s32.totalorder %s370, %s371
    %p383 = scmp.eq.s32.totalorder %s73, 1
    %p384 = por %p382, %p383
    %p386 = scmp.ne.s32.totalorder %s371, %s385
    %p387 = scmp.eq.s32.totalorder %s73, 0
    %p388 = por %p386, %p387
    %s390 = sadd.s32 %s389, 1
    %p393 = scmp.eq.s32.totalorder %s67, 1
    %p394 = scmp.ne.s32.totalorder %s389, %s391
    %p395 = scmp.eq.s32.totalorder %s67, 0
    %p396 = por %p394, %p395
    %p397 = scmp.ne.s32.totalorder %s389, %s391
    %p398 = scmp.eq.s32.totalorder %s72, 1
    %p399 = por %p397, %p398
    %p400 = scmp.ne.s32.totalorder %s391, %s392
    %p401 = scmp.eq.s32.totalorder %s72, 0
    %p402 = por %p400, %p401
    %p403 = scmp.ne.s32.totalorder %s391, %s392
    %p404 = scmp.eq.s32.totalorder %s73, 1
    %p405 = por %p403, %p404
    %p407 = scmp.ne.s32.totalorder %s392, %s406
    %p408 = scmp.eq.s32.totalorder %s73, 0
    %p409 = por %p407, %p408
    %s411 = sadd.s32 %s410, 1
    %p414 = scmp.eq.s32.totalorder %s67, 1
    %p415 = scmp.ne.s32.totalorder %s410, %s412
    %p416 = scmp.eq.s32.totalorder %s67, 0
    %p417 = por %p415, %p416
    %p418 = scmp.ne.s32.totalorder %s410, %s412
    %p419 = scmp.eq.s32.totalorder %s72, 1
    %p420 = por %p418, %p419
    %p421 = scmp.ne.s32.totalorder %s412, %s413
    %p422 = scmp.eq.s32.totalorder %s72, 0
    %p423 = por %p421, %p422
    %p424 = scmp.ne.s32.totalorder %s412, %s413
    %p425 = scmp.eq.s32.totalorder %s73, 1
    %p426 = por %p424, %p425
    %p428 = scmp.ne.s32.totalorder %s413, %s427
    %p429 = scmp.eq.s32.totalorder %s73, 0
    %p430 = por %p428, %p429
    %s432 = sadd.s32 %s431, 1
    %p435 = scmp.eq.s32.totalorder %s67, 1
    %p436 = scmp.ne.s32.totalorder %s431, %s433
    %p437 = scmp.eq.s32.totalorder %s67, 0
    %p438 = por %p436, %p437
    %p439 = scmp.ne.s32.totalorder %s431, %s433
    %p440 = scmp.eq.s32.totalorder %s72, 1
    %p441 = por %p439, %p440
    %p442 = scmp.ne.s32.totalorder %s433, %s434
    %p443 = scmp.eq.s32.totalorder %s72, 0
    %p444 = por %p442, %p443
    %p445 = scmp.ne.s32.totalorder %s433, %s434
    %p446 = scmp.eq.s32.totalorder %s73, 1
    %p447 = por %p445, %p446
    %p449 = scmp.ne.s32.totalorder %s434, %s448
    %p450 = scmp.eq.s32.totalorder %s73, 0
    %p451 = por %p449, %p450
    %s453 = sadd.s32 %s452, 1
    %p456 = scmp.eq.s32.totalorder %s67, 1
    %p457 = scmp.ne.s32.totalorder %s452, %s454
    %p458 = scmp.eq.s32.totalorder %s67, 0
    %p459 = por %p457, %p458
    %p460 = scmp.ne.s32.totalorder %s452, %s454
    %p461 = scmp.eq.s32.totalorder %s72, 1
    %p462 = por %p460, %p461
    %p463 = scmp.ne.s32.totalorder %s454, %s455
    %p464 = scmp.eq.s32.totalorder %s72, 0
    %p465 = por %p463, %p464
    %p466 = scmp.ne.s32.totalorder %s454, %s455
    %p467 = scmp.eq.s32.totalorder %s73, 1
    %p468 = por %p466, %p467
    %p470 = scmp.ne.s32.totalorder %s455, %s469
    %p471 = scmp.eq.s32.totalorder %s73, 0
    %p472 = por %p470, %p471
    %s474 = sadd.s32 %s473, 1
    %p477 = scmp.eq.s32.totalorder %s67, 1
    %p478 = scmp.ne.s32.totalorder %s473, %s475
    %p479 = scmp.eq.s32.totalorder %s67, 0
    %p480 = por %p478, %p479
    %p481 = scmp.ne.s32.totalorder %s473, %s475
    %p482 = scmp.eq.s32.totalorder %s72, 1
    %p483 = por %p481, %p482
    %p484 = scmp.ne.s32.totalorder %s475, %s476
    %p485 = scmp.eq.s32.totalorder %s72, 0
    %p486 = por %p484, %p485
    %p487 = scmp.ne.s32.totalorder %s475, %s476
    %p488 = scmp.eq.s32.totalorder %s73, 1
    %p489 = por %p487, %p488
    %p491 = scmp.ne.s32.totalorder %s476, %s490
    %p492 = scmp.eq.s32.totalorder %s73, 0
    %p493 = por %p491, %p492
    %s495 = sadd.s32 %s494, 1
    %p498 = scmp.eq.s32.totalorder %s67, 1
    %p499 = scmp.ne.s32.totalorder %s494, %s496
    %p500 = scmp.eq.s32.totalorder %s67, 0
    %p501 = por %p499, %p500
    %p502 = scmp.ne.s32.totalorder %s494, %s496
    %p503 = scmp.eq.s32.totalorder %s72, 1
    %p504 = por %p502, %p503
    %p505 = scmp.ne.s32.totalorder %s496, %s497
    %p506 = scmp.eq.s32.totalorder %s72, 0
    %p507 = por %p505, %p506
    %p508 = scmp.ne.s32.totalorder %s496, %s497
    %p509 = scmp.eq.s32.totalorder %s73, 1
    %p510 = por %p508, %p509
    %p512 = scmp.ne.s32.totalorder %s497, %s511
    %p513 = scmp.eq.s32.totalorder %s73, 0
    %p514 = por %p512, %p513
    %s516 = sadd.s32 %s515, 1
    %p519 = scmp.eq.s32.totalorder %s67, 1
    %p520 = scmp.ne.s32.totalorder %s515, %s517
    %p521 = scmp.eq.s32.totalorder %s67, 0
    %p522 = por %p520, %p521
    %p523 = scmp.ne.s32.totalorder %s515, %s517
    %p524 = scmp.eq.s32.totalorder %s72, 1
    %p525 = por %p523, %p524
    %p526 = scmp.ne.s32.totalorder %s517, %s518
    %p527 = scmp.eq.s32.totalorder %s72, 0
    %p528 = por %p526, %p527
    %p529 = scmp.ne.s32.totalorder %s517, %s518
    %p530 = scmp.eq.s32.totalorder %s73, 1
    %p531 = por %p529, %p530
    %p533 = scmp.ne.s32.totalorder %s518, %s532
    %p534 = scmp.eq.s32.totalorder %s73, 0
    %p535 = por %p533, %p534
    %s537 = sadd.s32 %s536, 1
    %p540 = scmp.eq.s32.totalorder %s67, 1
    %p541 = scmp.ne.s32.totalorder %s536, %s538
    %p542 = scmp.eq.s32.totalorder %s67, 0
    %p543 = por %p541, %p542
    %p544 = scmp.ne.s32.totalorder %s536, %s538
    %p545 = scmp.eq.s32.totalorder %s72, 1
    %p546 = por %p544, %p545
    %p547 = scmp.ne.s32.totalorder %s538, %s539
    %p548 = scmp.eq.s32.totalorder %s72, 0
    %p549 = por %p547, %p548
    %p550 = scmp.ne.s32.totalorder %s538, %s539
    %p551 = scmp.eq.s32.totalorder %s73, 1
    %p552 = por %p550, %p551
    %p554 = scmp.ne.s32.totalorder %s539, %s553
    %p555 = scmp.eq.s32.totalorder %s73, 0
    %p556 = por %p554, %p555
    %s558 = sadd.s32 %s557, 1
    %p561 = scmp.eq.s32.totalorder %s67, 1
    %p562 = scmp.ne.s32.totalorder %s557, %s559
    %p563 = scmp.eq.s32.totalorder %s67, 0
    %p564 = por %p562, %p563
    %p565 = scmp.ne.s32.totalorder %s557, %s559
    %p566 = scmp.eq.s32.totalorder %s72, 1
    %p567 = por %p565, %p566
    %p568 = scmp.ne.s32.totalorder %s559, %s560
    %p569 = scmp.eq.s32.totalorder %s72, 0
    %p570 = por %p568, %p569
    %p571 = scmp.ne.s32.totalorder %s559, %s560
    %p572 = scmp.eq.s32.totalorder %s73, 1
    %p573 = por %p571, %p572
    %p575 = scmp.ne.s32.totalorder %s560, %s574
    %p576 = scmp.eq.s32.totalorder %s73, 0
    %p577 = por %p575, %p576
    %s579 = sadd.s32 %s578, 1
    %p582 = scmp.eq.s32.totalorder %s67, 1
    %p583 = scmp.ne.s32.totalorder %s578, %s580
    %p584 = scmp.eq.s32.totalorder %s67, 0
    %p585 = por %p583, %p584
    %p586 = scmp.ne.s32.totalorder %s578, %s580
    %p587 = scmp.eq.s32.totalorder %s72, 1
    %p588 = por %p586, %p587
    %p589 = scmp.ne.s32.totalorder %s580, %s581
    %p590 = scmp.eq.s32.totalorder %s72, 0
    %p591 = por %p589, %p590
    %p592 = scmp.ne.s32.totalorder %s580, %s581
    %p593 = scmp.eq.s32.totalorder %s73, 1
    %p594 = por %p592, %p593
    %p596 = scmp.ne.s32.totalorder %s581, %s595
    %p597 = scmp.eq.s32.totalorder %s73, 0
    %p598 = por %p596, %p597
    %s600 = sadd.s32 %s599, 1
    %p603 = scmp.eq.s32.totalorder %s67, 1
    %p604 = scmp.ne.s32.totalorder %s599, %s601
    %p605 = scmp.eq.s32.totalorder %s67, 0
    %p606 = por %p604, %p605
    %p607 = scmp.ne.s32.totalorder %s599, %s601
    %p608 = scmp.eq.s32.totalorder %s72, 1
    %p609 = por %p607, %p608
    %p610 = scmp.ne.s32.totalorder %s601, %s602
    %p611 = scmp.eq.s32.totalorder %s72, 0
    %p612 = por %p610, %p611
    %p613 = scmp.ne.s32.totalorder %s601, %s602
    %p614 = scmp.eq.s32.totalorder %s73, 1
    %p615 = por %p613, %p614
    %p617 = scmp.ne.s32.totalorder %s602, %s616
    %p618 = scmp.eq.s32.totalorder %s73, 0
    %p619 = por %p617, %p618
    %s621 = sadd.s32 %s620, 1
    %p624 = scmp.eq.s32.totalorder %s67, 1
    %p625 = scmp.ne.s32.totalorder %s620, %s622
    %p626 = scmp.eq.s32.totalorder %s67, 0
    %p627 = por %p625, %p626
    %p628 = scmp.ne.s32.totalorder %s620, %s622
    %p629 = scmp.eq.s32.totalorder %s72, 1
    %p630 = por %p628, %p629
    %p631 = scmp.ne.s32.totalorder %s622, %s623
    %p632 = scmp.eq.s32.totalorder %s72, 0
    %p633 = por %p631, %p632
    %p634 = scmp.ne.s32.totalorder %s622, %s623
    %p635 = scmp.eq.s32.totalorder %s73, 1
    %p636 = por %p634, %p635
    %p638 = scmp.ne.s32.totalorder %s623, %s637
    %p639 = scmp.eq.s32.totalorder %s73, 0
    %p640 = por %p638, %p639
    %s642 = sadd.s32 %s641, 1
    %p645 = scmp.eq.s32.totalorder %s67, 1
    %p646 = scmp.ne.s32.totalorder %s641, %s643
    %p647 = scmp.eq.s32.totalorder %s67, 0
    %p648 = por %p646, %p647
    %p649 = scmp.ne.s32.totalorder %s641, %s643
    %p650 = scmp.eq.s32.totalorder %s72, 1
    %p651 = por %p649, %p650
    %p652 = scmp.ne.s32.totalorder %s643, %s644
    %p653 = scmp.eq.s32.totalorder %s72, 0
    %p654 = por %p652, %p653
    %p655 = scmp.ne.s32.totalorder %s643, %s644
    %p656 = scmp.eq.s32.totalorder %s73, 1
    %p657 = por %p655, %p656
    %p659 = scmp.ne.s32.totalorder %s644, %s658
    %p660 = scmp.eq.s32.totalorder %s73, 0
    %p661 = por %p659, %p660
    %s663 = sadd.s32 %s662, 1
    %p666 = scmp.eq.s32.totalorder %s67, 1
    %p667 = scmp.ne.s32.totalorder %s662, %s664
    %p668 = scmp.eq.s32.totalorder %s67, 0
    %p669 = por %p667, %p668
    %p670 = scmp.ne.s32.totalorder %s662, %s664
    %p671 = scmp.eq.s32.totalorder %s72, 1
    %p672 = por %p670, %p671
    %p673 = scmp.ne.s32.totalorder %s664, %s665
    %p674 = scmp.eq.s32.totalorder %s72, 0
    %p675 = por %p673, %p674
    %p676 = scmp.ne.s32.totalorder %s664, %s665
    %p677 = scmp.eq.s32.totalorder %s73, 1
    %p678 = por %p676, %p677
    %p680 = scmp.ne.s32.totalorder %s665, %s679
    %p681 = scmp.eq.s32.totalorder %s73, 0
    %p682 = por %p680, %p681
    %s684 = sadd.s32 %s683, 1
    %p687 = scmp.eq.s32.totalorder %s67, 1
    %p688 = scmp.ne.s32.totalorder %s683, %s685
    %p689 = scmp.eq.s32.totalorder %s67, 0
    %p690 = por %p688, %p689
    %p691 = scmp.ne.s32.totalorder %s683, %s685
    %p692 = scmp.eq.s32.totalorder %s72, 1
    %p693 = por %p691, %p692
    %p694 = scmp.ne.s32.totalorder %s685, %s686
    %p695 = scmp.eq.s32.totalorder %s72, 0
    %p696 = por %p694, %p695
    %p697 = scmp.ne.s32.totalorder %s685, %s686
    %p698 = scmp.eq.s32.totalorder %s73, 1
    %p699 = por %p697, %p698
    %p701 = scmp.ne.s32.totalorder %s686, %s700
    %p702 = scmp.eq.s32.totalorder %s73, 0
    %p703 = por %p701, %p702
    %s705 = sadd.s32 %s704, 1
    %p708 = scmp.eq.s32.totalorder %s67, 1
    %p709 = scmp.ne.s32.totalorder %s704, %s706
    %p710 = scmp.eq.s32.totalorder %s67, 0
    %p711 = por %p709, %p710
    %p712 = scmp.ne.s32.totalorder %s704, %s706
    %p713 = scmp.eq.s32.totalorder %s72, 1
    %p714 = por %p712, %p713
    %p715 = scmp.ne.s32.totalorder %s706, %s707
    %p716 = scmp.eq.s32.totalorder %s72, 0
    %p717 = por %p715, %p716
    %p718 = scmp.ne.s32.totalorder %s706, %s707
    %p719 = scmp.eq.s32.totalorder %s73, 1
    %p720 = por %p718, %p719
    %p722 = scmp.ne.s32.totalorder %s707, %s721
    %p723 = scmp.eq.s32.totalorder %s73, 0
    %p724 = por %p722, %p723
    %s725 = ssub.s32 %s67, %s74
    %p726 = scmp.eq.s32.totalorder %s725, 0
    %s728 = sadd.s32 %s727, 1
    %s729 = scalar_select %p726, %s727, %s728
    %p732 = pneg %p726
    %p733 = scmp.eq.s32.totalorder %s67, 1
    %p734 = por %p732, %p733
    %p735 = scmp.ne.s32.totalorder %s727, %s730
    %p736 = scmp.eq.s32.totalorder %s67, 0
    %p737 = por %p735, %p736
    %p738 = scmp.ne.s32.totalorder %s727, %s730
    %p739 = scmp.eq.s32.totalorder %s72, 1
    %p740 = por %p738, %p739
    %p741 = scmp.ne.s32.totalorder %s730, %s731
    %p742 = scmp.eq.s32.totalorder %s72, 0
    %p743 = por %p741, %p742
    %p744 = scmp.ne.s32.totalorder %s730, %s731
    %p745 = scmp.eq.s32.totalorder %s73, 1
    %p746 = por %p744, %p745
    %p748 = scmp.ne.s32.totalorder %s731, %s747
    %p749 = scmp.eq.s32.totalorder %s73, 0
    %p750 = por %p748, %p749
    %p751 = scmp.le.s32.totalorder 1, %s67
    %p752 = scmp.lt.s32.totalorder %s67, 3
    %p753 = pnand %p751, %p752
    %p754 = pneg %p753
    // Predicated region
    $region9: #{seq2seq_forward.7} parent=5 // pred_check
      _
    $region10: #{seq2seq_forward.7} parent=5 // pred_check_branch
      %756 = sbr.rel (%p753) target = $region12
    $region11: #{seq2seq_forward.7} parent=5 // pred_region
      %s757 = ssub.s32 %s67, 1
      // Predicated region
      $region13: #{seq2seq_forward.7} parent=11 // pred_check
        %p758 = pneg %p192
      $region14: #{seq2seq_forward.7} parent=11 // pred_check_branch
        %760 = sbr.rel (%p758) target = $region16
      $region15: #{seq2seq_forward.7} parent=11 // pred_region
        _
      $region16: #{seq2seq_forward.7} parent=11 // pred_fallthru
        _
      // Predicated region
      $region17: #{seq2seq_forward.7} parent=11 // pred_check
        %p761 = pneg %p213
      $region18: #{seq2seq_forward.7} parent=11 // pred_check_branch
        %763 = sbr.rel (%p761) target = $region20
      $region19: #{seq2seq_forward.7} parent=11 // pred_region
        _
      $region20: #{seq2seq_forward.7} parent=11 // pred_fallthru
        _
      // Predicated region
      $region21: #{seq2seq_forward.7} parent=11 // pred_check
        %p764 = pneg %p234
      $region22: #{seq2seq_forward.7} parent=11 // pred_check_branch
        %766 = sbr.rel (%p764) target = $region24
      $region23: #{seq2seq_forward.7} parent=11 // pred_region
        _
      $region24: #{seq2seq_forward.7} parent=11 // pred_fallthru
        _
      // Predicated region
      $region25: #{seq2seq_forward.7} parent=11 // pred_check
        %p767 = pneg %p255
      $region26: #{seq2seq_forward.7} parent=11 // pred_check_branch
        %769 = sbr.rel (%p767) target = $region28
      $region27: #{seq2seq_forward.7} parent=11 // pred_region
        _
      $region28: #{seq2seq_forward.7} parent=11 // pred_fallthru
        _
      // Predicated region
      $region29: #{seq2seq_forward.7} parent=11 // pred_check
        %p770 = pneg %p276
      $region30: #{seq2seq_forward.7} parent=11 // pred_check_branch
        %772 = sbr.rel (%p770) target = $region32
      $region31: #{seq2seq_forward.7} parent=11 // pred_region
        _
      $region32: #{seq2seq_forward.7} parent=11 // pred_fallthru
        _
      // Predicated region
      $region33: #{seq2seq_forward.7} parent=11 // pred_check
        %p773 = pneg %p297
      $region34: #{seq2seq_forward.7} parent=11 // pred_check_branch
        %775 = sbr.rel (%p773) target = $region36
      $region35: #{seq2seq_forward.7} parent=11 // pred_region
        _
      $region36: #{seq2seq_forward.7} parent=11 // pred_fallthru
        _
      // Predicated region
      $region37: #{seq2seq_forward.7} parent=11 // pred_check
        %p776 = pneg %p318
      $region38: #{seq2seq_forward.7} parent=11 // pred_check_branch
        %778 = sbr.rel (%p776) target = $region40
      $region39: #{seq2seq_forward.7} parent=11 // pred_region
        _
      $region40: #{seq2seq_forward.7} parent=11 // pred_fallthru
        _
      // Predicated region
      $region41: #{seq2seq_forward.7} parent=11 // pred_check
        %p779 = pneg %p339
      $region42: #{seq2seq_forward.7} parent=11 // pred_check_branch
        %781 = sbr.rel (%p779) target = $region44
      $region43: #{seq2seq_forward.7} parent=11 // pred_region
        _
      $region44: #{seq2seq_forward.7} parent=11 // pred_fallthru
        _
      // Predicated region
      $region45: #{seq2seq_forward.7} parent=11 // pred_check
        %p782 = pneg %p360
      $region46: #{seq2seq_forward.7} parent=11 // pred_check_branch
        %784 = sbr.rel (%p782) target = $region48
      $region47: #{seq2seq_forward.7} parent=11 // pred_region
        _
      $region48: #{seq2seq_forward.7} parent=11 // pred_fallthru
        _
      // Predicated region
      $region49: #{seq2seq_forward.7} parent=11 // pred_check
        %p785 = pneg %p381
      $region50: #{seq2seq_forward.7} parent=11 // pred_check_branch
        %787 = sbr.rel (%p785) target = $region52
      $region51: #{seq2seq_forward.7} parent=11 // pred_region
        _
      $region52: #{seq2seq_forward.7} parent=11 // pred_fallthru
        _
      // Predicated region
      $region53: #{seq2seq_forward.7} parent=11 // pred_check
        %p788 = pneg %p402
      $region54: #{seq2seq_forward.7} parent=11 // pred_check_branch
        %790 = sbr.rel (%p788) target = $region56
      $region55: #{seq2seq_forward.7} parent=11 // pred_region
        _
      $region56: #{seq2seq_forward.7} parent=11 // pred_fallthru
        _
      // Predicated region
      $region57: #{seq2seq_forward.7} parent=11 // pred_check
        %p791 = pneg %p423
      $region58: #{seq2seq_forward.7} parent=11 // pred_check_branch
        %793 = sbr.rel (%p791) target = $region60
      $region59: #{seq2seq_forward.7} parent=11 // pred_region
        _
      $region60: #{seq2seq_forward.7} parent=11 // pred_fallthru
        _
      // Predicated region
      $region61: #{seq2seq_forward.7} parent=11 // pred_check
        %p794 = pneg %p444
      $region62: #{seq2seq_forward.7} parent=11 // pred_check_branch
        %796 = sbr.rel (%p794) target = $region64
      $region63: #{seq2seq_forward.7} parent=11 // pred_region
        _
      $region64: #{seq2seq_forward.7} parent=11 // pred_fallthru
        _
      // Predicated region
      $region65: #{seq2seq_forward.7} parent=11 // pred_check
        %p797 = pneg %p465
      $region66: #{seq2seq_forward.7} parent=11 // pred_check_branch
        %799 = sbr.rel (%p797) target = $region68
      $region67: #{seq2seq_forward.7} parent=11 // pred_region
        _
      $region68: #{seq2seq_forward.7} parent=11 // pred_fallthru
        _
      // Predicated region
      $region69: #{seq2seq_forward.7} parent=11 // pred_check
        %p800 = pneg %p486
      $region70: #{seq2seq_forward.7} parent=11 // pred_check_branch
        %802 = sbr.rel (%p800) target = $region72
      $region71: #{seq2seq_forward.7} parent=11 // pred_region
        _
      $region72: #{seq2seq_forward.7} parent=11 // pred_fallthru
        _
      // Predicated region
      $region73: #{seq2seq_forward.7} parent=11 // pred_check
        %p803 = pneg %p507
      $region74: #{seq2seq_forward.7} parent=11 // pred_check_branch
        %805 = sbr.rel (%p803) target = $region76
      $region75: #{seq2seq_forward.7} parent=11 // pred_region
        _
      $region76: #{seq2seq_forward.7} parent=11 // pred_fallthru
        _
      // Predicated region
      $region77: #{seq2seq_forward.7} parent=11 // pred_check
        %p806 = pneg %p528
      $region78: #{seq2seq_forward.7} parent=11 // pred_check_branch
        %808 = sbr.rel (%p806) target = $region80
      $region79: #{seq2seq_forward.7} parent=11 // pred_region
        _
      $region80: #{seq2seq_forward.7} parent=11 // pred_fallthru
        _
      // Predicated region
      $region81: #{seq2seq_forward.7} parent=11 // pred_check
        %p809 = pneg %p549
      $region82: #{seq2seq_forward.7} parent=11 // pred_check_branch
        %811 = sbr.rel (%p809) target = $region84
      $region83: #{seq2seq_forward.7} parent=11 // pred_region
        _
      $region84: #{seq2seq_forward.7} parent=11 // pred_fallthru
        _
      // Predicated region
      $region85: #{seq2seq_forward.7} parent=11 // pred_check
        %p812 = pneg %p570
      $region86: #{seq2seq_forward.7} parent=11 // pred_check_branch
        %814 = sbr.rel (%p812) target = $region88
      $region87: #{seq2seq_forward.7} parent=11 // pred_region
        _
      $region88: #{seq2seq_forward.7} parent=11 // pred_fallthru
        _
      // Predicated region
      $region89: #{seq2seq_forward.7} parent=11 // pred_check
        %p815 = pneg %p591
      $region90: #{seq2seq_forward.7} parent=11 // pred_check_branch
        %817 = sbr.rel (%p815) target = $region92
      $region91: #{seq2seq_forward.7} parent=11 // pred_region
        _
      $region92: #{seq2seq_forward.7} parent=11 // pred_fallthru
        _
      // Predicated region
      $region93: #{seq2seq_forward.7} parent=11 // pred_check
        %p818 = pneg %p612
      $region94: #{seq2seq_forward.7} parent=11 // pred_check_branch
        %820 = sbr.rel (%p818) target = $region96
      $region95: #{seq2seq_forward.7} parent=11 // pred_region
        _
      $region96: #{seq2seq_forward.7} parent=11 // pred_fallthru
        _
      // Predicated region
      $region97: #{seq2seq_forward.7} parent=11 // pred_check
        %p821 = pneg %p633
      $region98: #{seq2seq_forward.7} parent=11 // pred_check_branch
        %823 = sbr.rel (%p821) target = $region100
      $region99: #{seq2seq_forward.7} parent=11 // pred_region
        _
      $region100: #{seq2seq_forward.7} parent=11 // pred_fallthru
        _
      // Predicated region
      $region101: #{seq2seq_forward.7} parent=11 // pred_check
        %p824 = pneg %p654
      $region102: #{seq2seq_forward.7} parent=11 // pred_check_branch
        %826 = sbr.rel (%p824) target = $region104
      $region103: #{seq2seq_forward.7} parent=11 // pred_region
        _
      $region104: #{seq2seq_forward.7} parent=11 // pred_fallthru
        _
      // Predicated region
      $region105: #{seq2seq_forward.7} parent=11 // pred_check
        %p827 = pneg %p675
      $region106: #{seq2seq_forward.7} parent=11 // pred_check_branch
        %829 = sbr.rel (%p827) target = $region108
      $region107: #{seq2seq_forward.7} parent=11 // pred_region
        _
      $region108: #{seq2seq_forward.7} parent=11 // pred_fallthru
        _
      // Predicated region
      $region109: #{seq2seq_forward.7} parent=11 // pred_check
        %p830 = pneg %p696
      $region110: #{seq2seq_forward.7} parent=11 // pred_check_branch
        %832 = sbr.rel (%p830) target = $region112
      $region111: #{seq2seq_forward.7} parent=11 // pred_region
        _
      $region112: #{seq2seq_forward.7} parent=11 // pred_fallthru
        _
      // Predicated region
      $region113: #{seq2seq_forward.7} parent=11 // pred_check
        %p833 = pneg %p717
      $region114: #{seq2seq_forward.7} parent=11 // pred_check_branch
        %835 = sbr.rel (%p833) target = $region116
      $region115: #{seq2seq_forward.7} parent=11 // pred_region
        _
      $region116: #{seq2seq_forward.7} parent=11 // pred_fallthru
        _
    $region12: #{seq2seq_forward.7} parent=5 // pred_fallthru
      _
    %p836 = scmp.lt.s32.totalorder %s67, 2
    // Predicated region
    $region117: #{seq2seq_forward.7} parent=5 // pred_check
      %p837 = pneg %p836
    $region118: #{seq2seq_forward.7} parent=5 // pred_check_branch
      %839 = sbr.rel (%p837) target = $region120
    $region119: #{seq2seq_forward.7} parent=5 // pred_region
      // Predicated region
      $region121: #{seq2seq_forward.7} parent=119 // pred_check
        %p840 = pneg %p87
      $region122: #{seq2seq_forward.7} parent=119 // pred_check_branch
        %842 = sbr.rel (%p840) target = $region124
      $region123: #{seq2seq_forward.7} parent=119 // pred_region
        %p843 = scmp.lt.s32.totalorder %s67, 1
        %s844 = scalar_select %p843, %s67, 1
        %s845 = smul.addr %s844, 8
        %s846 = scalar_lea.vmem %s1, %s845
      $region124: #{seq2seq_forward.7} parent=119 // pred_fallthru
        _
      // Predicated region
      $region125: #{seq2seq_forward.7} parent=119 // pred_check
        %p847 = pneg %p113
      $region126: #{seq2seq_forward.7} parent=119 // pred_check_branch
        %849 = sbr.rel (%p847) target = $region128
      $region127: #{seq2seq_forward.7} parent=119 // pred_region
        %p850 = scmp.lt.s32.totalorder %s67, 1
        %s851 = scalar_select %p850, %s67, 1
        %s852 = smul.addr %s851, 8
        %s853 = scalar_lea.vmem %s3, %s852
      $region128: #{seq2seq_forward.7} parent=119 // pred_fallthru
        _
      // Predicated region
      $region129: #{seq2seq_forward.7} parent=119 // pred_check
        %p854 = pneg %p139
      $region130: #{seq2seq_forward.7} parent=119 // pred_check_branch
        %856 = sbr.rel (%p854) target = $region132
      $region131: #{seq2seq_forward.7} parent=119 // pred_region
        %p857 = scmp.lt.s32.totalorder %s67, 1
        %s858 = scalar_select %p857, %s67, 1
        %s859 = smul.addr %s858, 8
        %s860 = scalar_lea.vmem %s5, %s859
      $region132: #{seq2seq_forward.7} parent=119 // pred_fallthru
        _
      // Predicated region
      $region133: #{seq2seq_forward.7} parent=119 // pred_check
        %p861 = pneg %p165
      $region134: #{seq2seq_forward.7} parent=119 // pred_check_branch
        %863 = sbr.rel (%p861) target = $region136
      $region135: #{seq2seq_forward.7} parent=119 // pred_region
        %p864 = scmp.lt.s32.totalorder %s67, 1
        %s865 = scalar_select %p864, %s67, 1
        %s866 = smul.addr %s865, 8
        %s867 = scalar_lea.vmem %s7, %s866
      $region136: #{seq2seq_forward.7} parent=119 // pred_fallthru
        _
    $region120: #{seq2seq_forward.7} parent=5 // pred_fallthru
      _
    %p868 = scmp.le.s32.totalorder 1, %s67
    %p869 = scmp.lt.s32.totalorder %s67, 3
    %p870 = pnand %p868, %p869
    %p871 = pneg %p870
    // Predicated region
    $region137: #{seq2seq_forward.7} parent=5 // pred_check
      _
    $region138: #{seq2seq_forward.7} parent=5 // pred_check_branch
      %873 = sbr.rel (%p870) target = $region140
    $region139: #{seq2seq_forward.7} parent=5 // pred_region
      %s874 = ssub.s32 %s67, 1
      %p875 = scmp.lt.s32.totalorder %s72, 1
      %s876 = scalar_select %p875, %s72, 1
      %s877 = smul.addr %s876, 8
      %s878 = scalar_lea.vmem %s1, %s877
      %p879 = pneg %p93
      %p880 = pneg %p90
      %p881 = scmp.lt.s32.totalorder %s72, 1
      %s882 = scalar_select %p881, %s72, 1
      %s883 = smul.addr %s882, 8
      %s884 = scalar_lea.vmem %s3, %s883
      %p885 = pneg %p119
      %p886 = pneg %p116
      %p887 = scmp.lt.s32.totalorder %s72, 1
      %s888 = scalar_select %p887, %s72, 1
      %s889 = smul.addr %s888, 8
      %s890 = scalar_lea.vmem %s5, %s889
      %p891 = pneg %p145
      %p892 = pneg %p142
      %p893 = scmp.lt.s32.totalorder %s72, 1
      %s894 = scalar_select %p893, %s72, 1
      %s895 = smul.addr %s894, 8
      %s896 = scalar_lea.vmem %s7, %s895
      %p897 = pneg %p171
      %p898 = pneg %p168
      %p899 = pneg %p192
      %p900 = pneg %p189
      %p901 = pneg %p213
      %p902 = pneg %p210
      %p903 = pneg %p234
      %p904 = pneg %p231
      %p905 = pneg %p255
      %p906 = pneg %p252
      %p907 = pneg %p276
      %p908 = pneg %p273
      %p909 = pneg %p297
      %p910 = pneg %p294
      %p911 = pneg %p318
      %p912 = pneg %p315
      %p913 = pneg %p339
      %p914 = pneg %p336
      %p915 = pneg %p360
      %p916 = pneg %p357
      %p917 = pneg %p381
      %p918 = pneg %p378
      %p919 = pneg %p402
      %p920 = pneg %p399
      %p921 = pneg %p423
      %p922 = pneg %p420
      %p923 = pneg %p444
      %p924 = pneg %p441
      %p925 = pneg %p465
      %p926 = pneg %p462
      %p927 = pneg %p486
      %p928 = pneg %p483
      %p929 = pneg %p507
      %p930 = pneg %p504
      %p931 = pneg %p528
      %p932 = pneg %p525
      %p933 = pneg %p549
      %p934 = pneg %p546
      %p935 = pneg %p570
      %p936 = pneg %p567
      %p937 = pneg %p591
      %p938 = pneg %p588
      %p939 = pneg %p612
      %p940 = pneg %p609
      %p941 = pneg %p633
      %p942 = pneg %p630
      %p943 = pneg %p654
      %p944 = pneg %p651
      %p945 = pneg %p675
      %p946 = pneg %p672
      %p947 = pneg %p696
      %p948 = pneg %p693
      %p949 = pneg %p717
      %p950 = pneg %p714
      %p951 = pneg %p743
      %p952 = pneg %p740
      %p953 = scmp.lt.s32.totalorder %s72, 1
      %s954 = scalar_select %p953, %s72, 1
      %s955 = smul.addr %s954, 8
      %s956 = scalar_lea.vmem %s61, %s955
      %p957 = scmp.lt.s32.totalorder %s72, 1
      %s958 = scalar_select %p957, %s72, 1
      %s959 = smul.addr %s958, 8
      %s960 = scalar_lea.vmem %s1, %s959
      %p961 = scmp.lt.s32.totalorder %s72, 1
      %s962 = scalar_select %p961, %s72, 1
      %s963 = smul.addr %s962, 8
      %s964 = scalar_lea.vmem %s3, %s963
      %p965 = scmp.lt.s32.totalorder %s72, 1
      %s966 = scalar_select %p965, %s72, 1
      %s967 = smul.addr %s966, 8
      %s968 = scalar_lea.vmem %s5, %s967
      %p969 = scmp.lt.s32.totalorder %s72, 1
      %s970 = scalar_select %p969, %s72, 1
      %s971 = smul.addr %s970, 8
      %s972 = scalar_lea.vmem %s7, %s971
      %p973 = scmp.lt.s32.totalorder %s72, 1
      %s974 = scalar_select %p973, %s72, 1
      %s975 = smul.addr %s974, 8
      %s976 = scalar_lea.vmem %s61, %s975
      %v978 = vld [vmem:[%s960] sm:$0xff]
      %v979 = vpack.c.bf16 %v978, %v978
      %v980 = vld [vmem:[%s968] sm:$0xff]
      %v981 = vld [vmem:[%s9] sm:$0xf]
      %v982 = vld [vmem:[%s9 + $0x4] sm:$0xf]
      %v983 = vld [vmem:[%s9 + $0x8] sm:$0xf]
      %v984 = vld [vmem:[%s9 + $0xc] sm:$0xf]
      %v985 = vld [vmem:[%s11] sm:$0xf]
      %v986 = vld [vmem:[%s11 + $0x4] sm:$0xf]
      %v987 = vld [vmem:[%s11 + $0x8] sm:$0xf]
      %v988 = vld [vmem:[%s11 + $0xc] sm:$0xf]
      %v989 = vld [vmem:[%s13] sm:$0xf]
      %v990 = vld [vmem:[%s13 + $0x4] sm:$0xf]
      %v991 = vld [vmem:[%s13 + $0x8] sm:$0xf]
      %v992 = vld [vmem:[%s13 + $0xc] sm:$0xf]
      %v993 = vld [vmem:[%s15] sm:$0xf]
      %v994 = vld [vmem:[%s15 + $0x4] sm:$0xf]
      %v995 = vld [vmem:[%s15 + $0x8] sm:$0xf]
      %v996 = vld [vmem:[%s15 + $0xc] sm:$0xf]
      %v997 = vld [vmem:[%s17] sm:$0x1]
      %v998 = vld [vmem:[%s19] sm:$0x1]
      %v999 = vld [vmem:[%s21] sm:$0x1]
      %v1000 = vld [vmem:[%s23] sm:$0x1]
      %v1002 = vlaneseq
      %v1003 = vshrl.u32 %v1002, 7
      %v1004 = vsub.s32 0, %v1003
      %v1005 = vrot.slane %v997, %v1004
      %v1011 = vunpack.c.l.b16 %v981
      %v1012 = vunpack.c.l.b16 %v982
      %v1013 = vunpack.c.l.b16 %v983
      %v1014 = vunpack.c.l.b16 %v984
      %v1015 = vpack.c.b16 %v1012, %v1011
      %v1016 = vpack.c.b16 %v1014, %v1013
      %vm1019 = vcmask 261120
      %v1021 = vsel %vm1019, %v979, 0
      %1023 = vmatprep.subr.bf16.mxu0 0
      %1024 = vmatpush1.bf16.msra.mxu0 %v1015
      %1025 = vmatprep.subr.bf16.mxu0 0
      %1026 = vmatpush1.bf16.msra.mxu0 %v1016
      %1027 = vmatprep.subr.bf16.mxu0 0
      %1028 = vmatpush1.bf16.msra.mxu0 0
      %1029 = vmatprep.subr.bf16.mxu0 0
      %1030 = vmatpush1.bf16.msra.mxu0 0
      %1031 = vmatprep.subr.bf16.mxu0 0
      %1032 = vmatpush1.bf16.msra.mxu0 0
      %1033 = vmatprep.subr.bf16.mxu0 0
      %1034 = vmatpush1.bf16.msra.mxu0 0
      %1035 = vmatprep.subr.bf16.mxu0 0
      %1036 = vmatpush1.bf16.msra.mxu0 0
      %1037 = vmatprep.subr.bf16.mxu0 0
      %1038 = vmatpush1.bf16.msra.mxu0 0
      %1039 = vmatprep.subr.bf16.mxu0 0
      %1040 = vmatpush1.bf16.msra.mxu0 0
      %1041 = vmatprep.subr.bf16.mxu0 0
      %1042 = vmatpush1.bf16.msra.mxu0 0
      %1043 = vmatprep.subr.bf16.mxu0 0
      %1044 = vmatpush1.bf16.msra.mxu0 0
      %1045 = vmatprep.subr.bf16.mxu0 0
      %1046 = vmatpush1.bf16.msra.mxu0 0
      %1047 = vmatprep.subr.bf16.mxu0 0
      %1048 = vmatpush1.bf16.msra.mxu0 0
      %1049 = vmatprep.subr.bf16.mxu0 0
      %1050 = vmatpush1.bf16.msra.mxu0 0
      %1051 = vmatprep.subr.bf16.mxu0 0
      %1052 = vmatpush1.bf16.msra.mxu0 0
      %1053 = vmatprep.subr.bf16.mxu0 0
      %1054 = vmatpush1.bf16.msra.mxu0 0
      %1055 = vmatprep.mubr.bf16.mxu0 0
      %1056 = vmatmul.mubr.bf16.gmra.mrb[0].mxu0 %v1021
      %v1057 = vpop.f32.mrb[0].mxu0
      %v1058 = vadd.f32 %v1005, %v1057
      %v1059 = vpop.f32.mrb[0].mxu0
      %v1060 = vpop.f32.mrb[0].mxu0
      %v1061 = vpop.f32.mrb[0].mxu0
      %1062 = vdwg.mxu0
      %v1063 = vmul.f32 %v1058, 0.35355338
      %v1065 = vlaneseq
      %v1066 = vshrl.u32 %v1065, 7
      %v1067 = vsub.s32 0, %v1066
      %v1068 = vrot.slane %v998, %v1067
      %v1074 = vunpack.c.l.b16 %v985
      %v1075 = vunpack.c.l.b16 %v986
      %v1076 = vunpack.c.l.b16 %v987
      %v1077 = vunpack.c.l.b16 %v988
      %v1078 = vpack.c.b16 %v1075, %v1074
      %v1079 = vpack.c.b16 %v1077, %v1076
      %1082 = vmatprep.subr.bf16.mxu0 0
      %1083 = vmatpush1.bf16.msra.mxu0 %v1078
      %1084 = vmatprep.subr.bf16.mxu0 0
      %1085 = vmatpush1.bf16.msra.mxu0 %v1079
      %1086 = vmatprep.subr.bf16.mxu0 0
      %1087 = vmatpush1.bf16.msra.mxu0 0
      %1088 = vmatprep.subr.bf16.mxu0 0
      %1089 = vmatpush1.bf16.msra.mxu0 0
      %1090 = vmatprep.subr.bf16.mxu0 0
      %1091 = vmatpush1.bf16.msra.mxu0 0
      %1092 = vmatprep.subr.bf16.mxu0 0
      %1093 = vmatpush1.bf16.msra.mxu0 0
      %1094 = vmatprep.subr.bf16.mxu0 0
      %1095 = vmatpush1.bf16.msra.mxu0 0
      %1096 = vmatprep.subr.bf16.mxu0 0
      %1097 = vmatpush1.bf16.msra.mxu0 0
      %1098 = vmatprep.subr.bf16.mxu0 0
      %1099 = vmatpush1.bf16.msra.mxu0 0
      %1100 = vmatprep.subr.bf16.mxu0 0
      %1101 = vmatpush1.bf16.msra.mxu0 0
      %1102 = vmatprep.subr.bf16.mxu0 0
      %1103 = vmatpush1.bf16.msra.mxu0 0
      %1104 = vmatprep.subr.bf16.mxu0 0
      %1105 = vmatpush1.bf16.msra.mxu0 0
      %1106 = vmatprep.subr.bf16.mxu0 0
      %1107 = vmatpush1.bf16.msra.mxu0 0
      %1108 = vmatprep.subr.bf16.mxu0 0
      %1109 = vmatpush1.bf16.msra.mxu0 0
      %1110 = vmatprep.subr.bf16.mxu0 0
      %1111 = vmatpush1.bf16.msra.mxu0 0
      %1112 = vmatprep.subr.bf16.mxu0 0
      %1113 = vmatpush1.bf16.msra.mxu0 0
      %1114 = vmatprep.mubr.bf16.mxu0 0
      %1115 = vmatmul.mubr.bf16.gmra.mrb[0].mxu0 %v1021
      %v1116 = vpop.f32.mrb[0].mxu0
      %v1117 = vadd.f32 %v1068, %v1116
      %v1118 = vpop.f32.mrb[0].mxu0
      %v1119 = vpop.f32.mrb[0].mxu0
      %v1120 = vpop.f32.mrb[0].mxu0
      %1121 = vdwg.mxu0
      %v1123 = vlaneseq
      %v1124 = vshrl.u32 %v1123, 7
      %v1125 = vsub.s32 0, %v1124
      %v1126 = vrot.slane %v999, %v1125
      %v1132 = vunpack.c.l.b16 %v989
      %v1133 = vunpack.c.l.b16 %v990
      %v1134 = vunpack.c.l.b16 %v991
      %v1135 = vunpack.c.l.b16 %v992
      %v1136 = vpack.c.b16 %v1133, %v1132
      %v1137 = vpack.c.b16 %v1135, %v1134
      %1140 = vmatprep.subr.bf16.mxu0 0
      %1141 = vmatpush1.bf16.msra.mxu0 %v1136
      %1142 = vmatprep.subr.bf16.mxu0 0
      %1143 = vmatpush1.bf16.msra.mxu0 %v1137
      %1144 = vmatprep.subr.bf16.mxu0 0
      %1145 = vmatpush1.bf16.msra.mxu0 0
      %1146 = vmatprep.subr.bf16.mxu0 0
      %1147 = vmatpush1.bf16.msra.mxu0 0
      %1148 = vmatprep.subr.bf16.mxu0 0
      %1149 = vmatpush1.bf16.msra.mxu0 0
      %1150 = vmatprep.subr.bf16.mxu0 0
      %1151 = vmatpush1.bf16.msra.mxu0 0
      %1152 = vmatprep.subr.bf16.mxu0 0
      %1153 = vmatpush1.bf16.msra.mxu0 0
      %1154 = vmatprep.subr.bf16.mxu0 0
      %1155 = vmatpush1.bf16.msra.mxu0 0
      %1156 = vmatprep.subr.bf16.mxu0 0
      %1157 = vmatpush1.bf16.msra.mxu0 0
      %1158 = vmatprep.subr.bf16.mxu0 0
      %1159 = vmatpush1.bf16.msra.mxu0 0
      %1160 = vmatprep.subr.bf16.mxu0 0
      %1161 = vmatpush1.bf16.msra.mxu0 0
      %1162 = vmatprep.subr.bf16.mxu0 0
      %1163 = vmatpush1.bf16.msra.mxu0 0
      %1164 = vmatprep.subr.bf16.mxu0 0
      %1165 = vmatpush1.bf16.msra.mxu0 0
      %1166 = vmatprep.subr.bf16.mxu0 0
      %1167 = vmatpush1.bf16.msra.mxu0 0
      %1168 = vmatprep.subr.bf16.mxu0 0
      %1169 = vmatpush1.bf16.msra.mxu0 0
      %1170 = vmatprep.subr.bf16.mxu0 0
      %1171 = vmatpush1.bf16.msra.mxu0 0
      %1172 = vmatprep.mubr.bf16.mxu0 0
      %1173 = vmatmul.mubr.bf16.gmra.mrb[0].mxu0 %v1021
      %v1174 = vpop.f32.mrb[0].mxu0
      %v1175 = vadd.f32 %v1126, %v1174
      %v1176 = vpop.f32.mrb[0].mxu0
      %v1177 = vpop.f32.mrb[0].mxu0
      %v1178 = vpop.f32.mrb[0].mxu0
      %1179 = vdwg.mxu0
      %v1180 = vpack.c.bf16 %v1063, %v1063
      %v1181 = vpack.c.bf16 %v1117, %v1117
      %v1182 = vpack.c.bf16 %v1175, %v1175
      %vm1183 = vcmask 64512
      %v1185 = vsel %vm1183, %v1180, 0
      %v1188 = vsel %vm1183, %v1181, 0
      %1190 = vmatprep.subr.bf16.mxu0 0
      %1191 = vmatpush1.bf16.xpose.msra.mxu0 %v1188
      %1192 = vmatprep.subr.bf16.mxu0 0
      %1193 = vmatpush1.bf16.xpose.msra.mxu0 0
      %1194 = vmatprep.subr.bf16.mxu0 0
      %1195 = vmatpush1.bf16.xpose.msra.mxu0 0
      %1196 = vmatprep.subr.bf16.mxu0 0
      %1197 = vmatpush1.bf16.xpose.msra.mxu0 0
      %1198 = vmatprep.subr.bf16.mxu0 0
      %1199 = vmatpush1.bf16.xpose.msra.mxu0 0
      %1200 = vmatprep.subr.bf16.mxu0 0
      %1201 = vmatpush1.bf16.xpose.msra.mxu0 0
      %1202 = vmatprep.subr.bf16.mxu0 0
      %1203 = vmatpush1.bf16.xpose.msra.mxu0 0
      %1204 = vmatprep.subr.bf16.mxu0 0
      %1205 = vmatpush1.bf16.xpose.msra.mxu0 0
      %1206 = vmatprep.subr.bf16.mxu0 0
      %1207 = vmatpush1.bf16.xpose.msra.mxu0 0
      %1208 = vmatprep.subr.bf16.mxu0 0
      %1209 = vmatpush1.bf16.xpose.msra.mxu0 0
      %1210 = vmatprep.subr.bf16.mxu0 0
      %1211 = vmatpush1.bf16.xpose.msra.mxu0 0
      %1212 = vmatprep.subr.bf16.mxu0 0
      %1213 = vmatpush1.bf16.xpose.msra.mxu0 0
      %1214 = vmatprep.subr.bf16.mxu0 0
      %1215 = vmatpush1.bf16.xpose.msra.mxu0 0
      %1216 = vmatprep.subr.bf16.mxu0 0
      %1217 = vmatpush1.bf16.xpose.msra.mxu0 0
      %1218 = vmatprep.subr.bf16.mxu0 0
      %1219 = vmatpush1.bf16.xpose.msra.mxu0 0
      %1220 = vmatprep.subr.bf16.mxu0 0
      %1221 = vmatpush1.bf16.xpose.msra.mxu0 0
      %1222 = vmatprep.mubr.bf16.mxu0 0
      %1223 = vmatmul.mubr.bf16.gmra.mrb[0].mxu0 %v1185
      %v1224 = vpop.f32.mrb[0].mxu0
      %v1225 = vadd.f32 %v980, %v1224
      %v1226 = vpop.f32.mrb[0].mxu0
      %v1227 = vpop.f32.mrb[0].mxu0
      %v1228 = vpop.f32.mrb[0].mxu0
      %1229 = vdwg.mxu0
      %v1230 = vsel %vm1183, %v1225, -inf
      %1231 = vmax.xlane.f32.xlu0 %v1230
      %v1232 = vpop.xlane.xlu0 %1231
      %v1233 = vsub.f32 %v1225, %v1232
      %v1234 = vmul.f32 %v1233, 1.442695
      %v1235 = vpow.pop %v1234
      %v1236 = vsel %vm1183, %v1235, 0.0
      %1237 = vadd.xlane.f32.xlu0 %v1236
      %v1238 = vpop.xlane.xlu0 %1237
      %v1239 = vrcp.pop %v1238
      %v1240 = vmul.f32 %v1235, %v1239
      %v1241 = vpack.c.bf16 %v1240, %v1240
      %v1243 = vsel %vm1183, %v1241, 0
      %vm1245 = vcmask 1043456
      %v1247 = vsel %vm1245, %v1182, 0
      %1249 = vmatprep.subr.bf16.mxu0 0
      %1250 = vmatpush1.bf16.msra.mxu0 %v1247
      %1251 = vmatprep.subr.bf16.mxu0 0
      %1252 = vmatpush1.bf16.msra.mxu0 0
      %1253 = vmatprep.subr.bf16.mxu0 0
      %1254 = vmatpush1.bf16.msra.mxu0 0
      %1255 = vmatprep.subr.bf16.mxu0 0
      %1256 = vmatpush1.bf16.msra.mxu0 0
      %1257 = vmatprep.subr.bf16.mxu0 0
      %1258 = vmatpush1.bf16.msra.mxu0 0
      %1259 = vmatprep.subr.bf16.mxu0 0
      %1260 = vmatpush1.bf16.msra.mxu0 0
      %1261 = vmatprep.subr.bf16.mxu0 0
      %1262 = vmatpush1.bf16.msra.mxu0 0
      %1263 = vmatprep.subr.bf16.mxu0 0
      %1264 = vmatpush1.bf16.msra.mxu0 0
      %1265 = vmatprep.subr.bf16.mxu0 0
      %1266 = vmatpush1.bf16.msra.mxu0 0
      %1267 = vmatprep.subr.bf16.mxu0 0
      %1268 = vmatpush1.bf16.msra.mxu0 0
      %1269 = vmatprep.subr.bf16.mxu0 0
      %1270 = vmatpush1.bf16.msra.mxu0 0
      %1271 = vmatprep.subr.bf16.mxu0 0
      %1272 = vmatpush1.bf16.msra.mxu0 0
      %1273 = vmatprep.subr.bf16.mxu0 0
      %1274 = vmatpush1.bf16.msra.mxu0 0
      %1275 = vmatprep.subr.bf16.mxu0 0
      %1276 = vmatpush1.bf16.msra.mxu0 0
      %1277 = vmatprep.subr.bf16.mxu0 0
      %1278 = vmatpush1.bf16.msra.mxu0 0
      %1279 = vmatprep.subr.bf16.mxu0 0
      %1280 = vmatpush1.bf16.msra.mxu0 0
      %1281 = vmatprep.mubr.bf16.mxu0 0
      %1282 = vmatmul.mubr.bf16.gmra.mrb[0].mxu0 %v1243
      %v1283 = vpop.f32.mrb[0].mxu0
      %v1284 = vadd.f32 0.0, %v1283
      %v1285 = vpop.f32.mrb[0].mxu0
      %v1286 = vpop.f32.mrb[0].mxu0
      %v1287 = vpop.f32.mrb[0].mxu0
      %1288 = vdwg.mxu0
      %1290 = vrot.lane.b32.xlu0 %v1180, 120
      %v1291 = vpop.permute.xlu0 %1290
      %1293 = vrot.lane.b32.xlu0 %v1181, 120
      %v1294 = vpop.permute.xlu0 %1293
      %v1296 = vsel %vm1183, %v1291, 0
      %v1299 = vsel %vm1183, %v1294, 0
      %1301 = vmatprep.subr.bf16.mxu0 0
      %1302 = vmatpush1.bf16.xpose.msra.mxu0 %v1299
      %1303 = vmatprep.subr.bf16.mxu0 0
      %1304 = vmatpush1.bf16.xpose.msra.mxu0 0
      %1305 = vmatprep.subr.bf16.mxu0 0
      %1306 = vmatpush1.bf16.xpose.msra.mxu0 0
      %1307 = vmatprep.subr.bf16.mxu0 0
      %1308 = vmatpush1.bf16.xpose.msra.mxu0 0
      %1309 = vmatprep.subr.bf16.mxu0 0
      %1310 = vmatpush1.bf16.xpose.msra.mxu0 0
      %1311 = vmatprep.subr.bf16.mxu0 0
      %1312 = vmatpush1.bf16.xpose.msra.mxu0 0
      %1313 = vmatprep.subr.bf16.mxu0 0
      %1314 = vmatpush1.bf16.xpose.msra.mxu0 0
      %1315 = vmatprep.subr.bf16.mxu0 0
      %1316 = vmatpush1.bf16.xpose.msra.mxu0 0
      %1317 = vmatprep.subr.bf16.mxu0 0
      %1318 = vmatpush1.bf16.xpose.msra.mxu0 0
      %1319 = vmatprep.subr.bf16.mxu0 0
      %1320 = vmatpush1.bf16.xpose.msra.mxu0 0
      %1321 = vmatprep.subr.bf16.mxu0 0
      %1322 = vmatpush1.bf16.xpose.msra.mxu0 0
      %1323 = vmatprep.subr.bf16.mxu0 0
      %1324 = vmatpush1.bf16.xpose.msra.mxu0 0
      %1325 = vmatprep.subr.bf16.mxu0 0
      %1326 = vmatpush1.bf16.xpose.msra.mxu0 0
      %1327 = vmatprep.subr.bf16.mxu0 0
      %1328 = vmatpush1.bf16.xpose.msra.mxu0 0
      %1329 = vmatprep.subr.bf16.mxu0 0
      %1330 = vmatpush1.bf16.xpose.msra.mxu0 0
      %1331 = vmatprep.subr.bf16.mxu0 0
      %1332 = vmatpush1.bf16.xpose.msra.mxu0 0
      %1333 = vmatprep.mubr.bf16.mxu0 0
      %1334 = vmatmul.mubr.bf16.gmra.mrb[0].mxu0 %v1296
      %v1335 = vpop.f32.mrb[0].mxu0
      %v1336 = vadd.f32 %v980, %v1335
      %v1337 = vpop.f32.mrb[0].mxu0
      %v1338 = vpop.f32.mrb[0].mxu0
      %v1339 = vpop.f32.mrb[0].mxu0
      %1340 = vdwg.mxu0
      %v1341 = vsel %vm1183, %v1336, -inf
      %1342 = vmax.xlane.f32.xlu0 %v1341
      %v1343 = vpop.xlane.xlu0 %1342
      %v1344 = vsub.f32 %v1336, %v1343
      %v1345 = vmul.f32 %v1344, 1.442695
      %v1346 = vpow.pop %v1345
      %v1347 = vsel %vm1183, %v1346, 0.0
      %1348 = vadd.xlane.f32.xlu0 %v1347
      %v1349 = vpop.xlane.xlu0 %1348
      %v1350 = vrcp.pop %v1349
      %v1351 = vmul.f32 %v1346, %v1350
      %v1352 = vpack.c.bf16 %v1351, %v1351
      %1354 = vrot.lane.b32.xlu0 %v1182, 120
      %v1355 = vpop.permute.xlu0 %1354
      %v1357 = vsel %vm1183, %v1352, 0
      %v1360 = vsel %vm1245, %v1355, 0
      %1362 = vmatprep.subr.bf16.mxu0 0
      %1363 = vmatpush1.bf16.msra.mxu0 %v1360
      %1364 = vmatprep.subr.bf16.mxu0 0
      %1365 = vmatpush1.bf16.msra.mxu0 0
      %1366 = vmatprep.subr.bf16.mxu0 0
      %1367 = vmatpush1.bf16.msra.mxu0 0
      %1368 = vmatprep.subr.bf16.mxu0 0
      %1369 = vmatpush1.bf16.msra.mxu0 0
      %1370 = vmatprep.subr.bf16.mxu0 0
      %1371 = vmatpush1.bf16.msra.mxu0 0
      %1372 = vmatprep.subr.bf16.mxu0 0
      %1373 = vmatpush1.bf16.msra.mxu0 0
      %1374 = vmatprep.subr.bf16.mxu0 0
      %1375 = vmatpush1.bf16.msra.mxu0 0
      %1376 = vmatprep.subr.bf16.mxu0 0
      %1377 = vmatpush1.bf16.msra.mxu0 0
      %1378 = vmatprep.subr.bf16.mxu0 0
      %1379 = vmatpush1.bf16.msra.mxu0 0
      %1380 = vmatprep.subr.bf16.mxu0 0
      %1381 = vmatpush1.bf16.msra.mxu0 0
      %1382 = vmatprep.subr.bf16.mxu0 0
      %1383 = vmatpush1.bf16.msra.mxu0 0
      %1384 = vmatprep.subr.bf16.mxu0 0
      %1385 = vmatpush1.bf16.msra.mxu0 0
      %1386 = vmatprep.subr.bf16.mxu0 0
      %1387 = vmatpush1.bf16.msra.mxu0 0
      %1388 = vmatprep.subr.bf16.mxu0 0
      %1389 = vmatpush1.bf16.msra.mxu0 0
      %1390 = vmatprep.subr.bf16.mxu0 0
      %1391 = vmatpush1.bf16.msra.mxu0 0
      %1392 = vmatprep.subr.bf16.mxu0 0
      %1393 = vmatpush1.bf16.msra.mxu0 0
      %1394 = vmatprep.mubr.bf16.mxu0 0
      %1395 = vmatmul.mubr.bf16.gmra.mrb[0].mxu0 %v1357
      %v1396 = vpop.f32.mrb[0].mxu0
      %v1397 = vadd.f32 0.0, %v1396
      %v1398 = vpop.f32.mrb[0].mxu0
      %v1399 = vpop.f32.mrb[0].mxu0
      %v1400 = vpop.f32.mrb[0].mxu0
      %1401 = vdwg.mxu0
      %1402 = vrot.lane.b32.xlu0 %v1180, 112
      %v1403 = vpop.permute.xlu0 %1402
      %1404 = vrot.lane.b32.xlu0 %v1181, 112
      %v1405 = vpop.permute.xlu0 %1404
      %v1407 = vsel %vm1183, %v1403, 0
      %v1410 = vsel %vm1183, %v1405, 0
      %1412 = vmatprep.subr.bf16.mxu0 0
      %1413 = vmatpush1.bf16.xpose.msra.mxu0 %v1410
      %1414 = vmatprep.subr.bf16.mxu0 0
      %1415 = vmatpush1.bf16.xpose.msra.mxu0 0
      %1416 = vmatprep.subr.bf16.mxu0 0
      %1417 = vmatpush1.bf16.xpose.msra.mxu0 0
      %1418 = vmatprep.subr.bf16.mxu0 0
      %1419 = vmatpush1.bf16.xpose.msra.mxu0 0
      %1420 = vmatprep.subr.bf16.mxu0 0
      %1421 = vmatpush1.bf16.xpose.msra.mxu0 0
      %1422 = vmatprep.subr.bf16.mxu0 0
      %1423 = vmatpush1.bf16.xpose.msra.mxu0 0
      %1424 = vmatprep.subr.bf16.mxu0 0
      %1425 = vmatpush1.bf16.xpose.msra.mxu0 0
      %1426 = vmatprep.subr.bf16.mxu0 0
      %1427 = vmatpush1.bf16.xpose.msra.mxu0 0
      %1428 = vmatprep.subr.bf16.mxu0 0
      %1429 = vmatpush1.bf16.xpose.msra.mxu0 0
      %1430 = vmatprep.subr.bf16.mxu0 0
      %1431 = vmatpush1.bf16.xpose.msra.mxu0 0
      %1432 = vmatprep.subr.bf16.mxu0 0
      %1433 = vmatpush1.bf16.xpose.msra.mxu0 0
      %1434 = vmatprep.subr.bf16.mxu0 0
      %1435 = vmatpush1.bf16.xpose.msra.mxu0 0
      %1436 = vmatprep.subr.bf16.mxu0 0
      %1437 = vmatpush1.bf16.xpose.msra.mxu0 0
      %1438 = vmatprep.subr.bf16.mxu0 0
      %1439 = vmatpush1.bf16.xpose.msra.mxu0 0
      %1440 = vmatprep.subr.bf16.mxu0 0
      %1441 = vmatpush1.bf16.xpose.msra.mxu0 0
      %1442 = vmatprep.subr.bf16.mxu0 0
      %1443 = vmatpush1.bf16.xpose.msra.mxu0 0
      %1444 = vmatprep.mubr.bf16.mxu0 0
      %1445 = vmatmul.mubr.bf16.gmra.mrb[0].mxu0 %v1407
      %v1446 = vpop.f32.mrb[0].mxu0
      %v1447 = vadd.f32 %v980, %v1446
      %v1448 = vpop.f32.mrb[0].mxu0
      %v1449 = vpop.f32.mrb[0].mxu0
      %v1450 = vpop.f32.mrb[0].mxu0
      %1451 = vdwg.mxu0
      %v1452 = vsel %vm1183, %v1447, -inf
      %1453 = vmax.xlane.f32.xlu0 %v1452
      %v1454 = vpop.xlane.xlu0 %1453
      %v1455 = vsub.f32 %v1447, %v1454
      %v1456 = vmul.f32 %v1455, 1.442695
      %v1457 = vpow.pop %v1456
      %v1458 = vsel %vm1183, %v1457, 0.0
      %1459 = vadd.xlane.f32.xlu0 %v1458
      %v1460 = vpop.xlane.xlu0 %1459
      %v1461 = vrcp.pop %v1460
      %v1462 = vmul.f32 %v1457, %v1461
      %v1463 = vpack.c.bf16 %v1462, %v1462
      %1464 = vrot.lane.b32.xlu0 %v1182, 112
      %v1465 = vpop.permute.xlu0 %1464
      %v1467 = vsel %vm1183, %v1463, 0
      %v1470 = vsel %vm1245, %v1465, 0
      %1472 = vmatprep.subr.bf16.mxu0 0
      %1473 = vmatpush1.bf16.msra.mxu0 %v1470
      %1474 = vmatprep.subr.bf16.mxu0 0
      %1475 = vmatpush1.bf16.msra.mxu0 0
      %1476 = vmatprep.subr.bf16.mxu0 0
      %1477 = vmatpush1.bf16.msra.mxu0 0
      %1478 = vmatprep.subr.bf16.mxu0 0
      %1479 = vmatpush1.bf16.msra.mxu0 0
      %1480 = vmatprep.subr.bf16.mxu0 0
      %1481 = vmatpush1.bf16.msra.mxu0 0
      %1482 = vmatprep.subr.bf16.mxu0 0
      %1483 = vmatpush1.bf16.msra.mxu0 0
      %1484 = vmatprep.subr.bf16.mxu0 0
      %1485 = vmatpush1.bf16.msra.mxu0 0
      %1486 = vmatprep.subr.bf16.mxu0 0
      %1487 = vmatpush1.bf16.msra.mxu0 0
      %1488 = vmatprep.subr.bf16.mxu0 0
      %1489 = vmatpush1.bf16.msra.mxu0 0
      %1490 = vmatprep.subr.bf16.mxu0 0
      %1491 = vmatpush1.bf16.msra.mxu0 0
      %1492 = vmatprep.subr.bf16.mxu0 0
      %1493 = vmatpush1.bf16.msra.mxu0 0
      %1494 = vmatprep.subr.bf16.mxu0 0
      %1495 = vmatpush1.bf16.msra.mxu0 0
      %1496 = vmatprep.subr.bf16.mxu0 0
      %1497 = vmatpush1.bf16.msra.mxu0 0
      %1498 = vmatprep.subr.bf16.mxu0 0
      %1499 = vmatpush1.bf16.msra.mxu0 0
      %1500 = vmatprep.subr.bf16.mxu0 0
      %1501 = vmatpush1.bf16.msra.mxu0 0
      %1502 = vmatprep.subr.bf16.mxu0 0
      %1503 = vmatpush1.bf16.msra.mxu0 0
      %1504 = vmatprep.mubr.bf16.mxu0 0
      %1505 = vmatmul.mubr.bf16.gmra.mrb[0].mxu0 %v1467
      %v1506 = vpop.f32.mrb[0].mxu0
      %v1507 = vadd.f32 0.0, %v1506
      %v1508 = vpop.f32.mrb[0].mxu0
      %v1509 = vpop.f32.mrb[0].mxu0
      %v1510 = vpop.f32.mrb[0].mxu0
      %1511 = vdwg.mxu0
      %1512 = vrot.lane.b32.xlu0 %v1180, 104
      %v1513 = vpop.permute.xlu0 %1512
      %1514 = vrot.lane.b32.xlu0 %v1181, 104
      %v1515 = vpop.permute.xlu0 %1514
      %v1517 = vsel %vm1183, %v1513, 0
      %v1520 = vsel %vm1183, %v1515, 0
      %1522 = vmatprep.subr.bf16.mxu0 0
      %1523 = vmatpush1.bf16.xpose.msra.mxu0 %v1520
      %1524 = vmatprep.subr.bf16.mxu0 0
      %1525 = vmatpush1.bf16.xpose.msra.mxu0 0
      %1526 = vmatprep.subr.bf16.mxu0 0
      %1527 = vmatpush1.bf16.xpose.msra.mxu0 0
      %1528 = vmatprep.subr.bf16.mxu0 0
      %1529 = vmatpush1.bf16.xpose.msra.mxu0 0
      %1530 = vmatprep.subr.bf16.mxu0 0
      %1531 = vmatpush1.bf16.xpose.msra.mxu0 0
      %1532 = vmatprep.subr.bf16.mxu0 0
      %1533 = vmatpush1.bf16.xpose.msra.mxu0 0
      %1534 = vmatprep.subr.bf16.mxu0 0
      %1535 = vmatpush1.bf16.xpose.msra.mxu0 0
      %1536 = vmatprep.subr.bf16.mxu0 0
      %1537 = vmatpush1.bf16.xpose.msra.mxu0 0
      %1538 = vmatprep.subr.bf16.mxu0 0
      %1539 = vmatpush1.bf16.xpose.msra.mxu0 0
      %1540 = vmatprep.subr.bf16.mxu0 0
      %1541 = vmatpush1.bf16.xpose.msra.mxu0 0
      %1542 = vmatprep.subr.bf16.mxu0 0
      %1543 = vmatpush1.bf16.xpose.msra.mxu0 0
      %1544 = vmatprep.subr.bf16.mxu0 0
      %1545 = vmatpush1.bf16.xpose.msra.mxu0 0
      %1546 = vmatprep.subr.bf16.mxu0 0
      %1547 = vmatpush1.bf16.xpose.msra.mxu0 0
      %1548 = vmatprep.subr.bf16.mxu0 0
      %1549 = vmatpush1.bf16.xpose.msra.mxu0 0
      %1550 = vmatprep.subr.bf16.mxu0 0
      %1551 = vmatpush1.bf16.xpose.msra.mxu0 0
      %1552 = vmatprep.subr.bf16.mxu0 0
      %1553 = vmatpush1.bf16.xpose.msra.mxu0 0
      %1554 = vmatprep.mubr.bf16.mxu0 0
      %1555 = vmatmul.mubr.bf16.gmra.mrb[0].mxu0 %v1517
      %v1556 = vpop.f32.mrb[0].mxu0
      %v1557 = vadd.f32 %v980, %v1556
      %v1558 = vpop.f32.mrb[0].mxu0
      %v1559 = vpop.f32.mrb[0].mxu0
      %v1560 = vpop.f32.mrb[0].mxu0
      %1561 = vdwg.mxu0
      %v1562 = vsel %vm1183, %v1557, -inf
      %1563 = vmax.xlane.f32.xlu0 %v1562
      %v1564 = vpop.xlane.xlu0 %1563
      %v1565 = vsub.f32 %v1557, %v1564
      %v1566 = vmul.f32 %v1565, 1.442695
      %v1567 = vpow.pop %v1566
      %v1568 = vsel %vm1183, %v1567, 0.0
      %1569 = vadd.xlane.f32.xlu0 %v1568
      %v1570 = vpop.xlane.xlu0 %1569
      %v1571 = vrcp.pop %v1570
      %v1572 = vmul.f32 %v1567, %v1571
      %v1573 = vpack.c.bf16 %v1572, %v1572
      %1574 = vrot.lane.b32.xlu0 %v1182, 104
      %v1575 = vpop.permute.xlu0 %1574
      %v1577 = vsel %vm1183, %v1573, 0
      %v1580 = vsel %vm1245, %v1575, 0
      %1582 = vmatprep.subr.bf16.mxu0 0
      %1583 = vmatpush1.bf16.msra.mxu0 %v1580
      %1584 = vmatprep.subr.bf16.mxu0 0
      %1585 = vmatpush1.bf16.msra.mxu0 0
      %1586 = vmatprep.subr.bf16.mxu0 0
      %1587 = vmatpush1.bf16.msra.mxu0 0
      %1588 = vmatprep.subr.bf16.mxu0 0
      %1589 = vmatpush1.bf16.msra.mxu0 0
      %1590 = vmatprep.subr.bf16.mxu0 0
      %1591 = vmatpush1.bf16.msra.mxu0 0
      %1592 = vmatprep.subr.bf16.mxu0 0
      %1593 = vmatpush1.bf16.msra.mxu0 0
      %1594 = vmatprep.subr.bf16.mxu0 0
      %1595 = vmatpush1.bf16.msra.mxu0 0
      %1596 = vmatprep.subr.bf16.mxu0 0
      %1597 = vmatpush1.bf16.msra.mxu0 0
      %1598 = vmatprep.subr.bf16.mxu0 0
      %1599 = vmatpush1.bf16.msra.mxu0 0
      %1600 = vmatprep.subr.bf16.mxu0 0
      %1601 = vmatpush1.bf16.msra.mxu0 0
      %1602 = vmatprep.subr.bf16.mxu0 0
      %1603 = vmatpush1.bf16.msra.mxu0 0
      %1604 = vmatprep.subr.bf16.mxu0 0
      %1605 = vmatpush1.bf16.msra.mxu0 0
      %1606 = vmatprep.subr.bf16.mxu0 0
      %1607 = vmatpush1.bf16.msra.mxu0 0
      %1608 = vmatprep.subr.bf16.mxu0 0
      %1609 = vmatpush1.bf16.msra.mxu0 0
      %1610 = vmatprep.subr.bf16.mxu0 0
      %1611 = vmatpush1.bf16.msra.mxu0 0
      %1612 = vmatprep.subr.bf16.mxu0 0
      %1613 = vmatpush1.bf16.msra.mxu0 0
      %1614 = vmatprep.mubr.bf16.mxu0 0
      %1615 = vmatmul.mubr.bf16.gmra.mrb[0].mxu0 %v1577
      %v1616 = vpop.f32.mrb[0].mxu0
      %v1617 = vadd.f32 0.0, %v1616
      %v1618 = vpop.f32.mrb[0].mxu0
      %v1619 = vpop.f32.mrb[0].mxu0
      %v1620 = vpop.f32.mrb[0].mxu0
      %1621 = vdwg.mxu0
      %1623 = vrot.lane.b32.xlu0 %v1397, 8
      %v1624 = vpop.permute.xlu0 %1623
      %1627 = vrot.lane.b32.xlu0 %v1507, 16
      %v1628 = vpop.permute.xlu0 %1627
      %1631 = vrot.lane.b32.xlu0 %v1617, 24
      %v1632 = vpop.permute.xlu0 %1631
      %v1634 = vsel %vm1183, %v1284, %v1624
      %vm1635 = vcmask 130048
      %v1636 = vsel %vm1635, %v1634, %v1628
      %vm1637 = vcmask 195584
      %v1638 = vsel %vm1637, %v1636, %v1632
      %v1639 = vpack.c.bf16 %v1638, %v1638
      %v1641 = vlaneseq
      %v1642 = vshrl.u32 %v1641, 7
      %v1643 = vsub.s32 0, %v1642
      %v1644 = vrot.slane %v1000, %v1643
      %v1650 = vunpack.c.l.b16 %v993
      %v1651 = vunpack.c.l.b16 %v994
      %v1652 = vunpack.c.l.b16 %v995
      %v1653 = vunpack.c.l.b16 %v996
      %v1654 = vpack.c.b16 %v1651, %v1650
      %v1655 = vpack.c.b16 %v1653, %v1652
      %v1659 = vsel %vm1019, %v1639, 0
      %1661 = vmatprep.subr.bf16.mxu0 0
      %1662 = vmatpush1.bf16.msra.mxu0 %v1654
      %1663 = vmatprep.subr.bf16.mxu0 0
      %1664 = vmatpush1.bf16.msra.mxu0 %v1655
      %1665 = vmatprep.subr.bf16.mxu0 0
      %1666 = vmatpush1.bf16.msra.mxu0 0
      %1667 = vmatprep.subr.bf16.mxu0 0
      %1668 = vmatpush1.bf16.msra.mxu0 0
      %1669 = vmatprep.subr.bf16.mxu0 0
      %1670 = vmatpush1.bf16.msra.mxu0 0
      %1671 = vmatprep.subr.bf16.mxu0 0
      %1672 = vmatpush1.bf16.msra.mxu0 0
      %1673 = vmatprep.subr.bf16.mxu0 0
      %1674 = vmatpush1.bf16.msra.mxu0 0
      %1675 = vmatprep.subr.bf16.mxu0 0
      %1676 = vmatpush1.bf16.msra.mxu0 0
      %1677 = vmatprep.subr.bf16.mxu0 0
      %1678 = vmatpush1.bf16.msra.mxu0 0
      %1679 = vmatprep.subr.bf16.mxu0 0
      %1680 = vmatpush1.bf16.msra.mxu0 0
      %1681 = vmatprep.subr.bf16.mxu0 0
      %1682 = vmatpush1.bf16.msra.mxu0 0
      %1683 = vmatprep.subr.bf16.mxu0 0
      %1684 = vmatpush1.bf16.msra.mxu0 0
      %1685 = vmatprep.subr.bf16.mxu0 0
      %1686 = vmatpush1.bf16.msra.mxu0 0
      %1687 = vmatprep.subr.bf16.mxu0 0
      %1688 = vmatpush1.bf16.msra.mxu0 0
      %1689 = vmatprep.subr.bf16.mxu0 0
      %1690 = vmatpush1.bf16.msra.mxu0 0
      %1691 = vmatprep.subr.bf16.mxu0 0
      %1692 = vmatpush1.bf16.msra.mxu0 0
      %1693 = vmatprep.mubr.bf16.mxu0 0
      %1694 = vmatmul.mubr.bf16.gmra.mrb[0].mxu0 %v1659
      %v1695 = vpop.f32.mrb[0].mxu0
      %v1696 = vadd.f32 %v1644, %v1695
      %v1697 = vpop.f32.mrb[0].mxu0
      %v1698 = vpop.f32.mrb[0].mxu0
      %v1699 = vpop.f32.mrb[0].mxu0
      %1700 = vdwg.mxu0
      %v1701 = vadd.f32 %v978, %v1696
      %v1702 = vld [vmem:[%s25] sm:$0x1]
      %v1703 = vld [vmem:[%s27] sm:$0x1]
      %v1704 = vsel %vm1019, %v1701, 0.0
      %1705 = vadd.xlane.f32.xlu0 %v1704
      %v1706 = vpop.xlane.xlu0 %1705
      %v1707 = vrcp.pop 32.0
      %v1708 = vmul.f32 %v1706, %v1707
      %v1709 = vmul.f32 %v1701, %v1701
      %v1710 = vsel %vm1019, %v1709, 0.0
      %1711 = vadd.xlane.f32.xlu0 %v1710
      %v1712 = vpop.xlane.xlu0 %1711
      %v1713 = vmul.f32 %v1712, %v1707
      %v1714 = vmul.f32 %v1708, %v1708
      %v1715 = vsub.f32 %v1713, %v1714
      %v1716 = vmax.f32 %v1715, 0.0
      %v1717 = vsub.f32 %v1701, %v1708
      %v1718 = vadd.f32 %v1716, 1e-05
      %v1719 = vrsqrt.pop %v1718
      %v1720 = vmul.f32 %v1717, %v1719
      %v1722 = vlaneseq
      %v1723 = vshrl.u32 %v1722, 7
      %v1724 = vsub.s32 0, %v1723
      %v1725 = vrot.slane %v1702, %v1724
      %v1727 = vmul.f32 %v1720, %v1725
      %v1729 = vlaneseq
      %v1730 = vshrl.u32 %v1729, 7
      %v1731 = vsub.s32 0, %v1730
      %v1732 = vrot.slane %v1703, %v1731
      %v1734 = vadd.f32 %v1727, %v1732
      %v1735 = vld [vmem:[%s964] sm:$0xff]
      %v1736 = vpack.c.bf16 %v1735, %v1735
      %v1737 = vpack.c.bf16 %v1734, %v1734
      %v1738 = vld [vmem:[%s972] sm:$0xff]
      %v1739 = vld [vmem:[%s29] sm:$0xf]
      %v1740 = vld [vmem:[%s29 + $0x4] sm:$0xf]
      %v1741 = vld [vmem:[%s29 + $0x8] sm:$0xf]
      %v1742 = vld [vmem:[%s29 + $0xc] sm:$0xf]
      %v1743 = vld [vmem:[%s31] sm:$0xf]
      %v1744 = vld [vmem:[%s31 + $0x4] sm:$0xf]
      %v1745 = vld [vmem:[%s31 + $0x8] sm:$0xf]
      %v1746 = vld [vmem:[%s31 + $0xc] sm:$0xf]
      %v1747 = vld [vmem:[%s33] sm:$0xf]
      %v1748 = vld [vmem:[%s33 + $0x4] sm:$0xf]
      %v1749 = vld [vmem:[%s33 + $0x8] sm:$0xf]
      %v1750 = vld [vmem:[%s33 + $0xc] sm:$0xf]
      %v1751 = vld [vmem:[%s35] sm:$0xf]
      %v1752 = vld [vmem:[%s35 + $0x4] sm:$0xf]
      %v1753 = vld [vmem:[%s35 + $0x8] sm:$0xf]
      %v1754 = vld [vmem:[%s35 + $0xc] sm:$0xf]
      %v1755 = vld [vmem:[%s37] sm:$0x1]
      %v1756 = vld [vmem:[%s39] sm:$0x1]
      %v1757 = vld [vmem:[%s41] sm:$0x1]
      %v1758 = vld [vmem:[%s43] sm:$0x1]
      %v1760 = vlaneseq
      %v1761 = vshrl.u32 %v1760, 7
      %v1762 = vsub.s32 0, %v1761
      %v1763 = vrot.slane %v1755, %v1762
      %v1769 = vunpack.c.l.b16 %v1739
      %v1770 = vunpack.c.l.b16 %v1740
      %v1771 = vunpack.c.l.b16 %v1741
      %v1772 = vunpack.c.l.b16 %v1742
      %v1773 = vpack.c.b16 %v1770, %v1769
      %v1774 = vpack.c.b16 %v1772, %v1771
      %v1778 = vsel %vm1019, %v1737, 0
      %1780 = vmatprep.subr.bf16.mxu0 0
      %1781 = vmatpush1.bf16.msra.mxu0 %v1773
      %1782 = vmatprep.subr.bf16.mxu0 0
      %1783 = vmatpush1.bf16.msra.mxu0 %v1774
      %1784 = vmatprep.subr.bf16.mxu0 0
      %1785 = vmatpush1.bf16.msra.mxu0 0
      %1786 = vmatprep.subr.bf16.mxu0 0
      %1787 = vmatpush1.bf16.msra.mxu0 0
      %1788 = vmatprep.subr.bf16.mxu0 0
      %1789 = vmatpush1.bf16.msra.mxu0 0
      %1790 = vmatprep.subr.bf16.mxu0 0
      %1791 = vmatpush1.bf16.msra.mxu0 0
      %1792 = vmatprep.subr.bf16.mxu0 0
      %1793 = vmatpush1.bf16.msra.mxu0 0
      %1794 = vmatprep.subr.bf16.mxu0 0
      %1795 = vmatpush1.bf16.msra.mxu0 0
      %1796 = vmatprep.subr.bf16.mxu0 0
      %1797 = vmatpush1.bf16.msra.mxu0 0
      %1798 = vmatprep.subr.bf16.mxu0 0
      %1799 = vmatpush1.bf16.msra.mxu0 0
      %1800 = vmatprep.subr.bf16.mxu0 0
      %1801 = vmatpush1.bf16.msra.mxu0 0
      %1802 = vmatprep.subr.bf16.mxu0 0
      %1803 = vmatpush1.bf16.msra.mxu0 0
      %1804 = vmatprep.subr.bf16.mxu0 0
      %1805 = vmatpush1.bf16.msra.mxu0 0
      %1806 = vmatprep.subr.bf16.mxu0 0
      %1807 = vmatpush1.bf16.msra.mxu0 0
      %1808 = vmatprep.subr.bf16.mxu0 0
      %1809 = vmatpush1.bf16.msra.mxu0 0
      %1810 = vmatprep.subr.bf16.mxu0 0
      %1811 = vmatpush1.bf16.msra.mxu0 0
      %1812 = vmatprep.mubr.bf16.mxu0 0
      %1813 = vmatmul.mubr.bf16.gmra.mrb[0].mxu0 %v1778
      %v1814 = vpop.f32.mrb[0].mxu0
      %v1815 = vadd.f32 %v1763, %v1814
      %v1816 = vpop.f32.mrb[0].mxu0
      %v1817 = vpop.f32.mrb[0].mxu0
      %v1818 = vpop.f32.mrb[0].mxu0
      %1819 = vdwg.mxu0
      %v1820 = vmul.f32 %v1815, 0.35355338
      %v1822 = vlaneseq
      %v1823 = vshrl.u32 %v1822, 7
      %v1824 = vsub.s32 0, %v1823
      %v1825 = vrot.slane %v1756, %v1824
      %v1831 = vunpack.c.l.b16 %v1743
      %v1832 = vunpack.c.l.b16 %v1744
      %v1833 = vunpack.c.l.b16 %v1745
      %v1834 = vunpack.c.l.b16 %v1746
      %v1835 = vpack.c.b16 %v1832, %v1831
      %v1836 = vpack.c.b16 %v1834, %v1833
      %v1840 = vsel %vm1019, %v1736, 0
      %1842 = vmatprep.subr.bf16.mxu0 0
      %1843 = vmatpush1.bf16.msra.mxu0 %v1835
      %1844 = vmatprep.subr.bf16.mxu0 0
      %1845 = vmatpush1.bf16.msra.mxu0 %v1836
      %1846 = vmatprep.subr.bf16.mxu0 0
      %1847 = vmatpush1.bf16.msra.mxu0 0
      %1848 = vmatprep.subr.bf16.mxu0 0
      %1849 = vmatpush1.bf16.msra.mxu0 0
      %1850 = vmatprep.subr.bf16.mxu0 0
      %1851 = vmatpush1.bf16.msra.mxu0 0
      %1852 = vmatprep.subr.bf16.mxu0 0
      %1853 = vmatpush1.bf16.msra.mxu0 0
      %1854 = vmatprep.subr.bf16.mxu0 0
      %1855 = vmatpush1.bf16.msra.mxu0 0
      %1856 = vmatprep.subr.bf16.mxu0 0
      %1857 = vmatpush1.bf16.msra.mxu0 0
      %1858 = vmatprep.subr.bf16.mxu0 0
      %1859 = vmatpush1.bf16.msra.mxu0 0
      %1860 = vmatprep.subr.bf16.mxu0 0
      %1861 = vmatpush1.bf16.msra.mxu0 0
      %1862 = vmatprep.subr.bf16.mxu0 0
      %1863 = vmatpush1.bf16.msra.mxu0 0
      %1864 = vmatprep.subr.bf16.mxu0 0
      %1865 = vmatpush1.bf16.msra.mxu0 0
      %1866 = vmatprep.subr.bf16.mxu0 0
      %1867 = vmatpush1.bf16.msra.mxu0 0
      %1868 = vmatprep.subr.bf16.mxu0 0
      %1869 = vmatpush1.bf16.msra.mxu0 0
      %1870 = vmatprep.subr.bf16.mxu0 0
      %1871 = vmatpush1.bf16.msra.mxu0 0
      %1872 = vmatprep.subr.bf16.mxu0 0
      %1873 = vmatpush1.bf16.msra.mxu0 0
      %1874 = vmatprep.mubr.bf16.mxu0 0
      %1875 = vmatmul.mubr.bf16.gmra.mrb[0].mxu0 %v1840
      %v1876 = vpop.f32.mrb[0].mxu0
      %v1877 = vadd.f32 %v1825, %v1876
      %v1878 = vpop.f32.mrb[0].mxu0
      %v1879 = vpop.f32.mrb[0].mxu0
      %v1880 = vpop.f32.mrb[0].mxu0
      %1881 = vdwg.mxu0
      %v1883 = vlaneseq
      %v1884 = vshrl.u32 %v1883, 7
      %v1885 = vsub.s32 0, %v1884
      %v1886 = vrot.slane %v1757, %v1885
      %v1892 = vunpack.c.l.b16 %v1747
      %v1893 = vunpack.c.l.b16 %v1748
      %v1894 = vunpack.c.l.b16 %v1749
      %v1895 = vunpack.c.l.b16 %v1750
      %v1896 = vpack.c.b16 %v1893, %v1892
      %v1897 = vpack.c.b16 %v1895, %v1894
      %1900 = vmatprep.subr.bf16.mxu0 0
      %1901 = vmatpush1.bf16.msra.mxu0 %v1896
      %1902 = vmatprep.subr.bf16.mxu0 0
      %1903 = vmatpush1.bf16.msra.mxu0 %v1897
      %1904 = vmatprep.subr.bf16.mxu0 0
      %1905 = vmatpush1.bf16.msra.mxu0 0
      %1906 = vmatprep.subr.bf16.mxu0 0
      %1907 = vmatpush1.bf16.msra.mxu0 0
      %1908 = vmatprep.subr.bf16.mxu0 0
      %1909 = vmatpush1.bf16.msra.mxu0 0
      %1910 = vmatprep.subr.bf16.mxu0 0
      %1911 = vmatpush1.bf16.msra.mxu0 0
      %1912 = vmatprep.subr.bf16.mxu0 0
      %1913 = vmatpush1.bf16.msra.mxu0 0
      %1914 = vmatprep.subr.bf16.mxu0 0
      %1915 = vmatpush1.bf16.msra.mxu0 0
      %1916 = vmatprep.subr.bf16.mxu0 0
      %1917 = vmatpush1.bf16.msra.mxu0 0
      %1918 = vmatprep.subr.bf16.mxu0 0
      %1919 = vmatpush1.bf16.msra.mxu0 0
      %1920 = vmatprep.subr.bf16.mxu0 0
      %1921 = vmatpush1.bf16.msra.mxu0 0
      %1922 = vmatprep.subr.bf16.mxu0 0
      %1923 = vmatpush1.bf16.msra.mxu0 0
      %1924 = vmatprep.subr.bf16.mxu0 0
      %1925 = vmatpush1.bf16.msra.mxu0 0
      %1926 = vmatprep.subr.bf16.mxu0 0
      %1927 = vmatpush1.bf16.msra.mxu0 0
      %1928 = vmatprep.subr.bf16.mxu0 0
      %1929 = vmatpush1.bf16.msra.mxu0 0
      %1930 = vmatprep.subr.bf16.mxu0 0
      %1931 = vmatpush1.bf16.msra.mxu0 0
      %1932 = vmatprep.mubr.bf16.mxu0 0
      %1933 = vmatmul.mubr.bf16.gmra.mrb[0].mxu0 %v1840
      %v1934 = vpop.f32.mrb[0].mxu0
      %v1935 = vadd.f32 %v1886, %v1934
      %v1936 = vpop.f32.mrb[0].mxu0
      %v1937 = vpop.f32.mrb[0].mxu0
      %v1938 = vpop.f32.mrb[0].mxu0
      %1939 = vdwg.mxu0
      %v1940 = vpack.c.bf16 %v1820, %v1820
      %v1941 = vpack.c.bf16 %v1877, %v1877
      %v1942 = vpack.c.bf16 %v1935, %v1935
      %v1944 = vsel %vm1183, %v1940, 0
      %v1947 = vsel %vm1183, %v1941, 0
      %1949 = vmatprep.subr.bf16.mxu0 0
      %1950 = vmatpush1.bf16.xpose.msra.mxu0 %v1947
      %1951 = vmatprep.subr.bf16.mxu0 0
      %1952 = vmatpush1.bf16.xpose.msra.mxu0 0
      %1953 = vmatprep.subr.bf16.mxu0 0
      %1954 = vmatpush1.bf16.xpose.msra.mxu0 0
      %1955 = vmatprep.subr.bf16.mxu0 0
      %1956 = vmatpush1.bf16.xpose.msra.mxu0 0
      %1957 = vmatprep.subr.bf16.mxu0 0
      %1958 = vmatpush1.bf16.xpose.msra.mxu0 0
      %1959 = vmatprep.subr.bf16.mxu0 0
      %1960 = vmatpush1.bf16.xpose.msra.mxu0 0
      %1961 = vmatprep.subr.bf16.mxu0 0
      %1962 = vmatpush1.bf16.xpose.msra.mxu0 0
      %1963 = vmatprep.subr.bf16.mxu0 0
      %1964 = vmatpush1.bf16.xpose.msra.mxu0 0
      %1965 = vmatprep.subr.bf16.mxu0 0
      %1966 = vmatpush1.bf16.xpose.msra.mxu0 0
      %1967 = vmatprep.subr.bf16.mxu0 0
      %1968 = vmatpush1.bf16.xpose.msra.mxu0 0
      %1969 = vmatprep.subr.bf16.mxu0 0
      %1970 = vmatpush1.bf16.xpose.msra.mxu0 0
      %1971 = vmatprep.subr.bf16.mxu0 0
      %1972 = vmatpush1.bf16.xpose.msra.mxu0 0
      %1973 = vmatprep.subr.bf16.mxu0 0
      %1974 = vmatpush1.bf16.xpose.msra.mxu0 0
      %1975 = vmatprep.subr.bf16.mxu0 0
      %1976 = vmatpush1.bf16.xpose.msra.mxu0 0
      %1977 = vmatprep.subr.bf16.mxu0 0
      %1978 = vmatpush1.bf16.xpose.msra.mxu0 0
      %1979 = vmatprep.subr.bf16.mxu0 0
      %1980 = vmatpush1.bf16.xpose.msra.mxu0 0
      %1981 = vmatprep.mubr.bf16.mxu0 0
      %1982 = vmatmul.mubr.bf16.gmra.mrb[0].mxu0 %v1944
      %v1983 = vpop.f32.mrb[0].mxu0
      %v1984 = vadd.f32 %v1738, %v1983
      %v1985 = vpop.f32.mrb[0].mxu0
      %v1986 = vpop.f32.mrb[0].mxu0
      %v1987 = vpop.f32.mrb[0].mxu0
      %1988 = vdwg.mxu0
      %v1989 = vsel %vm1183, %v1984, -inf
      %1990 = vmax.xlane.f32.xlu0 %v1989
      %v1991 = vpop.xlane.xlu0 %1990
      %v1992 = vsub.f32 %v1984, %v1991
      %v1993 = vmul.f32 %v1992, 1.442695
      %v1994 = vpow.pop %v1993
      %v1995 = vsel %vm1183, %v1994, 0.0
      %1996 = vadd.xlane.f32.xlu0 %v1995
      %v1997 = vpop.xlane.xlu0 %1996
      %v1998 = vrcp.pop %v1997
      %v1999 = vmul.f32 %v1994, %v1998
      %v2000 = vpack.c.bf16 %v1999, %v1999
      %v2002 = vsel %vm1183, %v2000, 0
      %v2005 = vsel %vm1245, %v1942, 0
      %2007 = vmatprep.subr.bf16.mxu0 0
      %2008 = vmatpush1.bf16.msra.mxu0 %v2005
      %2009 = vmatprep.subr.bf16.mxu0 0
      %2010 = vmatpush1.bf16.msra.mxu0 0
      %2011 = vmatprep.subr.bf16.mxu0 0
      %2012 = vmatpush1.bf16.msra.mxu0 0
      %2013 = vmatprep.subr.bf16.mxu0 0
      %2014 = vmatpush1.bf16.msra.mxu0 0
      %2015 = vmatprep.subr.bf16.mxu0 0
      %2016 = vmatpush1.bf16.msra.mxu0 0
      %2017 = vmatprep.subr.bf16.mxu0 0
      %2018 = vmatpush1.bf16.msra.mxu0 0
      %2019 = vmatprep.subr.bf16.mxu0 0
      %2020 = vmatpush1.bf16.msra.mxu0 0
      %2021 = vmatprep.subr.bf16.mxu0 0
      %2022 = vmatpush1.bf16.msra.mxu0 0
      %2023 = vmatprep.subr.bf16.mxu0 0
      %2024 = vmatpush1.bf16.msra.mxu0 0
      %2025 = vmatprep.subr.bf16.mxu0 0
      %2026 = vmatpush1.bf16.msra.mxu0 0
      %2027 = vmatprep.subr.bf16.mxu0 0
      %2028 = vmatpush1.bf16.msra.mxu0 0
      %2029 = vmatprep.subr.bf16.mxu0 0
      %2030 = vmatpush1.bf16.msra.mxu0 0
      %2031 = vmatprep.subr.bf16.mxu0 0
      %2032 = vmatpush1.bf16.msra.mxu0 0
      %2033 = vmatprep.subr.bf16.mxu0 0
      %2034 = vmatpush1.bf16.msra.mxu0 0
      %2035 = vmatprep.subr.bf16.mxu0 0
      %2036 = vmatpush1.bf16.msra.mxu0 0
      %2037 = vmatprep.subr.bf16.mxu0 0
      %2038 = vmatpush1.bf16.msra.mxu0 0
      %2039 = vmatprep.mubr.bf16.mxu0 0
      %2040 = vmatmul.mubr.bf16.gmra.mrb[0].mxu0 %v2002
      %v2041 = vpop.f32.mrb[0].mxu0
      %v2042 = vadd.f32 0.0, %v2041
      %v2043 = vpop.f32.mrb[0].mxu0
      %v2044 = vpop.f32.mrb[0].mxu0
      %v2045 = vpop.f32.mrb[0].mxu0
      %2046 = vdwg.mxu0
      %2048 = vrot.lane.b32.xlu0 %v1940, 120
      %v2049 = vpop.permute.xlu0 %2048
      %2051 = vrot.lane.b32.xlu0 %v1941, 120
      %v2052 = vpop.permute.xlu0 %2051
      %v2054 = vsel %vm1183, %v2049, 0
      %v2057 = vsel %vm1183, %v2052, 0
      %2059 = vmatprep.subr.bf16.mxu0 0
      %2060 = vmatpush1.bf16.xpose.msra.mxu0 %v2057
      %2061 = vmatprep.subr.bf16.mxu0 0
      %2062 = vmatpush1.bf16.xpose.msra.mxu0 0
      %2063 = vmatprep.subr.bf16.mxu0 0
      %2064 = vmatpush1.bf16.xpose.msra.mxu0 0
      %2065 = vmatprep.subr.bf16.mxu0 0
      %2066 = vmatpush1.bf16.xpose.msra.mxu0 0
      %2067 = vmatprep.subr.bf16.mxu0 0
      %2068 = vmatpush1.bf16.xpose.msra.mxu0 0
      %2069 = vmatprep.subr.bf16.mxu0 0
      %2070 = vmatpush1.bf16.xpose.msra.mxu0 0
      %2071 = vmatprep.subr.bf16.mxu0 0
      %2072 = vmatpush1.bf16.xpose.msra.mxu0 0
      %2073 = vmatprep.subr.bf16.mxu0 0
      %2074 = vmatpush1.bf16.xpose.msra.mxu0 0
      %2075 = vmatprep.subr.bf16.mxu0 0
      %2076 = vmatpush1.bf16.xpose.msra.mxu0 0
      %2077 = vmatprep.subr.bf16.mxu0 0
      %2078 = vmatpush1.bf16.xpose.msra.mxu0 0
      %2079 = vmatprep.subr.bf16.mxu0 0
      %2080 = vmatpush1.bf16.xpose.msra.mxu0 0
      %2081 = vmatprep.subr.bf16.mxu0 0
      %2082 = vmatpush1.bf16.xpose.msra.mxu0 0
      %2083 = vmatprep.subr.bf16.mxu0 0
      %2084 = vmatpush1.bf16.xpose.msra.mxu0 0
      %2085 = vmatprep.subr.bf16.mxu0 0
      %2086 = vmatpush1.bf16.xpose.msra.mxu0 0
      %2087 = vmatprep.subr.bf16.mxu0 0
      %2088 = vmatpush1.bf16.xpose.msra.mxu0 0
      %2089 = vmatprep.subr.bf16.mxu0 0
      %2090 = vmatpush1.bf16.xpose.msra.mxu0 0
      %2091 = vmatprep.mubr.bf16.mxu0 0
      %2092 = vmatmul.mubr.bf16.gmra.mrb[0].mxu0 %v2054
      %v2093 = vpop.f32.mrb[0].mxu0
      %v2094 = vadd.f32 %v1738, %v2093
      %v2095 = vpop.f32.mrb[0].mxu0
      %v2096 = vpop.f32.mrb[0].mxu0
      %v2097 = vpop.f32.mrb[0].mxu0
      %2098 = vdwg.mxu0
      %v2099 = vsel %vm1183, %v2094, -inf
      %2100 = vmax.xlane.f32.xlu0 %v2099
      %v2101 = vpop.xlane.xlu0 %2100
      %v2102 = vsub.f32 %v2094, %v2101
      %v2103 = vmul.f32 %v2102, 1.442695
      %v2104 = vpow.pop %v2103
      %v2105 = vsel %vm1183, %v2104, 0.0
      %2106 = vadd.xlane.f32.xlu0 %v2105
      %v2107 = vpop.xlane.xlu0 %2106
      %v2108 = vrcp.pop %v2107
      %v2109 = vmul.f32 %v2104, %v2108
      %v2110 = vpack.c.bf16 %v2109, %v2109
      %2112 = vrot.lane.b32.xlu0 %v1942, 120
      %v2113 = vpop.permute.xlu0 %2112
      %v2115 = vsel %vm1183, %v2110, 0
      %v2118 = vsel %vm1245, %v2113, 0
      %2120 = vmatprep.subr.bf16.mxu0 0
      %2121 = vmatpush1.bf16.msra.mxu0 %v2118
      %2122 = vmatprep.subr.bf16.mxu0 0
      %2123 = vmatpush1.bf16.msra.mxu0 0
      %2124 = vmatprep.subr.bf16.mxu0 0
      %2125 = vmatpush1.bf16.msra.mxu0 0
      %2126 = vmatprep.subr.bf16.mxu0 0
      %2127 = vmatpush1.bf16.msra.mxu0 0
      %2128 = vmatprep.subr.bf16.mxu0 0
      %2129 = vmatpush1.bf16.msra.mxu0 0
      %2130 = vmatprep.subr.bf16.mxu0 0
      %2131 = vmatpush1.bf16.msra.mxu0 0
      %2132 = vmatprep.subr.bf16.mxu0 0
      %2133 = vmatpush1.bf16.msra.mxu0 0
      %2134 = vmatprep.subr.bf16.mxu0 0
      %2135 = vmatpush1.bf16.msra.mxu0 0
      %2136 = vmatprep.subr.bf16.mxu0 0
      %2137 = vmatpush1.bf16.msra.mxu0 0
      %2138 = vmatprep.subr.bf16.mxu0 0
      %2139 = vmatpush1.bf16.msra.mxu0 0
      %2140 = vmatprep.subr.bf16.mxu0 0
      %2141 = vmatpush1.bf16.msra.mxu0 0
      %2142 = vmatprep.subr.bf16.mxu0 0
      %2143 = vmatpush1.bf16.msra.mxu0 0
      %2144 = vmatprep.subr.bf16.mxu0 0
      %2145 = vmatpush1.bf16.msra.mxu0 0
      %2146 = vmatprep.subr.bf16.mxu0 0
      %2147 = vmatpush1.bf16.msra.mxu0 0
      %2148 = vmatprep.subr.bf16.mxu0 0
      %2149 = vmatpush1.bf16.msra.mxu0 0
      %2150 = vmatprep.subr.bf16.mxu0 0
      %2151 = vmatpush1.bf16.msra.mxu0 0
      %2152 = vmatprep.mubr.bf16.mxu0 0
      %2153 = vmatmul.mubr.bf16.gmra.mrb[0].mxu0 %v2115
      %v2154 = vpop.f32.mrb[0].mxu0
      %v2155 = vadd.f32 0.0, %v2154
      %v2156 = vpop.f32.mrb[0].mxu0
      %v2157 = vpop.f32.mrb[0].mxu0
      %v2158 = vpop.f32.mrb[0].mxu0
      %2159 = vdwg.mxu0
      %2160 = vrot.lane.b32.xlu0 %v1940, 112
      %v2161 = vpop.permute.xlu0 %2160
      %2162 = vrot.lane.b32.xlu0 %v1941, 112
      %v2163 = vpop.permute.xlu0 %2162
      %v2165 = vsel %vm1183, %v2161, 0
      %v2168 = vsel %vm1183, %v2163, 0
      %2170 = vmatprep.subr.bf16.mxu0 0
      %2171 = vmatpush1.bf16.xpose.msra.mxu0 %v2168
      %2172 = vmatprep.subr.bf16.mxu0 0
      %2173 = vmatpush1.bf16.xpose.msra.mxu0 0
      %2174 = vmatprep.subr.bf16.mxu0 0
      %2175 = vmatpush1.bf16.xpose.msra.mxu0 0
      %2176 = vmatprep.subr.bf16.mxu0 0
      %2177 = vmatpush1.bf16.xpose.msra.mxu0 0
      %2178 = vmatprep.subr.bf16.mxu0 0
      %2179 = vmatpush1.bf16.xpose.msra.mxu0 0
      %2180 = vmatprep.subr.bf16.mxu0 0
      %2181 = vmatpush1.bf16.xpose.msra.mxu0 0
      %2182 = vmatprep.subr.bf16.mxu0 0
      %2183 = vmatpush1.bf16.xpose.msra.mxu0 0
      %2184 = vmatprep.subr.bf16.mxu0 0
      %2185 = vmatpush1.bf16.xpose.msra.mxu0 0
      %2186 = vmatprep.subr.bf16.mxu0 0
      %2187 = vmatpush1.bf16.xpose.msra.mxu0 0
      %2188 = vmatprep.subr.bf16.mxu0 0
      %2189 = vmatpush1.bf16.xpose.msra.mxu0 0
      %2190 = vmatprep.subr.bf16.mxu0 0
      %2191 = vmatpush1.bf16.xpose.msra.mxu0 0
      %2192 = vmatprep.subr.bf16.mxu0 0
      %2193 = vmatpush1.bf16.xpose.msra.mxu0 0
      %2194 = vmatprep.subr.bf16.mxu0 0
      %2195 = vmatpush1.bf16.xpose.msra.mxu0 0
      %2196 = vmatprep.subr.bf16.mxu0 0
      %2197 = vmatpush1.bf16.xpose.msra.mxu0 0
      %2198 = vmatprep.subr.bf16.mxu0 0
      %2199 = vmatpush1.bf16.xpose.msra.mxu0 0
      %2200 = vmatprep.subr.bf16.mxu0 0
      %2201 = vmatpush1.bf16.xpose.msra.mxu0 0
      %2202 = vmatprep.mubr.bf16.mxu0 0
      %2203 = vmatmul.mubr.bf16.gmra.mrb[0].mxu0 %v2165
      %v2204 = vpop.f32.mrb[0].mxu0
      %v2205 = vadd.f32 %v1738, %v2204
      %v2206 = vpop.f32.mrb[0].mxu0
      %v2207 = vpop.f32.mrb[0].mxu0
      %v2208 = vpop.f32.mrb[0].mxu0
      %2209 = vdwg.mxu0
      %v2210 = vsel %vm1183, %v2205, -inf
      %2211 = vmax.xlane.f32.xlu0 %v2210
      %v2212 = vpop.xlane.xlu0 %2211
      %v2213 = vsub.f32 %v2205, %v2212
      %v2214 = vmul.f32 %v2213, 1.442695
      %v2215 = vpow.pop %v2214
      %v2216 = vsel %vm1183, %v2215, 0.0
      %2217 = vadd.xlane.f32.xlu0 %v2216
      %v2218 = vpop.xlane.xlu0 %2217
      %v2219 = vrcp.pop %v2218
      %v2220 = vmul.f32 %v2215, %v2219
      %v2221 = vpack.c.bf16 %v2220, %v2220
      %2222 = vrot.lane.b32.xlu0 %v1942, 112
      %v2223 = vpop.permute.xlu0 %2222
      %v2225 = vsel %vm1183, %v2221, 0
      %v2228 = vsel %vm1245, %v2223, 0
      %2230 = vmatprep.subr.bf16.mxu0 0
      %2231 = vmatpush1.bf16.msra.mxu0 %v2228
      %2232 = vmatprep.subr.bf16.mxu0 0
      %2233 = vmatpush1.bf16.msra.mxu0 0
      %2234 = vmatprep.subr.bf16.mxu0 0
      %2235 = vmatpush1.bf16.msra.mxu0 0
      %2236 = vmatprep.subr.bf16.mxu0 0
      %2237 = vmatpush1.bf16.msra.mxu0 0
      %2238 = vmatprep.subr.bf16.mxu0 0
      %2239 = vmatpush1.bf16.msra.mxu0 0
      %2240 = vmatprep.subr.bf16.mxu0 0
      %2241 = vmatpush1.bf16.msra.mxu0 0
      %2242 = vmatprep.subr.bf16.mxu0 0
      %2243 = vmatpush1.bf16.msra.mxu0 0
      %2244 = vmatprep.subr.bf16.mxu0 0
      %2245 = vmatpush1.bf16.msra.mxu0 0
      %2246 = vmatprep.subr.bf16.mxu0 0
      %2247 = vmatpush1.bf16.msra.mxu0 0
      %2248 = vmatprep.subr.bf16.mxu0 0
      %2249 = vmatpush1.bf16.msra.mxu0 0
      %2250 = vmatprep.subr.bf16.mxu0 0
      %2251 = vmatpush1.bf16.msra.mxu0 0
      %2252 = vmatprep.subr.bf16.mxu0 0
      %2253 = vmatpush1.bf16.msra.mxu0 0
      %2254 = vmatprep.subr.bf16.mxu0 0
      %2255 = vmatpush1.bf16.msra.mxu0 0
      %2256 = vmatprep.subr.bf16.mxu0 0
      %2257 = vmatpush1.bf16.msra.mxu0 0
      %2258 = vmatprep.subr.bf16.mxu0 0
      %2259 = vmatpush1.bf16.msra.mxu0 0
      %2260 = vmatprep.subr.bf16.mxu0 0
      %2261 = vmatpush1.bf16.msra.mxu0 0
      %2262 = vmatprep.mubr.bf16.mxu0 0
      %2263 = vmatmul.mubr.bf16.gmra.mrb[0].mxu0 %v2225
      %v2264 = vpop.f32.mrb[0].mxu0
      %v2265 = vadd.f32 0.0, %v2264
      %v2266 = vpop.f32.mrb[0].mxu0
      %v2267 = vpop.f32.mrb[0].mxu0
      %v2268 = vpop.f32.mrb[0].mxu0
      %2269 = vdwg.mxu0
      %2270 = vrot.lane.b32.xlu0 %v1940, 104
      %v2271 = vpop.permute.xlu0 %2270
      %2272 = vrot.lane.b32.xlu0 %v1941, 104
      %v2273 = vpop.permute.xlu0 %2272
      %v2275 = vsel %vm1183, %v2271, 0
      %v2278 = vsel %vm1183, %v2273, 0
      %2280 = vmatprep.subr.bf16.mxu0 0
      %2281 = vmatpush1.bf16.xpose.msra.mxu0 %v2278
      %2282 = vmatprep.subr.bf16.mxu0 0
      %2283 = vmatpush1.bf16.xpose.msra.mxu0 0
      %2284 = vmatprep.subr.bf16.mxu0 0
      %2285 = vmatpush1.bf16.xpose.msra.mxu0 0
      %2286 = vmatprep.subr.bf16.mxu0 0
      %2287 = vmatpush1.bf16.xpose.msra.mxu0 0
      %2288 = vmatprep.subr.bf16.mxu0 0
      %2289 = vmatpush1.bf16.xpose.msra.mxu0 0
      %2290 = vmatprep.subr.bf16.mxu0 0
      %2291 = vmatpush1.bf16.xpose.msra.mxu0 0
      %2292 = vmatprep.subr.bf16.mxu0 0
      %2293 = vmatpush1.bf16.xpose.msra.mxu0 0
      %2294 = vmatprep.subr.bf16.mxu0 0
      %2295 = vmatpush1.bf16.xpose.msra.mxu0 0
      %2296 = vmatprep.subr.bf16.mxu0 0
      %2297 = vmatpush1.bf16.xpose.msra.mxu0 0
      %2298 = vmatprep.subr.bf16.mxu0 0
      %2299 = vmatpush1.bf16.xpose.msra.mxu0 0
      %2300 = vmatprep.subr.bf16.mxu0 0
      %2301 = vmatpush1.bf16.xpose.msra.mxu0 0
      %2302 = vmatprep.subr.bf16.mxu0 0
      %2303 = vmatpush1.bf16.xpose.msra.mxu0 0
      %2304 = vmatprep.subr.bf16.mxu0 0
      %2305 = vmatpush1.bf16.xpose.msra.mxu0 0
      %2306 = vmatprep.subr.bf16.mxu0 0
      %2307 = vmatpush1.bf16.xpose.msra.mxu0 0
      %2308 = vmatprep.subr.bf16.mxu0 0
      %2309 = vmatpush1.bf16.xpose.msra.mxu0 0
      %2310 = vmatprep.subr.bf16.mxu0 0
      %2311 = vmatpush1.bf16.xpose.msra.mxu0 0
      %2312 = vmatprep.mubr.bf16.mxu0 0
      %2313 = vmatmul.mubr.bf16.gmra.mrb[0].mxu0 %v2275
      %v2314 = vpop.f32.mrb[0].mxu0
      %v2315 = vadd.f32 %v1738, %v2314
      %v2316 = vpop.f32.mrb[0].mxu0
      %v2317 = vpop.f32.mrb[0].mxu0
      %v2318 = vpop.f32.mrb[0].mxu0
      %2319 = vdwg.mxu0
      %v2320 = vsel %vm1183, %v2315, -inf
      %2321 = vmax.xlane.f32.xlu0 %v2320
      %v2322 = vpop.xlane.xlu0 %2321
      %v2323 = vsub.f32 %v2315, %v2322
      %v2324 = vmul.f32 %v2323, 1.442695
      %v2325 = vpow.pop %v2324
      %v2326 = vsel %vm1183, %v2325, 0.0
      %2327 = vadd.xlane.f32.xlu0 %v2326
      %v2328 = vpop.xlane.xlu0 %2327
      %v2329 = vrcp.pop %v2328
      %v2330 = vmul.f32 %v2325, %v2329
      %v2331 = vpack.c.bf16 %v2330, %v2330
      %2332 = vrot.lane.b32.xlu0 %v1942, 104
      %v2333 = vpop.permute.xlu0 %2332
      %v2335 = vsel %vm1183, %v2331, 0
      %v2338 = vsel %vm1245, %v2333, 0
      %2340 = vmatprep.subr.bf16.mxu0 0
      %2341 = vmatpush1.bf16.msra.mxu0 %v2338
      %2342 = vmatprep.subr.bf16.mxu0 0
      %2343 = vmatpush1.bf16.msra.mxu0 0
      %2344 = vmatprep.subr.bf16.mxu0 0
      %2345 = vmatpush1.bf16.msra.mxu0 0
      %2346 = vmatprep.subr.bf16.mxu0 0
      %2347 = vmatpush1.bf16.msra.mxu0 0
      %2348 = vmatprep.subr.bf16.mxu0 0
      %2349 = vmatpush1.bf16.msra.mxu0 0
      %2350 = vmatprep.subr.bf16.mxu0 0
      %2351 = vmatpush1.bf16.msra.mxu0 0
      %2352 = vmatprep.subr.bf16.mxu0 0
      %2353 = vmatpush1.bf16.msra.mxu0 0
      %2354 = vmatprep.subr.bf16.mxu0 0
      %2355 = vmatpush1.bf16.msra.mxu0 0
      %2356 = vmatprep.subr.bf16.mxu0 0
      %2357 = vmatpush1.bf16.msra.mxu0 0
      %2358 = vmatprep.subr.bf16.mxu0 0
      %2359 = vmatpush1.bf16.msra.mxu0 0
      %2360 = vmatprep.subr.bf16.mxu0 0
      %2361 = vmatpush1.bf16.msra.mxu0 0
      %2362 = vmatprep.subr.bf16.mxu0 0
      %2363 = vmatpush1.bf16.msra.mxu0 0
      %2364 = vmatprep.subr.bf16.mxu0 0
      %2365 = vmatpush1.bf16.msra.mxu0 0
      %2366 = vmatprep.subr.bf16.mxu0 0
      %2367 = vmatpush1.bf16.msra.mxu0 0
      %2368 = vmatprep.subr.bf16.mxu0 0
      %2369 = vmatpush1.bf16.msra.mxu0 0
      %2370 = vmatprep.subr.bf16.mxu0 0
      %2371 = vmatpush1.bf16.msra.mxu0 0
      %2372 = vmatprep.mubr.bf16.mxu0 0
      %2373 = vmatmul.mubr.bf16.gmra.mrb[0].mxu0 %v2335
      %v2374 = vpop.f32.mrb[0].mxu0
      %v2375 = vadd.f32 0.0, %v2374
      %v2376 = vpop.f32.mrb[0].mxu0
      %v2377 = vpop.f32.mrb[0].mxu0
      %v2378 = vpop.f32.mrb[0].mxu0
      %2379 = vdwg.mxu0
      %2381 = vrot.lane.b32.xlu0 %v2155, 8
      %v2382 = vpop.permute.xlu0 %2381
      %2385 = vrot.lane.b32.xlu0 %v2265, 16
      %v2386 = vpop.permute.xlu0 %2385
      %2389 = vrot.lane.b32.xlu0 %v2375, 24
      %v2390 = vpop.permute.xlu0 %2389
      %v2392 = vsel %vm1183, %v2042, %v2382
      %v2393 = vsel %vm1635, %v2392, %v2386
      %v2394 = vsel %vm1637, %v2393, %v2390
      %v2395 = vpack.c.bf16 %v2394, %v2394
      %v2397 = vlaneseq
      %v2398 = vshrl.u32 %v2397, 7
      %v2399 = vsub.s32 0, %v2398
      %v2400 = vrot.slane %v1758, %v2399
      %v2406 = vunpack.c.l.b16 %v1751
      %v2407 = vunpack.c.l.b16 %v1752
      %v2408 = vunpack.c.l.b16 %v1753
      %v2409 = vunpack.c.l.b16 %v1754
      %v2410 = vpack.c.b16 %v2407, %v2406
      %v2411 = vpack.c.b16 %v2409, %v2408
      %v2415 = vsel %vm1019, %v2395, 0
      %2417 = vmatprep.subr.bf16.mxu0 0
      %2418 = vmatpush1.bf16.msra.mxu0 %v2410
      %2419 = vmatprep.subr.bf16.mxu0 0
      %2420 = vmatpush1.bf16.msra.mxu0 %v2411
      %2421 = vmatprep.subr.bf16.mxu0 0
      %2422 = vmatpush1.bf16.msra.mxu0 0
      %2423 = vmatprep.subr.bf16.mxu0 0
      %2424 = vmatpush1.bf16.msra.mxu0 0
      %2425 = vmatprep.subr.bf16.mxu0 0
      %2426 = vmatpush1.bf16.msra.mxu0 0
      %2427 = vmatprep.subr.bf16.mxu0 0
      %2428 = vmatpush1.bf16.msra.mxu0 0
      %2429 = vmatprep.subr.bf16.mxu0 0
      %2430 = vmatpush1.bf16.msra.mxu0 0
      %2431 = vmatprep.subr.bf16.mxu0 0
      %2432 = vmatpush1.bf16.msra.mxu0 0
      %2433 = vmatprep.subr.bf16.mxu0 0
      %2434 = vmatpush1.bf16.msra.mxu0 0
      %2435 = vmatprep.subr.bf16.mxu0 0
      %2436 = vmatpush1.bf16.msra.mxu0 0
      %2437 = vmatprep.subr.bf16.mxu0 0
      %2438 = vmatpush1.bf16.msra.mxu0 0
      %2439 = vmatprep.subr.bf16.mxu0 0
      %2440 = vmatpush1.bf16.msra.mxu0 0
      %2441 = vmatprep.subr.bf16.mxu0 0
      %2442 = vmatpush1.bf16.msra.mxu0 0
      %2443 = vmatprep.subr.bf16.mxu0 0
      %2444 = vmatpush1.bf16.msra.mxu0 0
      %2445 = vmatprep.subr.bf16.mxu0 0
      %2446 = vmatpush1.bf16.msra.mxu0 0
      %2447 = vmatprep.subr.bf16.mxu0 0
      %2448 = vmatpush1.bf16.msra.mxu0 0
      %2449 = vmatprep.mubr.bf16.mxu0 0
      %2450 = vmatmul.mubr.bf16.gmra.mrb[0].mxu0 %v2415
      %v2451 = vpop.f32.mrb[0].mxu0
      %v2452 = vadd.f32 %v2400, %v2451
      %v2453 = vpop.f32.mrb[0].mxu0
      %v2454 = vpop.f32.mrb[0].mxu0
      %v2455 = vpop.f32.mrb[0].mxu0
      %2456 = vdwg.mxu0
      %v2457 = vadd.f32 %v1734, %v2452
      %v2458 = vld [vmem:[%s45] sm:$0x1]
      %v2459 = vld [vmem:[%s47] sm:$0x1]
      %v2460 = vsel %vm1019, %v2457, 0.0
      %2461 = vadd.xlane.f32.xlu0 %v2460
      %v2462 = vpop.xlane.xlu0 %2461
      %v2463 = vmul.f32 %v2462, %v1707
      %v2464 = vmul.f32 %v2457, %v2457
      %v2465 = vsel %vm1019, %v2464, 0.0
      %2466 = vadd.xlane.f32.xlu0 %v2465
      %v2467 = vpop.xlane.xlu0 %2466
      %v2468 = vmul.f32 %v2467, %v1707
      %v2469 = vmul.f32 %v2463, %v2463
      %v2470 = vsub.f32 %v2468, %v2469
      %v2471 = vmax.f32 %v2470, 0.0
      %v2472 = vsub.f32 %v2457, %v2463
      %v2473 = vadd.f32 %v2471, 1e-05
      %v2474 = vrsqrt.pop %v2473
      %v2475 = vmul.f32 %v2472, %v2474
      %v2477 = vlaneseq
      %v2478 = vshrl.u32 %v2477, 7
      %v2479 = vsub.s32 0, %v2478
      %v2480 = vrot.slane %v2458, %v2479
      %v2482 = vmul.f32 %v2475, %v2480
      %v2484 = vlaneseq
      %v2485 = vshrl.u32 %v2484, 7
      %v2486 = vsub.s32 0, %v2485
      %v2487 = vrot.slane %v2459, %v2486
      %v2489 = vadd.f32 %v2482, %v2487
      %v2490 = vld [vmem:[%s49] sm:$0xf]
      %v2491 = vld [vmem:[%s49 + $0x4] sm:$0xf]
      %v2492 = vld [vmem:[%s49 + $0x8] sm:$0xf]
      %v2493 = vld [vmem:[%s49 + $0xc] sm:$0xf]
      %v2494 = vld [vmem:[%s51] sm:$0x1]
      %v2495 = vld [vmem:[%s53] sm:$0xf]
      %v2496 = vld [vmem:[%s53 + $0x4] sm:$0xf]
      %v2497 = vld [vmem:[%s53 + $0x8] sm:$0xf]
      %v2498 = vld [vmem:[%s53 + $0xc] sm:$0xf]
      %v2499 = vld [vmem:[%s53 + $0x10] sm:$0xf]
      %v2500 = vld [vmem:[%s53 + $0x14] sm:$0xf]
      %v2501 = vld [vmem:[%s53 + $0x18] sm:$0xf]
      %v2502 = vld [vmem:[%s53 + $0x1c] sm:$0xf]
      %v2503 = vld [vmem:[%s55] sm:$0x1]
      %v2504 = vpack.c.bf16 %v2489, %v2489
      %v2506 = vlaneseq
      %v2507 = vshrl.u32 %v2506, 7
      %v2508 = vsub.s32 0, %v2507
      %v2509 = vrot.slane %v2494, %v2508
      %v2515 = vunpack.c.l.b16 %v2490
      %v2516 = vunpack.c.l.b16 %v2491
      %v2517 = vunpack.c.l.b16 %v2492
      %v2518 = vunpack.c.l.b16 %v2493
      %v2519 = vpack.c.b16 %v2516, %v2515
      %v2520 = vpack.c.b16 %v2518, %v2517
      %v2524 = vsel %vm1019, %v2504, 0
      %2526 = vmatprep.subr.bf16.mxu0 0
      %2527 = vmatpush1.bf16.msra.mxu0 %v2519
      %2528 = vmatprep.subr.bf16.mxu0 0
      %2529 = vmatpush1.bf16.msra.mxu0 %v2520
      %2530 = vmatprep.subr.bf16.mxu0 0
      %2531 = vmatpush1.bf16.msra.mxu0 0
      %2532 = vmatprep.subr.bf16.mxu0 0
      %2533 = vmatpush1.bf16.msra.mxu0 0
      %2534 = vmatprep.subr.bf16.mxu0 0
      %2535 = vmatpush1.bf16.msra.mxu0 0
      %2536 = vmatprep.subr.bf16.mxu0 0
      %2537 = vmatpush1.bf16.msra.mxu0 0
      %2538 = vmatprep.subr.bf16.mxu0 0
      %2539 = vmatpush1.bf16.msra.mxu0 0
      %2540 = vmatprep.subr.bf16.mxu0 0
      %2541 = vmatpush1.bf16.msra.mxu0 0
      %2542 = vmatprep.subr.bf16.mxu0 0
      %2543 = vmatpush1.bf16.msra.mxu0 0
      %2544 = vmatprep.subr.bf16.mxu0 0
      %2545 = vmatpush1.bf16.msra.mxu0 0
      %2546 = vmatprep.subr.bf16.mxu0 0
      %2547 = vmatpush1.bf16.msra.mxu0 0
      %2548 = vmatprep.subr.bf16.mxu0 0
      %2549 = vmatpush1.bf16.msra.mxu0 0
      %2550 = vmatprep.subr.bf16.mxu0 0
      %2551 = vmatpush1.bf16.msra.mxu0 0
      %2552 = vmatprep.subr.bf16.mxu0 0
      %2553 = vmatpush1.bf16.msra.mxu0 0
      %2554 = vmatprep.subr.bf16.mxu0 0
      %2555 = vmatpush1.bf16.msra.mxu0 0
      %2556 = vmatprep.subr.bf16.mxu0 0
      %2557 = vmatpush1.bf16.msra.mxu0 0
      %2558 = vmatprep.mubr.bf16.mxu0 0
      %2559 = vmatmul.mubr.bf16.gmra.mrb[0].mxu0 %v2524
      %v2560 = vpop.f32.mrb[0].mxu0
      %v2561 = vadd.f32 %v2509, %v2560
      %v2562 = vpop.f32.mrb[0].mxu0
      %v2563 = vpop.f32.mrb[0].mxu0
      %v2564 = vpop.f32.mrb[0].mxu0
      %2565 = vdwg.mxu0
      %v2566 = vmax.f32 %v2561, 0.0
      %v2567 = vpack.c.bf16 %v2566, %v2566
      %v2569 = vlaneseq
      %v2570 = vshrl.u32 %v2569, 7
      %v2571 = vsub.s32 0, %v2570
      %v2572 = vrot.slane %v2503, %v2571
      %v2582 = vunpack.c.l.b16 %v2495
      %v2583 = vunpack.c.l.b16 %v2496
      %v2584 = vunpack.c.l.b16 %v2497
      %v2585 = vunpack.c.l.b16 %v2498
      %v2586 = vunpack.c.l.b16 %v2499
      %v2587 = vunpack.c.l.b16 %v2500
      %v2588 = vunpack.c.l.b16 %v2501
      %v2589 = vunpack.c.l.b16 %v2502
      %v2590 = vpack.c.b16 %v2583, %v2582
      %v2591 = vpack.c.b16 %v2585, %v2584
      %v2592 = vpack.c.b16 %v2587, %v2586
      %v2593 = vpack.c.b16 %v2589, %v2588
      %vm2598 = vcmask 523264
      %v2600 = vsel %vm2598, %v2567, 0
      %2602 = vmatprep.subr.bf16.mxu0 0
      %2603 = vmatpush1.bf16.msra.mxu0 %v2590
      %2604 = vmatprep.subr.bf16.mxu0 0
      %2605 = vmatpush1.bf16.msra.mxu0 %v2591
      %2606 = vmatprep.subr.bf16.mxu0 0
      %2607 = vmatpush1.bf16.msra.mxu0 %v2592
      %2608 = vmatprep.subr.bf16.mxu0 0
      %2609 = vmatpush1.bf16.msra.mxu0 %v2593
      %2610 = vmatprep.subr.bf16.mxu0 0
      %2611 = vmatpush1.bf16.msra.mxu0 0
      %2612 = vmatprep.subr.bf16.mxu0 0
      %2613 = vmatpush1.bf16.msra.mxu0 0
      %2614 = vmatprep.subr.bf16.mxu0 0
      %2615 = vmatpush1.bf16.msra.mxu0 0
      %2616 = vmatprep.subr.bf16.mxu0 0
      %2617 = vmatpush1.bf16.msra.mxu0 0
      %2618 = vmatprep.subr.bf16.mxu0 0
      %2619 = vmatpush1.bf16.msra.mxu0 0
      %2620 = vmatprep.subr.bf16.mxu0 0
      %2621 = vmatpush1.bf16.msra.mxu0 0
      %2622 = vmatprep.subr.bf16.mxu0 0
      %2623 = vmatpush1.bf16.msra.mxu0 0
      %2624 = vmatprep.subr.bf16.mxu0 0
      %2625 = vmatpush1.bf16.msra.mxu0 0
      %2626 = vmatprep.subr.bf16.mxu0 0
      %2627 = vmatpush1.bf16.msra.mxu0 0
      %2628 = vmatprep.subr.bf16.mxu0 0
      %2629 = vmatpush1.bf16.msra.mxu0 0
      %2630 = vmatprep.subr.bf16.mxu0 0
      %2631 = vmatpush1.bf16.msra.mxu0 0
      %2632 = vmatprep.subr.bf16.mxu0 0
      %2633 = vmatpush1.bf16.msra.mxu0 0
      %2634 = vmatprep.mubr.bf16.mxu0 0
      %2635 = vmatmul.mubr.bf16.gmra.mrb[0].mxu0 %v2600
      %v2636 = vpop.f32.mrb[0].mxu0
      %v2637 = vadd.f32 %v2572, %v2636
      %v2638 = vpop.f32.mrb[0].mxu0
      %v2639 = vpop.f32.mrb[0].mxu0
      %v2640 = vpop.f32.mrb[0].mxu0
      %2641 = vdwg.mxu0
      %v2642 = vadd.f32 %v2489, %v2637
      %v2643 = vld [vmem:[%s57] sm:$0x1]
      %v2644 = vld [vmem:[%s59] sm:$0x1]
      %v2645 = vsel %vm1019, %v2642, 0.0
      %2646 = vadd.xlane.f32.xlu0 %v2645
      %v2647 = vpop.xlane.xlu0 %2646
      %v2648 = vmul.f32 %v2647, %v1707
      %v2649 = vmul.f32 %v2642, %v2642
      %v2650 = vsel %vm1019, %v2649, 0.0
      %2651 = vadd.xlane.f32.xlu0 %v2650
      %v2652 = vpop.xlane.xlu0 %2651
      %v2653 = vmul.f32 %v2652, %v1707
      %v2654 = vmul.f32 %v2648, %v2648
      %v2655 = vsub.f32 %v2653, %v2654
      %v2656 = vmax.f32 %v2655, 0.0
      %v2657 = vsub.f32 %v2642, %v2648
      %v2658 = vadd.f32 %v2656, 1e-05
      %v2659 = vrsqrt.pop %v2658
      %v2660 = vmul.f32 %v2657, %v2659
      %v2662 = vlaneseq
      %v2663 = vshrl.u32 %v2662, 7
      %v2664 = vsub.s32 0, %v2663
      %v2665 = vrot.slane %v2643, %v2664
      %v2667 = vmul.f32 %v2660, %v2665
      %v2669 = vlaneseq
      %v2670 = vshrl.u32 %v2669, 7
      %v2671 = vsub.s32 0, %v2670
      %v2672 = vrot.slane %v2644, %v2671
      %v2674 = vadd.f32 %v2667, %v2672
      %2675 = vst.msk [vmem:[%s976] sm:$0xff] %vm1019, %v2674
      %p2676 = scmp.lt.s32.totalorder %s72, 1
      %s2677 = scalar_select %p2676, %s72, 1
      %s2678 = smul.addr %s2677, 8
      %s2679 = scalar_lea.vmem %s61, %s2678
      // Predicated region
      $region141: #{seq2seq_forward.7} parent=139 // pred_check
        %p2680 = pneg %p740
      $region142: #{seq2seq_forward.7} parent=139 // pred_check_branch
        %2682 = sbr.rel (%p2680) target = $region144
      $region143: #{seq2seq_forward.7} parent=139 // pred_region
        _
      $region144: #{seq2seq_forward.7} parent=139 // pred_fallthru
        _
    $region140: #{seq2seq_forward.7} parent=5 // pred_fallthru
      _
    %p2683 = scmp.le.s32.totalorder 2, %s67
    // Predicated region
    $region145: #{seq2seq_forward.7} parent=5 // pred_check
      %p2684 = pneg %p2683
    $region146: #{seq2seq_forward.7} parent=5 // pred_check_branch
      %2686 = sbr.rel (%p2684) target = $region148
    $region147: #{seq2seq_forward.7} parent=5 // pred_region
      %s2687 = ssub.s32 %s67, 2
      // Predicated region
      $region149: #{seq2seq_forward.7} parent=147 // pred_check
        %p2688 = pneg %p746
      $region150: #{seq2seq_forward.7} parent=147 // pred_check_branch
        %2690 = sbr.rel (%p2688) target = $region152
      $region151: #{seq2seq_forward.7} parent=147 // pred_region
        %p2691 = scmp.lt.s32.totalorder %s73, 1
        %s2692 = scalar_select %p2691, %s73, 1
        %s2693 = smul.addr %s2692, 8
        %s2694 = scalar_lea.vmem %s61, %s2693
      $region152: #{seq2seq_forward.7} parent=147 // pred_fallthru
        _
    $region148: #{seq2seq_forward.7} parent=5 // pred_fallthru
      _
  $region6: #{seq2seq_forward.7} parent=0 // loop_footer
    %s71 = sadd.s32 1, %s67
  $region7: #{seq2seq_forward.7} parent=0 // loop_footer_branch
    %66 = sbr.rel target = $region3
  $region8: #{seq2seq_forward.7} parent=0 // loop_exit
    _

</llo_original>
